<compile_context>
chip_gen: v7x
topology: tpu7x:2x2x1
jax: 0.10.0
libtpu: 0.0.40
codegen_flags: <defaults>
</compile_context>

<pallas_src>
import functools

import jax
import jax.numpy as jnp
from jax.experimental import pallas as pl
from jax.experimental.pallas import tpu as pltpu


# ------------------------------- fused Pallas kernel ---------------------------------

def _sigmoid_eup(x):
    # exact identity: sigma(x) = 0.5 * (tanh(x/2) + 1)  -> single EUP op per gate
    return 0.5 * jnp.tanh(0.5 * x) + 0.5


def _nonres_lstm_kernel(xc_ref, win_ref, bg_ref, whh_ref,
                        w1a_ref, w1b_ref, b1_ref, w2_ref, b2_ref,
                        out_ref,
                        g_sc, ha_sc, hr_sc,
                        *, seq_len, batch):
    S, B = seq_len, batch
    H2 = whh_ref.shape[0]         # 2 * d_model (128 lanes when d_model = 64)

    # ---- input projections for BOTH directions, all timesteps, ONE MXU pass -----------
    # xc rows at time t = [ x(t) | x(S-1-t) ]; gate-column layout (gate-major, dir-inner):
    #   [ i_f i_r | f_f f_r | g_f g_r | o_f o_r ]   (each gate block is 2H = 128 lanes)
    g_sc[...] = (jnp.dot(xc_ref[...], win_ref[...], preferred_element_type=jnp.float32)
                 + bg_ref[...])                     # merged biases (b_ih + b_hh, both dirs)

    # ---- merged bidirectional recurrence: state = [h_fwd | h_rev], one serial scan -----
    h0 = jnp.zeros((B, H2), jnp.float32)
    c0 = jnp.zeros((B, H2), jnp.float32)

    def step(t, carry):
        h, c = carry
        f0 = pl.multiple_of(t * B, B)                 # forward direction emits time t
        r0 = pl.multiple_of((S - 1 - t) * B, B)       # reverse direction emits time S-1-t
        g = g_sc[pl.ds(f0, B), :] + jnp.dot(h, whh_ref[...],
                                            preferred_element_type=jnp.float32)   # (B, 8H)
        i_g = _sigmoid_eup(g[:, 0 * H2:1 * H2])       # each gate slice = one whole vreg
        f_g = _sigmoid_eup(g[:, 1 * H2:2 * H2])
        g_g = jnp.tanh(g[:, 2 * H2:3 * H2])
        o_g = _sigmoid_eup(g[:, 3 * H2:4 * H2])
        c = f_g * c + i_g * g_g
        h = o_g * jnp.tanh(c)
        ha_sc[pl.ds(f0, B), :] = h                    # full-vreg (8,128) unmasked stores
        hr_sc[pl.ds(r0, B), :] = h
        return (h, c)

    jax.lax.fori_loop(0, S, step, (h0, c0), unroll=True)

    # ---- fused MLP head: relu(Linear1([h_fwd | h_rev])) -> Linear2 ---------------------
    # Lane selection of the correct-time halves of ha/hr is folded into zero-padded
    # Linear1 weights (w1a uses only the fwd rows, w1b only the rev rows).
    z = (jnp.dot(ha_sc[...], w1a_ref[...], preferred_element_type=jnp.float32)
         + jnp.dot(hr_sc[...], w1b_ref[...], preferred_element_type=jnp.float32)
         + b1_ref[...])
    z = jnp.maximum(z, 0.0)
    out_ref[...] = (jnp.dot(z, w2_ref[...], preferred_element_type=jnp.float32)
                    + b2_ref[...])


def non_residual_lstm(x, p):
    """Forward pass of NonResidualLSTM.  x: (S, B, d_model) -> (S, B, d_model)."""
    S, B, H = x.shape
    G = 8 * H
    # [x(t) | x(S-1-t)] per timestep: layout plumbing only, lets the kernel do one
    # combined input projection and keeps the serial loop free of a second gate load.
    xc = jnp.concatenate([x, x[::-1]], axis=-1).reshape(S * B, 2 * H)
    y2 = pl.pallas_call(
        functools.partial(_nonres_lstm_kernel, seq_len=S, batch=B),
        out_shape=jax.ShapeDtypeStruct((S * B, H), jnp.float32),
        grid=(1,),
        in_specs=[
            pl.BlockSpec((S * B, 2 * H), lambda i: (0, 0)),  # [x | x_rev] rows
            pl.BlockSpec((2 * H, G), lambda i: (0, 0)),      # combined input-proj weight
            pl.BlockSpec((1, G), lambda i: (0, 0)),          # merged gate bias (both dirs)
            pl.BlockSpec((2 * H, G), lambda i: (0, 0)),      # block-diagonal recurrent weight
            pl.BlockSpec((2 * H, 4 * H), lambda i: (0, 0)),  # linear1 weight (fwd rows only)
            pl.BlockSpec((2 * H, 4 * H), lambda i: (0, 0)),  # linear1 weight (rev rows only)
            pl.BlockSpec((1, 4 * H), lambda i: (0, 0)),      # linear1 bias
            pl.BlockSpec((4 * H, H), lambda i: (0, 0)),      # linear2 weight
            pl.BlockSpec((1, H), lambda i: (0, 0)),          # linear2 bias
        ],
        out_specs=pl.BlockSpec((S * B, H), lambda i: (0, 0)),
        scratch_shapes=[
            pltpu.VMEM((S * B, G), jnp.float32),       # gate inputs (both dirs), all t
            pltpu.VMEM((S * B, 2 * H), jnp.float32),   # h in forward time order
            pltpu.VMEM((S * B, 2 * H), jnp.float32),   # h scattered to reverse time order
        ],
    )(xc, p['win'], p['bg'], p['whh'],
      p['w1a'], p['w1b'], p['b1'], p['w2'], p['b2'])
    return y2.reshape(S, B, H)


# ------------------------- parameters (PyTorch layout + one-time repack) --------------

def init_params(key, d_model):
    """Raw parameters in PyTorch layouts (nn.LSTM / nn.Linear conventions)."""
    H = d_model
    ks = jax.random.split(key, 12)
    w = lambda k, s: 0.1 * jax.random.normal(k, s, dtype=jnp.float32)
    return {
        'wih_f': w(ks[0], (4 * H, H)), 'whh_f': w(ks[1], (4 * H, H)),
        'bih_f': w(ks[2], (4 * H,)),   'bhh_f': w(ks[3], (4 * H,)),
        'wih_r': w(ks[4], (4 * H, H)), 'whh_r': w(ks[5], (4 * H, H)),
        'bih_r': w(ks[6], (4 * H,)),   'bhh_r': w(ks[7], (4 * H,)),
        'l1_w': w(ks[8], (4 * H, 2 * H)), 'l1_b': w(ks[9], (4 * H,)),
        'l2_w': w(ks[10], (H, 4 * H)),    'l2_b': w(ks[11], (H,)),
    }


def prepare_params(raw, d_model):
    """One-time repack (hoisted out of the forward pass):
      * transpose all weights for right-multiplication,
      * merge b_ih + b_hh,
      * gate-major, direction-inner gate axis: [ i_f i_r | f_f f_r | g_f g_r | o_f o_r ],
      * combined (2H, 8H) input-projection weight (top rows: fwd, bottom rows: rev),
      * block-diagonal (2H, 8H) recurrent weight so one matmul drives both directions,
      * zero-padded Linear1 weights so the [h_fwd | h_rev] selection is folded away.
    """
    H = d_model
    H2, G = 2 * H, 8 * H
    WfT, WrT = raw['wih_f'].T, raw['wih_r'].T            # (H, 4H), columns = i, f, g, o
    WhfT, WhrT = raw['whh_f'].T, raw['whh_r'].T
    bf = raw['bih_f'] + raw['bhh_f']
    br = raw['bih_r'] + raw['bhh_r']

    win = jnp.zeros((H2, G), jnp.float32)
    whh = jnp.zeros((H2, G), jnp.float32)
    bg = jnp.zeros((G,), jnp.float32)
    for k in range(4):                                   # gate blocks i, f, g, o
        src = slice(k * H, (k + 1) * H)
        cf = slice(k * H2, k * H2 + H)                   # forward half of gate block k
        cr = slice(k * H2 + H, (k + 1) * H2)             # reverse half of gate block k
        win = win.at[:H, cf].set(WfT[:, src])            # x(t)      -> fwd gate columns
        win = win.at[H:, cr].set(WrT[:, src])            # x(S-1-t)  -> rev gate columns
        whh = whh.at[:H, cf].set(WhfT[:, src])
        whh = whh.at[H:, cr].set(WhrT[:, src])
        bg = bg.at[cf].set(bf[src])
        bg = bg.at[cr].set(br[src])

    w1a = jnp.zeros((H2, 4 * H), jnp.float32).at[:H, :].set(raw['l1_w'][:, :H].T)
    w1b = jnp.zeros((H2, 4 * H), jnp.float32).at[H:, :].set(raw['l1_w'][:, H:].T)

    return {
        'win': win, 'bg': bg.reshape(1, G), 'whh': whh,
        'w1a': w1a, 'w1b': w1b,
        'b1': raw['l1_b'].reshape(1, 4 * H),
        'w2': raw['l2_w'].T, 'b2': raw['l2_b'].reshape(1, H),
    }


# ------------------------------ pure-JAX reference ------------------------------------

def _lstm_direction_ref(x, wih, whh, bih, bhh):
    H = whh.shape[1]
    B = x.shape[1]

    def step(carry, xt):
        h, c = carry
        g = xt @ wih.T + bih + h @ whh.T + bhh
        i = jax.nn.sigmoid(g[:, 0:H])
        f = jax.nn.sigmoid(g[:, H:2 * H])
        gg = jnp.tanh(g[:, 2 * H:3 * H])
        o = jax.nn.sigmoid(g[:, 3 * H:4 * H])
        c = f * c + i * gg
        h = o * jnp.tanh(c)
        return (h, c), h

    init = (jnp.zeros((B, H), jnp.float32), jnp.zeros((B, H), jnp.float32))
    _, hs = jax.lax.scan(step, init, x)
    return hs


def non_residual_lstm_ref(x, raw):
    hf = _lstm_direction_ref(x, raw['wih_f'], raw['whh_f'], raw['bih_f'], raw['bhh_f'])
    hr = _lstm_direction_ref(x[::-1], raw['wih_r'], raw['whh_r'],
                             raw['bih_r'], raw['bhh_r'])[::-1]
    h = jnp.concatenate([hf, hr], axis=-1)
    z = jax.nn.relu(h @ raw['l1_w'].T + raw['l1_b'])
    return z @ raw['l2_w'].T + raw['l2_b']


# -------------------------------------- main ------------------------------------------

if __name__ == "__main__":
    d_model = 64          # 2*d_model = 128 -> every gate block / h state is one vreg wide
    S, B = 16, 8          # batch = 8 keeps every dynamic row block sublane(8)-aligned

    key = jax.random.PRNGKey(0)
    pkey, xkey = jax.random.split(key)
    raw = init_params(pkey, d_model)
    params = prepare_params(raw, d_model)    # one-time repack, outside the forward pass

    x = jax.random.normal(xkey, (S, B, d_model), dtype=jnp.float32)

    fwd = jax.jit(non_residual_lstm)
    out = jax.block_until_ready(fwd(x, params))

    assert out.shape == (S, B, d_model), out.shape
    assert bool(jnp.all(jnp.isfinite(out)))

    ref = non_residual_lstm_ref(x, raw)
    max_err = float(jnp.max(jnp.abs(out - ref)))
    assert max_err < 2e-2, f"mismatch vs pure-JAX reference: {max_err}"

    print("KERNEL_OK")
</pallas_src>

<mosaic_0001>
module attributes {stable_mosaic.version = 11 : i64} {
  func.func @_nonres_lstm_kernel(%arg0: i32, %arg1: memref<128x128xf32, #tpu.memory_space<vmem>>, %arg2: memref<128x512xf32, #tpu.memory_space<vmem>>, %arg3: memref<1x512xf32, #tpu.memory_space<vmem>>, %arg4: memref<128x512xf32, #tpu.memory_space<vmem>>, %arg5: memref<128x256xf32, #tpu.memory_space<vmem>>, %arg6: memref<128x256xf32, #tpu.memory_space<vmem>>, %arg7: memref<1x256xf32, #tpu.memory_space<vmem>>, %arg8: memref<256x64xf32, #tpu.memory_space<vmem>>, %arg9: memref<1x64xf32, #tpu.memory_space<vmem>>, %arg10: memref<128x64xf32, #tpu.memory_space<vmem>>, %arg11: memref<128x512xf32, #tpu.memory_space<vmem>>, %arg12: memref<128x128xf32, #tpu.memory_space<vmem>>, %arg13: memref<128x128xf32, #tpu.memory_space<vmem>>) attributes {dimension_semantics = [#tpu.dimension_semantics<arbitrary>], iteration_bounds = array<i64: 1>, scalar_prefetch = 0 : i64, scratch_operands = 3 : i64, tpu.core_type = #tpu.core_type<tc>, window_params = [{pipeline_mode = #tpu.pipeline_mode<synchronous>, transform_indices = @transform_0, window_bounds = array<i64: 128, 128>}, {pipeline_mode = #tpu.pipeline_mode<synchronous>, transform_indices = @transform_1, window_bounds = array<i64: 128, 512>}, {pipeline_mode = #tpu.pipeline_mode<synchronous>, transform_indices = @transform_2, window_bounds = array<i64: 1, 512>}, {pipeline_mode = #tpu.pipeline_mode<synchronous>, transform_indices = @transform_3, window_bounds = array<i64: 128, 512>}, {pipeline_mode = #tpu.pipeline_mode<synchronous>, transform_indices = @transform_4, window_bounds = array<i64: 128, 256>}, {pipeline_mode = #tpu.pipeline_mode<synchronous>, transform_indices = @transform_5, window_bounds = array<i64: 128, 256>}, {pipeline_mode = #tpu.pipeline_mode<synchronous>, transform_indices = @transform_6, window_bounds = array<i64: 1, 256>}, {pipeline_mode = #tpu.pipeline_mode<synchronous>, transform_indices = @transform_7, window_bounds = array<i64: 256, 64>}, {pipeline_mode = #tpu.pipeline_mode<synchronous>, transform_indices = @transform_8, window_bounds = array<i64: 1, 64>}, {pipeline_mode = #tpu.pipeline_mode<synchronous>, transform_indices = @transform_9, window_bounds = array<i64: 128, 64>}]} {
    %c0 = arith.constant 0 : index
    %c0_0 = arith.constant 0 : index
    %0 = vector.load %arg1[%c0, %c0_0] : memref<128x128xf32, #tpu.memory_space<vmem>>, vector<128x128xf32>
    %c0_1 = arith.constant 0 : index
    %c0_2 = arith.constant 0 : index
    %1 = vector.load %arg2[%c0_1, %c0_2] : memref<128x512xf32, #tpu.memory_space<vmem>>, vector<128x512xf32>
    %cst = arith.constant dense<0.000000e+00> : vector<128x512xf32>
    %2 = tpu.matmul %0, %1, %cst {dimension_numbers = #tpu.dot_dimension_numbers<[1], [0], [0], [1], [0, 0, 1, 1], [], []>} : vector<128x128xf32>, vector<128x512xf32>, vector<128x512xf32> -> vector<128x512xf32>
    %c0_3 = arith.constant 0 : index
    %c0_4 = arith.constant 0 : index
    %3 = vector.load %arg3[%c0_3, %c0_4] : memref<1x512xf32, #tpu.memory_space<vmem>>, vector<1x512xf32>
    %4 = vector.broadcast %3 : vector<1x512xf32> to vector<128x512xf32>
    %5 = arith.addf %2, %4 : vector<128x512xf32>
    %c0_5 = arith.constant 0 : index
    %c0_6 = arith.constant 0 : index
    %6 = vector.load %arg11[%c0_5, %c0_6] : memref<128x512xf32, #tpu.memory_space<vmem>>, vector<128x512xf32>
    tpu.vector_store %arg11[%c0_5, %c0_6], %5 {strides = array<i32>} : memref<128x512xf32, #tpu.memory_space<vmem>>, vector<128x512xf32>,
    %cst_7 = arith.constant 0.000000e+00 : f32
    %7 = vector.broadcast %cst_7 : f32 to vector<8x128xf32>
    %cst_8 = arith.constant 0.000000e+00 : f32
    %8 = vector.broadcast %cst_8 : f32 to vector<8x128xf32>
    %c0_i32 = arith.constant 0 : i32
    %c8_i32 = arith.constant 8 : i32
    %9 = arith.muli %c0_i32, %c8_i32 : i32
    %10 = tpu.assume_multiple %9, 8 : i32
    %c15_i32 = arith.constant 15 : i32
    %11 = arith.subi %c15_i32, %c0_i32 : i32
    %c8_i32_9 = arith.constant 8 : i32
    %12 = arith.muli %11, %c8_i32_9 : i32
    %13 = tpu.assume_multiple %12, 8 : i32
    %14 = arith.index_cast %10 : i32 to index
    %c0_10 = arith.constant 0 : index
    %15 = vector.load %arg11[%14, %c0_10] : memref<128x512xf32, #tpu.memory_space<vmem>>, vector<8x512xf32>
    %c0_11 = arith.constant 0 : index
    %c0_12 = arith.constant 0 : index
    %16 = vector.load %arg4[%c0_11, %c0_12] : memref<128x512xf32, #tpu.memory_space<vmem>>, vector<128x512xf32>
    %cst_13 = arith.constant dense<0.000000e+00> : vector<8x512xf32>
    %17 = tpu.matmul %7, %16, %cst_13 {dimension_numbers = #tpu.dot_dimension_numbers<[1], [0], [0], [1], [0, 0, 1, 1], [], []>} : vector<8x128xf32>, vector<128x512xf32>, vector<8x512xf32> -> vector<8x512xf32>
    %18 = arith.addf %15, %17 : vector<8x512xf32>
    %19 = vector.extract_strided_slice %18 {offsets = [0, 0], sizes = [8, 128], strides = [1, 1]} : vector<8x512xf32> to vector<8x128xf32>
    %cst_14 = arith.constant 5.000000e-01 : f32
    %20 = vector.broadcast %cst_14 : f32 to vector<8x128xf32>
    %21 = arith.mulf %20, %19 : vector<8x128xf32>
    %22 = math.tanh %21 : vector<8x128xf32>
    %cst_15 = arith.constant 5.000000e-01 : f32
    %23 = vector.broadcast %cst_15 : f32 to vector<8x128xf32>
    %24 = arith.mulf %23, %22 : vector<8x128xf32>
    %cst_16 = arith.constant 5.000000e-01 : f32
    %25 = vector.broadcast %cst_16 : f32 to vector<8x128xf32>
    %26 = arith.addf %24, %25 : vector<8x128xf32>
    %27 = vector.extract_strided_slice %18 {offsets = [0, 128], sizes = [8, 128], strides = [1, 1]} : vector<8x512xf32> to vector<8x128xf32>
    %cst_17 = arith.constant 5.000000e-01 : f32
    %28 = vector.broadcast %cst_17 : f32 to vector<8x128xf32>
    %29 = arith.mulf %28, %27 : vector<8x128xf32>
    %30 = math.tanh %29 : vector<8x128xf32>
    %cst_18 = arith.constant 5.000000e-01 : f32
    %31 = vector.broadcast %cst_18 : f32 to vector<8x128xf32>
    %32 = arith.mulf %31, %30 : vector<8x128xf32>
    %cst_19 = arith.constant 5.000000e-01 : f32
    %33 = vector.broadcast %cst_19 : f32 to vector<8x128xf32>
    %34 = arith.addf %32, %33 : vector<8x128xf32>
    %35 = vector.extract_strided_slice %18 {offsets = [0, 256], sizes = [8, 128], strides = [1, 1]} : vector<8x512xf32> to vector<8x128xf32>
    %36 = math.tanh %35 : vector<8x128xf32>
    %37 = vector.extract_strided_slice %18 {offsets = [0, 384], sizes = [8, 128], strides = [1, 1]} : vector<8x512xf32> to vector<8x128xf32>
    %cst_20 = arith.constant 5.000000e-01 : f32
    %38 = vector.broadcast %cst_20 : f32 to vector<8x128xf32>
    %39 = arith.mulf %38, %37 : vector<8x128xf32>
    %40 = math.tanh %39 : vector<8x128xf32>
    %cst_21 = arith.constant 5.000000e-01 : f32
    %41 = vector.broadcast %cst_21 : f32 to vector<8x128xf32>
    %42 = arith.mulf %41, %40 : vector<8x128xf32>
    %cst_22 = arith.constant 5.000000e-01 : f32
    %43 = vector.broadcast %cst_22 : f32 to vector<8x128xf32>
    %44 = arith.addf %42, %43 : vector<8x128xf32>
    %45 = arith.mulf %34, %8 : vector<8x128xf32>
    %46 = arith.mulf %26, %36 : vector<8x128xf32>
    %47 = arith.addf %45, %46 : vector<8x128xf32>
    %48 = math.tanh %47 : vector<8x128xf32>
    %49 = arith.mulf %44, %48 : vector<8x128xf32>
    %50 = arith.index_cast %10 : i32 to index
    %c0_23 = arith.constant 0 : index
    %51 = vector.load %arg12[%50, %c0_23] : memref<128x128xf32, #tpu.memory_space<vmem>>, vector<8x128xf32>
    tpu.vector_store %arg12[%50, %c0_23], %49 {strides = array<i32>} : memref<128x128xf32, #tpu.memory_space<vmem>>, vector<8x128xf32>,
    %52 = arith.index_cast %13 : i32 to index
    %c0_24 = arith.constant 0 : index
    %53 = vector.load %arg13[%52, %c0_24] : memref<128x128xf32, #tpu.memory_space<vmem>>, vector<8x128xf32>
    tpu.vector_store %arg13[%52, %c0_24], %49 {strides = array<i32>} : memref<128x128xf32, #tpu.memory_space<vmem>>, vector<8x128xf32>,
    %c1_i32 = arith.constant 1 : i32
    %c8_i32_25 = arith.constant 8 : i32
    %54 = arith.muli %c1_i32, %c8_i32_25 : i32
    %55 = tpu.assume_multiple %54, 8 : i32
    %c15_i32_26 = arith.constant 15 : i32
    %56 = arith.subi %c15_i32_26, %c1_i32 : i32
    %c8_i32_27 = arith.constant 8 : i32
    %57 = arith.muli %56, %c8_i32_27 : i32
    %58 = tpu.assume_multiple %57, 8 : i32
    %59 = arith.index_cast %55 : i32 to index
    %c0_28 = arith.constant 0 : index
    %60 = vector.load %arg11[%59, %c0_28] : memref<128x512xf32, #tpu.memory_space<vmem>>, vector<8x512xf32>
    %c0_29 = arith.constant 0 : index
    %c0_30 = arith.constant 0 : index
    %61 = vector.load %arg4[%c0_29, %c0_30] : memref<128x512xf32, #tpu.memory_space<vmem>>, vector<128x512xf32>
    %cst_31 = arith.constant dense<0.000000e+00> : vector<8x512xf32>
    %62 = tpu.matmul %49, %61, %cst_31 {dimension_numbers = #tpu.dot_dimension_numbers<[1], [0], [0], [1], [0, 0, 1, 1], [], []>} : vector<8x128xf32>, vector<128x512xf32>, vector<8x512xf32> -> vector<8x512xf32>
    %63 = arith.addf %60, %62 : vector<8x512xf32>
    %64 = vector.extract_strided_slice %63 {offsets = [0, 0], sizes = [8, 128], strides = [1, 1]} : vector<8x512xf32> to vector<8x128xf32>
    %cst_32 = arith.constant 5.000000e-01 : f32
    %65 = vector.broadcast %cst_32 : f32 to vector<8x128xf32>
    %66 = arith.mulf %65, %64 : vector<8x128xf32>
    %67 = math.tanh %66 : vector<8x128xf32>
    %cst_33 = arith.constant 5.000000e-01 : f32
    %68 = vector.broadcast %cst_33 : f32 to vector<8x128xf32>
    %69 = arith.mulf %68, %67 : vector<8x128xf32>
    %cst_34 = arith.constant 5.000000e-01 : f32
    %70 = vector.broadcast %cst_34 : f32 to vector<8x128xf32>
    %71 = arith.addf %69, %70 : vector<8x128xf32>
    %72 = vector.extract_strided_slice %63 {offsets = [0, 128], sizes = [8, 128], strides = [1, 1]} : vector<8x512xf32> to vector<8x128xf32>
    %cst_35 = arith.constant 5.000000e-01 : f32
    %73 = vector.broadcast %cst_35 : f32 to vector<8x128xf32>
    %74 = arith.mulf %73, %72 : vector<8x128xf32>
    %75 = math.tanh %74 : vector<8x128xf32>
    %cst_36 = arith.constant 5.000000e-01 : f32
    %76 = vector.broadcast %cst_36 : f32 to vector<8x128xf32>
    %77 = arith.mulf %76, %75 : vector<8x128xf32>
    %cst_37 = arith.constant 5.000000e-01 : f32
    %78 = vector.broadcast %cst_37 : f32 to vector<8x128xf32>
    %79 = arith.addf %77, %78 : vector<8x128xf32>
    %80 = vector.extract_strided_slice %63 {offsets = [0, 256], sizes = [8, 128], strides = [1, 1]} : vector<8x512xf32> to vector<8x128xf32>
    %81 = math.tanh %80 : vector<8x128xf32>
    %82 = vector.extract_strided_slice %63 {offsets = [0, 384], sizes = [8, 128], strides = [1, 1]} : vector<8x512xf32> to vector<8x128xf32>
    %cst_38 = arith.constant 5.000000e-01 : f32
    %83 = vector.broadcast %cst_38 : f32 to vector<8x128xf32>
    %84 = arith.mulf %83, %82 : vector<8x128xf32>
    %85 = math.tanh %84 : vector<8x128xf32>
    %cst_39 = arith.constant 5.000000e-01 : f32
    %86 = vector.broadcast %cst_39 : f32 to vector<8x128xf32>
    %87 = arith.mulf %86, %85 : vector<8x128xf32>
    %cst_40 = arith.constant 5.000000e-01 : f32
    %88 = vector.broadcast %cst_40 : f32 to vector<8x128xf32>
    %89 = arith.addf %87, %88 : vector<8x128xf32>
    %90 = arith.mulf %79, %47 : vector<8x128xf32>
    %91 = arith.mulf %71, %81 : vector<8x128xf32>
    %92 = arith.addf %90, %91 : vector<8x128xf32>
    %93 = math.tanh %92 : vector<8x128xf32>
    %94 = arith.mulf %89, %93 : vector<8x128xf32>
    %95 = arith.index_cast %55 : i32 to index
    %c0_41 = arith.constant 0 : index
    %96 = vector.load %arg12[%95, %c0_41] : memref<128x128xf32, #tpu.memory_space<vmem>>, vector<8x128xf32>
    tpu.vector_store %arg12[%95, %c0_41], %94 {strides = array<i32>} : memref<128x128xf32, #tpu.memory_space<vmem>>, vector<8x128xf32>,
    %97 = arith.index_cast %58 : i32 to index
    %c0_42 = arith.constant 0 : index
    %98 = vector.load %arg13[%97, %c0_42] : memref<128x128xf32, #tpu.memory_space<vmem>>, vector<8x128xf32>
    tpu.vector_store %arg13[%97, %c0_42], %94 {strides = array<i32>} : memref<128x128xf32, #tpu.memory_space<vmem>>, vector<8x128xf32>,
    %c2_i32 = arith.constant 2 : i32
    %c8_i32_43 = arith.constant 8 : i32
    %99 = arith.muli %c2_i32, %c8_i32_43 : i32
    %100 = tpu.assume_multiple %99, 8 : i32
    %c15_i32_44 = arith.constant 15 : i32
    %101 = arith.subi %c15_i32_44, %c2_i32 : i32
    %c8_i32_45 = arith.constant 8 : i32
    %102 = arith.muli %101, %c8_i32_45 : i32
    %103 = tpu.assume_multiple %102, 8 : i32
    %104 = arith.index_cast %100 : i32 to index
    %c0_46 = arith.constant 0 : index
    %105 = vector.load %arg11[%104, %c0_46] : memref<128x512xf32, #tpu.memory_space<vmem>>, vector<8x512xf32>
    %c0_47 = arith.constant 0 : index
    %c0_48 = arith.constant 0 : index
    %106 = vector.load %arg4[%c0_47, %c0_48] : memref<128x512xf32, #tpu.memory_space<vmem>>, vector<128x512xf32>
    %cst_49 = arith.constant dense<0.000000e+00> : vector<8x512xf32>
    %107 = tpu.matmul %94, %106, %cst_49 {dimension_numbers = #tpu.dot_dimension_numbers<[1], [0], [0], [1], [0, 0, 1, 1], [], []>} : vector<8x128xf32>, vector<128x512xf32>, vector<8x512xf32> -> vector<8x512xf32>
    %108 = arith.addf %105, %107 : vector<8x512xf32>
    %109 = vector.extract_strided_slice %108 {offsets = [0, 0], sizes = [8, 128], strides = [1, 1]} : vector<8x512xf32> to vector<8x128xf32>
    %cst_50 = arith.constant 5.000000e-01 : f32
    %110 = vector.broadcast %cst_50 : f32 to vector<8x128xf32>
    %111 = arith.mulf %110, %109 : vector<8x128xf32>
    %112 = math.tanh %111 : vector<8x128xf32>
    %cst_51 = arith.constant 5.000000e-01 : f32
    %113 = vector.broadcast %cst_51 : f32 to vector<8x128xf32>
    %114 = arith.mulf %113, %112 : vector<8x128xf32>
    %cst_52 = arith.constant 5.000000e-01 : f32
    %115 = vector.broadcast %cst_52 : f32 to vector<8x128xf32>
    %116 = arith.addf %114, %115 : vector<8x128xf32>
    %117 = vector.extract_strided_slice %108 {offsets = [0, 128], sizes = [8, 128], strides = [1, 1]} : vector<8x512xf32> to vector<8x128xf32>
    %cst_53 = arith.constant 5.000000e-01 : f32
    %118 = vector.broadcast %cst_53 : f32 to vector<8x128xf32>
    %119 = arith.mulf %118, %117 : vector<8x128xf32>
    %120 = math.tanh %119 : vector<8x128xf32>
    %cst_54 = arith.constant 5.000000e-01 : f32
    %121 = vector.broadcast %cst_54 : f32 to vector<8x128xf32>
    %122 = arith.mulf %121, %120 : vector<8x128xf32>
    %cst_55 = arith.constant 5.000000e-01 : f32
    %123 = vector.broadcast %cst_55 : f32 to vector<8x128xf32>
    %124 = arith.addf %122, %123 : vector<8x128xf32>
    %125 = vector.extract_strided_slice %108 {offsets = [0, 256], sizes = [8, 128], strides = [1, 1]} : vector<8x512xf32> to vector<8x128xf32>
    %126 = math.tanh %125 : vector<8x128xf32>
    %127 = vector.extract_strided_slice %108 {offsets = [0, 384], sizes = [8, 128], strides = [1, 1]} : vector<8x512xf32> to vector<8x128xf32>
    %cst_56 = arith.constant 5.000000e-01 : f32
    %128 = vector.broadcast %cst_56 : f32 to vector<8x128xf32>
    %129 = arith.mulf %128, %127 : vector<8x128xf32>
    %130 = math.tanh %129 : vector<8x128xf32>
    %cst_57 = arith.constant 5.000000e-01 : f32
    %131 = vector.broadcast %cst_57 : f32 to vector<8x128xf32>
    %132 = arith.mulf %131, %130 : vector<8x128xf32>
    %cst_58 = arith.constant 5.000000e-01 : f32
    %133 = vector.broadcast %cst_58 : f32 to vector<8x128xf32>
    %134 = arith.addf %132, %133 : vector<8x128xf32>
    %135 = arith.mulf %124, %92 : vector<8x128xf32>
    %136 = arith.mulf %116, %126 : vector<8x128xf32>
    %137 = arith.addf %135, %136 : vector<8x128xf32>
    %138 = math.tanh %137 : vector<8x128xf32>
    %139 = arith.mulf %134, %138 : vector<8x128xf32>
    %140 = arith.index_cast %100 : i32 to index
    %c0_59 = arith.constant 0 : index
    %141 = vector.load %arg12[%140, %c0_59] : memref<128x128xf32, #tpu.memory_space<vmem>>, vector<8x128xf32>
    tpu.vector_store %arg12[%140, %c0_59], %139 {strides = array<i32>} : memref<128x128xf32, #tpu.memory_space<vmem>>, vector<8x128xf32>,
    %142 = arith.index_cast %103 : i32 to index
    %c0_60 = arith.constant 0 : index
    %143 = vector.load %arg13[%142, %c0_60] : memref<128x128xf32, #tpu.memory_space<vmem>>, vector<8x128xf32>
    tpu.vector_store %arg13[%142, %c0_60], %139 {strides = array<i32>} : memref<128x128xf32, #tpu.memory_space<vmem>>, vector<8x128xf32>,
    %c3_i32 = arith.constant 3 : i32
    %c8_i32_61 = arith.constant 8 : i32
    %144 = arith.muli %c3_i32, %c8_i32_61 : i32
    %145 = tpu.assume_multiple %144, 8 : i32
    %c15_i32_62 = arith.constant 15 : i32
    %146 = arith.subi %c15_i32_62, %c3_i32 : i32
    %c8_i32_63 = arith.constant 8 : i32
    %147 = arith.muli %146, %c8_i32_63 : i32
    %148 = tpu.assume_multiple %147, 8 : i32
    %149 = arith.index_cast %145 : i32 to index
    %c0_64 = arith.constant 0 : index
    %150 = vector.load %arg11[%149, %c0_64] : memref<128x512xf32, #tpu.memory_space<vmem>>, vector<8x512xf32>
    %c0_65 = arith.constant 0 : index
    %c0_66 = arith.constant 0 : index
    %151 = vector.load %arg4[%c0_65, %c0_66] : memref<128x512xf32, #tpu.memory_space<vmem>>, vector<128x512xf32>
    %cst_67 = arith.constant dense<0.000000e+00> : vector<8x512xf32>
    %152 = tpu.matmul %139, %151, %cst_67 {dimension_numbers = #tpu.dot_dimension_numbers<[1], [0], [0], [1], [0, 0, 1, 1], [], []>} : vector<8x128xf32>, vector<128x512xf32>, vector<8x512xf32> -> vector<8x512xf32>
    %153 = arith.addf %150, %152 : vector<8x512xf32>
    %154 = vector.extract_strided_slice %153 {offsets = [0, 0], sizes = [8, 128], strides = [1, 1]} : vector<8x512xf32> to vector<8x128xf32>
    %cst_68 = arith.constant 5.000000e-01 : f32
    %155 = vector.broadcast %cst_68 : f32 to vector<8x128xf32>
    %156 = arith.mulf %155, %154 : vector<8x128xf32>
    %157 = math.tanh %156 : vector<8x128xf32>
    %cst_69 = arith.constant 5.000000e-01 : f32
    %158 = vector.broadcast %cst_69 : f32 to vector<8x128xf32>
    %159 = arith.mulf %158, %157 : vector<8x128xf32>
    %cst_70 = arith.constant 5.000000e-01 : f32
    %160 = vector.broadcast %cst_70 : f32 to vector<8x128xf32>
    %161 = arith.addf %159, %160 : vector<8x128xf32>
    %162 = vector.extract_strided_slice %153 {offsets = [0, 128], sizes = [8, 128], strides = [1, 1]} : vector<8x512xf32> to vector<8x128xf32>
    %cst_71 = arith.constant 5.000000e-01 : f32
    %163 = vector.broadcast %cst_71 : f32 to vector<8x128xf32>
    %164 = arith.mulf %163, %162 : vector<8x128xf32>
    %165 = math.tanh %164 : vector<8x128xf32>
    %cst_72 = arith.constant 5.000000e-01 : f32
    %166 = vector.broadcast %cst_72 : f32 to vector<8x128xf32>
    %167 = arith.mulf %166, %165 : vector<8x128xf32>
    %cst_73 = arith.constant 5.000000e-01 : f32
    %168 = vector.broadcast %cst_73 : f32 to vector<8x128xf32>
    %169 = arith.addf %167, %168 : vector<8x128xf32>
    %170 = vector.extract_strided_slice %153 {offsets = [0, 256], sizes = [8, 128], strides = [1, 1]} : vector<8x512xf32> to vector<8x128xf32>
    %171 = math.tanh %170 : vector<8x128xf32>
    %172 = vector.extract_strided_slice %153 {offsets = [0, 384], sizes = [8, 128], strides = [1, 1]} : vector<8x512xf32> to vector<8x128xf32>
    %cst_74 = arith.constant 5.000000e-01 : f32
    %173 = vector.broadcast %cst_74 : f32 to vector<8x128xf32>
    %174 = arith.mulf %173, %172 : vector<8x128xf32>
    %175 = math.tanh %174 : vector<8x128xf32>
    %cst_75 = arith.constant 5.000000e-01 : f32
    %176 = vector.broadcast %cst_75 : f32 to vector<8x128xf32>
    %177 = arith.mulf %176, %175 : vector<8x128xf32>
    %cst_76 = arith.constant 5.000000e-01 : f32
    %178 = vector.broadcast %cst_76 : f32 to vector<8x128xf32>
    %179 = arith.addf %177, %178 : vector<8x128xf32>
    %180 = arith.mulf %169, %137 : vector<8x128xf32>
    %181 = arith.mulf %161, %171 : vector<8x128xf32>
    %182 = arith.addf %180, %181 : vector<8x128xf32>
    %183 = math.tanh %182 : vector<8x128xf32>
    %184 = arith.mulf %179, %183 : vector<8x128xf32>
    %185 = arith.index_cast %145 : i32 to index
    %c0_77 = arith.constant 0 : index
    %186 = vector.load %arg12[%185, %c0_77] : memref<128x128xf32, #tpu.memory_space<vmem>>, vector<8x128xf32>
    tpu.vector_store %arg12[%185, %c0_77], %184 {strides = array<i32>} : memref<128x128xf32, #tpu.memory_space<vmem>>, vector<8x128xf32>,
    %187 = arith.index_cast %148 : i32 to index
    %c0_78 = arith.constant 0 : index
    %188 = vector.load %arg13[%187, %c0_78] : memref<128x128xf32, #tpu.memory_space<vmem>>, vector<8x128xf32>
    tpu.vector_store %arg13[%187, %c0_78], %184 {strides = array<i32>} : memref<128x128xf32, #tpu.memory_space<vmem>>, vector<8x128xf32>,
    %c4_i32 = arith.constant 4 : i32
    %c8_i32_79 = arith.constant 8 : i32
    %189 = arith.muli %c4_i32, %c8_i32_79 : i32
    %190 = tpu.assume_multiple %189, 8 : i32
    %c15_i32_80 = arith.constant 15 : i32
    %191 = arith.subi %c15_i32_80, %c4_i32 : i32
    %c8_i32_81 = arith.constant 8 : i32
    %192 = arith.muli %191, %c8_i32_81 : i32
    %193 = tpu.assume_multiple %192, 8 : i32
    %194 = arith.index_cast %190 : i32 to index
    %c0_82 = arith.constant 0 : index
    %195 = vector.load %arg11[%194, %c0_82] : memref<128x512xf32, #tpu.memory_space<vmem>>, vector<8x512xf32>
    %c0_83 = arith.constant 0 : index
    %c0_84 = arith.constant 0 : index
    %196 = vector.load %arg4[%c0_83, %c0_84] : memref<128x512xf32, #tpu.memory_space<vmem>>, vector<128x512xf32>
    %cst_85 = arith.constant dense<0.000000e+00> : vector<8x512xf32>
    %197 = tpu.matmul %184, %196, %cst_85 {dimension_numbers = #tpu.dot_dimension_numbers<[1], [0], [0], [1], [0, 0, 1, 1], [], []>} : vector<8x128xf32>, vector<128x512xf32>, vector<8x512xf32> -> vector<8x512xf32>
    %198 = arith.addf %195, %197 : vector<8x512xf32>
    %199 = vector.extract_strided_slice %198 {offsets = [0, 0], sizes = [8, 128], strides = [1, 1]} : vector<8x512xf32> to vector<8x128xf32>
    %cst_86 = arith.constant 5.000000e-01 : f32
    %200 = vector.broadcast %cst_86 : f32 to vector<8x128xf32>
    %201 = arith.mulf %200, %199 : vector<8x128xf32>
    %202 = math.tanh %201 : vector<8x128xf32>
    %cst_87 = arith.constant 5.000000e-01 : f32
    %203 = vector.broadcast %cst_87 : f32 to vector<8x128xf32>
    %204 = arith.mulf %203, %202 : vector<8x128xf32>
    %cst_88 = arith.constant 5.000000e-01 : f32
    %205 = vector.broadcast %cst_88 : f32 to vector<8x128xf32>
    %206 = arith.addf %204, %205 : vector<8x128xf32>
    %207 = vector.extract_strided_slice %198 {offsets = [0, 128], sizes = [8, 128], strides = [1, 1]} : vector<8x512xf32> to vector<8x128xf32>
    %cst_89 = arith.constant 5.000000e-01 : f32
    %208 = vector.broadcast %cst_89 : f32 to vector<8x128xf32>
    %209 = arith.mulf %208, %207 : vector<8x128xf32>
    %210 = math.tanh %209 : vector<8x128xf32>
    %cst_90 = arith.constant 5.000000e-01 : f32
    %211 = vector.broadcast %cst_90 : f32 to vector<8x128xf32>
    %212 = arith.mulf %211, %210 : vector<8x128xf32>
    %cst_91 = arith.constant 5.000000e-01 : f32
    %213 = vector.broadcast %cst_91 : f32 to vector<8x128xf32>
    %214 = arith.addf %212, %213 : vector<8x128xf32>
    %215 = vector.extract_strided_slice %198 {offsets = [0, 256], sizes = [8, 128], strides = [1, 1]} : vector<8x512xf32> to vector<8x128xf32>
    %216 = math.tanh %215 : vector<8x128xf32>
    %217 = vector.extract_strided_slice %198 {offsets = [0, 384], sizes = [8, 128], strides = [1, 1]} : vector<8x512xf32> to vector<8x128xf32>
    %cst_92 = arith.constant 5.000000e-01 : f32
    %218 = vector.broadcast %cst_92 : f32 to vector<8x128xf32>
    %219 = arith.mulf %218, %217 : vector<8x128xf32>
    %220 = math.tanh %219 : vector<8x128xf32>
    %cst_93 = arith.constant 5.000000e-01 : f32
    %221 = vector.broadcast %cst_93 : f32 to vector<8x128xf32>
    %222 = arith.mulf %221, %220 : vector<8x128xf32>
    %cst_94 = arith.constant 5.000000e-01 : f32
    %223 = vector.broadcast %cst_94 : f32 to vector<8x128xf32>
    %224 = arith.addf %222, %223 : vector<8x128xf32>
    %225 = arith.mulf %214, %182 : vector<8x128xf32>
    %226 = arith.mulf %206, %216 : vector<8x128xf32>
    %227 = arith.addf %225, %226 : vector<8x128xf32>
    %228 = math.tanh %227 : vector<8x128xf32>
    %229 = arith.mulf %224, %228 : vector<8x128xf32>
    %230 = arith.index_cast %190 : i32 to index
    %c0_95 = arith.constant 0 : index
    %231 = vector.load %arg12[%230, %c0_95] : memref<128x128xf32, #tpu.memory_space<vmem>>, vector<8x128xf32>
    tpu.vector_store %arg12[%230, %c0_95], %229 {strides = array<i32>} : memref<128x128xf32, #tpu.memory_space<vmem>>, vector<8x128xf32>,
    %232 = arith.index_cast %193 : i32 to index
    %c0_96 = arith.constant 0 : index
    %233 = vector.load %arg13[%232, %c0_96] : memref<128x128xf32, #tpu.memory_space<vmem>>, vector<8x128xf32>
    tpu.vector_store %arg13[%232, %c0_96], %229 {strides = array<i32>} : memref<128x128xf32, #tpu.memory_space<vmem>>, vector<8x128xf32>,
    %c5_i32 = arith.constant 5 : i32
    %c8_i32_97 = arith.constant 8 : i32
    %234 = arith.muli %c5_i32, %c8_i32_97 : i32
    %235 = tpu.assume_multiple %234, 8 : i32
    %c15_i32_98 = arith.constant 15 : i32
    %236 = arith.subi %c15_i32_98, %c5_i32 : i32
    %c8_i32_99 = arith.constant 8 : i32
    %237 = arith.muli %236, %c8_i32_99 : i32
    %238 = tpu.assume_multiple %237, 8 : i32
    %239 = arith.index_cast %235 : i32 to index
    %c0_100 = arith.constant 0 : index
    %240 = vector.load %arg11[%239, %c0_100] : memref<128x512xf32, #tpu.memory_space<vmem>>, vector<8x512xf32>
    %c0_101 = arith.constant 0 : index
    %c0_102 = arith.constant 0 : index
    %241 = vector.load %arg4[%c0_101, %c0_102] : memref<128x512xf32, #tpu.memory_space<vmem>>, vector<128x512xf32>
    %cst_103 = arith.constant dense<0.000000e+00> : vector<8x512xf32>
    %242 = tpu.matmul %229, %241, %cst_103 {dimension_numbers = #tpu.dot_dimension_numbers<[1], [0], [0], [1], [0, 0, 1, 1], [], []>} : vector<8x128xf32>, vector<128x512xf32>, vector<8x512xf32> -> vector<8x512xf32>
    %243 = arith.addf %240, %242 : vector<8x512xf32>
    %244 = vector.extract_strided_slice %243 {offsets = [0, 0], sizes = [8, 128], strides = [1, 1]} : vector<8x512xf32> to vector<8x128xf32>
    %cst_104 = arith.constant 5.000000e-01 : f32
    %245 = vector.broadcast %cst_104 : f32 to vector<8x128xf32>
    %246 = arith.mulf %245, %244 : vector<8x128xf32>
    %247 = math.tanh %246 : vector<8x128xf32>
    %cst_105 = arith.constant 5.000000e-01 : f32
    %248 = vector.broadcast %cst_105 : f32 to vector<8x128xf32>
    %249 = arith.mulf %248, %247 : vector<8x128xf32>
    %cst_106 = arith.constant 5.000000e-01 : f32
    %250 = vector.broadcast %cst_106 : f32 to vector<8x128xf32>
    %251 = arith.addf %249, %250 : vector<8x128xf32>
    %252 = vector.extract_strided_slice %243 {offsets = [0, 128], sizes = [8, 128], strides = [1, 1]} : vector<8x512xf32> to vector<8x128xf32>
    %cst_107 = arith.constant 5.000000e-01 : f32
    %253 = vector.broadcast %cst_107 : f32 to vector<8x128xf32>
    %254 = arith.mulf %253, %252 : vector<8x128xf32>
    %255 = math.tanh %254 : vector<8x128xf32>
    %cst_108 = arith.constant 5.000000e-01 : f32
    %256 = vector.broadcast %cst_108 : f32 to vector<8x128xf32>
    %257 = arith.mulf %256, %255 : vector<8x128xf32>
    %cst_109 = arith.constant 5.000000e-01 : f32
    %258 = vector.broadcast %cst_109 : f32 to vector<8x128xf32>
    %259 = arith.addf %257, %258 : vector<8x128xf32>
    %260 = vector.extract_strided_slice %243 {offsets = [0, 256], sizes = [8, 128], strides = [1, 1]} : vector<8x512xf32> to vector<8x128xf32>
    %261 = math.tanh %260 : vector<8x128xf32>
    %262 = vector.extract_strided_slice %243 {offsets = [0, 384], sizes = [8, 128], strides = [1, 1]} : vector<8x512xf32> to vector<8x128xf32>
    %cst_110 = arith.constant 5.000000e-01 : f32
    %263 = vector.broadcast %cst_110 : f32 to vector<8x128xf32>
    %264 = arith.mulf %263, %262 : vector<8x128xf32>
    %265 = math.tanh %264 : vector<8x128xf32>
    %cst_111 = arith.constant 5.000000e-01 : f32
    %266 = vector.broadcast %cst_111 : f32 to vector<8x128xf32>
    %267 = arith.mulf %266, %265 : vector<8x128xf32>
    %cst_112 = arith.constant 5.000000e-01 : f32
    %268 = vector.broadcast %cst_112 : f32 to vector<8x128xf32>
    %269 = arith.addf %267, %268 : vector<8x128xf32>
    %270 = arith.mulf %259, %227 : vector<8x128xf32>
    %271 = arith.mulf %251, %261 : vector<8x128xf32>
    %272 = arith.addf %270, %271 : vector<8x128xf32>
    %273 = math.tanh %272 : vector<8x128xf32>
    %274 = arith.mulf %269, %273 : vector<8x128xf32>
    %275 = arith.index_cast %235 : i32 to index
    %c0_113 = arith.constant 0 : index
    %276 = vector.load %arg12[%275, %c0_113] : memref<128x128xf32, #tpu.memory_space<vmem>>, vector<8x128xf32>
    tpu.vector_store %arg12[%275, %c0_113], %274 {strides = array<i32>} : memref<128x128xf32, #tpu.memory_space<vmem>>, vector<8x128xf32>,
    %277 = arith.index_cast %238 : i32 to index
    %c0_114 = arith.constant 0 : index
    %278 = vector.load %arg13[%277, %c0_114] : memref<128x128xf32, #tpu.memory_space<vmem>>, vector<8x128xf32>
    tpu.vector_store %arg13[%277, %c0_114], %274 {strides = array<i32>} : memref<128x128xf32, #tpu.memory_space<vmem>>, vector<8x128xf32>,
    %c6_i32 = arith.constant 6 : i32
    %c8_i32_115 = arith.constant 8 : i32
    %279 = arith.muli %c6_i32, %c8_i32_115 : i32
    %280 = tpu.assume_multiple %279, 8 : i32
    %c15_i32_116 = arith.constant 15 : i32
    %281 = arith.subi %c15_i32_116, %c6_i32 : i32
    %c8_i32_117 = arith.constant 8 : i32
    %282 = arith.muli %281, %c8_i32_117 : i32
    %283 = tpu.assume_multiple %282, 8 : i32
    %284 = arith.index_cast %280 : i32 to index
    %c0_118 = arith.constant 0 : index
    %285 = vector.load %arg11[%284, %c0_118] : memref<128x512xf32, #tpu.memory_space<vmem>>, vector<8x512xf32>
    %c0_119 = arith.constant 0 : index
    %c0_120 = arith.constant 0 : index
    %286 = vector.load %arg4[%c0_119, %c0_120] : memref<128x512xf32, #tpu.memory_space<vmem>>, vector<128x512xf32>
    %cst_121 = arith.constant dense<0.000000e+00> : vector<8x512xf32>
    %287 = tpu.matmul %274, %286, %cst_121 {dimension_numbers = #tpu.dot_dimension_numbers<[1], [0], [0], [1], [0, 0, 1, 1], [], []>} : vector<8x128xf32>, vector<128x512xf32>, vector<8x512xf32> -> vector<8x512xf32>
    %288 = arith.addf %285, %287 : vector<8x512xf32>
    %289 = vector.extract_strided_slice %288 {offsets = [0, 0], sizes = [8, 128], strides = [1, 1]} : vector<8x512xf32> to vector<8x128xf32>
    %cst_122 = arith.constant 5.000000e-01 : f32
    %290 = vector.broadcast %cst_122 : f32 to vector<8x128xf32>
    %291 = arith.mulf %290, %289 : vector<8x128xf32>
    %292 = math.tanh %291 : vector<8x128xf32>
    %cst_123 = arith.constant 5.000000e-01 : f32
    %293 = vector.broadcast %cst_123 : f32 to vector<8x128xf32>
    %294 = arith.mulf %293, %292 : vector<8x128xf32>
    %cst_124 = arith.constant 5.000000e-01 : f32
    %295 = vector.broadcast %cst_124 : f32 to vector<8x128xf32>
    %296 = arith.addf %294, %295 : vector<8x128xf32>
    %297 = vector.extract_strided_slice %288 {offsets = [0, 128], sizes = [8, 128], strides = [1, 1]} : vector<8x512xf32> to vector<8x128xf32>
    %cst_125 = arith.constant 5.000000e-01 : f32
    %298 = vector.broadcast %cst_125 : f32 to vector<8x128xf32>
    %299 = arith.mulf %298, %297 : vector<8x128xf32>
    %300 = math.tanh %299 : vector<8x128xf32>
    %cst_126 = arith.constant 5.000000e-01 : f32
    %301 = vector.broadcast %cst_126 : f32 to vector<8x128xf32>
    %302 = arith.mulf %301, %300 : vector<8x128xf32>
    %cst_127 = arith.constant 5.000000e-01 : f32
    %303 = vector.broadcast %cst_127 : f32 to vector<8x128xf32>
    %304 = arith.addf %302, %303 : vector<8x128xf32>
    %305 = vector.extract_strided_slice %288 {offsets = [0, 256], sizes = [8, 128], strides = [1, 1]} : vector<8x512xf32> to vector<8x128xf32>
    %306 = math.tanh %305 : vector<8x128xf32>
    %307 = vector.extract_strided_slice %288 {offsets = [0, 384], sizes = [8, 128], strides = [1, 1]} : vector<8x512xf32> to vector<8x128xf32>
    %cst_128 = arith.constant 5.000000e-01 : f32
    %308 = vector.broadcast %cst_128 : f32 to vector<8x128xf32>
    %309 = arith.mulf %308, %307 : vector<8x128xf32>
    %310 = math.tanh %309 : vector<8x128xf32>
    %cst_129 = arith.constant 5.000000e-01 : f32
    %311 = vector.broadcast %cst_129 : f32 to vector<8x128xf32>
    %312 = arith.mulf %311, %310 : vector<8x128xf32>
    %cst_130 = arith.constant 5.000000e-01 : f32
    %313 = vector.broadcast %cst_130 : f32 to vector<8x128xf32>
    %314 = arith.addf %312, %313 : vector<8x128xf32>
    %315 = arith.mulf %304, %272 : vector<8x128xf32>
    %316 = arith.mulf %296, %306 : vector<8x128xf32>
    %317 = arith.addf %315, %316 : vector<8x128xf32>
    %318 = math.tanh %317 : vector<8x128xf32>
    %319 = arith.mulf %314, %318 : vector<8x128xf32>
    %320 = arith.index_cast %280 : i32 to index
    %c0_131 = arith.constant 0 : index
    %321 = vector.load %arg12[%320, %c0_131] : memref<128x128xf32, #tpu.memory_space<vmem>>, vector<8x128xf32>
    tpu.vector_store %arg12[%320, %c0_131], %319 {strides = array<i32>} : memref<128x128xf32, #tpu.memory_space<vmem>>, vector<8x128xf32>,
    %322 = arith.index_cast %283 : i32 to index
    %c0_132 = arith.constant 0 : index
    %323 = vector.load %arg13[%322, %c0_132] : memref<128x128xf32, #tpu.memory_space<vmem>>, vector<8x128xf32>
    tpu.vector_store %arg13[%322, %c0_132], %319 {strides = array<i32>} : memref<128x128xf32, #tpu.memory_space<vmem>>, vector<8x128xf32>,
    %c7_i32 = arith.constant 7 : i32
    %c8_i32_133 = arith.constant 8 : i32
    %324 = arith.muli %c7_i32, %c8_i32_133 : i32
    %325 = tpu.assume_multiple %324, 8 : i32
    %c15_i32_134 = arith.constant 15 : i32
    %326 = arith.subi %c15_i32_134, %c7_i32 : i32
    %c8_i32_135 = arith.constant 8 : i32
    %327 = arith.muli %326, %c8_i32_135 : i32
    %328 = tpu.assume_multiple %327, 8 : i32
    %329 = arith.index_cast %325 : i32 to index
    %c0_136 = arith.constant 0 : index
    %330 = vector.load %arg11[%329, %c0_136] : memref<128x512xf32, #tpu.memory_space<vmem>>, vector<8x512xf32>
    %c0_137 = arith.constant 0 : index
    %c0_138 = arith.constant 0 : index
    %331 = vector.load %arg4[%c0_137, %c0_138] : memref<128x512xf32, #tpu.memory_space<vmem>>, vector<128x512xf32>
    %cst_139 = arith.constant dense<0.000000e+00> : vector<8x512xf32>
    %332 = tpu.matmul %319, %331, %cst_139 {dimension_numbers = #tpu.dot_dimension_numbers<[1], [0], [0], [1], [0, 0, 1, 1], [], []>} : vector<8x128xf32>, vector<128x512xf32>, vector<8x512xf32> -> vector<8x512xf32>
    %333 = arith.addf %330, %332 : vector<8x512xf32>
    %334 = vector.extract_strided_slice %333 {offsets = [0, 0], sizes = [8, 128], strides = [1, 1]} : vector<8x512xf32> to vector<8x128xf32>
    %cst_140 = arith.constant 5.000000e-01 : f32
    %335 = vector.broadcast %cst_140 : f32 to vector<8x128xf32>
    %336 = arith.mulf %335, %334 : vector<8x128xf32>
    %337 = math.tanh %336 : vector<8x128xf32>
    %cst_141 = arith.constant 5.000000e-01 : f32
    %338 = vector.broadcast %cst_141 : f32 to vector<8x128xf32>
    %339 = arith.mulf %338, %337 : vector<8x128xf32>
    %cst_142 = arith.constant 5.000000e-01 : f32
    %340 = vector.broadcast %cst_142 : f32 to vector<8x128xf32>
    %341 = arith.addf %339, %340 : vector<8x128xf32>
    %342 = vector.extract_strided_slice %333 {offsets = [0, 128], sizes = [8, 128], strides = [1, 1]} : vector<8x512xf32> to vector<8x128xf32>
    %cst_143 = arith.constant 5.000000e-01 : f32
    %343 = vector.broadcast %cst_143 : f32 to vector<8x128xf32>
    %344 = arith.mulf %343, %342 : vector<8x128xf32>
    %345 = math.tanh %344 : vector<8x128xf32>
    %cst_144 = arith.constant 5.000000e-01 : f32
    %346 = vector.broadcast %cst_144 : f32 to vector<8x128xf32>
    %347 = arith.mulf %346, %345 : vector<8x128xf32>
    %cst_145 = arith.constant 5.000000e-01 : f32
    %348 = vector.broadcast %cst_145 : f32 to vector<8x128xf32>
    %349 = arith.addf %347, %348 : vector<8x128xf32>
    %350 = vector.extract_strided_slice %333 {offsets = [0, 256], sizes = [8, 128], strides = [1, 1]} : vector<8x512xf32> to vector<8x128xf32>
    %351 = math.tanh %350 : vector<8x128xf32>
    %352 = vector.extract_strided_slice %333 {offsets = [0, 384], sizes = [8, 128], strides = [1, 1]} : vector<8x512xf32> to vector<8x128xf32>
    %cst_146 = arith.constant 5.000000e-01 : f32
    %353 = vector.broadcast %cst_146 : f32 to vector<8x128xf32>
    %354 = arith.mulf %353, %352 : vector<8x128xf32>
    %355 = math.tanh %354 : vector<8x128xf32>
    %cst_147 = arith.constant 5.000000e-01 : f32
    %356 = vector.broadcast %cst_147 : f32 to vector<8x128xf32>
    %357 = arith.mulf %356, %355 : vector<8x128xf32>
    %cst_148 = arith.constant 5.000000e-01 : f32
    %358 = vector.broadcast %cst_148 : f32 to vector<8x128xf32>
    %359 = arith.addf %357, %358 : vector<8x128xf32>
    %360 = arith.mulf %349, %317 : vector<8x128xf32>
    %361 = arith.mulf %341, %351 : vector<8x128xf32>
    %362 = arith.addf %360, %361 : vector<8x128xf32>
    %363 = math.tanh %362 : vector<8x128xf32>
    %364 = arith.mulf %359, %363 : vector<8x128xf32>
    %365 = arith.index_cast %325 : i32 to index
    %c0_149 = arith.constant 0 : index
    %366 = vector.load %arg12[%365, %c0_149] : memref<128x128xf32, #tpu.memory_space<vmem>>, vector<8x128xf32>
    tpu.vector_store %arg12[%365, %c0_149], %364 {strides = array<i32>} : memref<128x128xf32, #tpu.memory_space<vmem>>, vector<8x128xf32>,
    %367 = arith.index_cast %328 : i32 to index
    %c0_150 = arith.constant 0 : index
    %368 = vector.load %arg13[%367, %c0_150] : memref<128x128xf32, #tpu.memory_space<vmem>>, vector<8x128xf32>
    tpu.vector_store %arg13[%367, %c0_150], %364 {strides = array<i32>} : memref<128x128xf32, #tpu.memory_space<vmem>>, vector<8x128xf32>,
    %c8_i32_151 = arith.constant 8 : i32
    %c8_i32_152 = arith.constant 8 : i32
    %369 = arith.muli %c8_i32_151, %c8_i32_152 : i32
    %370 = tpu.assume_multiple %369, 8 : i32
    %c15_i32_153 = arith.constant 15 : i32
    %371 = arith.subi %c15_i32_153, %c8_i32_151 : i32
    %c8_i32_154 = arith.constant 8 : i32
    %372 = arith.muli %371, %c8_i32_154 : i32
    %373 = tpu.assume_multiple %372, 8 : i32
    %374 = arith.index_cast %370 : i32 to index
    %c0_155 = arith.constant 0 : index
    %375 = vector.load %arg11[%374, %c0_155] : memref<128x512xf32, #tpu.memory_space<vmem>>, vector<8x512xf32>
    %c0_156 = arith.constant 0 : index
    %c0_157 = arith.constant 0 : index
    %376 = vector.load %arg4[%c0_156, %c0_157] : memref<128x512xf32, #tpu.memory_space<vmem>>, vector<128x512xf32>
    %cst_158 = arith.constant dense<0.000000e+00> : vector<8x512xf32>
    %377 = tpu.matmul %364, %376, %cst_158 {dimension_numbers = #tpu.dot_dimension_numbers<[1], [0], [0], [1], [0, 0, 1, 1], [], []>} : vector<8x128xf32>, vector<128x512xf32>, vector<8x512xf32> -> vector<8x512xf32>
    %378 = arith.addf %375, %377 : vector<8x512xf32>
    %379 = vector.extract_strided_slice %378 {offsets = [0, 0], sizes = [8, 128], strides = [1, 1]} : vector<8x512xf32> to vector<8x128xf32>
    %cst_159 = arith.constant 5.000000e-01 : f32
    %380 = vector.broadcast %cst_159 : f32 to vector<8x128xf32>
    %381 = arith.mulf %380, %379 : vector<8x128xf32>
    %382 = math.tanh %381 : vector<8x128xf32>
    %cst_160 = arith.constant 5.000000e-01 : f32
    %383 = vector.broadcast %cst_160 : f32 to vector<8x128xf32>
    %384 = arith.mulf %383, %382 : vector<8x128xf32>
    %cst_161 = arith.constant 5.000000e-01 : f32
    %385 = vector.broadcast %cst_161 : f32 to vector<8x128xf32>
    %386 = arith.addf %384, %385 : vector<8x128xf32>
    %387 = vector.extract_strided_slice %378 {offsets = [0, 128], sizes = [8, 128], strides = [1, 1]} : vector<8x512xf32> to vector<8x128xf32>
    %cst_162 = arith.constant 5.000000e-01 : f32
    %388 = vector.broadcast %cst_162 : f32 to vector<8x128xf32>
    %389 = arith.mulf %388, %387 : vector<8x128xf32>
    %390 = math.tanh %389 : vector<8x128xf32>
    %cst_163 = arith.constant 5.000000e-01 : f32
    %391 = vector.broadcast %cst_163 : f32 to vector<8x128xf32>
    %392 = arith.mulf %391, %390 : vector<8x128xf32>
    %cst_164 = arith.constant 5.000000e-01 : f32
    %393 = vector.broadcast %cst_164 : f32 to vector<8x128xf32>
    %394 = arith.addf %392, %393 : vector<8x128xf32>
    %395 = vector.extract_strided_slice %378 {offsets = [0, 256], sizes = [8, 128], strides = [1, 1]} : vector<8x512xf32> to vector<8x128xf32>
    %396 = math.tanh %395 : vector<8x128xf32>
    %397 = vector.extract_strided_slice %378 {offsets = [0, 384], sizes = [8, 128], strides = [1, 1]} : vector<8x512xf32> to vector<8x128xf32>
    %cst_165 = arith.constant 5.000000e-01 : f32
    %398 = vector.broadcast %cst_165 : f32 to vector<8x128xf32>
    %399 = arith.mulf %398, %397 : vector<8x128xf32>
    %400 = math.tanh %399 : vector<8x128xf32>
    %cst_166 = arith.constant 5.000000e-01 : f32
    %401 = vector.broadcast %cst_166 : f32 to vector<8x128xf32>
    %402 = arith.mulf %401, %400 : vector<8x128xf32>
    %cst_167 = arith.constant 5.000000e-01 : f32
    %403 = vector.broadcast %cst_167 : f32 to vector<8x128xf32>
    %404 = arith.addf %402, %403 : vector<8x128xf32>
    %405 = arith.mulf %394, %362 : vector<8x128xf32>
    %406 = arith.mulf %386, %396 : vector<8x128xf32>
    %407 = arith.addf %405, %406 : vector<8x128xf32>
    %408 = math.tanh %407 : vector<8x128xf32>
    %409 = arith.mulf %404, %408 : vector<8x128xf32>
    %410 = arith.index_cast %370 : i32 to index
    %c0_168 = arith.constant 0 : index
    %411 = vector.load %arg12[%410, %c0_168] : memref<128x128xf32, #tpu.memory_space<vmem>>, vector<8x128xf32>
    tpu.vector_store %arg12[%410, %c0_168], %409 {strides = array<i32>} : memref<128x128xf32, #tpu.memory_space<vmem>>, vector<8x128xf32>,
    %412 = arith.index_cast %373 : i32 to index
    %c0_169 = arith.constant 0 : index
    %413 = vector.load %arg13[%412, %c0_169] : memref<128x128xf32, #tpu.memory_space<vmem>>, vector<8x128xf32>
    tpu.vector_store %arg13[%412, %c0_169], %409 {strides = array<i32>} : memref<128x128xf32, #tpu.memory_space<vmem>>, vector<8x128xf32>,
    %c9_i32 = arith.constant 9 : i32
    %c8_i32_170 = arith.constant 8 : i32
    %414 = arith.muli %c9_i32, %c8_i32_170 : i32
    %415 = tpu.assume_multiple %414, 8 : i32
    %c15_i32_171 = arith.constant 15 : i32
    %416 = arith.subi %c15_i32_171, %c9_i32 : i32
    %c8_i32_172 = arith.constant 8 : i32
    %417 = arith.muli %416, %c8_i32_172 : i32
    %418 = tpu.assume_multiple %417, 8 : i32
    %419 = arith.index_cast %415 : i32 to index
    %c0_173 = arith.constant 0 : index
    %420 = vector.load %arg11[%419, %c0_173] : memref<128x512xf32, #tpu.memory_space<vmem>>, vector<8x512xf32>
    %c0_174 = arith.constant 0 : index
    %c0_175 = arith.constant 0 : index
    %421 = vector.load %arg4[%c0_174, %c0_175] : memref<128x512xf32, #tpu.memory_space<vmem>>, vector<128x512xf32>
    %cst_176 = arith.constant dense<0.000000e+00> : vector<8x512xf32>
    %422 = tpu.matmul %409, %421, %cst_176 {dimension_numbers = #tpu.dot_dimension_numbers<[1], [0], [0], [1], [0, 0, 1, 1], [], []>} : vector<8x128xf32>, vector<128x512xf32>, vector<8x512xf32> -> vector<8x512xf32>
    %423 = arith.addf %420, %422 : vector<8x512xf32>
    %424 = vector.extract_strided_slice %423 {offsets = [0, 0], sizes = [8, 128], strides = [1, 1]} : vector<8x512xf32> to vector<8x128xf32>
    %cst_177 = arith.constant 5.000000e-01 : f32
    %425 = vector.broadcast %cst_177 : f32 to vector<8x128xf32>
    %426 = arith.mulf %425, %424 : vector<8x128xf32>
    %427 = math.tanh %426 : vector<8x128xf32>
    %cst_178 = arith.constant 5.000000e-01 : f32
    %428 = vector.broadcast %cst_178 : f32 to vector<8x128xf32>
    %429 = arith.mulf %428, %427 : vector<8x128xf32>
    %cst_179 = arith.constant 5.000000e-01 : f32
    %430 = vector.broadcast %cst_179 : f32 to vector<8x128xf32>
    %431 = arith.addf %429, %430 : vector<8x128xf32>
    %432 = vector.extract_strided_slice %423 {offsets = [0, 128], sizes = [8, 128], strides = [1, 1]} : vector<8x512xf32> to vector<8x128xf32>
    %cst_180 = arith.constant 5.000000e-01 : f32
    %433 = vector.broadcast %cst_180 : f32 to vector<8x128xf32>
    %434 = arith.mulf %433, %432 : vector<8x128xf32>
    %435 = math.tanh %434 : vector<8x128xf32>
    %cst_181 = arith.constant 5.000000e-01 : f32
    %436 = vector.broadcast %cst_181 : f32 to vector<8x128xf32>
    %437 = arith.mulf %436, %435 : vector<8x128xf32>
    %cst_182 = arith.constant 5.000000e-01 : f32
    %438 = vector.broadcast %cst_182 : f32 to vector<8x128xf32>
    %439 = arith.addf %437, %438 : vector<8x128xf32>
    %440 = vector.extract_strided_slice %423 {offsets = [0, 256], sizes = [8, 128], strides = [1, 1]} : vector<8x512xf32> to vector<8x128xf32>
    %441 = math.tanh %440 : vector<8x128xf32>
    %442 = vector.extract_strided_slice %423 {offsets = [0, 384], sizes = [8, 128], strides = [1, 1]} : vector<8x512xf32> to vector<8x128xf32>
    %cst_183 = arith.constant 5.000000e-01 : f32
    %443 = vector.broadcast %cst_183 : f32 to vector<8x128xf32>
    %444 = arith.mulf %443, %442 : vector<8x128xf32>
    %445 = math.tanh %444 : vector<8x128xf32>
    %cst_184 = arith.constant 5.000000e-01 : f32
    %446 = vector.broadcast %cst_184 : f32 to vector<8x128xf32>
    %447 = arith.mulf %446, %445 : vector<8x128xf32>
    %cst_185 = arith.constant 5.000000e-01 : f32
    %448 = vector.broadcast %cst_185 : f32 to vector<8x128xf32>
    %449 = arith.addf %447, %448 : vector<8x128xf32>
    %450 = arith.mulf %439, %407 : vector<8x128xf32>
    %451 = arith.mulf %431, %441 : vector<8x128xf32>
    %452 = arith.addf %450, %451 : vector<8x128xf32>
    %453 = math.tanh %452 : vector<8x128xf32>
    %454 = arith.mulf %449, %453 : vector<8x128xf32>
    %455 = arith.index_cast %415 : i32 to index
    %c0_186 = arith.constant 0 : index
    %456 = vector.load %arg12[%455, %c0_186] : memref<128x128xf32, #tpu.memory_space<vmem>>, vector<8x128xf32>
    tpu.vector_store %arg12[%455, %c0_186], %454 {strides = array<i32>} : memref<128x128xf32, #tpu.memory_space<vmem>>, vector<8x128xf32>,
    %457 = arith.index_cast %418 : i32 to index
    %c0_187 = arith.constant 0 : index
    %458 = vector.load %arg13[%457, %c0_187] : memref<128x128xf32, #tpu.memory_space<vmem>>, vector<8x128xf32>
    tpu.vector_store %arg13[%457, %c0_187], %454 {strides = array<i32>} : memref<128x128xf32, #tpu.memory_space<vmem>>, vector<8x128xf32>,
    %c10_i32 = arith.constant 10 : i32
    %c8_i32_188 = arith.constant 8 : i32
    %459 = arith.muli %c10_i32, %c8_i32_188 : i32
    %460 = tpu.assume_multiple %459, 8 : i32
    %c15_i32_189 = arith.constant 15 : i32
    %461 = arith.subi %c15_i32_189, %c10_i32 : i32
    %c8_i32_190 = arith.constant 8 : i32
    %462 = arith.muli %461, %c8_i32_190 : i32
    %463 = tpu.assume_multiple %462, 8 : i32
    %464 = arith.index_cast %460 : i32 to index
    %c0_191 = arith.constant 0 : index
    %465 = vector.load %arg11[%464, %c0_191] : memref<128x512xf32, #tpu.memory_space<vmem>>, vector<8x512xf32>
    %c0_192 = arith.constant 0 : index
    %c0_193 = arith.constant 0 : index
    %466 = vector.load %arg4[%c0_192, %c0_193] : memref<128x512xf32, #tpu.memory_space<vmem>>, vector<128x512xf32>
    %cst_194 = arith.constant dense<0.000000e+00> : vector<8x512xf32>
    %467 = tpu.matmul %454, %466, %cst_194 {dimension_numbers = #tpu.dot_dimension_numbers<[1], [0], [0], [1], [0, 0, 1, 1], [], []>} : vector<8x128xf32>, vector<128x512xf32>, vector<8x512xf32> -> vector<8x512xf32>
    %468 = arith.addf %465, %467 : vector<8x512xf32>
    %469 = vector.extract_strided_slice %468 {offsets = [0, 0], sizes = [8, 128], strides = [1, 1]} : vector<8x512xf32> to vector<8x128xf32>
    %cst_195 = arith.constant 5.000000e-01 : f32
    %470 = vector.broadcast %cst_195 : f32 to vector<8x128xf32>
    %471 = arith.mulf %470, %469 : vector<8x128xf32>
    %472 = math.tanh %471 : vector<8x128xf32>
    %cst_196 = arith.constant 5.000000e-01 : f32
    %473 = vector.broadcast %cst_196 : f32 to vector<8x128xf32>
    %474 = arith.mulf %473, %472 : vector<8x128xf32>
    %cst_197 = arith.constant 5.000000e-01 : f32
    %475 = vector.broadcast %cst_197 : f32 to vector<8x128xf32>
    %476 = arith.addf %474, %475 : vector<8x128xf32>
    %477 = vector.extract_strided_slice %468 {offsets = [0, 128], sizes = [8, 128], strides = [1, 1]} : vector<8x512xf32> to vector<8x128xf32>
    %cst_198 = arith.constant 5.000000e-01 : f32
    %478 = vector.broadcast %cst_198 : f32 to vector<8x128xf32>
    %479 = arith.mulf %478, %477 : vector<8x128xf32>
    %480 = math.tanh %479 : vector<8x128xf32>
    %cst_199 = arith.constant 5.000000e-01 : f32
    %481 = vector.broadcast %cst_199 : f32 to vector<8x128xf32>
    %482 = arith.mulf %481, %480 : vector<8x128xf32>
    %cst_200 = arith.constant 5.000000e-01 : f32
    %483 = vector.broadcast %cst_200 : f32 to vector<8x128xf32>
    %484 = arith.addf %482, %483 : vector<8x128xf32>
    %485 = vector.extract_strided_slice %468 {offsets = [0, 256], sizes = [8, 128], strides = [1, 1]} : vector<8x512xf32> to vector<8x128xf32>
    %486 = math.tanh %485 : vector<8x128xf32>
    %487 = vector.extract_strided_slice %468 {offsets = [0, 384], sizes = [8, 128], strides = [1, 1]} : vector<8x512xf32> to vector<8x128xf32>
    %cst_201 = arith.constant 5.000000e-01 : f32
    %488 = vector.broadcast %cst_201 : f32 to vector<8x128xf32>
    %489 = arith.mulf %488, %487 : vector<8x128xf32>
    %490 = math.tanh %489 : vector<8x128xf32>
    %cst_202 = arith.constant 5.000000e-01 : f32
    %491 = vector.broadcast %cst_202 : f32 to vector<8x128xf32>
    %492 = arith.mulf %491, %490 : vector<8x128xf32>
    %cst_203 = arith.constant 5.000000e-01 : f32
    %493 = vector.broadcast %cst_203 : f32 to vector<8x128xf32>
    %494 = arith.addf %492, %493 : vector<8x128xf32>
    %495 = arith.mulf %484, %452 : vector<8x128xf32>
    %496 = arith.mulf %476, %486 : vector<8x128xf32>
    %497 = arith.addf %495, %496 : vector<8x128xf32>
    %498 = math.tanh %497 : vector<8x128xf32>
    %499 = arith.mulf %494, %498 : vector<8x128xf32>
    %500 = arith.index_cast %460 : i32 to index
    %c0_204 = arith.constant 0 : index
    %501 = vector.load %arg12[%500, %c0_204] : memref<128x128xf32, #tpu.memory_space<vmem>>, vector<8x128xf32>
    tpu.vector_store %arg12[%500, %c0_204], %499 {strides = array<i32>} : memref<128x128xf32, #tpu.memory_space<vmem>>, vector<8x128xf32>,
    %502 = arith.index_cast %463 : i32 to index
    %c0_205 = arith.constant 0 : index
    %503 = vector.load %arg13[%502, %c0_205] : memref<128x128xf32, #tpu.memory_space<vmem>>, vector<8x128xf32>
    tpu.vector_store %arg13[%502, %c0_205], %499 {strides = array<i32>} : memref<128x128xf32, #tpu.memory_space<vmem>>, vector<8x128xf32>,
    %c11_i32 = arith.constant 11 : i32
    %c8_i32_206 = arith.constant 8 : i32
    %504 = arith.muli %c11_i32, %c8_i32_206 : i32
    %505 = tpu.assume_multiple %504, 8 : i32
    %c15_i32_207 = arith.constant 15 : i32
    %506 = arith.subi %c15_i32_207, %c11_i32 : i32
    %c8_i32_208 = arith.constant 8 : i32
    %507 = arith.muli %506, %c8_i32_208 : i32
    %508 = tpu.assume_multiple %507, 8 : i32
    %509 = arith.index_cast %505 : i32 to index
    %c0_209 = arith.constant 0 : index
    %510 = vector.load %arg11[%509, %c0_209] : memref<128x512xf32, #tpu.memory_space<vmem>>, vector<8x512xf32>
    %c0_210 = arith.constant 0 : index
    %c0_211 = arith.constant 0 : index
    %511 = vector.load %arg4[%c0_210, %c0_211] : memref<128x512xf32, #tpu.memory_space<vmem>>, vector<128x512xf32>
    %cst_212 = arith.constant dense<0.000000e+00> : vector<8x512xf32>
    %512 = tpu.matmul %499, %511, %cst_212 {dimension_numbers = #tpu.dot_dimension_numbers<[1], [0], [0], [1], [0, 0, 1, 1], [], []>} : vector<8x128xf32>, vector<128x512xf32>, vector<8x512xf32> -> vector<8x512xf32>
    %513 = arith.addf %510, %512 : vector<8x512xf32>
    %514 = vector.extract_strided_slice %513 {offsets = [0, 0], sizes = [8, 128], strides = [1, 1]} : vector<8x512xf32> to vector<8x128xf32>
    %cst_213 = arith.constant 5.000000e-01 : f32
    %515 = vector.broadcast %cst_213 : f32 to vector<8x128xf32>
    %516 = arith.mulf %515, %514 : vector<8x128xf32>
    %517 = math.tanh %516 : vector<8x128xf32>
    %cst_214 = arith.constant 5.000000e-01 : f32
    %518 = vector.broadcast %cst_214 : f32 to vector<8x128xf32>
    %519 = arith.mulf %518, %517 : vector<8x128xf32>
    %cst_215 = arith.constant 5.000000e-01 : f32
    %520 = vector.broadcast %cst_215 : f32 to vector<8x128xf32>
    %521 = arith.addf %519, %520 : vector<8x128xf32>
    %522 = vector.extract_strided_slice %513 {offsets = [0, 128], sizes = [8, 128], strides = [1, 1]} : vector<8x512xf32> to vector<8x128xf32>
    %cst_216 = arith.constant 5.000000e-01 : f32
    %523 = vector.broadcast %cst_216 : f32 to vector<8x128xf32>
    %524 = arith.mulf %523, %522 : vector<8x128xf32>
    %525 = math.tanh %524 : vector<8x128xf32>
    %cst_217 = arith.constant 5.000000e-01 : f32
    %526 = vector.broadcast %cst_217 : f32 to vector<8x128xf32>
    %527 = arith.mulf %526, %525 : vector<8x128xf32>
    %cst_218 = arith.constant 5.000000e-01 : f32
    %528 = vector.broadcast %cst_218 : f32 to vector<8x128xf32>
    %529 = arith.addf %527, %528 : vector<8x128xf32>
    %530 = vector.extract_strided_slice %513 {offsets = [0, 256], sizes = [8, 128], strides = [1, 1]} : vector<8x512xf32> to vector<8x128xf32>
    %531 = math.tanh %530 : vector<8x128xf32>
    %532 = vector.extract_strided_slice %513 {offsets = [0, 384], sizes = [8, 128], strides = [1, 1]} : vector<8x512xf32> to vector<8x128xf32>
    %cst_219 = arith.constant 5.000000e-01 : f32
    %533 = vector.broadcast %cst_219 : f32 to vector<8x128xf32>
    %534 = arith.mulf %533, %532 : vector<8x128xf32>
    %535 = math.tanh %534 : vector<8x128xf32>
    %cst_220 = arith.constant 5.000000e-01 : f32
    %536 = vector.broadcast %cst_220 : f32 to vector<8x128xf32>
    %537 = arith.mulf %536, %535 : vector<8x128xf32>
    %cst_221 = arith.constant 5.000000e-01 : f32
    %538 = vector.broadcast %cst_221 : f32 to vector<8x128xf32>
    %539 = arith.addf %537, %538 : vector<8x128xf32>
    %540 = arith.mulf %529, %497 : vector<8x128xf32>
    %541 = arith.mulf %521, %531 : vector<8x128xf32>
    %542 = arith.addf %540, %541 : vector<8x128xf32>
    %543 = math.tanh %542 : vector<8x128xf32>
    %544 = arith.mulf %539, %543 : vector<8x128xf32>
    %545 = arith.index_cast %505 : i32 to index
    %c0_222 = arith.constant 0 : index
    %546 = vector.load %arg12[%545, %c0_222] : memref<128x128xf32, #tpu.memory_space<vmem>>, vector<8x128xf32>
    tpu.vector_store %arg12[%545, %c0_222], %544 {strides = array<i32>} : memref<128x128xf32, #tpu.memory_space<vmem>>, vector<8x128xf32>,
    %547 = arith.index_cast %508 : i32 to index
    %c0_223 = arith.constant 0 : index
    %548 = vector.load %arg13[%547, %c0_223] : memref<128x128xf32, #tpu.memory_space<vmem>>, vector<8x128xf32>
    tpu.vector_store %arg13[%547, %c0_223], %544 {strides = array<i32>} : memref<128x128xf32, #tpu.memory_space<vmem>>, vector<8x128xf32>,
    %c12_i32 = arith.constant 12 : i32
    %c8_i32_224 = arith.constant 8 : i32
    %549 = arith.muli %c12_i32, %c8_i32_224 : i32
    %550 = tpu.assume_multiple %549, 8 : i32
    %c15_i32_225 = arith.constant 15 : i32
    %551 = arith.subi %c15_i32_225, %c12_i32 : i32
    %c8_i32_226 = arith.constant 8 : i32
    %552 = arith.muli %551, %c8_i32_226 : i32
    %553 = tpu.assume_multiple %552, 8 : i32
    %554 = arith.index_cast %550 : i32 to index
    %c0_227 = arith.constant 0 : index
    %555 = vector.load %arg11[%554, %c0_227] : memref<128x512xf32, #tpu.memory_space<vmem>>, vector<8x512xf32>
    %c0_228 = arith.constant 0 : index
    %c0_229 = arith.constant 0 : index
    %556 = vector.load %arg4[%c0_228, %c0_229] : memref<128x512xf32, #tpu.memory_space<vmem>>, vector<128x512xf32>
    %cst_230 = arith.constant dense<0.000000e+00> : vector<8x512xf32>
    %557 = tpu.matmul %544, %556, %cst_230 {dimension_numbers = #tpu.dot_dimension_numbers<[1], [0], [0], [1], [0, 0, 1, 1], [], []>} : vector<8x128xf32>, vector<128x512xf32>, vector<8x512xf32> -> vector<8x512xf32>
    %558 = arith.addf %555, %557 : vector<8x512xf32>
    %559 = vector.extract_strided_slice %558 {offsets = [0, 0], sizes = [8, 128], strides = [1, 1]} : vector<8x512xf32> to vector<8x128xf32>
    %cst_231 = arith.constant 5.000000e-01 : f32
    %560 = vector.broadcast %cst_231 : f32 to vector<8x128xf32>
    %561 = arith.mulf %560, %559 : vector<8x128xf32>
    %562 = math.tanh %561 : vector<8x128xf32>
    %cst_232 = arith.constant 5.000000e-01 : f32
    %563 = vector.broadcast %cst_232 : f32 to vector<8x128xf32>
    %564 = arith.mulf %563, %562 : vector<8x128xf32>
    %cst_233 = arith.constant 5.000000e-01 : f32
    %565 = vector.broadcast %cst_233 : f32 to vector<8x128xf32>
    %566 = arith.addf %564, %565 : vector<8x128xf32>
    %567 = vector.extract_strided_slice %558 {offsets = [0, 128], sizes = [8, 128], strides = [1, 1]} : vector<8x512xf32> to vector<8x128xf32>
    %cst_234 = arith.constant 5.000000e-01 : f32
    %568 = vector.broadcast %cst_234 : f32 to vector<8x128xf32>
    %569 = arith.mulf %568, %567 : vector<8x128xf32>
    %570 = math.tanh %569 : vector<8x128xf32>
    %cst_235 = arith.constant 5.000000e-01 : f32
    %571 = vector.broadcast %cst_235 : f32 to vector<8x128xf32>
    %572 = arith.mulf %571, %570 : vector<8x128xf32>
    %cst_236 = arith.constant 5.000000e-01 : f32
    %573 = vector.broadcast %cst_236 : f32 to vector<8x128xf32>
    %574 = arith.addf %572, %573 : vector<8x128xf32>
    %575 = vector.extract_strided_slice %558 {offsets = [0, 256], sizes = [8, 128], strides = [1, 1]} : vector<8x512xf32> to vector<8x128xf32>
    %576 = math.tanh %575 : vector<8x128xf32>
    %577 = vector.extract_strided_slice %558 {offsets = [0, 384], sizes = [8, 128], strides = [1, 1]} : vector<8x512xf32> to vector<8x128xf32>
    %cst_237 = arith.constant 5.000000e-01 : f32
    %578 = vector.broadcast %cst_237 : f32 to vector<8x128xf32>
    %579 = arith.mulf %578, %577 : vector<8x128xf32>
    %580 = math.tanh %579 : vector<8x128xf32>
    %cst_238 = arith.constant 5.000000e-01 : f32
    %581 = vector.broadcast %cst_238 : f32 to vector<8x128xf32>
    %582 = arith.mulf %581, %580 : vector<8x128xf32>
    %cst_239 = arith.constant 5.000000e-01 : f32
    %583 = vector.broadcast %cst_239 : f32 to vector<8x128xf32>
    %584 = arith.addf %582, %583 : vector<8x128xf32>
    %585 = arith.mulf %574, %542 : vector<8x128xf32>
    %586 = arith.mulf %566, %576 : vector<8x128xf32>
    %587 = arith.addf %585, %586 : vector<8x128xf32>
    %588 = math.tanh %587 : vector<8x128xf32>
    %589 = arith.mulf %584, %588 : vector<8x128xf32>
    %590 = arith.index_cast %550 : i32 to index
    %c0_240 = arith.constant 0 : index
    %591 = vector.load %arg12[%590, %c0_240] : memref<128x128xf32, #tpu.memory_space<vmem>>, vector<8x128xf32>
    tpu.vector_store %arg12[%590, %c0_240], %589 {strides = array<i32>} : memref<128x128xf32, #tpu.memory_space<vmem>>, vector<8x128xf32>,
    %592 = arith.index_cast %553 : i32 to index
    %c0_241 = arith.constant 0 : index
    %593 = vector.load %arg13[%592, %c0_241] : memref<128x128xf32, #tpu.memory_space<vmem>>, vector<8x128xf32>
    tpu.vector_store %arg13[%592, %c0_241], %589 {strides = array<i32>} : memref<128x128xf32, #tpu.memory_space<vmem>>, vector<8x128xf32>,
    %c13_i32 = arith.constant 13 : i32
    %c8_i32_242 = arith.constant 8 : i32
    %594 = arith.muli %c13_i32, %c8_i32_242 : i32
    %595 = tpu.assume_multiple %594, 8 : i32
    %c15_i32_243 = arith.constant 15 : i32
    %596 = arith.subi %c15_i32_243, %c13_i32 : i32
    %c8_i32_244 = arith.constant 8 : i32
    %597 = arith.muli %596, %c8_i32_244 : i32
    %598 = tpu.assume_multiple %597, 8 : i32
    %599 = arith.index_cast %595 : i32 to index
    %c0_245 = arith.constant 0 : index
    %600 = vector.load %arg11[%599, %c0_245] : memref<128x512xf32, #tpu.memory_space<vmem>>, vector<8x512xf32>
    %c0_246 = arith.constant 0 : index
    %c0_247 = arith.constant 0 : index
    %601 = vector.load %arg4[%c0_246, %c0_247] : memref<128x512xf32, #tpu.memory_space<vmem>>, vector<128x512xf32>
    %cst_248 = arith.constant dense<0.000000e+00> : vector<8x512xf32>
    %602 = tpu.matmul %589, %601, %cst_248 {dimension_numbers = #tpu.dot_dimension_numbers<[1], [0], [0], [1], [0, 0, 1, 1], [], []>} : vector<8x128xf32>, vector<128x512xf32>, vector<8x512xf32> -> vector<8x512xf32>
    %603 = arith.addf %600, %602 : vector<8x512xf32>
    %604 = vector.extract_strided_slice %603 {offsets = [0, 0], sizes = [8, 128], strides = [1, 1]} : vector<8x512xf32> to vector<8x128xf32>
    %cst_249 = arith.constant 5.000000e-01 : f32
    %605 = vector.broadcast %cst_249 : f32 to vector<8x128xf32>
    %606 = arith.mulf %605, %604 : vector<8x128xf32>
    %607 = math.tanh %606 : vector<8x128xf32>
    %cst_250 = arith.constant 5.000000e-01 : f32
    %608 = vector.broadcast %cst_250 : f32 to vector<8x128xf32>
    %609 = arith.mulf %608, %607 : vector<8x128xf32>
    %cst_251 = arith.constant 5.000000e-01 : f32
    %610 = vector.broadcast %cst_251 : f32 to vector<8x128xf32>
    %611 = arith.addf %609, %610 : vector<8x128xf32>
    %612 = vector.extract_strided_slice %603 {offsets = [0, 128], sizes = [8, 128], strides = [1, 1]} : vector<8x512xf32> to vector<8x128xf32>
    %cst_252 = arith.constant 5.000000e-01 : f32
    %613 = vector.broadcast %cst_252 : f32 to vector<8x128xf32>
    %614 = arith.mulf %613, %612 : vector<8x128xf32>
    %615 = math.tanh %614 : vector<8x128xf32>
    %cst_253 = arith.constant 5.000000e-01 : f32
    %616 = vector.broadcast %cst_253 : f32 to vector<8x128xf32>
    %617 = arith.mulf %616, %615 : vector<8x128xf32>
    %cst_254 = arith.constant 5.000000e-01 : f32
    %618 = vector.broadcast %cst_254 : f32 to vector<8x128xf32>
    %619 = arith.addf %617, %618 : vector<8x128xf32>
    %620 = vector.extract_strided_slice %603 {offsets = [0, 256], sizes = [8, 128], strides = [1, 1]} : vector<8x512xf32> to vector<8x128xf32>
    %621 = math.tanh %620 : vector<8x128xf32>
    %622 = vector.extract_strided_slice %603 {offsets = [0, 384], sizes = [8, 128], strides = [1, 1]} : vector<8x512xf32> to vector<8x128xf32>
    %cst_255 = arith.constant 5.000000e-01 : f32
    %623 = vector.broadcast %cst_255 : f32 to vector<8x128xf32>
    %624 = arith.mulf %623, %622 : vector<8x128xf32>
    %625 = math.tanh %624 : vector<8x128xf32>
    %cst_256 = arith.constant 5.000000e-01 : f32
    %626 = vector.broadcast %cst_256 : f32 to vector<8x128xf32>
    %627 = arith.mulf %626, %625 : vector<8x128xf32>
    %cst_257 = arith.constant 5.000000e-01 : f32
    %628 = vector.broadcast %cst_257 : f32 to vector<8x128xf32>
    %629 = arith.addf %627, %628 : vector<8x128xf32>
    %630 = arith.mulf %619, %587 : vector<8x128xf32>
    %631 = arith.mulf %611, %621 : vector<8x128xf32>
    %632 = arith.addf %630, %631 : vector<8x128xf32>
    %633 = math.tanh %632 : vector<8x128xf32>
    %634 = arith.mulf %629, %633 : vector<8x128xf32>
    %635 = arith.index_cast %595 : i32 to index
    %c0_258 = arith.constant 0 : index
    %636 = vector.load %arg12[%635, %c0_258] : memref<128x128xf32, #tpu.memory_space<vmem>>, vector<8x128xf32>
    tpu.vector_store %arg12[%635, %c0_258], %634 {strides = array<i32>} : memref<128x128xf32, #tpu.memory_space<vmem>>, vector<8x128xf32>,
    %637 = arith.index_cast %598 : i32 to index
    %c0_259 = arith.constant 0 : index
    %638 = vector.load %arg13[%637, %c0_259] : memref<128x128xf32, #tpu.memory_space<vmem>>, vector<8x128xf32>
    tpu.vector_store %arg13[%637, %c0_259], %634 {strides = array<i32>} : memref<128x128xf32, #tpu.memory_space<vmem>>, vector<8x128xf32>,
    %c14_i32 = arith.constant 14 : i32
    %c8_i32_260 = arith.constant 8 : i32
    %639 = arith.muli %c14_i32, %c8_i32_260 : i32
    %640 = tpu.assume_multiple %639, 8 : i32
    %c15_i32_261 = arith.constant 15 : i32
    %641 = arith.subi %c15_i32_261, %c14_i32 : i32
    %c8_i32_262 = arith.constant 8 : i32
    %642 = arith.muli %641, %c8_i32_262 : i32
    %643 = tpu.assume_multiple %642, 8 : i32
    %644 = arith.index_cast %640 : i32 to index
    %c0_263 = arith.constant 0 : index
    %645 = vector.load %arg11[%644, %c0_263] : memref<128x512xf32, #tpu.memory_space<vmem>>, vector<8x512xf32>
    %c0_264 = arith.constant 0 : index
    %c0_265 = arith.constant 0 : index
    %646 = vector.load %arg4[%c0_264, %c0_265] : memref<128x512xf32, #tpu.memory_space<vmem>>, vector<128x512xf32>
    %cst_266 = arith.constant dense<0.000000e+00> : vector<8x512xf32>
    %647 = tpu.matmul %634, %646, %cst_266 {dimension_numbers = #tpu.dot_dimension_numbers<[1], [0], [0], [1], [0, 0, 1, 1], [], []>} : vector<8x128xf32>, vector<128x512xf32>, vector<8x512xf32> -> vector<8x512xf32>
    %648 = arith.addf %645, %647 : vector<8x512xf32>
    %649 = vector.extract_strided_slice %648 {offsets = [0, 0], sizes = [8, 128], strides = [1, 1]} : vector<8x512xf32> to vector<8x128xf32>
    %cst_267 = arith.constant 5.000000e-01 : f32
    %650 = vector.broadcast %cst_267 : f32 to vector<8x128xf32>
    %651 = arith.mulf %650, %649 : vector<8x128xf32>
    %652 = math.tanh %651 : vector<8x128xf32>
    %cst_268 = arith.constant 5.000000e-01 : f32
    %653 = vector.broadcast %cst_268 : f32 to vector<8x128xf32>
    %654 = arith.mulf %653, %652 : vector<8x128xf32>
    %cst_269 = arith.constant 5.000000e-01 : f32
    %655 = vector.broadcast %cst_269 : f32 to vector<8x128xf32>
    %656 = arith.addf %654, %655 : vector<8x128xf32>
    %657 = vector.extract_strided_slice %648 {offsets = [0, 128], sizes = [8, 128], strides = [1, 1]} : vector<8x512xf32> to vector<8x128xf32>
    %cst_270 = arith.constant 5.000000e-01 : f32
    %658 = vector.broadcast %cst_270 : f32 to vector<8x128xf32>
    %659 = arith.mulf %658, %657 : vector<8x128xf32>
    %660 = math.tanh %659 : vector<8x128xf32>
    %cst_271 = arith.constant 5.000000e-01 : f32
    %661 = vector.broadcast %cst_271 : f32 to vector<8x128xf32>
    %662 = arith.mulf %661, %660 : vector<8x128xf32>
    %cst_272 = arith.constant 5.000000e-01 : f32
    %663 = vector.broadcast %cst_272 : f32 to vector<8x128xf32>
    %664 = arith.addf %662, %663 : vector<8x128xf32>
    %665 = vector.extract_strided_slice %648 {offsets = [0, 256], sizes = [8, 128], strides = [1, 1]} : vector<8x512xf32> to vector<8x128xf32>
    %666 = math.tanh %665 : vector<8x128xf32>
    %667 = vector.extract_strided_slice %648 {offsets = [0, 384], sizes = [8, 128], strides = [1, 1]} : vector<8x512xf32> to vector<8x128xf32>
    %cst_273 = arith.constant 5.000000e-01 : f32
    %668 = vector.broadcast %cst_273 : f32 to vector<8x128xf32>
    %669 = arith.mulf %668, %667 : vector<8x128xf32>
    %670 = math.tanh %669 : vector<8x128xf32>
    %cst_274 = arith.constant 5.000000e-01 : f32
    %671 = vector.broadcast %cst_274 : f32 to vector<8x128xf32>
    %672 = arith.mulf %671, %670 : vector<8x128xf32>
    %cst_275 = arith.constant 5.000000e-01 : f32
    %673 = vector.broadcast %cst_275 : f32 to vector<8x128xf32>
    %674 = arith.addf %672, %673 : vector<8x128xf32>
    %675 = arith.mulf %664, %632 : vector<8x128xf32>
    %676 = arith.mulf %656, %666 : vector<8x128xf32>
    %677 = arith.addf %675, %676 : vector<8x128xf32>
    %678 = math.tanh %677 : vector<8x128xf32>
    %679 = arith.mulf %674, %678 : vector<8x128xf32>
    %680 = arith.index_cast %640 : i32 to index
    %c0_276 = arith.constant 0 : index
    %681 = vector.load %arg12[%680, %c0_276] : memref<128x128xf32, #tpu.memory_space<vmem>>, vector<8x128xf32>
    tpu.vector_store %arg12[%680, %c0_276], %679 {strides = array<i32>} : memref<128x128xf32, #tpu.memory_space<vmem>>, vector<8x128xf32>,
    %682 = arith.index_cast %643 : i32 to index
    %c0_277 = arith.constant 0 : index
    %683 = vector.load %arg13[%682, %c0_277] : memref<128x128xf32, #tpu.memory_space<vmem>>, vector<8x128xf32>
    tpu.vector_store %arg13[%682, %c0_277], %679 {strides = array<i32>} : memref<128x128xf32, #tpu.memory_space<vmem>>, vector<8x128xf32>,
    %c15_i32_278 = arith.constant 15 : i32
    %c8_i32_279 = arith.constant 8 : i32
    %684 = arith.muli %c15_i32_278, %c8_i32_279 : i32
    %685 = tpu.assume_multiple %684, 8 : i32
    %c15_i32_280 = arith.constant 15 : i32
    %686 = arith.subi %c15_i32_280, %c15_i32_278 : i32
    %c8_i32_281 = arith.constant 8 : i32
    %687 = arith.muli %686, %c8_i32_281 : i32
    %688 = tpu.assume_multiple %687, 8 : i32
    %689 = arith.index_cast %685 : i32 to index
    %c0_282 = arith.constant 0 : index
    %690 = vector.load %arg11[%689, %c0_282] : memref<128x512xf32, #tpu.memory_space<vmem>>, vector<8x512xf32>
    %c0_283 = arith.constant 0 : index
    %c0_284 = arith.constant 0 : index
    %691 = vector.load %arg4[%c0_283, %c0_284] : memref<128x512xf32, #tpu.memory_space<vmem>>, vector<128x512xf32>
    %cst_285 = arith.constant dense<0.000000e+00> : vector<8x512xf32>
    %692 = tpu.matmul %679, %691, %cst_285 {dimension_numbers = #tpu.dot_dimension_numbers<[1], [0], [0], [1], [0, 0, 1, 1], [], []>} : vector<8x128xf32>, vector<128x512xf32>, vector<8x512xf32> -> vector<8x512xf32>
    %693 = arith.addf %690, %692 : vector<8x512xf32>
    %694 = vector.extract_strided_slice %693 {offsets = [0, 0], sizes = [8, 128], strides = [1, 1]} : vector<8x512xf32> to vector<8x128xf32>
    %cst_286 = arith.constant 5.000000e-01 : f32
    %695 = vector.broadcast %cst_286 : f32 to vector<8x128xf32>
    %696 = arith.mulf %695, %694 : vector<8x128xf32>
    %697 = math.tanh %696 : vector<8x128xf32>
    %cst_287 = arith.constant 5.000000e-01 : f32
    %698 = vector.broadcast %cst_287 : f32 to vector<8x128xf32>
    %699 = arith.mulf %698, %697 : vector<8x128xf32>
    %cst_288 = arith.constant 5.000000e-01 : f32
    %700 = vector.broadcast %cst_288 : f32 to vector<8x128xf32>
    %701 = arith.addf %699, %700 : vector<8x128xf32>
    %702 = vector.extract_strided_slice %693 {offsets = [0, 128], sizes = [8, 128], strides = [1, 1]} : vector<8x512xf32> to vector<8x128xf32>
    %cst_289 = arith.constant 5.000000e-01 : f32
    %703 = vector.broadcast %cst_289 : f32 to vector<8x128xf32>
    %704 = arith.mulf %703, %702 : vector<8x128xf32>
    %705 = math.tanh %704 : vector<8x128xf32>
    %cst_290 = arith.constant 5.000000e-01 : f32
    %706 = vector.broadcast %cst_290 : f32 to vector<8x128xf32>
    %707 = arith.mulf %706, %705 : vector<8x128xf32>
    %cst_291 = arith.constant 5.000000e-01 : f32
    %708 = vector.broadcast %cst_291 : f32 to vector<8x128xf32>
    %709 = arith.addf %707, %708 : vector<8x128xf32>
    %710 = vector.extract_strided_slice %693 {offsets = [0, 256], sizes = [8, 128], strides = [1, 1]} : vector<8x512xf32> to vector<8x128xf32>
    %711 = math.tanh %710 : vector<8x128xf32>
    %712 = vector.extract_strided_slice %693 {offsets = [0, 384], sizes = [8, 128], strides = [1, 1]} : vector<8x512xf32> to vector<8x128xf32>
    %cst_292 = arith.constant 5.000000e-01 : f32
    %713 = vector.broadcast %cst_292 : f32 to vector<8x128xf32>
    %714 = arith.mulf %713, %712 : vector<8x128xf32>
    %715 = math.tanh %714 : vector<8x128xf32>
    %cst_293 = arith.constant 5.000000e-01 : f32
    %716 = vector.broadcast %cst_293 : f32 to vector<8x128xf32>
    %717 = arith.mulf %716, %715 : vector<8x128xf32>
    %cst_294 = arith.constant 5.000000e-01 : f32
    %718 = vector.broadcast %cst_294 : f32 to vector<8x128xf32>
    %719 = arith.addf %717, %718 : vector<8x128xf32>
    %720 = arith.mulf %709, %677 : vector<8x128xf32>
    %721 = arith.mulf %701, %711 : vector<8x128xf32>
    %722 = arith.addf %720, %721 : vector<8x128xf32>
    %723 = math.tanh %722 : vector<8x128xf32>
    %724 = arith.mulf %719, %723 : vector<8x128xf32>
    %725 = arith.index_cast %685 : i32 to index
    %c0_295 = arith.constant 0 : index
    %726 = vector.load %arg12[%725, %c0_295] : memref<128x128xf32, #tpu.memory_space<vmem>>, vector<8x128xf32>
    tpu.vector_store %arg12[%725, %c0_295], %724 {strides = array<i32>} : memref<128x128xf32, #tpu.memory_space<vmem>>, vector<8x128xf32>,
    %727 = arith.index_cast %688 : i32 to index
    %c0_296 = arith.constant 0 : index
    %728 = vector.load %arg13[%727, %c0_296] : memref<128x128xf32, #tpu.memory_space<vmem>>, vector<8x128xf32>
    tpu.vector_store %arg13[%727, %c0_296], %724 {strides = array<i32>} : memref<128x128xf32, #tpu.memory_space<vmem>>, vector<8x128xf32>,
    %c16_i32 = arith.constant 16 : i32
    %c0_297 = arith.constant 0 : index
    %c0_298 = arith.constant 0 : index
    %729 = vector.load %arg12[%c0_297, %c0_298] : memref<128x128xf32, #tpu.memory_space<vmem>>, vector<128x128xf32>
    %c0_299 = arith.constant 0 : index
    %c0_300 = arith.constant 0 : index
    %730 = vector.load %arg5[%c0_299, %c0_300] : memref<128x256xf32, #tpu.memory_space<vmem>>, vector<128x256xf32>
    %cst_301 = arith.constant dense<0.000000e+00> : vector<128x256xf32>
    %731 = tpu.matmul %729, %730, %cst_301 {dimension_numbers = #tpu.dot_dimension_numbers<[1], [0], [0], [1], [0, 0, 1, 1], [], []>} : vector<128x128xf32>, vector<128x256xf32>, vector<128x256xf32> -> vector<128x256xf32>
    %c0_302 = arith.constant 0 : index
    %c0_303 = arith.constant 0 : index
    %732 = vector.load %arg13[%c0_302, %c0_303] : memref<128x128xf32, #tpu.memory_space<vmem>>, vector<128x128xf32>
    %c0_304 = arith.constant 0 : index
    %c0_305 = arith.constant 0 : index
    %733 = vector.load %arg6[%c0_304, %c0_305] : memref<128x256xf32, #tpu.memory_space<vmem>>, vector<128x256xf32>
    %cst_306 = arith.constant dense<0.000000e+00> : vector<128x256xf32>
    %734 = tpu.matmul %732, %733, %cst_306 {dimension_numbers = #tpu.dot_dimension_numbers<[1], [0], [0], [1], [0, 0, 1, 1], [], []>} : vector<128x128xf32>, vector<128x256xf32>, vector<128x256xf32> -> vector<128x256xf32>
    %735 = arith.addf %731, %734 : vector<128x256xf32>
    %c0_307 = arith.constant 0 : index
    %c0_308 = arith.constant 0 : index
    %736 = vector.load %arg7[%c0_307, %c0_308] : memref<1x256xf32, #tpu.memory_space<vmem>>, vector<1x256xf32>
    %737 = vector.broadcast %736 : vector<1x256xf32> to vector<128x256xf32>
    %738 = arith.addf %735, %737 : vector<128x256xf32>
    %cst_309 = arith.constant 0.000000e+00 : f32
    %739 = vector.broadcast %cst_309 : f32 to vector<128x256xf32>
    %740 = arith.maximumf %738, %739 : vector<128x256xf32>
    %c0_310 = arith.constant 0 : index
    %c0_311 = arith.constant 0 : index
    %741 = vector.load %arg8[%c0_310, %c0_311] : memref<256x64xf32, #tpu.memory_space<vmem>>, vector<256x64xf32>
    %cst_312 = arith.constant dense<0.000000e+00> : vector<128x64xf32>
    %742 = tpu.matmul %740, %741, %cst_312 {dimension_numbers = #tpu.dot_dimension_numbers<[1], [0], [0], [1], [0, 0, 1, 1], [], []>} : vector<128x256xf32>, vector<256x64xf32>, vector<128x64xf32> -> vector<128x64xf32>
    %c0_313 = arith.constant 0 : index
    %c0_314 = arith.constant 0 : index
    %743 = vector.load %arg9[%c0_313, %c0_314] : memref<1x64xf32, #tpu.memory_space<vmem>>, vector<1x64xf32>
    %744 = vector.broadcast %743 : vector<1x64xf32> to vector<128x64xf32>
    %745 = arith.addf %742, %744 : vector<128x64xf32>
    %c0_315 = arith.constant 0 : index
    %c0_316 = arith.constant 0 : index
    %746 = vector.load %arg10[%c0_315, %c0_316] : memref<128x64xf32, #tpu.memory_space<vmem>>, vector<128x64xf32>
    tpu.vector_store %arg10[%c0_315, %c0_316], %745 {strides = array<i32>} : memref<128x64xf32, #tpu.memory_space<vmem>>, vector<128x64xf32>,
    return
  }
  func.func @transform_0(%arg0: i32) -> (i32, i32) {
    %c0_i32 = arith.constant 0 : i32
    %c0_i32_0 = arith.constant 0 : i32
    %c0_i32_1 = arith.constant 0 : i32
    return %c0_i32, %c0_i32_0 : i32, i32
  }
  func.func @transform_1(%arg0: i32) -> (i32, i32) {
    %c0_i32 = arith.constant 0 : i32
    %c0_i32_0 = arith.constant 0 : i32
    %c0_i32_1 = arith.constant 0 : i32
    return %c0_i32, %c0_i32_0 : i32, i32
  }
  func.func @transform_2(%arg0: i32) -> (i32, i32) {
    %c0_i32 = arith.constant 0 : i32
    %c0_i32_0 = arith.constant 0 : i32
    %c0_i32_1 = arith.constant 0 : i32
    return %c0_i32, %c0_i32_0 : i32, i32
  }
  func.func @transform_3(%arg0: i32) -> (i32, i32) {
    %c0_i32 = arith.constant 0 : i32
    %c0_i32_0 = arith.constant 0 : i32
    %c0_i32_1 = arith.constant 0 : i32
    return %c0_i32, %c0_i32_0 : i32, i32
  }
  func.func @transform_4(%arg0: i32) -> (i32, i32) {
    %c0_i32 = arith.constant 0 : i32
    %c0_i32_0 = arith.constant 0 : i32
    %c0_i32_1 = arith.constant 0 : i32
    return %c0_i32, %c0_i32_0 : i32, i32
  }
  func.func @transform_5(%arg0: i32) -> (i32, i32) {
    %c0_i32 = arith.constant 0 : i32
    %c0_i32_0 = arith.constant 0 : i32
    %c0_i32_1 = arith.constant 0 : i32
    return %c0_i32, %c0_i32_0 : i32, i32
  }
  func.func @transform_6(%arg0: i32) -> (i32, i32) {
    %c0_i32 = arith.constant 0 : i32
    %c0_i32_0 = arith.constant 0 : i32
    %c0_i32_1 = arith.constant 0 : i32
    return %c0_i32, %c0_i32_0 : i32, i32
  }
  func.func @transform_7(%arg0: i32) -> (i32, i32) {
    %c0_i32 = arith.constant 0 : i32
    %c0_i32_0 = arith.constant 0 : i32
    %c0_i32_1 = arith.constant 0 : i32
    return %c0_i32, %c0_i32_0 : i32, i32
  }
  func.func @transform_8(%arg0: i32) -> (i32, i32) {
    %c0_i32 = arith.constant 0 : i32
    %c0_i32_0 = arith.constant 0 : i32
    %c0_i32_1 = arith.constant 0 : i32
    return %c0_i32, %c0_i32_0 : i32, i32
  }
  func.func @transform_9(%arg0: i32) -> (i32, i32) {
    %c0_i32 = arith.constant 0 : i32
    %c0_i32_0 = arith.constant 0 : i32
    %c0_i32_1 = arith.constant 0 : i32
    return %c0_i32, %c0_i32_0 : i32, i32
  }
}

</mosaic_0001>

<llo_original>
// kernel: non_residual_lstm.1
$region0: #{non_residual_lstm.1}
  #allocation0 [shape = 'u32[]', space=smem, size = 0x4, offset = 0x4, fixed_abs, tag = 'smem constant byte address 0x4 - core index']
  #allocation1 [shape = 'u32[144,128]{1,0:T(1,128)}', space=vmem, size = 0x12000, scoped, tag = 'internal scratch']
  #allocation2 [shape = 'f32[128,512]{1,0:T(8,128)}', space=vmem, size = 0x40000, scoped, tag = 'scratch operand']
  #allocation3 [shape = 'f32[128,128]{1,0:T(8,128)}', space=vmem, size = 0x10000, scoped, tag = 'scratch operand']
  #allocation4 [shape = 'f32[128,128]{1,0:T(8,128)}', space=vmem, size = 0x10000, scoped, tag = 'scratch operand']
  %s0 = inlined_call_operand.vmem [shape: f32[128,128], index: 0, kind: input, shape index: {}]
  %s1 = inlined_call_operand.vmem [shape: f32[128,512], index: 1, kind: input, shape index: {}]
  %s2 = inlined_call_operand.hbm [shape: f32[1,512], index: 2, kind: input, shape index: {}]
  %s3 = inlined_call_operand.vmem [shape: f32[128,512], index: 3, kind: input, shape index: {}]
  %s4 = inlined_call_operand.hbm [shape: f32[128,256], index: 4, kind: input, shape index: {}]
  %s5 = inlined_call_operand.hbm [shape: f32[128,256], index: 5, kind: input, shape index: {}]
  %s6 = inlined_call_operand.vmem [shape: f32[1,256], index: 6, kind: input, shape index: {}]
  %s7 = inlined_call_operand.vmem [shape: f32[256,64], index: 7, kind: input, shape index: {}]
  %s8 = inlined_call_operand.vmem [shape: f32[1,64], index: 8, kind: input, shape index: {}]
  %s9 = inlined_call_operand.hbm [shape: f32[128,64], index: 9, kind: output, shape index: {}]
  %s10 = sld [smem:[#allocation0]]
  $region58: #{non_residual_lstm.1} parent=0
    _
  %s12 = ssub.s32 1, %s10
  %s13 = scalar_select 0, %s12, %s10
  $region1: #{non_residual_lstm.1} parent=0
    #allocation5 [shape = 'u8[2048]{0}', space=vmem, size = 0x800, scoped, tag = 'input window, operand 2, single buffered']
    #allocation6 [shape = 's32[1]{0}', space=sflag, size = 0x4, scoped, tag = 'scoped memory for non_residual_lstm.1']
    #allocation7 [shape = 's32[1]{0}', space=sflag, size = 0x4, scoped, tag = 'scoped memory for non_residual_lstm.1']
    #allocation8 [shape = 'u8[131072]{0}', space=vmem, size = 0x20000, scoped, tag = 'input window, operand 4, single buffered']
    #allocation9 [shape = 's32[1]{0}', space=sflag, size = 0x4, scoped, tag = 'scoped memory for non_residual_lstm.1']
    #allocation10 [shape = 'u8[131072]{0}', space=vmem, size = 0x20000, scoped, tag = 'input window, operand 5, single buffered']
    #allocation11 [shape = 'u8[65536]{0}', space=vmem, size = 0x10000, scoped, tag = 'output window, operand 0, single buffered']
    %14 = vsyncpa [#allocation6], 0
    %15 = vsyncpa [#allocation9], 0
    %16 = vsyncpa [#allocation7], 0
    // Predicated region
    $region2: #{non_residual_lstm.1} parent=1 // pred_check
      _
    $region3: #{non_residual_lstm.1} parent=1 // pred_check_branch
      %18 = sbr.rel (0) target = $region5
    $region4: #{non_residual_lstm.1} parent=1 // pred_region
      _
    $region5: #{non_residual_lstm.1} parent=1 // pred_fallthru
      _
    // Predicated region
    $region6: #{non_residual_lstm.1} parent=1 // pred_check
      _
    $region7: #{non_residual_lstm.1} parent=1 // pred_check_branch
      %20 = sbr.rel (0) target = $region9
    $region8: #{non_residual_lstm.1} parent=1 // pred_region
      _
    $region9: #{non_residual_lstm.1} parent=1 // pred_fallthru
      _
    // Predicated region
    $region10: #{non_residual_lstm.1} parent=1 // pred_check
      _
    $region11: #{non_residual_lstm.1} parent=1 // pred_check_branch
      %22 = sbr.rel (0) target = $region13
    $region12: #{non_residual_lstm.1} parent=1 // pred_region
      %s24 = ssub.s32 64, 64
      %25 = vsyncadd [#allocation6], %s24
      %s27 = sshll.u32 [#allocation5], 4
      %s28 = int_to_ptr.vmem [resolvable:$true] %s27
      %30 = dma.hbm_to_vmem [thread:$0]  %s2, 64, %s28, [#allocation6]
    $region13: #{non_residual_lstm.1} parent=1 // pred_fallthru
      _
    // Predicated region
    $region14: #{non_residual_lstm.1} parent=1 // pred_check
      _
    $region15: #{non_residual_lstm.1} parent=1 // pred_check_branch
      %32 = sbr.rel (0) target = $region17
    $region16: #{non_residual_lstm.1} parent=1 // pred_region
      _
    $region17: #{non_residual_lstm.1} parent=1 // pred_fallthru
      _
    // Predicated region
    $region18: #{non_residual_lstm.1} parent=1 // pred_check
      _
    $region19: #{non_residual_lstm.1} parent=1 // pred_check_branch
      %34 = sbr.rel (0) target = $region21
    $region20: #{non_residual_lstm.1} parent=1 // pred_region
      %s36 = ssub.s32 4096, 4096
      %37 = vsyncadd [#allocation9], %s36
      %s38 = sshll.u32 [#allocation8], 4
      %s39 = int_to_ptr.vmem [resolvable:$true] %s38
      %44 = dma.hbm_to_vmem [thread:$0]  %s4, 4096, %s39, [#allocation9], 256, 256, 16
    $region21: #{non_residual_lstm.1} parent=1 // pred_fallthru
      _
    // Predicated region
    $region22: #{non_residual_lstm.1} parent=1 // pred_check
      _
    $region23: #{non_residual_lstm.1} parent=1 // pred_check_branch
      %46 = sbr.rel (0) target = $region25
    $region24: #{non_residual_lstm.1} parent=1 // pred_region
      %s48 = ssub.s32 4096, 4096
      %49 = vsyncadd [#allocation9], %s48
      %s50 = sshll.u32 [#allocation10], 4
      %s51 = int_to_ptr.vmem [resolvable:$true] %s50
      %56 = dma.hbm_to_vmem [thread:$0]  %s5, 4096, %s51, [#allocation9], 256, 256, 16
    $region25: #{non_residual_lstm.1} parent=1 // pred_fallthru
      _
    // Predicated region
    $region26: #{non_residual_lstm.1} parent=1 // pred_check
      _
    $region27: #{non_residual_lstm.1} parent=1 // pred_check_branch
      %58 = sbr.rel (0) target = $region29
    $region28: #{non_residual_lstm.1} parent=1 // pred_region
      _
    $region29: #{non_residual_lstm.1} parent=1 // pred_fallthru
      _
    // Predicated region
    $region30: #{non_residual_lstm.1} parent=1 // pred_check
      _
    $region31: #{non_residual_lstm.1} parent=1 // pred_check_branch
      %60 = sbr.rel (0) target = $region33
    $region32: #{non_residual_lstm.1} parent=1 // pred_region
      _
    $region33: #{non_residual_lstm.1} parent=1 // pred_fallthru
      _
    // Predicated region
    $region34: #{non_residual_lstm.1} parent=1 // pred_check
      _
    $region35: #{non_residual_lstm.1} parent=1 // pred_check_branch
      %62 = sbr.rel (0) target = $region37
    $region36: #{non_residual_lstm.1} parent=1 // pred_region
      _
    $region37: #{non_residual_lstm.1} parent=1 // pred_fallthru
      _
    // Predicated region
    $region38: #{non_residual_lstm.1} parent=1 // pred_check
      _
    $region39: #{non_residual_lstm.1} parent=1 // pred_check_branch
      %64 = sbr.rel (0) target = $region41
    $region40: #{non_residual_lstm.1} parent=1 // pred_region
      %65 = dma.done [#allocation6], 64
    $region41: #{non_residual_lstm.1} parent=1 // pred_fallthru
      _
    // Predicated region
    $region42: #{non_residual_lstm.1} parent=1 // pred_check
      _
    $region43: #{non_residual_lstm.1} parent=1 // pred_check_branch
      %67 = sbr.rel (0) target = $region45
    $region44: #{non_residual_lstm.1} parent=1 // pred_region
      %68 = dma.done [#allocation9], 4096
    $region45: #{non_residual_lstm.1} parent=1 // pred_fallthru
      _
    // Predicated region
    $region46: #{non_residual_lstm.1} parent=1 // pred_check
      _
    $region47: #{non_residual_lstm.1} parent=1 // pred_check_branch
      %70 = sbr.rel (0) target = $region49
    $region48: #{non_residual_lstm.1} parent=1 // pred_region
      %71 = dma.done [#allocation9], 4096
    $region49: #{non_residual_lstm.1} parent=1 // pred_fallthru
      _
    %v72 = vld [vmem:[%s0] sm:$0xff]
    %v73 = vld [vmem:[%s0 + $0x8] sm:$0xff]
    %v74 = vld [vmem:[%s0 + $0x10] sm:$0xff]
    %v75 = vld [vmem:[%s0 + $0x18] sm:$0xff]
    %v76 = vld [vmem:[%s0 + $0x20] sm:$0xff]
    %v77 = vld [vmem:[%s0 + $0x28] sm:$0xff]
    %v78 = vld [vmem:[%s0 + $0x30] sm:$0xff]
    %v79 = vld [vmem:[%s0 + $0x38] sm:$0xff]
    %v80 = vld [vmem:[%s0 + $0x40] sm:$0xff]
    %v81 = vld [vmem:[%s0 + $0x48] sm:$0xff]
    %v82 = vld [vmem:[%s0 + $0x50] sm:$0xff]
    %v83 = vld [vmem:[%s0 + $0x58] sm:$0xff]
    %v84 = vld [vmem:[%s0 + $0x60] sm:$0xff]
    %v85 = vld [vmem:[%s0 + $0x68] sm:$0xff]
    %v86 = vld [vmem:[%s0 + $0x70] sm:$0xff]
    %v87 = vld [vmem:[%s0 + $0x78] sm:$0xff]
    %v88 = vld [vmem:[%s1] sm:$0xff]
    %v89 = vld [vmem:[%s1 + $0x8] sm:$0xff]
    %v90 = vld [vmem:[%s1 + $0x10] sm:$0xff]
    %v91 = vld [vmem:[%s1 + $0x18] sm:$0xff]
    %v92 = vld [vmem:[%s1 + $0x20] sm:$0xff]
    %v93 = vld [vmem:[%s1 + $0x28] sm:$0xff]
    %v94 = vld [vmem:[%s1 + $0x30] sm:$0xff]
    %v95 = vld [vmem:[%s1 + $0x38] sm:$0xff]
    %v96 = vld [vmem:[%s1 + $0x40] sm:$0xff]
    %v97 = vld [vmem:[%s1 + $0x48] sm:$0xff]
    %v98 = vld [vmem:[%s1 + $0x50] sm:$0xff]
    %v99 = vld [vmem:[%s1 + $0x58] sm:$0xff]
    %v100 = vld [vmem:[%s1 + $0x60] sm:$0xff]
    %v101 = vld [vmem:[%s1 + $0x68] sm:$0xff]
    %v102 = vld [vmem:[%s1 + $0x70] sm:$0xff]
    %v103 = vld [vmem:[%s1 + $0x78] sm:$0xff]
    %v104 = vld [vmem:[%s1 + $0x80] sm:$0xff]
    %v105 = vld [vmem:[%s1 + $0x88] sm:$0xff]
    %v106 = vld [vmem:[%s1 + $0x90] sm:$0xff]
    %v107 = vld [vmem:[%s1 + $0x98] sm:$0xff]
    %v108 = vld [vmem:[%s1 + $0xa0] sm:$0xff]
    %v109 = vld [vmem:[%s1 + $0xa8] sm:$0xff]
    %v110 = vld [vmem:[%s1 + $0xb0] sm:$0xff]
    %v111 = vld [vmem:[%s1 + $0xb8] sm:$0xff]
    %v112 = vld [vmem:[%s1 + $0xc0] sm:$0xff]
    %v113 = vld [vmem:[%s1 + $0xc8] sm:$0xff]
    %v114 = vld [vmem:[%s1 + $0xd0] sm:$0xff]
    %v115 = vld [vmem:[%s1 + $0xd8] sm:$0xff]
    %v116 = vld [vmem:[%s1 + $0xe0] sm:$0xff]
    %v117 = vld [vmem:[%s1 + $0xe8] sm:$0xff]
    %v118 = vld [vmem:[%s1 + $0xf0] sm:$0xff]
    %v119 = vld [vmem:[%s1 + $0xf8] sm:$0xff]
    %v120 = vld [vmem:[%s1 + $0x100] sm:$0xff]
    %v121 = vld [vmem:[%s1 + $0x108] sm:$0xff]
    %v122 = vld [vmem:[%s1 + $0x110] sm:$0xff]
    %v123 = vld [vmem:[%s1 + $0x118] sm:$0xff]
    %v124 = vld [vmem:[%s1 + $0x120] sm:$0xff]
    %v125 = vld [vmem:[%s1 + $0x128] sm:$0xff]
    %v126 = vld [vmem:[%s1 + $0x130] sm:$0xff]
    %v127 = vld [vmem:[%s1 + $0x138] sm:$0xff]
    %v128 = vld [vmem:[%s1 + $0x140] sm:$0xff]
    %v129 = vld [vmem:[%s1 + $0x148] sm:$0xff]
    %v130 = vld [vmem:[%s1 + $0x150] sm:$0xff]
    %v131 = vld [vmem:[%s1 + $0x158] sm:$0xff]
    %v132 = vld [vmem:[%s1 + $0x160] sm:$0xff]
    %v133 = vld [vmem:[%s1 + $0x168] sm:$0xff]
    %v134 = vld [vmem:[%s1 + $0x170] sm:$0xff]
    %v135 = vld [vmem:[%s1 + $0x178] sm:$0xff]
    %v136 = vld [vmem:[%s1 + $0x180] sm:$0xff]
    %v137 = vld [vmem:[%s1 + $0x188] sm:$0xff]
    %v138 = vld [vmem:[%s1 + $0x190] sm:$0xff]
    %v139 = vld [vmem:[%s1 + $0x198] sm:$0xff]
    %v140 = vld [vmem:[%s1 + $0x1a0] sm:$0xff]
    %v141 = vld [vmem:[%s1 + $0x1a8] sm:$0xff]
    %v142 = vld [vmem:[%s1 + $0x1b0] sm:$0xff]
    %v143 = vld [vmem:[%s1 + $0x1b8] sm:$0xff]
    %v144 = vld [vmem:[%s1 + $0x1c0] sm:$0xff]
    %v145 = vld [vmem:[%s1 + $0x1c8] sm:$0xff]
    %v146 = vld [vmem:[%s1 + $0x1d0] sm:$0xff]
    %v147 = vld [vmem:[%s1 + $0x1d8] sm:$0xff]
    %v148 = vld [vmem:[%s1 + $0x1e0] sm:$0xff]
    %v149 = vld [vmem:[%s1 + $0x1e8] sm:$0xff]
    %v150 = vld [vmem:[%s1 + $0x1f0] sm:$0xff]
    %v151 = vld [vmem:[%s1 + $0x1f8] sm:$0xff]
    %v152 = vld [vmem:[#allocation5] sm:$0xf]
    %v154 = vlaneseq
    %v155 = vshrl.u32 %v154, 7
    %v156 = vsub.s32 0, %v155
    %v157 = vrot.slane %v152, %v156
    %v158 = vlaneseq
    %v159 = vshrl.u32 %v158, 7
    %v160 = vsub.s32 1, %v159
    %v161 = vrot.slane %v152, %v160
    %v162 = vlaneseq
    %v163 = vshrl.u32 %v162, 7
    %v164 = vsub.s32 2, %v163
    %v165 = vrot.slane %v152, %v164
    %v166 = vlaneseq
    %v167 = vshrl.u32 %v166, 7
    %v168 = vsub.s32 3, %v167
    %v169 = vrot.slane %v152, %v168
    %174 = vmatprep.subr.mxu0 %v89
    %175 = vmatpush1.msra.mxu0 %v88
    %176 = vmatprep.subr.mxu0 %v93
    %177 = vmatpush1.msra.mxu0 %v92
    %178 = vmatprep.subr.mxu0 %v97
    %179 = vmatpush1.msra.mxu0 %v96
    %180 = vmatprep.subr.mxu0 %v101
    %181 = vmatpush1.msra.mxu0 %v100
    %182 = vmatprep.subr.mxu0 %v105
    %183 = vmatpush1.msra.mxu0 %v104
    %184 = vmatprep.subr.mxu0 %v109
    %185 = vmatpush1.msra.mxu0 %v108
    %186 = vmatprep.subr.mxu0 %v113
    %187 = vmatpush1.msra.mxu0 %v112
    %188 = vmatprep.subr.mxu0 %v117
    %189 = vmatpush1.msra.mxu0 %v116
    %190 = vmatprep.subr.mxu0 %v121
    %191 = vmatpush1.msra.mxu0 %v120
    %192 = vmatprep.subr.mxu0 %v125
    %193 = vmatpush1.msra.mxu0 %v124
    %194 = vmatprep.subr.mxu0 %v129
    %195 = vmatpush1.msra.mxu0 %v128
    %196 = vmatprep.subr.mxu0 %v133
    %197 = vmatpush1.msra.mxu0 %v132
    %198 = vmatprep.subr.mxu0 %v137
    %199 = vmatpush1.msra.mxu0 %v136
    %200 = vmatprep.subr.mxu0 %v141
    %201 = vmatpush1.msra.mxu0 %v140
    %202 = vmatprep.subr.mxu0 %v145
    %203 = vmatpush1.msra.mxu0 %v144
    %204 = vmatprep.subr.mxu0 %v149
    %205 = vmatpush1.msra.mxu0 %v148
    %206 = vmatprep.subr.mxu0 0.0
    %207 = vmatpush1.msra.mxu0 0.0
    %208 = vmatprep.subr.mxu0 0.0
    %209 = vmatpush1.msra.mxu0 0.0
    %210 = vmatprep.subr.mxu0 0.0
    %211 = vmatpush1.msra.mxu0 0.0
    %212 = vmatprep.subr.mxu0 0.0
    %213 = vmatpush1.msra.mxu0 0.0
    %214 = vmatprep.subr.mxu0 0.0
    %215 = vmatpush1.msra.mxu0 0.0
    %216 = vmatprep.subr.mxu0 0.0
    %217 = vmatpush1.msra.mxu0 0.0
    %218 = vmatprep.subr.mxu0 0.0
    %219 = vmatpush1.msra.mxu0 0.0
    %220 = vmatprep.subr.mxu0 0.0
    %221 = vmatpush1.msra.mxu0 0.0
    %222 = vmatprep.subr.mxu0 0.0
    %223 = vmatpush1.msra.mxu0 0.0
    %224 = vmatprep.subr.mxu0 0.0
    %225 = vmatpush1.msra.mxu0 0.0
    %226 = vmatprep.subr.mxu0 0.0
    %227 = vmatpush1.msra.mxu0 0.0
    %228 = vmatprep.subr.mxu0 0.0
    %229 = vmatpush1.msra.mxu0 0.0
    %230 = vmatprep.subr.mxu0 0.0
    %231 = vmatpush1.msra.mxu0 0.0
    %232 = vmatprep.subr.mxu0 0.0
    %233 = vmatpush1.msra.mxu0 0.0
    %234 = vmatprep.subr.mxu0 0.0
    %235 = vmatpush1.msra.mxu0 0.0
    %236 = vmatprep.subr.mxu0 0.0
    %237 = vmatpush1.msra.mxu0 0.0
    %238 = vmatprep.mubr.f32.mxu0 0.0
    %239 = vmatmul.mubr.f32.gmra.mrb[0].mxu0 %v72
    %v240 = vpop.f32.mrb[0].mxu0
    %v241 = vadd.f32 %v157, %v240
    %v242 = vpop.f32.mrb[0].mxu0
    %v243 = vadd.f32 %v161, %v242
    %244 = vmatprep.mubr.f32.mxu0 0.0
    %245 = vmatmul.mubr.f32.gmra.mrb[0].mxu0 %v73
    %v246 = vpop.f32.mrb[0].mxu0
    %v247 = vadd.f32 %v157, %v246
    %v248 = vpop.f32.mrb[0].mxu0
    %v249 = vadd.f32 %v161, %v248
    %250 = vmatprep.mubr.f32.mxu0 0.0
    %251 = vmatmul.mubr.f32.gmra.mrb[0].mxu0 %v74
    %v252 = vpop.f32.mrb[0].mxu0
    %v253 = vadd.f32 %v157, %v252
    %v254 = vpop.f32.mrb[0].mxu0
    %v255 = vadd.f32 %v161, %v254
    %256 = vmatprep.mubr.f32.mxu0 0.0
    %257 = vmatmul.mubr.f32.gmra.mrb[0].mxu0 %v75
    %v258 = vpop.f32.mrb[0].mxu0
    %v259 = vadd.f32 %v157, %v258
    %v260 = vpop.f32.mrb[0].mxu0
    %v261 = vadd.f32 %v161, %v260
    %262 = vmatprep.mubr.f32.mxu0 0.0
    %263 = vmatmul.mubr.f32.gmra.mrb[0].mxu0 %v76
    %v264 = vpop.f32.mrb[0].mxu0
    %v265 = vadd.f32 %v157, %v264
    %v266 = vpop.f32.mrb[0].mxu0
    %v267 = vadd.f32 %v161, %v266
    %268 = vmatprep.mubr.f32.mxu0 0.0
    %269 = vmatmul.mubr.f32.gmra.mrb[0].mxu0 %v77
    %v270 = vpop.f32.mrb[0].mxu0
    %v271 = vadd.f32 %v157, %v270
    %v272 = vpop.f32.mrb[0].mxu0
    %v273 = vadd.f32 %v161, %v272
    %274 = vmatprep.mubr.f32.mxu0 0.0
    %275 = vmatmul.mubr.f32.gmra.mrb[0].mxu0 %v78
    %v276 = vpop.f32.mrb[0].mxu0
    %v277 = vadd.f32 %v157, %v276
    %v278 = vpop.f32.mrb[0].mxu0
    %v279 = vadd.f32 %v161, %v278
    %280 = vmatprep.mubr.f32.mxu0 0.0
    %281 = vmatmul.mubr.f32.gmra.mrb[0].mxu0 %v79
    %v282 = vpop.f32.mrb[0].mxu0
    %v283 = vadd.f32 %v157, %v282
    %v284 = vpop.f32.mrb[0].mxu0
    %v285 = vadd.f32 %v161, %v284
    %286 = vmatprep.mubr.f32.mxu0 0.0
    %287 = vmatmul.mubr.f32.gmra.mrb[0].mxu0 %v80
    %v288 = vpop.f32.mrb[0].mxu0
    %v289 = vadd.f32 %v157, %v288
    %v290 = vpop.f32.mrb[0].mxu0
    %v291 = vadd.f32 %v161, %v290
    %292 = vmatprep.mubr.f32.mxu0 0.0
    %293 = vmatmul.mubr.f32.gmra.mrb[0].mxu0 %v81
    %v294 = vpop.f32.mrb[0].mxu0
    %v295 = vadd.f32 %v157, %v294
    %v296 = vpop.f32.mrb[0].mxu0
    %v297 = vadd.f32 %v161, %v296
    %298 = vmatprep.mubr.f32.mxu0 0.0
    %299 = vmatmul.mubr.f32.gmra.mrb[0].mxu0 %v82
    %v300 = vpop.f32.mrb[0].mxu0
    %v301 = vadd.f32 %v157, %v300
    %v302 = vpop.f32.mrb[0].mxu0
    %v303 = vadd.f32 %v161, %v302
    %304 = vmatprep.mubr.f32.mxu0 0.0
    %305 = vmatmul.mubr.f32.gmra.mrb[0].mxu0 %v83
    %v306 = vpop.f32.mrb[0].mxu0
    %v307 = vadd.f32 %v157, %v306
    %v308 = vpop.f32.mrb[0].mxu0
    %v309 = vadd.f32 %v161, %v308
    %310 = vmatprep.mubr.f32.mxu0 0.0
    %311 = vmatmul.mubr.f32.gmra.mrb[0].mxu0 %v84
    %v312 = vpop.f32.mrb[0].mxu0
    %v313 = vadd.f32 %v157, %v312
    %v314 = vpop.f32.mrb[0].mxu0
    %v315 = vadd.f32 %v161, %v314
    %316 = vmatprep.mubr.f32.mxu0 0.0
    %317 = vmatmul.mubr.f32.gmra.mrb[0].mxu0 %v85
    %v318 = vpop.f32.mrb[0].mxu0
    %v319 = vadd.f32 %v157, %v318
    %v320 = vpop.f32.mrb[0].mxu0
    %v321 = vadd.f32 %v161, %v320
    %322 = vmatprep.mubr.f32.mxu0 0.0
    %323 = vmatmul.mubr.f32.gmra.mrb[0].mxu0 %v86
    %v324 = vpop.f32.mrb[0].mxu0
    %v325 = vadd.f32 %v157, %v324
    %v326 = vpop.f32.mrb[0].mxu0
    %v327 = vadd.f32 %v161, %v326
    %328 = vmatprep.mubr.f32.mxu0 0.0
    %329 = vmatmul.mubr.f32.gmra.mrb[0].mxu0 %v87
    %v330 = vpop.f32.mrb[0].mxu0
    %v331 = vadd.f32 %v157, %v330
    %v332 = vpop.f32.mrb[0].mxu0
    %v333 = vadd.f32 %v161, %v332
    %334 = vdwg.mxu0
    %335 = vmatprep.subr.mxu0 %v91
    %336 = vmatpush1.msra.mxu0 %v90
    %337 = vmatprep.subr.mxu0 %v95
    %338 = vmatpush1.msra.mxu0 %v94
    %339 = vmatprep.subr.mxu0 %v99
    %340 = vmatpush1.msra.mxu0 %v98
    %341 = vmatprep.subr.mxu0 %v103
    %342 = vmatpush1.msra.mxu0 %v102
    %343 = vmatprep.subr.mxu0 %v107
    %344 = vmatpush1.msra.mxu0 %v106
    %345 = vmatprep.subr.mxu0 %v111
    %346 = vmatpush1.msra.mxu0 %v110
    %347 = vmatprep.subr.mxu0 %v115
    %348 = vmatpush1.msra.mxu0 %v114
    %349 = vmatprep.subr.mxu0 %v119
    %350 = vmatpush1.msra.mxu0 %v118
    %351 = vmatprep.subr.mxu0 %v123
    %352 = vmatpush1.msra.mxu0 %v122
    %353 = vmatprep.subr.mxu0 %v127
    %354 = vmatpush1.msra.mxu0 %v126
    %355 = vmatprep.subr.mxu0 %v131
    %356 = vmatpush1.msra.mxu0 %v130
    %357 = vmatprep.subr.mxu0 %v135
    %358 = vmatpush1.msra.mxu0 %v134
    %359 = vmatprep.subr.mxu0 %v139
    %360 = vmatpush1.msra.mxu0 %v138
    %361 = vmatprep.subr.mxu0 %v143
    %362 = vmatpush1.msra.mxu0 %v142
    %363 = vmatprep.subr.mxu0 %v147
    %364 = vmatpush1.msra.mxu0 %v146
    %365 = vmatprep.subr.mxu0 %v151
    %366 = vmatpush1.msra.mxu0 %v150
    %367 = vmatprep.subr.mxu0 0.0
    %368 = vmatpush1.msra.mxu0 0.0
    %369 = vmatprep.subr.mxu0 0.0
    %370 = vmatpush1.msra.mxu0 0.0
    %371 = vmatprep.subr.mxu0 0.0
    %372 = vmatpush1.msra.mxu0 0.0
    %373 = vmatprep.subr.mxu0 0.0
    %374 = vmatpush1.msra.mxu0 0.0
    %375 = vmatprep.subr.mxu0 0.0
    %376 = vmatpush1.msra.mxu0 0.0
    %377 = vmatprep.subr.mxu0 0.0
    %378 = vmatpush1.msra.mxu0 0.0
    %379 = vmatprep.subr.mxu0 0.0
    %380 = vmatpush1.msra.mxu0 0.0
    %381 = vmatprep.subr.mxu0 0.0
    %382 = vmatpush1.msra.mxu0 0.0
    %383 = vmatprep.subr.mxu0 0.0
    %384 = vmatpush1.msra.mxu0 0.0
    %385 = vmatprep.subr.mxu0 0.0
    %386 = vmatpush1.msra.mxu0 0.0
    %387 = vmatprep.subr.mxu0 0.0
    %388 = vmatpush1.msra.mxu0 0.0
    %389 = vmatprep.subr.mxu0 0.0
    %390 = vmatpush1.msra.mxu0 0.0
    %391 = vmatprep.subr.mxu0 0.0
    %392 = vmatpush1.msra.mxu0 0.0
    %393 = vmatprep.subr.mxu0 0.0
    %394 = vmatpush1.msra.mxu0 0.0
    %395 = vmatprep.subr.mxu0 0.0
    %396 = vmatpush1.msra.mxu0 0.0
    %397 = vmatprep.subr.mxu0 0.0
    %398 = vmatpush1.msra.mxu0 0.0
    %399 = vmatprep.mubr.f32.mxu0 0.0
    %400 = vmatmul.mubr.f32.gmra.mrb[0].mxu0 %v72
    %v401 = vpop.f32.mrb[0].mxu0
    %v402 = vadd.f32 %v165, %v401
    %v403 = vpop.f32.mrb[0].mxu0
    %v404 = vadd.f32 %v169, %v403
    %405 = vmatprep.mubr.f32.mxu0 0.0
    %406 = vmatmul.mubr.f32.gmra.mrb[0].mxu0 %v73
    %v407 = vpop.f32.mrb[0].mxu0
    %v408 = vadd.f32 %v165, %v407
    %v409 = vpop.f32.mrb[0].mxu0
    %v410 = vadd.f32 %v169, %v409
    %411 = vmatprep.mubr.f32.mxu0 0.0
    %412 = vmatmul.mubr.f32.gmra.mrb[0].mxu0 %v74
    %v413 = vpop.f32.mrb[0].mxu0
    %v414 = vadd.f32 %v165, %v413
    %v415 = vpop.f32.mrb[0].mxu0
    %v416 = vadd.f32 %v169, %v415
    %417 = vmatprep.mubr.f32.mxu0 0.0
    %418 = vmatmul.mubr.f32.gmra.mrb[0].mxu0 %v75
    %v419 = vpop.f32.mrb[0].mxu0
    %v420 = vadd.f32 %v165, %v419
    %v421 = vpop.f32.mrb[0].mxu0
    %v422 = vadd.f32 %v169, %v421
    %423 = vmatprep.mubr.f32.mxu0 0.0
    %424 = vmatmul.mubr.f32.gmra.mrb[0].mxu0 %v76
    %v425 = vpop.f32.mrb[0].mxu0
    %v426 = vadd.f32 %v165, %v425
    %v427 = vpop.f32.mrb[0].mxu0
    %v428 = vadd.f32 %v169, %v427
    %429 = vmatprep.mubr.f32.mxu0 0.0
    %430 = vmatmul.mubr.f32.gmra.mrb[0].mxu0 %v77
    %v431 = vpop.f32.mrb[0].mxu0
    %v432 = vadd.f32 %v165, %v431
    %v433 = vpop.f32.mrb[0].mxu0
    %v434 = vadd.f32 %v169, %v433
    %435 = vmatprep.mubr.f32.mxu0 0.0
    %436 = vmatmul.mubr.f32.gmra.mrb[0].mxu0 %v78
    %v437 = vpop.f32.mrb[0].mxu0
    %v438 = vadd.f32 %v165, %v437
    %v439 = vpop.f32.mrb[0].mxu0
    %v440 = vadd.f32 %v169, %v439
    %441 = vmatprep.mubr.f32.mxu0 0.0
    %442 = vmatmul.mubr.f32.gmra.mrb[0].mxu0 %v79
    %v443 = vpop.f32.mrb[0].mxu0
    %v444 = vadd.f32 %v165, %v443
    %v445 = vpop.f32.mrb[0].mxu0
    %v446 = vadd.f32 %v169, %v445
    %447 = vmatprep.mubr.f32.mxu0 0.0
    %448 = vmatmul.mubr.f32.gmra.mrb[0].mxu0 %v80
    %v449 = vpop.f32.mrb[0].mxu0
    %v450 = vadd.f32 %v165, %v449
    %v451 = vpop.f32.mrb[0].mxu0
    %v452 = vadd.f32 %v169, %v451
    %453 = vmatprep.mubr.f32.mxu0 0.0
    %454 = vmatmul.mubr.f32.gmra.mrb[0].mxu0 %v81
    %v455 = vpop.f32.mrb[0].mxu0
    %v456 = vadd.f32 %v165, %v455
    %v457 = vpop.f32.mrb[0].mxu0
    %v458 = vadd.f32 %v169, %v457
    %459 = vmatprep.mubr.f32.mxu0 0.0
    %460 = vmatmul.mubr.f32.gmra.mrb[0].mxu0 %v82
    %v461 = vpop.f32.mrb[0].mxu0
    %v462 = vadd.f32 %v165, %v461
    %v463 = vpop.f32.mrb[0].mxu0
    %v464 = vadd.f32 %v169, %v463
    %465 = vmatprep.mubr.f32.mxu0 0.0
    %466 = vmatmul.mubr.f32.gmra.mrb[0].mxu0 %v83
    %v467 = vpop.f32.mrb[0].mxu0
    %v468 = vadd.f32 %v165, %v467
    %v469 = vpop.f32.mrb[0].mxu0
    %v470 = vadd.f32 %v169, %v469
    %471 = vmatprep.mubr.f32.mxu0 0.0
    %472 = vmatmul.mubr.f32.gmra.mrb[0].mxu0 %v84
    %v473 = vpop.f32.mrb[0].mxu0
    %v474 = vadd.f32 %v165, %v473
    %v475 = vpop.f32.mrb[0].mxu0
    %v476 = vadd.f32 %v169, %v475
    %477 = vmatprep.mubr.f32.mxu0 0.0
    %478 = vmatmul.mubr.f32.gmra.mrb[0].mxu0 %v85
    %v479 = vpop.f32.mrb[0].mxu0
    %v480 = vadd.f32 %v165, %v479
    %v481 = vpop.f32.mrb[0].mxu0
    %v482 = vadd.f32 %v169, %v481
    %483 = vmatprep.mubr.f32.mxu0 0.0
    %484 = vmatmul.mubr.f32.gmra.mrb[0].mxu0 %v86
    %v485 = vpop.f32.mrb[0].mxu0
    %v486 = vadd.f32 %v165, %v485
    %v487 = vpop.f32.mrb[0].mxu0
    %v488 = vadd.f32 %v169, %v487
    %489 = vmatprep.mubr.f32.mxu0 0.0
    %490 = vmatmul.mubr.f32.gmra.mrb[0].mxu0 %v87
    %v491 = vpop.f32.mrb[0].mxu0
    %v492 = vadd.f32 %v165, %v491
    %v493 = vpop.f32.mrb[0].mxu0
    %v494 = vadd.f32 %v169, %v493
    %495 = vdwg.mxu0
    %496 = vst [vmem:[#allocation2] sm:$0xff] %v241
    %497 = vst [vmem:[#allocation2 + $0x8] sm:$0xff] %v243
    %498 = vst [vmem:[#allocation2 + $0x10] sm:$0xff] %v402
    %499 = vst [vmem:[#allocation2 + $0x18] sm:$0xff] %v404
    %500 = vst [vmem:[#allocation2 + $0x20] sm:$0xff] %v247
    %501 = vst [vmem:[#allocation2 + $0x28] sm:$0xff] %v249
    %502 = vst [vmem:[#allocation2 + $0x30] sm:$0xff] %v408
    %503 = vst [vmem:[#allocation2 + $0x38] sm:$0xff] %v410
    %504 = vst [vmem:[#allocation2 + $0x40] sm:$0xff] %v253
    %505 = vst [vmem:[#allocation2 + $0x48] sm:$0xff] %v255
    %506 = vst [vmem:[#allocation2 + $0x50] sm:$0xff] %v414
    %507 = vst [vmem:[#allocation2 + $0x58] sm:$0xff] %v416
    %508 = vst [vmem:[#allocation2 + $0x60] sm:$0xff] %v259
    %509 = vst [vmem:[#allocation2 + $0x68] sm:$0xff] %v261
    %510 = vst [vmem:[#allocation2 + $0x70] sm:$0xff] %v420
    %511 = vst [vmem:[#allocation2 + $0x78] sm:$0xff] %v422
    %512 = vst [vmem:[#allocation2 + $0x80] sm:$0xff] %v265
    %513 = vst [vmem:[#allocation2 + $0x88] sm:$0xff] %v267
    %514 = vst [vmem:[#allocation2 + $0x90] sm:$0xff] %v426
    %515 = vst [vmem:[#allocation2 + $0x98] sm:$0xff] %v428
    %516 = vst [vmem:[#allocation2 + $0xa0] sm:$0xff] %v271
    %517 = vst [vmem:[#allocation2 + $0xa8] sm:$0xff] %v273
    %518 = vst [vmem:[#allocation2 + $0xb0] sm:$0xff] %v432
    %519 = vst [vmem:[#allocation2 + $0xb8] sm:$0xff] %v434
    %520 = vst [vmem:[#allocation2 + $0xc0] sm:$0xff] %v277
    %521 = vst [vmem:[#allocation2 + $0xc8] sm:$0xff] %v279
    %522 = vst [vmem:[#allocation2 + $0xd0] sm:$0xff] %v438
    %523 = vst [vmem:[#allocation2 + $0xd8] sm:$0xff] %v440
    %524 = vst [vmem:[#allocation2 + $0xe0] sm:$0xff] %v283
    %525 = vst [vmem:[#allocation2 + $0xe8] sm:$0xff] %v285
    %526 = vst [vmem:[#allocation2 + $0xf0] sm:$0xff] %v444
    %527 = vst [vmem:[#allocation2 + $0xf8] sm:$0xff] %v446
    %528 = vst [vmem:[#allocation2 + $0x100] sm:$0xff] %v289
    %529 = vst [vmem:[#allocation2 + $0x108] sm:$0xff] %v291
    %530 = vst [vmem:[#allocation2 + $0x110] sm:$0xff] %v450
    %531 = vst [vmem:[#allocation2 + $0x118] sm:$0xff] %v452
    %532 = vst [vmem:[#allocation2 + $0x120] sm:$0xff] %v295
    %533 = vst [vmem:[#allocation2 + $0x128] sm:$0xff] %v297
    %534 = vst [vmem:[#allocation2 + $0x130] sm:$0xff] %v456
    %535 = vst [vmem:[#allocation2 + $0x138] sm:$0xff] %v458
    %536 = vst [vmem:[#allocation2 + $0x140] sm:$0xff] %v301
    %537 = vst [vmem:[#allocation2 + $0x148] sm:$0xff] %v303
    %538 = vst [vmem:[#allocation2 + $0x150] sm:$0xff] %v462
    %539 = vst [vmem:[#allocation2 + $0x158] sm:$0xff] %v464
    %540 = vst [vmem:[#allocation2 + $0x160] sm:$0xff] %v307
    %541 = vst [vmem:[#allocation2 + $0x168] sm:$0xff] %v309
    %542 = vst [vmem:[#allocation2 + $0x170] sm:$0xff] %v468
    %543 = vst [vmem:[#allocation2 + $0x178] sm:$0xff] %v470
    %544 = vst [vmem:[#allocation2 + $0x180] sm:$0xff] %v313
    %545 = vst [vmem:[#allocation2 + $0x188] sm:$0xff] %v315
    %546 = vst [vmem:[#allocation2 + $0x190] sm:$0xff] %v474
    %547 = vst [vmem:[#allocation2 + $0x198] sm:$0xff] %v476
    %548 = vst [vmem:[#allocation2 + $0x1a0] sm:$0xff] %v319
    %549 = vst [vmem:[#allocation2 + $0x1a8] sm:$0xff] %v321
    %550 = vst [vmem:[#allocation2 + $0x1b0] sm:$0xff] %v480
    %551 = vst [vmem:[#allocation2 + $0x1b8] sm:$0xff] %v482
    %552 = vst [vmem:[#allocation2 + $0x1c0] sm:$0xff] %v325
    %553 = vst [vmem:[#allocation2 + $0x1c8] sm:$0xff] %v327
    %554 = vst [vmem:[#allocation2 + $0x1d0] sm:$0xff] %v486
    %555 = vst [vmem:[#allocation2 + $0x1d8] sm:$0xff] %v488
    %556 = vst [vmem:[#allocation2 + $0x1e0] sm:$0xff] %v331
    %557 = vst [vmem:[#allocation2 + $0x1e8] sm:$0xff] %v333
    %558 = vst [vmem:[#allocation2 + $0x1f0] sm:$0xff] %v492
    %559 = vst [vmem:[#allocation2 + $0x1f8] sm:$0xff] %v494
    %s560 = smul.u32 0, 4
    %s561 = smul.addr %s560, 8
    %s562 = scalar_lea.vmem [#allocation2], %s561
    %v563 = vld [vmem:[%s562] sm:$0xff]
    %v564 = vld [vmem:[%s562 + $0x8] sm:$0xff]
    %v565 = vld [vmem:[%s562 + $0x10] sm:$0xff]
    %v566 = vld [vmem:[%s562 + $0x18] sm:$0xff]
    %v567 = vld [vmem:[%s3] sm:$0xff]
    %v568 = vld [vmem:[%s3 + $0x8] sm:$0xff]
    %v569 = vld [vmem:[%s3 + $0x10] sm:$0xff]
    %v570 = vld [vmem:[%s3 + $0x18] sm:$0xff]
    %v571 = vld [vmem:[%s3 + $0x20] sm:$0xff]
    %v572 = vld [vmem:[%s3 + $0x28] sm:$0xff]
    %v573 = vld [vmem:[%s3 + $0x30] sm:$0xff]
    %v574 = vld [vmem:[%s3 + $0x38] sm:$0xff]
    %v575 = vld [vmem:[%s3 + $0x40] sm:$0xff]
    %v576 = vld [vmem:[%s3 + $0x48] sm:$0xff]
    %v577 = vld [vmem:[%s3 + $0x50] sm:$0xff]
    %v578 = vld [vmem:[%s3 + $0x58] sm:$0xff]
    %v579 = vld [vmem:[%s3 + $0x60] sm:$0xff]
    %v580 = vld [vmem:[%s3 + $0x68] sm:$0xff]
    %v581 = vld [vmem:[%s3 + $0x70] sm:$0xff]
    %v582 = vld [vmem:[%s3 + $0x78] sm:$0xff]
    %v583 = vld [vmem:[%s3 + $0x80] sm:$0xff]
    %v584 = vld [vmem:[%s3 + $0x88] sm:$0xff]
    %v585 = vld [vmem:[%s3 + $0x90] sm:$0xff]
    %v586 = vld [vmem:[%s3 + $0x98] sm:$0xff]
    %v587 = vld [vmem:[%s3 + $0xa0] sm:$0xff]
    %v588 = vld [vmem:[%s3 + $0xa8] sm:$0xff]
    %v589 = vld [vmem:[%s3 + $0xb0] sm:$0xff]
    %v590 = vld [vmem:[%s3 + $0xb8] sm:$0xff]
    %v591 = vld [vmem:[%s3 + $0xc0] sm:$0xff]
    %v592 = vld [vmem:[%s3 + $0xc8] sm:$0xff]
    %v593 = vld [vmem:[%s3 + $0xd0] sm:$0xff]
    %v594 = vld [vmem:[%s3 + $0xd8] sm:$0xff]
    %v595 = vld [vmem:[%s3 + $0xe0] sm:$0xff]
    %v596 = vld [vmem:[%s3 + $0xe8] sm:$0xff]
    %v597 = vld [vmem:[%s3 + $0xf0] sm:$0xff]
    %v598 = vld [vmem:[%s3 + $0xf8] sm:$0xff]
    %v599 = vld [vmem:[%s3 + $0x100] sm:$0xff]
    %v600 = vld [vmem:[%s3 + $0x108] sm:$0xff]
    %v601 = vld [vmem:[%s3 + $0x110] sm:$0xff]
    %v602 = vld [vmem:[%s3 + $0x118] sm:$0xff]
    %v603 = vld [vmem:[%s3 + $0x120] sm:$0xff]
    %v604 = vld [vmem:[%s3 + $0x128] sm:$0xff]
    %v605 = vld [vmem:[%s3 + $0x130] sm:$0xff]
    %v606 = vld [vmem:[%s3 + $0x138] sm:$0xff]
    %v607 = vld [vmem:[%s3 + $0x140] sm:$0xff]
    %v608 = vld [vmem:[%s3 + $0x148] sm:$0xff]
    %v609 = vld [vmem:[%s3 + $0x150] sm:$0xff]
    %v610 = vld [vmem:[%s3 + $0x158] sm:$0xff]
    %v611 = vld [vmem:[%s3 + $0x160] sm:$0xff]
    %v612 = vld [vmem:[%s3 + $0x168] sm:$0xff]
    %v613 = vld [vmem:[%s3 + $0x170] sm:$0xff]
    %v614 = vld [vmem:[%s3 + $0x178] sm:$0xff]
    %v615 = vld [vmem:[%s3 + $0x180] sm:$0xff]
    %v616 = vld [vmem:[%s3 + $0x188] sm:$0xff]
    %v617 = vld [vmem:[%s3 + $0x190] sm:$0xff]
    %v618 = vld [vmem:[%s3 + $0x198] sm:$0xff]
    %v619 = vld [vmem:[%s3 + $0x1a0] sm:$0xff]
    %v620 = vld [vmem:[%s3 + $0x1a8] sm:$0xff]
    %v621 = vld [vmem:[%s3 + $0x1b0] sm:$0xff]
    %v622 = vld [vmem:[%s3 + $0x1b8] sm:$0xff]
    %v623 = vld [vmem:[%s3 + $0x1c0] sm:$0xff]
    %v624 = vld [vmem:[%s3 + $0x1c8] sm:$0xff]
    %v625 = vld [vmem:[%s3 + $0x1d0] sm:$0xff]
    %v626 = vld [vmem:[%s3 + $0x1d8] sm:$0xff]
    %v627 = vld [vmem:[%s3 + $0x1e0] sm:$0xff]
    %v628 = vld [vmem:[%s3 + $0x1e8] sm:$0xff]
    %v629 = vld [vmem:[%s3 + $0x1f0] sm:$0xff]
    %v630 = vld [vmem:[%s3 + $0x1f8] sm:$0xff]
    %631 = vmatprep.subr.mxu0 %v568
    %632 = vmatpush1.msra.mxu0 %v567
    %633 = vmatprep.subr.mxu0 %v572
    %634 = vmatpush1.msra.mxu0 %v571
    %635 = vmatprep.subr.mxu0 %v576
    %636 = vmatpush1.msra.mxu0 %v575
    %637 = vmatprep.subr.mxu0 %v580
    %638 = vmatpush1.msra.mxu0 %v579
    %639 = vmatprep.subr.mxu0 %v584
    %640 = vmatpush1.msra.mxu0 %v583
    %641 = vmatprep.subr.mxu0 %v588
    %642 = vmatpush1.msra.mxu0 %v587
    %643 = vmatprep.subr.mxu0 %v592
    %644 = vmatpush1.msra.mxu0 %v591
    %645 = vmatprep.subr.mxu0 %v596
    %646 = vmatpush1.msra.mxu0 %v595
    %647 = vmatprep.subr.mxu0 %v600
    %648 = vmatpush1.msra.mxu0 %v599
    %649 = vmatprep.subr.mxu0 %v604
    %650 = vmatpush1.msra.mxu0 %v603
    %651 = vmatprep.subr.mxu0 %v608
    %652 = vmatpush1.msra.mxu0 %v607
    %653 = vmatprep.subr.mxu0 %v612
    %654 = vmatpush1.msra.mxu0 %v611
    %655 = vmatprep.subr.mxu0 %v616
    %656 = vmatpush1.msra.mxu0 %v615
    %657 = vmatprep.subr.mxu0 %v620
    %658 = vmatpush1.msra.mxu0 %v619
    %659 = vmatprep.subr.mxu0 %v624
    %660 = vmatpush1.msra.mxu0 %v623
    %661 = vmatprep.subr.mxu0 %v628
    %662 = vmatpush1.msra.mxu0 %v627
    %663 = vmatprep.subr.mxu0 0.0
    %664 = vmatpush1.msra.mxu0 0.0
    %665 = vmatprep.subr.mxu0 0.0
    %666 = vmatpush1.msra.mxu0 0.0
    %667 = vmatprep.subr.mxu0 0.0
    %668 = vmatpush1.msra.mxu0 0.0
    %669 = vmatprep.subr.mxu0 0.0
    %670 = vmatpush1.msra.mxu0 0.0
    %671 = vmatprep.subr.mxu0 0.0
    %672 = vmatpush1.msra.mxu0 0.0
    %673 = vmatprep.subr.mxu0 0.0
    %674 = vmatpush1.msra.mxu0 0.0
    %675 = vmatprep.subr.mxu0 0.0
    %676 = vmatpush1.msra.mxu0 0.0
    %677 = vmatprep.subr.mxu0 0.0
    %678 = vmatpush1.msra.mxu0 0.0
    %679 = vmatprep.subr.mxu0 0.0
    %680 = vmatpush1.msra.mxu0 0.0
    %681 = vmatprep.subr.mxu0 0.0
    %682 = vmatpush1.msra.mxu0 0.0
    %683 = vmatprep.subr.mxu0 0.0
    %684 = vmatpush1.msra.mxu0 0.0
    %685 = vmatprep.subr.mxu0 0.0
    %686 = vmatpush1.msra.mxu0 0.0
    %687 = vmatprep.subr.mxu0 0.0
    %688 = vmatpush1.msra.mxu0 0.0
    %689 = vmatprep.subr.mxu0 0.0
    %690 = vmatpush1.msra.mxu0 0.0
    %691 = vmatprep.subr.mxu0 0.0
    %692 = vmatpush1.msra.mxu0 0.0
    %693 = vmatprep.subr.mxu0 0.0
    %694 = vmatpush1.msra.mxu0 0.0
    %695 = vmatprep.mubr.f32.mxu0 0.0
    %696 = vmatmul.mubr.f32.gmra.mrb[0].mxu0 0.0
    %v697 = vpop.f32.mrb[0].mxu0
    %v698 = vadd.f32 0.0, %v697
    %v699 = vpop.f32.mrb[0].mxu0
    %v700 = vadd.f32 0.0, %v699
    %701 = vdwg.mxu0
    %702 = vmatprep.subr.mxu0 %v570
    %703 = vmatpush1.msra.mxu0 %v569
    %704 = vmatprep.subr.mxu0 %v574
    %705 = vmatpush1.msra.mxu0 %v573
    %706 = vmatprep.subr.mxu0 %v578
    %707 = vmatpush1.msra.mxu0 %v577
    %708 = vmatprep.subr.mxu0 %v582
    %709 = vmatpush1.msra.mxu0 %v581
    %710 = vmatprep.subr.mxu0 %v586
    %711 = vmatpush1.msra.mxu0 %v585
    %712 = vmatprep.subr.mxu0 %v590
    %713 = vmatpush1.msra.mxu0 %v589
    %714 = vmatprep.subr.mxu0 %v594
    %715 = vmatpush1.msra.mxu0 %v593
    %716 = vmatprep.subr.mxu0 %v598
    %717 = vmatpush1.msra.mxu0 %v597
    %718 = vmatprep.subr.mxu0 %v602
    %719 = vmatpush1.msra.mxu0 %v601
    %720 = vmatprep.subr.mxu0 %v606
    %721 = vmatpush1.msra.mxu0 %v605
    %722 = vmatprep.subr.mxu0 %v610
    %723 = vmatpush1.msra.mxu0 %v609
    %724 = vmatprep.subr.mxu0 %v614
    %725 = vmatpush1.msra.mxu0 %v613
    %726 = vmatprep.subr.mxu0 %v618
    %727 = vmatpush1.msra.mxu0 %v617
    %728 = vmatprep.subr.mxu0 %v622
    %729 = vmatpush1.msra.mxu0 %v621
    %730 = vmatprep.subr.mxu0 %v626
    %731 = vmatpush1.msra.mxu0 %v625
    %732 = vmatprep.subr.mxu0 %v630
    %733 = vmatpush1.msra.mxu0 %v629
    %734 = vmatprep.subr.mxu0 0.0
    %735 = vmatpush1.msra.mxu0 0.0
    %736 = vmatprep.subr.mxu0 0.0
    %737 = vmatpush1.msra.mxu0 0.0
    %738 = vmatprep.subr.mxu0 0.0
    %739 = vmatpush1.msra.mxu0 0.0
    %740 = vmatprep.subr.mxu0 0.0
    %741 = vmatpush1.msra.mxu0 0.0
    %742 = vmatprep.subr.mxu0 0.0
    %743 = vmatpush1.msra.mxu0 0.0
    %744 = vmatprep.subr.mxu0 0.0
    %745 = vmatpush1.msra.mxu0 0.0
    %746 = vmatprep.subr.mxu0 0.0
    %747 = vmatpush1.msra.mxu0 0.0
    %748 = vmatprep.subr.mxu0 0.0
    %749 = vmatpush1.msra.mxu0 0.0
    %750 = vmatprep.subr.mxu0 0.0
    %751 = vmatpush1.msra.mxu0 0.0
    %752 = vmatprep.subr.mxu0 0.0
    %753 = vmatpush1.msra.mxu0 0.0
    %754 = vmatprep.subr.mxu0 0.0
    %755 = vmatpush1.msra.mxu0 0.0
    %756 = vmatprep.subr.mxu0 0.0
    %757 = vmatpush1.msra.mxu0 0.0
    %758 = vmatprep.subr.mxu0 0.0
    %759 = vmatpush1.msra.mxu0 0.0
    %760 = vmatprep.subr.mxu0 0.0
    %761 = vmatpush1.msra.mxu0 0.0
    %762 = vmatprep.subr.mxu0 0.0
    %763 = vmatpush1.msra.mxu0 0.0
    %764 = vmatprep.subr.mxu0 0.0
    %765 = vmatpush1.msra.mxu0 0.0
    %766 = vmatprep.mubr.f32.mxu0 0.0
    %767 = vmatmul.mubr.f32.gmra.mrb[0].mxu0 0.0
    %v768 = vpop.f32.mrb[0].mxu0
    %v769 = vadd.f32 0.0, %v768
    %v770 = vpop.f32.mrb[0].mxu0
    %v771 = vadd.f32 0.0, %v770
    %772 = vdwg.mxu0
    %v773 = vadd.f32 %v563, %v698
    %v774 = vadd.f32 %v564, %v700
    %v775 = vadd.f32 %v565, %v769
    %v776 = vadd.f32 %v566, %v771
    %v777 = vmul.f32 %v773, 0.5
    %v778 = vtanh.pop %v777
    %v779 = vmul.f32 %v778, 0.5
    %v780 = vadd.f32 %v779, 0.5
    %v781 = vmul.f32 %v774, 0.5
    %v782 = vtanh.pop %v781
    %v783 = vmul.f32 %v782, 0.5
    %v784 = vadd.f32 %v783, 0.5
    %v785 = vtanh.pop %v775
    %v786 = vmul.f32 %v776, 0.5
    %v787 = vtanh.pop %v786
    %v788 = vmul.f32 %v787, 0.5
    %v789 = vadd.f32 %v788, 0.5
    %v790 = vmul.f32 %v784, 0.0
    %v791 = vmul.f32 %v780, %v785
    %v792 = vadd.f32 %v790, %v791
    %v793 = vtanh.pop %v792
    %v794 = vmul.f32 %v789, %v793
    %795 = vst [vmem:[#allocation3] sm:$0xff] %v794
    %s796 = scalar_lea.vmem [#allocation4], 120
    %797 = vst [vmem:[%s796] sm:$0xff] %v794
    %s798 = smul.u32 1, 4
    %s799 = smul.addr %s798, 8
    %s800 = scalar_lea.vmem [#allocation2], %s799
    %v801 = vld [vmem:[%s800] sm:$0xff]
    %v802 = vld [vmem:[%s800 + $0x8] sm:$0xff]
    %v803 = vld [vmem:[%s800 + $0x10] sm:$0xff]
    %v804 = vld [vmem:[%s800 + $0x18] sm:$0xff]
    %v805 = vld [vmem:[%s3] sm:$0xff]
    %v806 = vld [vmem:[%s3 + $0x8] sm:$0xff]
    %v807 = vld [vmem:[%s3 + $0x10] sm:$0xff]
    %v808 = vld [vmem:[%s3 + $0x18] sm:$0xff]
    %v809 = vld [vmem:[%s3 + $0x20] sm:$0xff]
    %v810 = vld [vmem:[%s3 + $0x28] sm:$0xff]
    %v811 = vld [vmem:[%s3 + $0x30] sm:$0xff]
    %v812 = vld [vmem:[%s3 + $0x38] sm:$0xff]
    %v813 = vld [vmem:[%s3 + $0x40] sm:$0xff]
    %v814 = vld [vmem:[%s3 + $0x48] sm:$0xff]
    %v815 = vld [vmem:[%s3 + $0x50] sm:$0xff]
    %v816 = vld [vmem:[%s3 + $0x58] sm:$0xff]
    %v817 = vld [vmem:[%s3 + $0x60] sm:$0xff]
    %v818 = vld [vmem:[%s3 + $0x68] sm:$0xff]
    %v819 = vld [vmem:[%s3 + $0x70] sm:$0xff]
    %v820 = vld [vmem:[%s3 + $0x78] sm:$0xff]
    %v821 = vld [vmem:[%s3 + $0x80] sm:$0xff]
    %v822 = vld [vmem:[%s3 + $0x88] sm:$0xff]
    %v823 = vld [vmem:[%s3 + $0x90] sm:$0xff]
    %v824 = vld [vmem:[%s3 + $0x98] sm:$0xff]
    %v825 = vld [vmem:[%s3 + $0xa0] sm:$0xff]
    %v826 = vld [vmem:[%s3 + $0xa8] sm:$0xff]
    %v827 = vld [vmem:[%s3 + $0xb0] sm:$0xff]
    %v828 = vld [vmem:[%s3 + $0xb8] sm:$0xff]
    %v829 = vld [vmem:[%s3 + $0xc0] sm:$0xff]
    %v830 = vld [vmem:[%s3 + $0xc8] sm:$0xff]
    %v831 = vld [vmem:[%s3 + $0xd0] sm:$0xff]
    %v832 = vld [vmem:[%s3 + $0xd8] sm:$0xff]
    %v833 = vld [vmem:[%s3 + $0xe0] sm:$0xff]
    %v834 = vld [vmem:[%s3 + $0xe8] sm:$0xff]
    %v835 = vld [vmem:[%s3 + $0xf0] sm:$0xff]
    %v836 = vld [vmem:[%s3 + $0xf8] sm:$0xff]
    %v837 = vld [vmem:[%s3 + $0x100] sm:$0xff]
    %v838 = vld [vmem:[%s3 + $0x108] sm:$0xff]
    %v839 = vld [vmem:[%s3 + $0x110] sm:$0xff]
    %v840 = vld [vmem:[%s3 + $0x118] sm:$0xff]
    %v841 = vld [vmem:[%s3 + $0x120] sm:$0xff]
    %v842 = vld [vmem:[%s3 + $0x128] sm:$0xff]
    %v843 = vld [vmem:[%s3 + $0x130] sm:$0xff]
    %v844 = vld [vmem:[%s3 + $0x138] sm:$0xff]
    %v845 = vld [vmem:[%s3 + $0x140] sm:$0xff]
    %v846 = vld [vmem:[%s3 + $0x148] sm:$0xff]
    %v847 = vld [vmem:[%s3 + $0x150] sm:$0xff]
    %v848 = vld [vmem:[%s3 + $0x158] sm:$0xff]
    %v849 = vld [vmem:[%s3 + $0x160] sm:$0xff]
    %v850 = vld [vmem:[%s3 + $0x168] sm:$0xff]
    %v851 = vld [vmem:[%s3 + $0x170] sm:$0xff]
    %v852 = vld [vmem:[%s3 + $0x178] sm:$0xff]
    %v853 = vld [vmem:[%s3 + $0x180] sm:$0xff]
    %v854 = vld [vmem:[%s3 + $0x188] sm:$0xff]
    %v855 = vld [vmem:[%s3 + $0x190] sm:$0xff]
    %v856 = vld [vmem:[%s3 + $0x198] sm:$0xff]
    %v857 = vld [vmem:[%s3 + $0x1a0] sm:$0xff]
    %v858 = vld [vmem:[%s3 + $0x1a8] sm:$0xff]
    %v859 = vld [vmem:[%s3 + $0x1b0] sm:$0xff]
    %v860 = vld [vmem:[%s3 + $0x1b8] sm:$0xff]
    %v861 = vld [vmem:[%s3 + $0x1c0] sm:$0xff]
    %v862 = vld [vmem:[%s3 + $0x1c8] sm:$0xff]
    %v863 = vld [vmem:[%s3 + $0x1d0] sm:$0xff]
    %v864 = vld [vmem:[%s3 + $0x1d8] sm:$0xff]
    %v865 = vld [vmem:[%s3 + $0x1e0] sm:$0xff]
    %v866 = vld [vmem:[%s3 + $0x1e8] sm:$0xff]
    %v867 = vld [vmem:[%s3 + $0x1f0] sm:$0xff]
    %v868 = vld [vmem:[%s3 + $0x1f8] sm:$0xff]
    %869 = vmatprep.subr.mxu0 %v806
    %870 = vmatpush1.msra.mxu0 %v805
    %871 = vmatprep.subr.mxu0 %v810
    %872 = vmatpush1.msra.mxu0 %v809
    %873 = vmatprep.subr.mxu0 %v814
    %874 = vmatpush1.msra.mxu0 %v813
    %875 = vmatprep.subr.mxu0 %v818
    %876 = vmatpush1.msra.mxu0 %v817
    %877 = vmatprep.subr.mxu0 %v822
    %878 = vmatpush1.msra.mxu0 %v821
    %879 = vmatprep.subr.mxu0 %v826
    %880 = vmatpush1.msra.mxu0 %v825
    %881 = vmatprep.subr.mxu0 %v830
    %882 = vmatpush1.msra.mxu0 %v829
    %883 = vmatprep.subr.mxu0 %v834
    %884 = vmatpush1.msra.mxu0 %v833
    %885 = vmatprep.subr.mxu0 %v838
    %886 = vmatpush1.msra.mxu0 %v837
    %887 = vmatprep.subr.mxu0 %v842
    %888 = vmatpush1.msra.mxu0 %v841
    %889 = vmatprep.subr.mxu0 %v846
    %890 = vmatpush1.msra.mxu0 %v845
    %891 = vmatprep.subr.mxu0 %v850
    %892 = vmatpush1.msra.mxu0 %v849
    %893 = vmatprep.subr.mxu0 %v854
    %894 = vmatpush1.msra.mxu0 %v853
    %895 = vmatprep.subr.mxu0 %v858
    %896 = vmatpush1.msra.mxu0 %v857
    %897 = vmatprep.subr.mxu0 %v862
    %898 = vmatpush1.msra.mxu0 %v861
    %899 = vmatprep.subr.mxu0 %v866
    %900 = vmatpush1.msra.mxu0 %v865
    %901 = vmatprep.subr.mxu0 0.0
    %902 = vmatpush1.msra.mxu0 0.0
    %903 = vmatprep.subr.mxu0 0.0
    %904 = vmatpush1.msra.mxu0 0.0
    %905 = vmatprep.subr.mxu0 0.0
    %906 = vmatpush1.msra.mxu0 0.0
    %907 = vmatprep.subr.mxu0 0.0
    %908 = vmatpush1.msra.mxu0 0.0
    %909 = vmatprep.subr.mxu0 0.0
    %910 = vmatpush1.msra.mxu0 0.0
    %911 = vmatprep.subr.mxu0 0.0
    %912 = vmatpush1.msra.mxu0 0.0
    %913 = vmatprep.subr.mxu0 0.0
    %914 = vmatpush1.msra.mxu0 0.0
    %915 = vmatprep.subr.mxu0 0.0
    %916 = vmatpush1.msra.mxu0 0.0
    %917 = vmatprep.subr.mxu0 0.0
    %918 = vmatpush1.msra.mxu0 0.0
    %919 = vmatprep.subr.mxu0 0.0
    %920 = vmatpush1.msra.mxu0 0.0
    %921 = vmatprep.subr.mxu0 0.0
    %922 = vmatpush1.msra.mxu0 0.0
    %923 = vmatprep.subr.mxu0 0.0
    %924 = vmatpush1.msra.mxu0 0.0
    %925 = vmatprep.subr.mxu0 0.0
    %926 = vmatpush1.msra.mxu0 0.0
    %927 = vmatprep.subr.mxu0 0.0
    %928 = vmatpush1.msra.mxu0 0.0
    %929 = vmatprep.subr.mxu0 0.0
    %930 = vmatpush1.msra.mxu0 0.0
    %931 = vmatprep.subr.mxu0 0.0
    %932 = vmatpush1.msra.mxu0 0.0
    %933 = vmatprep.mubr.f32.mxu0 0.0
    %934 = vmatmul.mubr.f32.gmra.mrb[0].mxu0 %v794
    %v935 = vpop.f32.mrb[0].mxu0
    %v936 = vadd.f32 0.0, %v935
    %v937 = vpop.f32.mrb[0].mxu0
    %v938 = vadd.f32 0.0, %v937
    %939 = vdwg.mxu0
    %940 = vmatprep.subr.mxu0 %v808
    %941 = vmatpush1.msra.mxu0 %v807
    %942 = vmatprep.subr.mxu0 %v812
    %943 = vmatpush1.msra.mxu0 %v811
    %944 = vmatprep.subr.mxu0 %v816
    %945 = vmatpush1.msra.mxu0 %v815
    %946 = vmatprep.subr.mxu0 %v820
    %947 = vmatpush1.msra.mxu0 %v819
    %948 = vmatprep.subr.mxu0 %v824
    %949 = vmatpush1.msra.mxu0 %v823
    %950 = vmatprep.subr.mxu0 %v828
    %951 = vmatpush1.msra.mxu0 %v827
    %952 = vmatprep.subr.mxu0 %v832
    %953 = vmatpush1.msra.mxu0 %v831
    %954 = vmatprep.subr.mxu0 %v836
    %955 = vmatpush1.msra.mxu0 %v835
    %956 = vmatprep.subr.mxu0 %v840
    %957 = vmatpush1.msra.mxu0 %v839
    %958 = vmatprep.subr.mxu0 %v844
    %959 = vmatpush1.msra.mxu0 %v843
    %960 = vmatprep.subr.mxu0 %v848
    %961 = vmatpush1.msra.mxu0 %v847
    %962 = vmatprep.subr.mxu0 %v852
    %963 = vmatpush1.msra.mxu0 %v851
    %964 = vmatprep.subr.mxu0 %v856
    %965 = vmatpush1.msra.mxu0 %v855
    %966 = vmatprep.subr.mxu0 %v860
    %967 = vmatpush1.msra.mxu0 %v859
    %968 = vmatprep.subr.mxu0 %v864
    %969 = vmatpush1.msra.mxu0 %v863
    %970 = vmatprep.subr.mxu0 %v868
    %971 = vmatpush1.msra.mxu0 %v867
    %972 = vmatprep.subr.mxu0 0.0
    %973 = vmatpush1.msra.mxu0 0.0
    %974 = vmatprep.subr.mxu0 0.0
    %975 = vmatpush1.msra.mxu0 0.0
    %976 = vmatprep.subr.mxu0 0.0
    %977 = vmatpush1.msra.mxu0 0.0
    %978 = vmatprep.subr.mxu0 0.0
    %979 = vmatpush1.msra.mxu0 0.0
    %980 = vmatprep.subr.mxu0 0.0
    %981 = vmatpush1.msra.mxu0 0.0
    %982 = vmatprep.subr.mxu0 0.0
    %983 = vmatpush1.msra.mxu0 0.0
    %984 = vmatprep.subr.mxu0 0.0
    %985 = vmatpush1.msra.mxu0 0.0
    %986 = vmatprep.subr.mxu0 0.0
    %987 = vmatpush1.msra.mxu0 0.0
    %988 = vmatprep.subr.mxu0 0.0
    %989 = vmatpush1.msra.mxu0 0.0
    %990 = vmatprep.subr.mxu0 0.0
    %991 = vmatpush1.msra.mxu0 0.0
    %992 = vmatprep.subr.mxu0 0.0
    %993 = vmatpush1.msra.mxu0 0.0
    %994 = vmatprep.subr.mxu0 0.0
    %995 = vmatpush1.msra.mxu0 0.0
    %996 = vmatprep.subr.mxu0 0.0
    %997 = vmatpush1.msra.mxu0 0.0
    %998 = vmatprep.subr.mxu0 0.0
    %999 = vmatpush1.msra.mxu0 0.0
    %1000 = vmatprep.subr.mxu0 0.0
    %1001 = vmatpush1.msra.mxu0 0.0
    %1002 = vmatprep.subr.mxu0 0.0
    %1003 = vmatpush1.msra.mxu0 0.0
    %1004 = vmatprep.mubr.f32.mxu0 0.0
    %1005 = vmatmul.mubr.f32.gmra.mrb[0].mxu0 %v794
    %v1006 = vpop.f32.mrb[0].mxu0
    %v1007 = vadd.f32 0.0, %v1006
    %v1008 = vpop.f32.mrb[0].mxu0
    %v1009 = vadd.f32 0.0, %v1008
    %1010 = vdwg.mxu0
    %v1011 = vadd.f32 %v801, %v936
    %v1012 = vadd.f32 %v802, %v938
    %v1013 = vadd.f32 %v803, %v1007
    %v1014 = vadd.f32 %v804, %v1009
    %v1015 = vmul.f32 %v1011, 0.5
    %v1016 = vtanh.pop %v1015
    %v1017 = vmul.f32 %v1016, 0.5
    %v1018 = vadd.f32 %v1017, 0.5
    %v1019 = vmul.f32 %v1012, 0.5
    %v1020 = vtanh.pop %v1019
    %v1021 = vmul.f32 %v1020, 0.5
    %v1022 = vadd.f32 %v1021, 0.5
    %v1023 = vtanh.pop %v1013
    %v1024 = vmul.f32 %v1014, 0.5
    %v1025 = vtanh.pop %v1024
    %v1026 = vmul.f32 %v1025, 0.5
    %v1027 = vadd.f32 %v1026, 0.5
    %v1028 = vmul.f32 %v1022, %v792
    %v1029 = vmul.f32 %v1018, %v1023
    %v1030 = vadd.f32 %v1028, %v1029
    %v1031 = vtanh.pop %v1030
    %v1032 = vmul.f32 %v1027, %v1031
    %s1033 = scalar_lea.vmem [#allocation3], 8
    %1034 = vst [vmem:[%s1033] sm:$0xff] %v1032
    %s1035 = scalar_lea.vmem [#allocation4], 112
    %1036 = vst [vmem:[%s1035] sm:$0xff] %v1032
    %s1037 = smul.u32 2, 4
    %s1038 = smul.addr %s1037, 8
    %s1039 = scalar_lea.vmem [#allocation2], %s1038
    %v1040 = vld [vmem:[%s1039] sm:$0xff]
    %v1041 = vld [vmem:[%s1039 + $0x8] sm:$0xff]
    %v1042 = vld [vmem:[%s1039 + $0x10] sm:$0xff]
    %v1043 = vld [vmem:[%s1039 + $0x18] sm:$0xff]
    %v1044 = vld [vmem:[%s3] sm:$0xff]
    %v1045 = vld [vmem:[%s3 + $0x8] sm:$0xff]
    %v1046 = vld [vmem:[%s3 + $0x10] sm:$0xff]
    %v1047 = vld [vmem:[%s3 + $0x18] sm:$0xff]
    %v1048 = vld [vmem:[%s3 + $0x20] sm:$0xff]
    %v1049 = vld [vmem:[%s3 + $0x28] sm:$0xff]
    %v1050 = vld [vmem:[%s3 + $0x30] sm:$0xff]
    %v1051 = vld [vmem:[%s3 + $0x38] sm:$0xff]
    %v1052 = vld [vmem:[%s3 + $0x40] sm:$0xff]
    %v1053 = vld [vmem:[%s3 + $0x48] sm:$0xff]
    %v1054 = vld [vmem:[%s3 + $0x50] sm:$0xff]
    %v1055 = vld [vmem:[%s3 + $0x58] sm:$0xff]
    %v1056 = vld [vmem:[%s3 + $0x60] sm:$0xff]
    %v1057 = vld [vmem:[%s3 + $0x68] sm:$0xff]
    %v1058 = vld [vmem:[%s3 + $0x70] sm:$0xff]
    %v1059 = vld [vmem:[%s3 + $0x78] sm:$0xff]
    %v1060 = vld [vmem:[%s3 + $0x80] sm:$0xff]
    %v1061 = vld [vmem:[%s3 + $0x88] sm:$0xff]
    %v1062 = vld [vmem:[%s3 + $0x90] sm:$0xff]
    %v1063 = vld [vmem:[%s3 + $0x98] sm:$0xff]
    %v1064 = vld [vmem:[%s3 + $0xa0] sm:$0xff]
    %v1065 = vld [vmem:[%s3 + $0xa8] sm:$0xff]
    %v1066 = vld [vmem:[%s3 + $0xb0] sm:$0xff]
    %v1067 = vld [vmem:[%s3 + $0xb8] sm:$0xff]
    %v1068 = vld [vmem:[%s3 + $0xc0] sm:$0xff]
    %v1069 = vld [vmem:[%s3 + $0xc8] sm:$0xff]
    %v1070 = vld [vmem:[%s3 + $0xd0] sm:$0xff]
    %v1071 = vld [vmem:[%s3 + $0xd8] sm:$0xff]
    %v1072 = vld [vmem:[%s3 + $0xe0] sm:$0xff]
    %v1073 = vld [vmem:[%s3 + $0xe8] sm:$0xff]
    %v1074 = vld [vmem:[%s3 + $0xf0] sm:$0xff]
    %v1075 = vld [vmem:[%s3 + $0xf8] sm:$0xff]
    %v1076 = vld [vmem:[%s3 + $0x100] sm:$0xff]
    %v1077 = vld [vmem:[%s3 + $0x108] sm:$0xff]
    %v1078 = vld [vmem:[%s3 + $0x110] sm:$0xff]
    %v1079 = vld [vmem:[%s3 + $0x118] sm:$0xff]
    %v1080 = vld [vmem:[%s3 + $0x120] sm:$0xff]
    %v1081 = vld [vmem:[%s3 + $0x128] sm:$0xff]
    %v1082 = vld [vmem:[%s3 + $0x130] sm:$0xff]
    %v1083 = vld [vmem:[%s3 + $0x138] sm:$0xff]
    %v1084 = vld [vmem:[%s3 + $0x140] sm:$0xff]
    %v1085 = vld [vmem:[%s3 + $0x148] sm:$0xff]
    %v1086 = vld [vmem:[%s3 + $0x150] sm:$0xff]
    %v1087 = vld [vmem:[%s3 + $0x158] sm:$0xff]
    %v1088 = vld [vmem:[%s3 + $0x160] sm:$0xff]
    %v1089 = vld [vmem:[%s3 + $0x168] sm:$0xff]
    %v1090 = vld [vmem:[%s3 + $0x170] sm:$0xff]
    %v1091 = vld [vmem:[%s3 + $0x178] sm:$0xff]
    %v1092 = vld [vmem:[%s3 + $0x180] sm:$0xff]
    %v1093 = vld [vmem:[%s3 + $0x188] sm:$0xff]
    %v1094 = vld [vmem:[%s3 + $0x190] sm:$0xff]
    %v1095 = vld [vmem:[%s3 + $0x198] sm:$0xff]
    %v1096 = vld [vmem:[%s3 + $0x1a0] sm:$0xff]
    %v1097 = vld [vmem:[%s3 + $0x1a8] sm:$0xff]
    %v1098 = vld [vmem:[%s3 + $0x1b0] sm:$0xff]
    %v1099 = vld [vmem:[%s3 + $0x1b8] sm:$0xff]
    %v1100 = vld [vmem:[%s3 + $0x1c0] sm:$0xff]
    %v1101 = vld [vmem:[%s3 + $0x1c8] sm:$0xff]
    %v1102 = vld [vmem:[%s3 + $0x1d0] sm:$0xff]
    %v1103 = vld [vmem:[%s3 + $0x1d8] sm:$0xff]
    %v1104 = vld [vmem:[%s3 + $0x1e0] sm:$0xff]
    %v1105 = vld [vmem:[%s3 + $0x1e8] sm:$0xff]
    %v1106 = vld [vmem:[%s3 + $0x1f0] sm:$0xff]
    %v1107 = vld [vmem:[%s3 + $0x1f8] sm:$0xff]
    %1108 = vmatprep.subr.mxu0 %v1045
    %1109 = vmatpush1.msra.mxu0 %v1044
    %1110 = vmatprep.subr.mxu0 %v1049
    %1111 = vmatpush1.msra.mxu0 %v1048
    %1112 = vmatprep.subr.mxu0 %v1053
    %1113 = vmatpush1.msra.mxu0 %v1052
    %1114 = vmatprep.subr.mxu0 %v1057
    %1115 = vmatpush1.msra.mxu0 %v1056
    %1116 = vmatprep.subr.mxu0 %v1061
    %1117 = vmatpush1.msra.mxu0 %v1060
    %1118 = vmatprep.subr.mxu0 %v1065
    %1119 = vmatpush1.msra.mxu0 %v1064
    %1120 = vmatprep.subr.mxu0 %v1069
    %1121 = vmatpush1.msra.mxu0 %v1068
    %1122 = vmatprep.subr.mxu0 %v1073
    %1123 = vmatpush1.msra.mxu0 %v1072
    %1124 = vmatprep.subr.mxu0 %v1077
    %1125 = vmatpush1.msra.mxu0 %v1076
    %1126 = vmatprep.subr.mxu0 %v1081
    %1127 = vmatpush1.msra.mxu0 %v1080
    %1128 = vmatprep.subr.mxu0 %v1085
    %1129 = vmatpush1.msra.mxu0 %v1084
    %1130 = vmatprep.subr.mxu0 %v1089
    %1131 = vmatpush1.msra.mxu0 %v1088
    %1132 = vmatprep.subr.mxu0 %v1093
    %1133 = vmatpush1.msra.mxu0 %v1092
    %1134 = vmatprep.subr.mxu0 %v1097
    %1135 = vmatpush1.msra.mxu0 %v1096
    %1136 = vmatprep.subr.mxu0 %v1101
    %1137 = vmatpush1.msra.mxu0 %v1100
    %1138 = vmatprep.subr.mxu0 %v1105
    %1139 = vmatpush1.msra.mxu0 %v1104
    %1140 = vmatprep.subr.mxu0 0.0
    %1141 = vmatpush1.msra.mxu0 0.0
    %1142 = vmatprep.subr.mxu0 0.0
    %1143 = vmatpush1.msra.mxu0 0.0
    %1144 = vmatprep.subr.mxu0 0.0
    %1145 = vmatpush1.msra.mxu0 0.0
    %1146 = vmatprep.subr.mxu0 0.0
    %1147 = vmatpush1.msra.mxu0 0.0
    %1148 = vmatprep.subr.mxu0 0.0
    %1149 = vmatpush1.msra.mxu0 0.0
    %1150 = vmatprep.subr.mxu0 0.0
    %1151 = vmatpush1.msra.mxu0 0.0
    %1152 = vmatprep.subr.mxu0 0.0
    %1153 = vmatpush1.msra.mxu0 0.0
    %1154 = vmatprep.subr.mxu0 0.0
    %1155 = vmatpush1.msra.mxu0 0.0
    %1156 = vmatprep.subr.mxu0 0.0
    %1157 = vmatpush1.msra.mxu0 0.0
    %1158 = vmatprep.subr.mxu0 0.0
    %1159 = vmatpush1.msra.mxu0 0.0
    %1160 = vmatprep.subr.mxu0 0.0
    %1161 = vmatpush1.msra.mxu0 0.0
    %1162 = vmatprep.subr.mxu0 0.0
    %1163 = vmatpush1.msra.mxu0 0.0
    %1164 = vmatprep.subr.mxu0 0.0
    %1165 = vmatpush1.msra.mxu0 0.0
    %1166 = vmatprep.subr.mxu0 0.0
    %1167 = vmatpush1.msra.mxu0 0.0
    %1168 = vmatprep.subr.mxu0 0.0
    %1169 = vmatpush1.msra.mxu0 0.0
    %1170 = vmatprep.subr.mxu0 0.0
    %1171 = vmatpush1.msra.mxu0 0.0
    %1172 = vmatprep.mubr.f32.mxu0 0.0
    %1173 = vmatmul.mubr.f32.gmra.mrb[0].mxu0 %v1032
    %v1174 = vpop.f32.mrb[0].mxu0
    %v1175 = vadd.f32 0.0, %v1174
    %v1176 = vpop.f32.mrb[0].mxu0
    %v1177 = vadd.f32 0.0, %v1176
    %1178 = vdwg.mxu0
    %1179 = vmatprep.subr.mxu0 %v1047
    %1180 = vmatpush1.msra.mxu0 %v1046
    %1181 = vmatprep.subr.mxu0 %v1051
    %1182 = vmatpush1.msra.mxu0 %v1050
    %1183 = vmatprep.subr.mxu0 %v1055
    %1184 = vmatpush1.msra.mxu0 %v1054
    %1185 = vmatprep.subr.mxu0 %v1059
    %1186 = vmatpush1.msra.mxu0 %v1058
    %1187 = vmatprep.subr.mxu0 %v1063
    %1188 = vmatpush1.msra.mxu0 %v1062
    %1189 = vmatprep.subr.mxu0 %v1067
    %1190 = vmatpush1.msra.mxu0 %v1066
    %1191 = vmatprep.subr.mxu0 %v1071
    %1192 = vmatpush1.msra.mxu0 %v1070
    %1193 = vmatprep.subr.mxu0 %v1075
    %1194 = vmatpush1.msra.mxu0 %v1074
    %1195 = vmatprep.subr.mxu0 %v1079
    %1196 = vmatpush1.msra.mxu0 %v1078
    %1197 = vmatprep.subr.mxu0 %v1083
    %1198 = vmatpush1.msra.mxu0 %v1082
    %1199 = vmatprep.subr.mxu0 %v1087
    %1200 = vmatpush1.msra.mxu0 %v1086
    %1201 = vmatprep.subr.mxu0 %v1091
    %1202 = vmatpush1.msra.mxu0 %v1090
    %1203 = vmatprep.subr.mxu0 %v1095
    %1204 = vmatpush1.msra.mxu0 %v1094
    %1205 = vmatprep.subr.mxu0 %v1099
    %1206 = vmatpush1.msra.mxu0 %v1098
    %1207 = vmatprep.subr.mxu0 %v1103
    %1208 = vmatpush1.msra.mxu0 %v1102
    %1209 = vmatprep.subr.mxu0 %v1107
    %1210 = vmatpush1.msra.mxu0 %v1106
    %1211 = vmatprep.subr.mxu0 0.0
    %1212 = vmatpush1.msra.mxu0 0.0
    %1213 = vmatprep.subr.mxu0 0.0
    %1214 = vmatpush1.msra.mxu0 0.0
    %1215 = vmatprep.subr.mxu0 0.0
    %1216 = vmatpush1.msra.mxu0 0.0
    %1217 = vmatprep.subr.mxu0 0.0
    %1218 = vmatpush1.msra.mxu0 0.0
    %1219 = vmatprep.subr.mxu0 0.0
    %1220 = vmatpush1.msra.mxu0 0.0
    %1221 = vmatprep.subr.mxu0 0.0
    %1222 = vmatpush1.msra.mxu0 0.0
    %1223 = vmatprep.subr.mxu0 0.0
    %1224 = vmatpush1.msra.mxu0 0.0
    %1225 = vmatprep.subr.mxu0 0.0
    %1226 = vmatpush1.msra.mxu0 0.0
    %1227 = vmatprep.subr.mxu0 0.0
    %1228 = vmatpush1.msra.mxu0 0.0
    %1229 = vmatprep.subr.mxu0 0.0
    %1230 = vmatpush1.msra.mxu0 0.0
    %1231 = vmatprep.subr.mxu0 0.0
    %1232 = vmatpush1.msra.mxu0 0.0
    %1233 = vmatprep.subr.mxu0 0.0
    %1234 = vmatpush1.msra.mxu0 0.0
    %1235 = vmatprep.subr.mxu0 0.0
    %1236 = vmatpush1.msra.mxu0 0.0
    %1237 = vmatprep.subr.mxu0 0.0
    %1238 = vmatpush1.msra.mxu0 0.0
    %1239 = vmatprep.subr.mxu0 0.0
    %1240 = vmatpush1.msra.mxu0 0.0
    %1241 = vmatprep.subr.mxu0 0.0
    %1242 = vmatpush1.msra.mxu0 0.0
    %1243 = vmatprep.mubr.f32.mxu0 0.0
    %1244 = vmatmul.mubr.f32.gmra.mrb[0].mxu0 %v1032
    %v1245 = vpop.f32.mrb[0].mxu0
    %v1246 = vadd.f32 0.0, %v1245
    %v1247 = vpop.f32.mrb[0].mxu0
    %v1248 = vadd.f32 0.0, %v1247
    %1249 = vdwg.mxu0
    %v1250 = vadd.f32 %v1040, %v1175
    %v1251 = vadd.f32 %v1041, %v1177
    %v1252 = vadd.f32 %v1042, %v1246
    %v1253 = vadd.f32 %v1043, %v1248
    %v1254 = vmul.f32 %v1250, 0.5
    %v1255 = vtanh.pop %v1254
    %v1256 = vmul.f32 %v1255, 0.5
    %v1257 = vadd.f32 %v1256, 0.5
    %v1258 = vmul.f32 %v1251, 0.5
    %v1259 = vtanh.pop %v1258
    %v1260 = vmul.f32 %v1259, 0.5
    %v1261 = vadd.f32 %v1260, 0.5
    %v1262 = vtanh.pop %v1252
    %v1263 = vmul.f32 %v1253, 0.5
    %v1264 = vtanh.pop %v1263
    %v1265 = vmul.f32 %v1264, 0.5
    %v1266 = vadd.f32 %v1265, 0.5
    %v1267 = vmul.f32 %v1261, %v1030
    %v1268 = vmul.f32 %v1257, %v1262
    %v1269 = vadd.f32 %v1267, %v1268
    %v1270 = vtanh.pop %v1269
    %v1271 = vmul.f32 %v1266, %v1270
    %s1272 = scalar_lea.vmem [#allocation3], 16
    %1273 = vst [vmem:[%s1272] sm:$0xff] %v1271
    %s1274 = scalar_lea.vmem [#allocation4], 104
    %1275 = vst [vmem:[%s1274] sm:$0xff] %v1271
    %s1276 = smul.u32 3, 4
    %s1277 = smul.addr %s1276, 8
    %s1278 = scalar_lea.vmem [#allocation2], %s1277
    %v1279 = vld [vmem:[%s1278] sm:$0xff]
    %v1280 = vld [vmem:[%s1278 + $0x8] sm:$0xff]
    %v1281 = vld [vmem:[%s1278 + $0x10] sm:$0xff]
    %v1282 = vld [vmem:[%s1278 + $0x18] sm:$0xff]
    %v1283 = vld [vmem:[%s3] sm:$0xff]
    %v1284 = vld [vmem:[%s3 + $0x8] sm:$0xff]
    %v1285 = vld [vmem:[%s3 + $0x10] sm:$0xff]
    %v1286 = vld [vmem:[%s3 + $0x18] sm:$0xff]
    %v1287 = vld [vmem:[%s3 + $0x20] sm:$0xff]
    %v1288 = vld [vmem:[%s3 + $0x28] sm:$0xff]
    %v1289 = vld [vmem:[%s3 + $0x30] sm:$0xff]
    %v1290 = vld [vmem:[%s3 + $0x38] sm:$0xff]
    %v1291 = vld [vmem:[%s3 + $0x40] sm:$0xff]
    %v1292 = vld [vmem:[%s3 + $0x48] sm:$0xff]
    %v1293 = vld [vmem:[%s3 + $0x50] sm:$0xff]
    %v1294 = vld [vmem:[%s3 + $0x58] sm:$0xff]
    %v1295 = vld [vmem:[%s3 + $0x60] sm:$0xff]
    %v1296 = vld [vmem:[%s3 + $0x68] sm:$0xff]
    %v1297 = vld [vmem:[%s3 + $0x70] sm:$0xff]
    %v1298 = vld [vmem:[%s3 + $0x78] sm:$0xff]
    %v1299 = vld [vmem:[%s3 + $0x80] sm:$0xff]
    %v1300 = vld [vmem:[%s3 + $0x88] sm:$0xff]
    %v1301 = vld [vmem:[%s3 + $0x90] sm:$0xff]
    %v1302 = vld [vmem:[%s3 + $0x98] sm:$0xff]
    %v1303 = vld [vmem:[%s3 + $0xa0] sm:$0xff]
    %v1304 = vld [vmem:[%s3 + $0xa8] sm:$0xff]
    %v1305 = vld [vmem:[%s3 + $0xb0] sm:$0xff]
    %v1306 = vld [vmem:[%s3 + $0xb8] sm:$0xff]
    %v1307 = vld [vmem:[%s3 + $0xc0] sm:$0xff]
    %v1308 = vld [vmem:[%s3 + $0xc8] sm:$0xff]
    %v1309 = vld [vmem:[%s3 + $0xd0] sm:$0xff]
    %v1310 = vld [vmem:[%s3 + $0xd8] sm:$0xff]
    %v1311 = vld [vmem:[%s3 + $0xe0] sm:$0xff]
    %v1312 = vld [vmem:[%s3 + $0xe8] sm:$0xff]
    %v1313 = vld [vmem:[%s3 + $0xf0] sm:$0xff]
    %v1314 = vld [vmem:[%s3 + $0xf8] sm:$0xff]
    %v1315 = vld [vmem:[%s3 + $0x100] sm:$0xff]
    %v1316 = vld [vmem:[%s3 + $0x108] sm:$0xff]
    %v1317 = vld [vmem:[%s3 + $0x110] sm:$0xff]
    %v1318 = vld [vmem:[%s3 + $0x118] sm:$0xff]
    %v1319 = vld [vmem:[%s3 + $0x120] sm:$0xff]
    %v1320 = vld [vmem:[%s3 + $0x128] sm:$0xff]
    %v1321 = vld [vmem:[%s3 + $0x130] sm:$0xff]
    %v1322 = vld [vmem:[%s3 + $0x138] sm:$0xff]
    %v1323 = vld [vmem:[%s3 + $0x140] sm:$0xff]
    %v1324 = vld [vmem:[%s3 + $0x148] sm:$0xff]
    %v1325 = vld [vmem:[%s3 + $0x150] sm:$0xff]
    %v1326 = vld [vmem:[%s3 + $0x158] sm:$0xff]
    %v1327 = vld [vmem:[%s3 + $0x160] sm:$0xff]
    %v1328 = vld [vmem:[%s3 + $0x168] sm:$0xff]
    %v1329 = vld [vmem:[%s3 + $0x170] sm:$0xff]
    %v1330 = vld [vmem:[%s3 + $0x178] sm:$0xff]
    %v1331 = vld [vmem:[%s3 + $0x180] sm:$0xff]
    %v1332 = vld [vmem:[%s3 + $0x188] sm:$0xff]
    %v1333 = vld [vmem:[%s3 + $0x190] sm:$0xff]
    %v1334 = vld [vmem:[%s3 + $0x198] sm:$0xff]
    %v1335 = vld [vmem:[%s3 + $0x1a0] sm:$0xff]
    %v1336 = vld [vmem:[%s3 + $0x1a8] sm:$0xff]
    %v1337 = vld [vmem:[%s3 + $0x1b0] sm:$0xff]
    %v1338 = vld [vmem:[%s3 + $0x1b8] sm:$0xff]
    %v1339 = vld [vmem:[%s3 + $0x1c0] sm:$0xff]
    %v1340 = vld [vmem:[%s3 + $0x1c8] sm:$0xff]
    %v1341 = vld [vmem:[%s3 + $0x1d0] sm:$0xff]
    %v1342 = vld [vmem:[%s3 + $0x1d8] sm:$0xff]
    %v1343 = vld [vmem:[%s3 + $0x1e0] sm:$0xff]
    %v1344 = vld [vmem:[%s3 + $0x1e8] sm:$0xff]
    %v1345 = vld [vmem:[%s3 + $0x1f0] sm:$0xff]
    %v1346 = vld [vmem:[%s3 + $0x1f8] sm:$0xff]
    %1347 = vmatprep.subr.mxu0 %v1284
    %1348 = vmatpush1.msra.mxu0 %v1283
    %1349 = vmatprep.subr.mxu0 %v1288
    %1350 = vmatpush1.msra.mxu0 %v1287
    %1351 = vmatprep.subr.mxu0 %v1292
    %1352 = vmatpush1.msra.mxu0 %v1291
    %1353 = vmatprep.subr.mxu0 %v1296
    %1354 = vmatpush1.msra.mxu0 %v1295
    %1355 = vmatprep.subr.mxu0 %v1300
    %1356 = vmatpush1.msra.mxu0 %v1299
    %1357 = vmatprep.subr.mxu0 %v1304
    %1358 = vmatpush1.msra.mxu0 %v1303
    %1359 = vmatprep.subr.mxu0 %v1308
    %1360 = vmatpush1.msra.mxu0 %v1307
    %1361 = vmatprep.subr.mxu0 %v1312
    %1362 = vmatpush1.msra.mxu0 %v1311
    %1363 = vmatprep.subr.mxu0 %v1316
    %1364 = vmatpush1.msra.mxu0 %v1315
    %1365 = vmatprep.subr.mxu0 %v1320
    %1366 = vmatpush1.msra.mxu0 %v1319
    %1367 = vmatprep.subr.mxu0 %v1324
    %1368 = vmatpush1.msra.mxu0 %v1323
    %1369 = vmatprep.subr.mxu0 %v1328
    %1370 = vmatpush1.msra.mxu0 %v1327
    %1371 = vmatprep.subr.mxu0 %v1332
    %1372 = vmatpush1.msra.mxu0 %v1331
    %1373 = vmatprep.subr.mxu0 %v1336
    %1374 = vmatpush1.msra.mxu0 %v1335
    %1375 = vmatprep.subr.mxu0 %v1340
    %1376 = vmatpush1.msra.mxu0 %v1339
    %1377 = vmatprep.subr.mxu0 %v1344
    %1378 = vmatpush1.msra.mxu0 %v1343
    %1379 = vmatprep.subr.mxu0 0.0
    %1380 = vmatpush1.msra.mxu0 0.0
    %1381 = vmatprep.subr.mxu0 0.0
    %1382 = vmatpush1.msra.mxu0 0.0
    %1383 = vmatprep.subr.mxu0 0.0
    %1384 = vmatpush1.msra.mxu0 0.0
    %1385 = vmatprep.subr.mxu0 0.0
    %1386 = vmatpush1.msra.mxu0 0.0
    %1387 = vmatprep.subr.mxu0 0.0
    %1388 = vmatpush1.msra.mxu0 0.0
    %1389 = vmatprep.subr.mxu0 0.0
    %1390 = vmatpush1.msra.mxu0 0.0
    %1391 = vmatprep.subr.mxu0 0.0
    %1392 = vmatpush1.msra.mxu0 0.0
    %1393 = vmatprep.subr.mxu0 0.0
    %1394 = vmatpush1.msra.mxu0 0.0
    %1395 = vmatprep.subr.mxu0 0.0
    %1396 = vmatpush1.msra.mxu0 0.0
    %1397 = vmatprep.subr.mxu0 0.0
    %1398 = vmatpush1.msra.mxu0 0.0
    %1399 = vmatprep.subr.mxu0 0.0
    %1400 = vmatpush1.msra.mxu0 0.0
    %1401 = vmatprep.subr.mxu0 0.0
    %1402 = vmatpush1.msra.mxu0 0.0
    %1403 = vmatprep.subr.mxu0 0.0
    %1404 = vmatpush1.msra.mxu0 0.0
    %1405 = vmatprep.subr.mxu0 0.0
    %1406 = vmatpush1.msra.mxu0 0.0
    %1407 = vmatprep.subr.mxu0 0.0
    %1408 = vmatpush1.msra.mxu0 0.0
    %1409 = vmatprep.subr.mxu0 0.0
    %1410 = vmatpush1.msra.mxu0 0.0
    %1411 = vmatprep.mubr.f32.mxu0 0.0
    %1412 = vmatmul.mubr.f32.gmra.mrb[0].mxu0 %v1271
    %v1413 = vpop.f32.mrb[0].mxu0
    %v1414 = vadd.f32 0.0, %v1413
    %v1415 = vpop.f32.mrb[0].mxu0
    %v1416 = vadd.f32 0.0, %v1415
    %1417 = vdwg.mxu0
    %1418 = vmatprep.subr.mxu0 %v1286
    %1419 = vmatpush1.msra.mxu0 %v1285
    %1420 = vmatprep.subr.mxu0 %v1290
    %1421 = vmatpush1.msra.mxu0 %v1289
    %1422 = vmatprep.subr.mxu0 %v1294
    %1423 = vmatpush1.msra.mxu0 %v1293
    %1424 = vmatprep.subr.mxu0 %v1298
    %1425 = vmatpush1.msra.mxu0 %v1297
    %1426 = vmatprep.subr.mxu0 %v1302
    %1427 = vmatpush1.msra.mxu0 %v1301
    %1428 = vmatprep.subr.mxu0 %v1306
    %1429 = vmatpush1.msra.mxu0 %v1305
    %1430 = vmatprep.subr.mxu0 %v1310
    %1431 = vmatpush1.msra.mxu0 %v1309
    %1432 = vmatprep.subr.mxu0 %v1314
    %1433 = vmatpush1.msra.mxu0 %v1313
    %1434 = vmatprep.subr.mxu0 %v1318
    %1435 = vmatpush1.msra.mxu0 %v1317
    %1436 = vmatprep.subr.mxu0 %v1322
    %1437 = vmatpush1.msra.mxu0 %v1321
    %1438 = vmatprep.subr.mxu0 %v1326
    %1439 = vmatpush1.msra.mxu0 %v1325
    %1440 = vmatprep.subr.mxu0 %v1330
    %1441 = vmatpush1.msra.mxu0 %v1329
    %1442 = vmatprep.subr.mxu0 %v1334
    %1443 = vmatpush1.msra.mxu0 %v1333
    %1444 = vmatprep.subr.mxu0 %v1338
    %1445 = vmatpush1.msra.mxu0 %v1337
    %1446 = vmatprep.subr.mxu0 %v1342
    %1447 = vmatpush1.msra.mxu0 %v1341
    %1448 = vmatprep.subr.mxu0 %v1346
    %1449 = vmatpush1.msra.mxu0 %v1345
    %1450 = vmatprep.subr.mxu0 0.0
    %1451 = vmatpush1.msra.mxu0 0.0
    %1452 = vmatprep.subr.mxu0 0.0
    %1453 = vmatpush1.msra.mxu0 0.0
    %1454 = vmatprep.subr.mxu0 0.0
    %1455 = vmatpush1.msra.mxu0 0.0
    %1456 = vmatprep.subr.mxu0 0.0
    %1457 = vmatpush1.msra.mxu0 0.0
    %1458 = vmatprep.subr.mxu0 0.0
    %1459 = vmatpush1.msra.mxu0 0.0
    %1460 = vmatprep.subr.mxu0 0.0
    %1461 = vmatpush1.msra.mxu0 0.0
    %1462 = vmatprep.subr.mxu0 0.0
    %1463 = vmatpush1.msra.mxu0 0.0
    %1464 = vmatprep.subr.mxu0 0.0
    %1465 = vmatpush1.msra.mxu0 0.0
    %1466 = vmatprep.subr.mxu0 0.0
    %1467 = vmatpush1.msra.mxu0 0.0
    %1468 = vmatprep.subr.mxu0 0.0
    %1469 = vmatpush1.msra.mxu0 0.0
    %1470 = vmatprep.subr.mxu0 0.0
    %1471 = vmatpush1.msra.mxu0 0.0
    %1472 = vmatprep.subr.mxu0 0.0
    %1473 = vmatpush1.msra.mxu0 0.0
    %1474 = vmatprep.subr.mxu0 0.0
    %1475 = vmatpush1.msra.mxu0 0.0
    %1476 = vmatprep.subr.mxu0 0.0
    %1477 = vmatpush1.msra.mxu0 0.0
    %1478 = vmatprep.subr.mxu0 0.0
    %1479 = vmatpush1.msra.mxu0 0.0
    %1480 = vmatprep.subr.mxu0 0.0
    %1481 = vmatpush1.msra.mxu0 0.0
    %1482 = vmatprep.mubr.f32.mxu0 0.0
    %1483 = vmatmul.mubr.f32.gmra.mrb[0].mxu0 %v1271
    %v1484 = vpop.f32.mrb[0].mxu0
    %v1485 = vadd.f32 0.0, %v1484
    %v1486 = vpop.f32.mrb[0].mxu0
    %v1487 = vadd.f32 0.0, %v1486
    %1488 = vdwg.mxu0
    %v1489 = vadd.f32 %v1279, %v1414
    %v1490 = vadd.f32 %v1280, %v1416
    %v1491 = vadd.f32 %v1281, %v1485
    %v1492 = vadd.f32 %v1282, %v1487
    %v1493 = vmul.f32 %v1489, 0.5
    %v1494 = vtanh.pop %v1493
    %v1495 = vmul.f32 %v1494, 0.5
    %v1496 = vadd.f32 %v1495, 0.5
    %v1497 = vmul.f32 %v1490, 0.5
    %v1498 = vtanh.pop %v1497
    %v1499 = vmul.f32 %v1498, 0.5
    %v1500 = vadd.f32 %v1499, 0.5
    %v1501 = vtanh.pop %v1491
    %v1502 = vmul.f32 %v1492, 0.5
    %v1503 = vtanh.pop %v1502
    %v1504 = vmul.f32 %v1503, 0.5
    %v1505 = vadd.f32 %v1504, 0.5
    %v1506 = vmul.f32 %v1500, %v1269
    %v1507 = vmul.f32 %v1496, %v1501
    %v1508 = vadd.f32 %v1506, %v1507
    %v1509 = vtanh.pop %v1508
    %v1510 = vmul.f32 %v1505, %v1509
    %s1511 = scalar_lea.vmem [#allocation3], 24
    %1512 = vst [vmem:[%s1511] sm:$0xff] %v1510
    %s1513 = scalar_lea.vmem [#allocation4], 96
    %1514 = vst [vmem:[%s1513] sm:$0xff] %v1510
    %s1515 = smul.u32 4, 4
    %s1516 = smul.addr %s1515, 8
    %s1517 = scalar_lea.vmem [#allocation2], %s1516
    %v1518 = vld [vmem:[%s1517] sm:$0xff]
    %v1519 = vld [vmem:[%s1517 + $0x8] sm:$0xff]
    %v1520 = vld [vmem:[%s1517 + $0x10] sm:$0xff]
    %v1521 = vld [vmem:[%s1517 + $0x18] sm:$0xff]
    %v1522 = vld [vmem:[%s3] sm:$0xff]
    %v1523 = vld [vmem:[%s3 + $0x8] sm:$0xff]
    %v1524 = vld [vmem:[%s3 + $0x10] sm:$0xff]
    %v1525 = vld [vmem:[%s3 + $0x18] sm:$0xff]
    %v1526 = vld [vmem:[%s3 + $0x20] sm:$0xff]
    %v1527 = vld [vmem:[%s3 + $0x28] sm:$0xff]
    %v1528 = vld [vmem:[%s3 + $0x30] sm:$0xff]
    %v1529 = vld [vmem:[%s3 + $0x38] sm:$0xff]
    %v1530 = vld [vmem:[%s3 + $0x40] sm:$0xff]
    %v1531 = vld [vmem:[%s3 + $0x48] sm:$0xff]
    %v1532 = vld [vmem:[%s3 + $0x50] sm:$0xff]
    %v1533 = vld [vmem:[%s3 + $0x58] sm:$0xff]
    %v1534 = vld [vmem:[%s3 + $0x60] sm:$0xff]
    %v1535 = vld [vmem:[%s3 + $0x68] sm:$0xff]
    %v1536 = vld [vmem:[%s3 + $0x70] sm:$0xff]
    %v1537 = vld [vmem:[%s3 + $0x78] sm:$0xff]
    %v1538 = vld [vmem:[%s3 + $0x80] sm:$0xff]
    %v1539 = vld [vmem:[%s3 + $0x88] sm:$0xff]
    %v1540 = vld [vmem:[%s3 + $0x90] sm:$0xff]
    %v1541 = vld [vmem:[%s3 + $0x98] sm:$0xff]
    %v1542 = vld [vmem:[%s3 + $0xa0] sm:$0xff]
    %v1543 = vld [vmem:[%s3 + $0xa8] sm:$0xff]
    %v1544 = vld [vmem:[%s3 + $0xb0] sm:$0xff]
    %v1545 = vld [vmem:[%s3 + $0xb8] sm:$0xff]
    %v1546 = vld [vmem:[%s3 + $0xc0] sm:$0xff]
    %v1547 = vld [vmem:[%s3 + $0xc8] sm:$0xff]
    %v1548 = vld [vmem:[%s3 + $0xd0] sm:$0xff]
    %v1549 = vld [vmem:[%s3 + $0xd8] sm:$0xff]
    %v1550 = vld [vmem:[%s3 + $0xe0] sm:$0xff]
    %v1551 = vld [vmem:[%s3 + $0xe8] sm:$0xff]
    %v1552 = vld [vmem:[%s3 + $0xf0] sm:$0xff]
    %v1553 = vld [vmem:[%s3 + $0xf8] sm:$0xff]
    %v1554 = vld [vmem:[%s3 + $0x100] sm:$0xff]
    %v1555 = vld [vmem:[%s3 + $0x108] sm:$0xff]
    %v1556 = vld [vmem:[%s3 + $0x110] sm:$0xff]
    %v1557 = vld [vmem:[%s3 + $0x118] sm:$0xff]
    %v1558 = vld [vmem:[%s3 + $0x120] sm:$0xff]
    %v1559 = vld [vmem:[%s3 + $0x128] sm:$0xff]
    %v1560 = vld [vmem:[%s3 + $0x130] sm:$0xff]
    %v1561 = vld [vmem:[%s3 + $0x138] sm:$0xff]
    %v1562 = vld [vmem:[%s3 + $0x140] sm:$0xff]
    %v1563 = vld [vmem:[%s3 + $0x148] sm:$0xff]
    %v1564 = vld [vmem:[%s3 + $0x150] sm:$0xff]
    %v1565 = vld [vmem:[%s3 + $0x158] sm:$0xff]
    %v1566 = vld [vmem:[%s3 + $0x160] sm:$0xff]
    %v1567 = vld [vmem:[%s3 + $0x168] sm:$0xff]
    %v1568 = vld [vmem:[%s3 + $0x170] sm:$0xff]
    %v1569 = vld [vmem:[%s3 + $0x178] sm:$0xff]
    %v1570 = vld [vmem:[%s3 + $0x180] sm:$0xff]
    %v1571 = vld [vmem:[%s3 + $0x188] sm:$0xff]
    %v1572 = vld [vmem:[%s3 + $0x190] sm:$0xff]
    %v1573 = vld [vmem:[%s3 + $0x198] sm:$0xff]
    %v1574 = vld [vmem:[%s3 + $0x1a0] sm:$0xff]
    %v1575 = vld [vmem:[%s3 + $0x1a8] sm:$0xff]
    %v1576 = vld [vmem:[%s3 + $0x1b0] sm:$0xff]
    %v1577 = vld [vmem:[%s3 + $0x1b8] sm:$0xff]
    %v1578 = vld [vmem:[%s3 + $0x1c0] sm:$0xff]
    %v1579 = vld [vmem:[%s3 + $0x1c8] sm:$0xff]
    %v1580 = vld [vmem:[%s3 + $0x1d0] sm:$0xff]
    %v1581 = vld [vmem:[%s3 + $0x1d8] sm:$0xff]
    %v1582 = vld [vmem:[%s3 + $0x1e0] sm:$0xff]
    %v1583 = vld [vmem:[%s3 + $0x1e8] sm:$0xff]
    %v1584 = vld [vmem:[%s3 + $0x1f0] sm:$0xff]
    %v1585 = vld [vmem:[%s3 + $0x1f8] sm:$0xff]
    %1586 = vmatprep.subr.mxu0 %v1523
    %1587 = vmatpush1.msra.mxu0 %v1522
    %1588 = vmatprep.subr.mxu0 %v1527
    %1589 = vmatpush1.msra.mxu0 %v1526
    %1590 = vmatprep.subr.mxu0 %v1531
    %1591 = vmatpush1.msra.mxu0 %v1530
    %1592 = vmatprep.subr.mxu0 %v1535
    %1593 = vmatpush1.msra.mxu0 %v1534
    %1594 = vmatprep.subr.mxu0 %v1539
    %1595 = vmatpush1.msra.mxu0 %v1538
    %1596 = vmatprep.subr.mxu0 %v1543
    %1597 = vmatpush1.msra.mxu0 %v1542
    %1598 = vmatprep.subr.mxu0 %v1547
    %1599 = vmatpush1.msra.mxu0 %v1546
    %1600 = vmatprep.subr.mxu0 %v1551
    %1601 = vmatpush1.msra.mxu0 %v1550
    %1602 = vmatprep.subr.mxu0 %v1555
    %1603 = vmatpush1.msra.mxu0 %v1554
    %1604 = vmatprep.subr.mxu0 %v1559
    %1605 = vmatpush1.msra.mxu0 %v1558
    %1606 = vmatprep.subr.mxu0 %v1563
    %1607 = vmatpush1.msra.mxu0 %v1562
    %1608 = vmatprep.subr.mxu0 %v1567
    %1609 = vmatpush1.msra.mxu0 %v1566
    %1610 = vmatprep.subr.mxu0 %v1571
    %1611 = vmatpush1.msra.mxu0 %v1570
    %1612 = vmatprep.subr.mxu0 %v1575
    %1613 = vmatpush1.msra.mxu0 %v1574
    %1614 = vmatprep.subr.mxu0 %v1579
    %1615 = vmatpush1.msra.mxu0 %v1578
    %1616 = vmatprep.subr.mxu0 %v1583
    %1617 = vmatpush1.msra.mxu0 %v1582
    %1618 = vmatprep.subr.mxu0 0.0
    %1619 = vmatpush1.msra.mxu0 0.0
    %1620 = vmatprep.subr.mxu0 0.0
    %1621 = vmatpush1.msra.mxu0 0.0
    %1622 = vmatprep.subr.mxu0 0.0
    %1623 = vmatpush1.msra.mxu0 0.0
    %1624 = vmatprep.subr.mxu0 0.0
    %1625 = vmatpush1.msra.mxu0 0.0
    %1626 = vmatprep.subr.mxu0 0.0
    %1627 = vmatpush1.msra.mxu0 0.0
    %1628 = vmatprep.subr.mxu0 0.0
    %1629 = vmatpush1.msra.mxu0 0.0
    %1630 = vmatprep.subr.mxu0 0.0
    %1631 = vmatpush1.msra.mxu0 0.0
    %1632 = vmatprep.subr.mxu0 0.0
    %1633 = vmatpush1.msra.mxu0 0.0
    %1634 = vmatprep.subr.mxu0 0.0
    %1635 = vmatpush1.msra.mxu0 0.0
    %1636 = vmatprep.subr.mxu0 0.0
    %1637 = vmatpush1.msra.mxu0 0.0
    %1638 = vmatprep.subr.mxu0 0.0
    %1639 = vmatpush1.msra.mxu0 0.0
    %1640 = vmatprep.subr.mxu0 0.0
    %1641 = vmatpush1.msra.mxu0 0.0
    %1642 = vmatprep.subr.mxu0 0.0
    %1643 = vmatpush1.msra.mxu0 0.0
    %1644 = vmatprep.subr.mxu0 0.0
    %1645 = vmatpush1.msra.mxu0 0.0
    %1646 = vmatprep.subr.mxu0 0.0
    %1647 = vmatpush1.msra.mxu0 0.0
    %1648 = vmatprep.subr.mxu0 0.0
    %1649 = vmatpush1.msra.mxu0 0.0
    %1650 = vmatprep.mubr.f32.mxu0 0.0
    %1651 = vmatmul.mubr.f32.gmra.mrb[0].mxu0 %v1510
    %v1652 = vpop.f32.mrb[0].mxu0
    %v1653 = vadd.f32 0.0, %v1652
    %v1654 = vpop.f32.mrb[0].mxu0
    %v1655 = vadd.f32 0.0, %v1654
    %1656 = vdwg.mxu0
    %1657 = vmatprep.subr.mxu0 %v1525
    %1658 = vmatpush1.msra.mxu0 %v1524
    %1659 = vmatprep.subr.mxu0 %v1529
    %1660 = vmatpush1.msra.mxu0 %v1528
    %1661 = vmatprep.subr.mxu0 %v1533
    %1662 = vmatpush1.msra.mxu0 %v1532
    %1663 = vmatprep.subr.mxu0 %v1537
    %1664 = vmatpush1.msra.mxu0 %v1536
    %1665 = vmatprep.subr.mxu0 %v1541
    %1666 = vmatpush1.msra.mxu0 %v1540
    %1667 = vmatprep.subr.mxu0 %v1545
    %1668 = vmatpush1.msra.mxu0 %v1544
    %1669 = vmatprep.subr.mxu0 %v1549
    %1670 = vmatpush1.msra.mxu0 %v1548
    %1671 = vmatprep.subr.mxu0 %v1553
    %1672 = vmatpush1.msra.mxu0 %v1552
    %1673 = vmatprep.subr.mxu0 %v1557
    %1674 = vmatpush1.msra.mxu0 %v1556
    %1675 = vmatprep.subr.mxu0 %v1561
    %1676 = vmatpush1.msra.mxu0 %v1560
    %1677 = vmatprep.subr.mxu0 %v1565
    %1678 = vmatpush1.msra.mxu0 %v1564
    %1679 = vmatprep.subr.mxu0 %v1569
    %1680 = vmatpush1.msra.mxu0 %v1568
    %1681 = vmatprep.subr.mxu0 %v1573
    %1682 = vmatpush1.msra.mxu0 %v1572
    %1683 = vmatprep.subr.mxu0 %v1577
    %1684 = vmatpush1.msra.mxu0 %v1576
    %1685 = vmatprep.subr.mxu0 %v1581
    %1686 = vmatpush1.msra.mxu0 %v1580
    %1687 = vmatprep.subr.mxu0 %v1585
    %1688 = vmatpush1.msra.mxu0 %v1584
    %1689 = vmatprep.subr.mxu0 0.0
    %1690 = vmatpush1.msra.mxu0 0.0
    %1691 = vmatprep.subr.mxu0 0.0
    %1692 = vmatpush1.msra.mxu0 0.0
    %1693 = vmatprep.subr.mxu0 0.0
    %1694 = vmatpush1.msra.mxu0 0.0
    %1695 = vmatprep.subr.mxu0 0.0
    %1696 = vmatpush1.msra.mxu0 0.0
    %1697 = vmatprep.subr.mxu0 0.0
    %1698 = vmatpush1.msra.mxu0 0.0
    %1699 = vmatprep.subr.mxu0 0.0
    %1700 = vmatpush1.msra.mxu0 0.0
    %1701 = vmatprep.subr.mxu0 0.0
    %1702 = vmatpush1.msra.mxu0 0.0
    %1703 = vmatprep.subr.mxu0 0.0
    %1704 = vmatpush1.msra.mxu0 0.0
    %1705 = vmatprep.subr.mxu0 0.0
    %1706 = vmatpush1.msra.mxu0 0.0
    %1707 = vmatprep.subr.mxu0 0.0
    %1708 = vmatpush1.msra.mxu0 0.0
    %1709 = vmatprep.subr.mxu0 0.0
    %1710 = vmatpush1.msra.mxu0 0.0
    %1711 = vmatprep.subr.mxu0 0.0
    %1712 = vmatpush1.msra.mxu0 0.0
    %1713 = vmatprep.subr.mxu0 0.0
    %1714 = vmatpush1.msra.mxu0 0.0
    %1715 = vmatprep.subr.mxu0 0.0
    %1716 = vmatpush1.msra.mxu0 0.0
    %1717 = vmatprep.subr.mxu0 0.0
    %1718 = vmatpush1.msra.mxu0 0.0
    %1719 = vmatprep.subr.mxu0 0.0
    %1720 = vmatpush1.msra.mxu0 0.0
    %1721 = vmatprep.mubr.f32.mxu0 0.0
    %1722 = vmatmul.mubr.f32.gmra.mrb[0].mxu0 %v1510
    %v1723 = vpop.f32.mrb[0].mxu0
    %v1724 = vadd.f32 0.0, %v1723
    %v1725 = vpop.f32.mrb[0].mxu0
    %v1726 = vadd.f32 0.0, %v1725
    %1727 = vdwg.mxu0
    %v1728 = vadd.f32 %v1518, %v1653
    %v1729 = vadd.f32 %v1519, %v1655
    %v1730 = vadd.f32 %v1520, %v1724
    %v1731 = vadd.f32 %v1521, %v1726
    %v1732 = vmul.f32 %v1728, 0.5
    %v1733 = vtanh.pop %v1732
    %v1734 = vmul.f32 %v1733, 0.5
    %v1735 = vadd.f32 %v1734, 0.5
    %v1736 = vmul.f32 %v1729, 0.5
    %v1737 = vtanh.pop %v1736
    %v1738 = vmul.f32 %v1737, 0.5
    %v1739 = vadd.f32 %v1738, 0.5
    %v1740 = vtanh.pop %v1730
    %v1741 = vmul.f32 %v1731, 0.5
    %v1742 = vtanh.pop %v1741
    %v1743 = vmul.f32 %v1742, 0.5
    %v1744 = vadd.f32 %v1743, 0.5
    %v1745 = vmul.f32 %v1739, %v1508
    %v1746 = vmul.f32 %v1735, %v1740
    %v1747 = vadd.f32 %v1745, %v1746
    %v1748 = vtanh.pop %v1747
    %v1749 = vmul.f32 %v1744, %v1748
    %s1750 = scalar_lea.vmem [#allocation3], 32
    %1751 = vst [vmem:[%s1750] sm:$0xff] %v1749
    %s1752 = scalar_lea.vmem [#allocation4], 88
    %1753 = vst [vmem:[%s1752] sm:$0xff] %v1749
    %s1754 = smul.u32 5, 4
    %s1755 = smul.addr %s1754, 8
    %s1756 = scalar_lea.vmem [#allocation2], %s1755
    %v1757 = vld [vmem:[%s1756] sm:$0xff]
    %v1758 = vld [vmem:[%s1756 + $0x8] sm:$0xff]
    %v1759 = vld [vmem:[%s1756 + $0x10] sm:$0xff]
    %v1760 = vld [vmem:[%s1756 + $0x18] sm:$0xff]
    %v1761 = vld [vmem:[%s3] sm:$0xff]
    %v1762 = vld [vmem:[%s3 + $0x8] sm:$0xff]
    %v1763 = vld [vmem:[%s3 + $0x10] sm:$0xff]
    %v1764 = vld [vmem:[%s3 + $0x18] sm:$0xff]
    %v1765 = vld [vmem:[%s3 + $0x20] sm:$0xff]
    %v1766 = vld [vmem:[%s3 + $0x28] sm:$0xff]
    %v1767 = vld [vmem:[%s3 + $0x30] sm:$0xff]
    %v1768 = vld [vmem:[%s3 + $0x38] sm:$0xff]
    %v1769 = vld [vmem:[%s3 + $0x40] sm:$0xff]
    %v1770 = vld [vmem:[%s3 + $0x48] sm:$0xff]
    %v1771 = vld [vmem:[%s3 + $0x50] sm:$0xff]
    %v1772 = vld [vmem:[%s3 + $0x58] sm:$0xff]
    %v1773 = vld [vmem:[%s3 + $0x60] sm:$0xff]
    %v1774 = vld [vmem:[%s3 + $0x68] sm:$0xff]
    %v1775 = vld [vmem:[%s3 + $0x70] sm:$0xff]
    %v1776 = vld [vmem:[%s3 + $0x78] sm:$0xff]
    %v1777 = vld [vmem:[%s3 + $0x80] sm:$0xff]
    %v1778 = vld [vmem:[%s3 + $0x88] sm:$0xff]
    %v1779 = vld [vmem:[%s3 + $0x90] sm:$0xff]
    %v1780 = vld [vmem:[%s3 + $0x98] sm:$0xff]
    %v1781 = vld [vmem:[%s3 + $0xa0] sm:$0xff]
    %v1782 = vld [vmem:[%s3 + $0xa8] sm:$0xff]
    %v1783 = vld [vmem:[%s3 + $0xb0] sm:$0xff]
    %v1784 = vld [vmem:[%s3 + $0xb8] sm:$0xff]
    %v1785 = vld [vmem:[%s3 + $0xc0] sm:$0xff]
    %v1786 = vld [vmem:[%s3 + $0xc8] sm:$0xff]
    %v1787 = vld [vmem:[%s3 + $0xd0] sm:$0xff]
    %v1788 = vld [vmem:[%s3 + $0xd8] sm:$0xff]
    %v1789 = vld [vmem:[%s3 + $0xe0] sm:$0xff]
    %v1790 = vld [vmem:[%s3 + $0xe8] sm:$0xff]
    %v1791 = vld [vmem:[%s3 + $0xf0] sm:$0xff]
    %v1792 = vld [vmem:[%s3 + $0xf8] sm:$0xff]
    %v1793 = vld [vmem:[%s3 + $0x100] sm:$0xff]
    %v1794 = vld [vmem:[%s3 + $0x108] sm:$0xff]
    %v1795 = vld [vmem:[%s3 + $0x110] sm:$0xff]
    %v1796 = vld [vmem:[%s3 + $0x118] sm:$0xff]
    %v1797 = vld [vmem:[%s3 + $0x120] sm:$0xff]
    %v1798 = vld [vmem:[%s3 + $0x128] sm:$0xff]
    %v1799 = vld [vmem:[%s3 + $0x130] sm:$0xff]
    %v1800 = vld [vmem:[%s3 + $0x138] sm:$0xff]
    %v1801 = vld [vmem:[%s3 + $0x140] sm:$0xff]
    %v1802 = vld [vmem:[%s3 + $0x148] sm:$0xff]
    %v1803 = vld [vmem:[%s3 + $0x150] sm:$0xff]
    %v1804 = vld [vmem:[%s3 + $0x158] sm:$0xff]
    %v1805 = vld [vmem:[%s3 + $0x160] sm:$0xff]
    %v1806 = vld [vmem:[%s3 + $0x168] sm:$0xff]
    %v1807 = vld [vmem:[%s3 + $0x170] sm:$0xff]
    %v1808 = vld [vmem:[%s3 + $0x178] sm:$0xff]
    %v1809 = vld [vmem:[%s3 + $0x180] sm:$0xff]
    %v1810 = vld [vmem:[%s3 + $0x188] sm:$0xff]
    %v1811 = vld [vmem:[%s3 + $0x190] sm:$0xff]
    %v1812 = vld [vmem:[%s3 + $0x198] sm:$0xff]
    %v1813 = vld [vmem:[%s3 + $0x1a0] sm:$0xff]
    %v1814 = vld [vmem:[%s3 + $0x1a8] sm:$0xff]
    %v1815 = vld [vmem:[%s3 + $0x1b0] sm:$0xff]
    %v1816 = vld [vmem:[%s3 + $0x1b8] sm:$0xff]
    %v1817 = vld [vmem:[%s3 + $0x1c0] sm:$0xff]
    %v1818 = vld [vmem:[%s3 + $0x1c8] sm:$0xff]
    %v1819 = vld [vmem:[%s3 + $0x1d0] sm:$0xff]
    %v1820 = vld [vmem:[%s3 + $0x1d8] sm:$0xff]
    %v1821 = vld [vmem:[%s3 + $0x1e0] sm:$0xff]
    %v1822 = vld [vmem:[%s3 + $0x1e8] sm:$0xff]
    %v1823 = vld [vmem:[%s3 + $0x1f0] sm:$0xff]
    %v1824 = vld [vmem:[%s3 + $0x1f8] sm:$0xff]
    %1825 = vmatprep.subr.mxu0 %v1762
    %1826 = vmatpush1.msra.mxu0 %v1761
    %1827 = vmatprep.subr.mxu0 %v1766
    %1828 = vmatpush1.msra.mxu0 %v1765
    %1829 = vmatprep.subr.mxu0 %v1770
    %1830 = vmatpush1.msra.mxu0 %v1769
    %1831 = vmatprep.subr.mxu0 %v1774
    %1832 = vmatpush1.msra.mxu0 %v1773
    %1833 = vmatprep.subr.mxu0 %v1778
    %1834 = vmatpush1.msra.mxu0 %v1777
    %1835 = vmatprep.subr.mxu0 %v1782
    %1836 = vmatpush1.msra.mxu0 %v1781
    %1837 = vmatprep.subr.mxu0 %v1786
    %1838 = vmatpush1.msra.mxu0 %v1785
    %1839 = vmatprep.subr.mxu0 %v1790
    %1840 = vmatpush1.msra.mxu0 %v1789
    %1841 = vmatprep.subr.mxu0 %v1794
    %1842 = vmatpush1.msra.mxu0 %v1793
    %1843 = vmatprep.subr.mxu0 %v1798
    %1844 = vmatpush1.msra.mxu0 %v1797
    %1845 = vmatprep.subr.mxu0 %v1802
    %1846 = vmatpush1.msra.mxu0 %v1801
    %1847 = vmatprep.subr.mxu0 %v1806
    %1848 = vmatpush1.msra.mxu0 %v1805
    %1849 = vmatprep.subr.mxu0 %v1810
    %1850 = vmatpush1.msra.mxu0 %v1809
    %1851 = vmatprep.subr.mxu0 %v1814
    %1852 = vmatpush1.msra.mxu0 %v1813
    %1853 = vmatprep.subr.mxu0 %v1818
    %1854 = vmatpush1.msra.mxu0 %v1817
    %1855 = vmatprep.subr.mxu0 %v1822
    %1856 = vmatpush1.msra.mxu0 %v1821
    %1857 = vmatprep.subr.mxu0 0.0
    %1858 = vmatpush1.msra.mxu0 0.0
    %1859 = vmatprep.subr.mxu0 0.0
    %1860 = vmatpush1.msra.mxu0 0.0
    %1861 = vmatprep.subr.mxu0 0.0
    %1862 = vmatpush1.msra.mxu0 0.0
    %1863 = vmatprep.subr.mxu0 0.0
    %1864 = vmatpush1.msra.mxu0 0.0
    %1865 = vmatprep.subr.mxu0 0.0
    %1866 = vmatpush1.msra.mxu0 0.0
    %1867 = vmatprep.subr.mxu0 0.0
    %1868 = vmatpush1.msra.mxu0 0.0
    %1869 = vmatprep.subr.mxu0 0.0
    %1870 = vmatpush1.msra.mxu0 0.0
    %1871 = vmatprep.subr.mxu0 0.0
    %1872 = vmatpush1.msra.mxu0 0.0
    %1873 = vmatprep.subr.mxu0 0.0
    %1874 = vmatpush1.msra.mxu0 0.0
    %1875 = vmatprep.subr.mxu0 0.0
    %1876 = vmatpush1.msra.mxu0 0.0
    %1877 = vmatprep.subr.mxu0 0.0
    %1878 = vmatpush1.msra.mxu0 0.0
    %1879 = vmatprep.subr.mxu0 0.0
    %1880 = vmatpush1.msra.mxu0 0.0
    %1881 = vmatprep.subr.mxu0 0.0
    %1882 = vmatpush1.msra.mxu0 0.0
    %1883 = vmatprep.subr.mxu0 0.0
    %1884 = vmatpush1.msra.mxu0 0.0
    %1885 = vmatprep.subr.mxu0 0.0
    %1886 = vmatpush1.msra.mxu0 0.0
    %1887 = vmatprep.subr.mxu0 0.0
    %1888 = vmatpush1.msra.mxu0 0.0
    %1889 = vmatprep.mubr.f32.mxu0 0.0
    %1890 = vmatmul.mubr.f32.gmra.mrb[0].mxu0 %v1749
    %v1891 = vpop.f32.mrb[0].mxu0
    %v1892 = vadd.f32 0.0, %v1891
    %v1893 = vpop.f32.mrb[0].mxu0
    %v1894 = vadd.f32 0.0, %v1893
    %1895 = vdwg.mxu0
    %1896 = vmatprep.subr.mxu0 %v1764
    %1897 = vmatpush1.msra.mxu0 %v1763
    %1898 = vmatprep.subr.mxu0 %v1768
    %1899 = vmatpush1.msra.mxu0 %v1767
    %1900 = vmatprep.subr.mxu0 %v1772
    %1901 = vmatpush1.msra.mxu0 %v1771
    %1902 = vmatprep.subr.mxu0 %v1776
    %1903 = vmatpush1.msra.mxu0 %v1775
    %1904 = vmatprep.subr.mxu0 %v1780
    %1905 = vmatpush1.msra.mxu0 %v1779
    %1906 = vmatprep.subr.mxu0 %v1784
    %1907 = vmatpush1.msra.mxu0 %v1783
    %1908 = vmatprep.subr.mxu0 %v1788
    %1909 = vmatpush1.msra.mxu0 %v1787
    %1910 = vmatprep.subr.mxu0 %v1792
    %1911 = vmatpush1.msra.mxu0 %v1791
    %1912 = vmatprep.subr.mxu0 %v1796
    %1913 = vmatpush1.msra.mxu0 %v1795
    %1914 = vmatprep.subr.mxu0 %v1800
    %1915 = vmatpush1.msra.mxu0 %v1799
    %1916 = vmatprep.subr.mxu0 %v1804
    %1917 = vmatpush1.msra.mxu0 %v1803
    %1918 = vmatprep.subr.mxu0 %v1808
    %1919 = vmatpush1.msra.mxu0 %v1807
    %1920 = vmatprep.subr.mxu0 %v1812
    %1921 = vmatpush1.msra.mxu0 %v1811
    %1922 = vmatprep.subr.mxu0 %v1816
    %1923 = vmatpush1.msra.mxu0 %v1815
    %1924 = vmatprep.subr.mxu0 %v1820
    %1925 = vmatpush1.msra.mxu0 %v1819
    %1926 = vmatprep.subr.mxu0 %v1824
    %1927 = vmatpush1.msra.mxu0 %v1823
    %1928 = vmatprep.subr.mxu0 0.0
    %1929 = vmatpush1.msra.mxu0 0.0
    %1930 = vmatprep.subr.mxu0 0.0
    %1931 = vmatpush1.msra.mxu0 0.0
    %1932 = vmatprep.subr.mxu0 0.0
    %1933 = vmatpush1.msra.mxu0 0.0
    %1934 = vmatprep.subr.mxu0 0.0
    %1935 = vmatpush1.msra.mxu0 0.0
    %1936 = vmatprep.subr.mxu0 0.0
    %1937 = vmatpush1.msra.mxu0 0.0
    %1938 = vmatprep.subr.mxu0 0.0
    %1939 = vmatpush1.msra.mxu0 0.0
    %1940 = vmatprep.subr.mxu0 0.0
    %1941 = vmatpush1.msra.mxu0 0.0
    %1942 = vmatprep.subr.mxu0 0.0
    %1943 = vmatpush1.msra.mxu0 0.0
    %1944 = vmatprep.subr.mxu0 0.0
    %1945 = vmatpush1.msra.mxu0 0.0
    %1946 = vmatprep.subr.mxu0 0.0
    %1947 = vmatpush1.msra.mxu0 0.0
    %1948 = vmatprep.subr.mxu0 0.0
    %1949 = vmatpush1.msra.mxu0 0.0
    %1950 = vmatprep.subr.mxu0 0.0
    %1951 = vmatpush1.msra.mxu0 0.0
    %1952 = vmatprep.subr.mxu0 0.0
    %1953 = vmatpush1.msra.mxu0 0.0
    %1954 = vmatprep.subr.mxu0 0.0
    %1955 = vmatpush1.msra.mxu0 0.0
    %1956 = vmatprep.subr.mxu0 0.0
    %1957 = vmatpush1.msra.mxu0 0.0
    %1958 = vmatprep.subr.mxu0 0.0
    %1959 = vmatpush1.msra.mxu0 0.0
    %1960 = vmatprep.mubr.f32.mxu0 0.0
    %1961 = vmatmul.mubr.f32.gmra.mrb[0].mxu0 %v1749
    %v1962 = vpop.f32.mrb[0].mxu0
    %v1963 = vadd.f32 0.0, %v1962
    %v1964 = vpop.f32.mrb[0].mxu0
    %v1965 = vadd.f32 0.0, %v1964
    %1966 = vdwg.mxu0
    %v1967 = vadd.f32 %v1757, %v1892
    %v1968 = vadd.f32 %v1758, %v1894
    %v1969 = vadd.f32 %v1759, %v1963
    %v1970 = vadd.f32 %v1760, %v1965
    %v1971 = vmul.f32 %v1967, 0.5
    %v1972 = vtanh.pop %v1971
    %v1973 = vmul.f32 %v1972, 0.5
    %v1974 = vadd.f32 %v1973, 0.5
    %v1975 = vmul.f32 %v1968, 0.5
    %v1976 = vtanh.pop %v1975
    %v1977 = vmul.f32 %v1976, 0.5
    %v1978 = vadd.f32 %v1977, 0.5
    %v1979 = vtanh.pop %v1969
    %v1980 = vmul.f32 %v1970, 0.5
    %v1981 = vtanh.pop %v1980
    %v1982 = vmul.f32 %v1981, 0.5
    %v1983 = vadd.f32 %v1982, 0.5
    %v1984 = vmul.f32 %v1978, %v1747
    %v1985 = vmul.f32 %v1974, %v1979
    %v1986 = vadd.f32 %v1984, %v1985
    %v1987 = vtanh.pop %v1986
    %v1988 = vmul.f32 %v1983, %v1987
    %s1989 = scalar_lea.vmem [#allocation3], 40
    %1990 = vst [vmem:[%s1989] sm:$0xff] %v1988
    %s1991 = scalar_lea.vmem [#allocation4], 80
    %1992 = vst [vmem:[%s1991] sm:$0xff] %v1988
    %s1993 = smul.u32 6, 4
    %s1994 = smul.addr %s1993, 8
    %s1995 = scalar_lea.vmem [#allocation2], %s1994
    %v1996 = vld [vmem:[%s1995] sm:$0xff]
    %v1997 = vld [vmem:[%s1995 + $0x8] sm:$0xff]
    %v1998 = vld [vmem:[%s1995 + $0x10] sm:$0xff]
    %v1999 = vld [vmem:[%s1995 + $0x18] sm:$0xff]
    %v2000 = vld [vmem:[%s3] sm:$0xff]
    %v2001 = vld [vmem:[%s3 + $0x8] sm:$0xff]
    %v2002 = vld [vmem:[%s3 + $0x10] sm:$0xff]
    %v2003 = vld [vmem:[%s3 + $0x18] sm:$0xff]
    %v2004 = vld [vmem:[%s3 + $0x20] sm:$0xff]
    %v2005 = vld [vmem:[%s3 + $0x28] sm:$0xff]
    %v2006 = vld [vmem:[%s3 + $0x30] sm:$0xff]
    %v2007 = vld [vmem:[%s3 + $0x38] sm:$0xff]
    %v2008 = vld [vmem:[%s3 + $0x40] sm:$0xff]
    %v2009 = vld [vmem:[%s3 + $0x48] sm:$0xff]
    %v2010 = vld [vmem:[%s3 + $0x50] sm:$0xff]
    %v2011 = vld [vmem:[%s3 + $0x58] sm:$0xff]
    %v2012 = vld [vmem:[%s3 + $0x60] sm:$0xff]
    %v2013 = vld [vmem:[%s3 + $0x68] sm:$0xff]
    %v2014 = vld [vmem:[%s3 + $0x70] sm:$0xff]
    %v2015 = vld [vmem:[%s3 + $0x78] sm:$0xff]
    %v2016 = vld [vmem:[%s3 + $0x80] sm:$0xff]
    %v2017 = vld [vmem:[%s3 + $0x88] sm:$0xff]
    %v2018 = vld [vmem:[%s3 + $0x90] sm:$0xff]
    %v2019 = vld [vmem:[%s3 + $0x98] sm:$0xff]
    %v2020 = vld [vmem:[%s3 + $0xa0] sm:$0xff]
    %v2021 = vld [vmem:[%s3 + $0xa8] sm:$0xff]
    %v2022 = vld [vmem:[%s3 + $0xb0] sm:$0xff]
    %v2023 = vld [vmem:[%s3 + $0xb8] sm:$0xff]
    %v2024 = vld [vmem:[%s3 + $0xc0] sm:$0xff]
    %v2025 = vld [vmem:[%s3 + $0xc8] sm:$0xff]
    %v2026 = vld [vmem:[%s3 + $0xd0] sm:$0xff]
    %v2027 = vld [vmem:[%s3 + $0xd8] sm:$0xff]
    %v2028 = vld [vmem:[%s3 + $0xe0] sm:$0xff]
    %v2029 = vld [vmem:[%s3 + $0xe8] sm:$0xff]
    %v2030 = vld [vmem:[%s3 + $0xf0] sm:$0xff]
    %v2031 = vld [vmem:[%s3 + $0xf8] sm:$0xff]
    %v2032 = vld [vmem:[%s3 + $0x100] sm:$0xff]
    %v2033 = vld [vmem:[%s3 + $0x108] sm:$0xff]
    %v2034 = vld [vmem:[%s3 + $0x110] sm:$0xff]
    %v2035 = vld [vmem:[%s3 + $0x118] sm:$0xff]
    %v2036 = vld [vmem:[%s3 + $0x120] sm:$0xff]
    %v2037 = vld [vmem:[%s3 + $0x128] sm:$0xff]
    %v2038 = vld [vmem:[%s3 + $0x130] sm:$0xff]
    %v2039 = vld [vmem:[%s3 + $0x138] sm:$0xff]
    %v2040 = vld [vmem:[%s3 + $0x140] sm:$0xff]
    %v2041 = vld [vmem:[%s3 + $0x148] sm:$0xff]
    %v2042 = vld [vmem:[%s3 + $0x150] sm:$0xff]
    %v2043 = vld [vmem:[%s3 + $0x158] sm:$0xff]
    %v2044 = vld [vmem:[%s3 + $0x160] sm:$0xff]
    %v2045 = vld [vmem:[%s3 + $0x168] sm:$0xff]
    %v2046 = vld [vmem:[%s3 + $0x170] sm:$0xff]
    %v2047 = vld [vmem:[%s3 + $0x178] sm:$0xff]
    %v2048 = vld [vmem:[%s3 + $0x180] sm:$0xff]
    %v2049 = vld [vmem:[%s3 + $0x188] sm:$0xff]
    %v2050 = vld [vmem:[%s3 + $0x190] sm:$0xff]
    %v2051 = vld [vmem:[%s3 + $0x198] sm:$0xff]
    %v2052 = vld [vmem:[%s3 + $0x1a0] sm:$0xff]
    %v2053 = vld [vmem:[%s3 + $0x1a8] sm:$0xff]
    %v2054 = vld [vmem:[%s3 + $0x1b0] sm:$0xff]
    %v2055 = vld [vmem:[%s3 + $0x1b8] sm:$0xff]
    %v2056 = vld [vmem:[%s3 + $0x1c0] sm:$0xff]
    %v2057 = vld [vmem:[%s3 + $0x1c8] sm:$0xff]
    %v2058 = vld [vmem:[%s3 + $0x1d0] sm:$0xff]
    %v2059 = vld [vmem:[%s3 + $0x1d8] sm:$0xff]
    %v2060 = vld [vmem:[%s3 + $0x1e0] sm:$0xff]
    %v2061 = vld [vmem:[%s3 + $0x1e8] sm:$0xff]
    %v2062 = vld [vmem:[%s3 + $0x1f0] sm:$0xff]
    %v2063 = vld [vmem:[%s3 + $0x1f8] sm:$0xff]
    %2064 = vmatprep.subr.mxu0 %v2001
    %2065 = vmatpush1.msra.mxu0 %v2000
    %2066 = vmatprep.subr.mxu0 %v2005
    %2067 = vmatpush1.msra.mxu0 %v2004
    %2068 = vmatprep.subr.mxu0 %v2009
    %2069 = vmatpush1.msra.mxu0 %v2008
    %2070 = vmatprep.subr.mxu0 %v2013
    %2071 = vmatpush1.msra.mxu0 %v2012
    %2072 = vmatprep.subr.mxu0 %v2017
    %2073 = vmatpush1.msra.mxu0 %v2016
    %2074 = vmatprep.subr.mxu0 %v2021
    %2075 = vmatpush1.msra.mxu0 %v2020
    %2076 = vmatprep.subr.mxu0 %v2025
    %2077 = vmatpush1.msra.mxu0 %v2024
    %2078 = vmatprep.subr.mxu0 %v2029
    %2079 = vmatpush1.msra.mxu0 %v2028
    %2080 = vmatprep.subr.mxu0 %v2033
    %2081 = vmatpush1.msra.mxu0 %v2032
    %2082 = vmatprep.subr.mxu0 %v2037
    %2083 = vmatpush1.msra.mxu0 %v2036
    %2084 = vmatprep.subr.mxu0 %v2041
    %2085 = vmatpush1.msra.mxu0 %v2040
    %2086 = vmatprep.subr.mxu0 %v2045
    %2087 = vmatpush1.msra.mxu0 %v2044
    %2088 = vmatprep.subr.mxu0 %v2049
    %2089 = vmatpush1.msra.mxu0 %v2048
    %2090 = vmatprep.subr.mxu0 %v2053
    %2091 = vmatpush1.msra.mxu0 %v2052
    %2092 = vmatprep.subr.mxu0 %v2057
    %2093 = vmatpush1.msra.mxu0 %v2056
    %2094 = vmatprep.subr.mxu0 %v2061
    %2095 = vmatpush1.msra.mxu0 %v2060
    %2096 = vmatprep.subr.mxu0 0.0
    %2097 = vmatpush1.msra.mxu0 0.0
    %2098 = vmatprep.subr.mxu0 0.0
    %2099 = vmatpush1.msra.mxu0 0.0
    %2100 = vmatprep.subr.mxu0 0.0
    %2101 = vmatpush1.msra.mxu0 0.0
    %2102 = vmatprep.subr.mxu0 0.0
    %2103 = vmatpush1.msra.mxu0 0.0
    %2104 = vmatprep.subr.mxu0 0.0
    %2105 = vmatpush1.msra.mxu0 0.0
    %2106 = vmatprep.subr.mxu0 0.0
    %2107 = vmatpush1.msra.mxu0 0.0
    %2108 = vmatprep.subr.mxu0 0.0
    %2109 = vmatpush1.msra.mxu0 0.0
    %2110 = vmatprep.subr.mxu0 0.0
    %2111 = vmatpush1.msra.mxu0 0.0
    %2112 = vmatprep.subr.mxu0 0.0
    %2113 = vmatpush1.msra.mxu0 0.0
    %2114 = vmatprep.subr.mxu0 0.0
    %2115 = vmatpush1.msra.mxu0 0.0
    %2116 = vmatprep.subr.mxu0 0.0
    %2117 = vmatpush1.msra.mxu0 0.0
    %2118 = vmatprep.subr.mxu0 0.0
    %2119 = vmatpush1.msra.mxu0 0.0
    %2120 = vmatprep.subr.mxu0 0.0
    %2121 = vmatpush1.msra.mxu0 0.0
    %2122 = vmatprep.subr.mxu0 0.0
    %2123 = vmatpush1.msra.mxu0 0.0
    %2124 = vmatprep.subr.mxu0 0.0
    %2125 = vmatpush1.msra.mxu0 0.0
    %2126 = vmatprep.subr.mxu0 0.0
    %2127 = vmatpush1.msra.mxu0 0.0
    %2128 = vmatprep.mubr.f32.mxu0 0.0
    %2129 = vmatmul.mubr.f32.gmra.mrb[0].mxu0 %v1988
    %v2130 = vpop.f32.mrb[0].mxu0
    %v2131 = vadd.f32 0.0, %v2130
    %v2132 = vpop.f32.mrb[0].mxu0
    %v2133 = vadd.f32 0.0, %v2132
    %2134 = vdwg.mxu0
    %2135 = vmatprep.subr.mxu0 %v2003
    %2136 = vmatpush1.msra.mxu0 %v2002
    %2137 = vmatprep.subr.mxu0 %v2007
    %2138 = vmatpush1.msra.mxu0 %v2006
    %2139 = vmatprep.subr.mxu0 %v2011
    %2140 = vmatpush1.msra.mxu0 %v2010
    %2141 = vmatprep.subr.mxu0 %v2015
    %2142 = vmatpush1.msra.mxu0 %v2014
    %2143 = vmatprep.subr.mxu0 %v2019
    %2144 = vmatpush1.msra.mxu0 %v2018
    %2145 = vmatprep.subr.mxu0 %v2023
    %2146 = vmatpush1.msra.mxu0 %v2022
    %2147 = vmatprep.subr.mxu0 %v2027
    %2148 = vmatpush1.msra.mxu0 %v2026
    %2149 = vmatprep.subr.mxu0 %v2031
    %2150 = vmatpush1.msra.mxu0 %v2030
    %2151 = vmatprep.subr.mxu0 %v2035
    %2152 = vmatpush1.msra.mxu0 %v2034
    %2153 = vmatprep.subr.mxu0 %v2039
    %2154 = vmatpush1.msra.mxu0 %v2038
    %2155 = vmatprep.subr.mxu0 %v2043
    %2156 = vmatpush1.msra.mxu0 %v2042
    %2157 = vmatprep.subr.mxu0 %v2047
    %2158 = vmatpush1.msra.mxu0 %v2046
    %2159 = vmatprep.subr.mxu0 %v2051
    %2160 = vmatpush1.msra.mxu0 %v2050
    %2161 = vmatprep.subr.mxu0 %v2055
    %2162 = vmatpush1.msra.mxu0 %v2054
    %2163 = vmatprep.subr.mxu0 %v2059
    %2164 = vmatpush1.msra.mxu0 %v2058
    %2165 = vmatprep.subr.mxu0 %v2063
    %2166 = vmatpush1.msra.mxu0 %v2062
    %2167 = vmatprep.subr.mxu0 0.0
    %2168 = vmatpush1.msra.mxu0 0.0
    %2169 = vmatprep.subr.mxu0 0.0
    %2170 = vmatpush1.msra.mxu0 0.0
    %2171 = vmatprep.subr.mxu0 0.0
    %2172 = vmatpush1.msra.mxu0 0.0
    %2173 = vmatprep.subr.mxu0 0.0
    %2174 = vmatpush1.msra.mxu0 0.0
    %2175 = vmatprep.subr.mxu0 0.0
    %2176 = vmatpush1.msra.mxu0 0.0
    %2177 = vmatprep.subr.mxu0 0.0
    %2178 = vmatpush1.msra.mxu0 0.0
    %2179 = vmatprep.subr.mxu0 0.0
    %2180 = vmatpush1.msra.mxu0 0.0
    %2181 = vmatprep.subr.mxu0 0.0
    %2182 = vmatpush1.msra.mxu0 0.0
    %2183 = vmatprep.subr.mxu0 0.0
    %2184 = vmatpush1.msra.mxu0 0.0
    %2185 = vmatprep.subr.mxu0 0.0
    %2186 = vmatpush1.msra.mxu0 0.0
    %2187 = vmatprep.subr.mxu0 0.0
    %2188 = vmatpush1.msra.mxu0 0.0
    %2189 = vmatprep.subr.mxu0 0.0
    %2190 = vmatpush1.msra.mxu0 0.0
    %2191 = vmatprep.subr.mxu0 0.0
    %2192 = vmatpush1.msra.mxu0 0.0
    %2193 = vmatprep.subr.mxu0 0.0
    %2194 = vmatpush1.msra.mxu0 0.0
    %2195 = vmatprep.subr.mxu0 0.0
    %2196 = vmatpush1.msra.mxu0 0.0
    %2197 = vmatprep.subr.mxu0 0.0
    %2198 = vmatpush1.msra.mxu0 0.0
    %2199 = vmatprep.mubr.f32.mxu0 0.0
    %2200 = vmatmul.mubr.f32.gmra.mrb[0].mxu0 %v1988
    %v2201 = vpop.f32.mrb[0].mxu0
    %v2202 = vadd.f32 0.0, %v2201
    %v2203 = vpop.f32.mrb[0].mxu0
    %v2204 = vadd.f32 0.0, %v2203
    %2205 = vdwg.mxu0
    %v2206 = vadd.f32 %v1996, %v2131
    %v2207 = vadd.f32 %v1997, %v2133
    %v2208 = vadd.f32 %v1998, %v2202
    %v2209 = vadd.f32 %v1999, %v2204
    %v2210 = vmul.f32 %v2206, 0.5
    %v2211 = vtanh.pop %v2210
    %v2212 = vmul.f32 %v2211, 0.5
    %v2213 = vadd.f32 %v2212, 0.5
    %v2214 = vmul.f32 %v2207, 0.5
    %v2215 = vtanh.pop %v2214
    %v2216 = vmul.f32 %v2215, 0.5
    %v2217 = vadd.f32 %v2216, 0.5
    %v2218 = vtanh.pop %v2208
    %v2219 = vmul.f32 %v2209, 0.5
    %v2220 = vtanh.pop %v2219
    %v2221 = vmul.f32 %v2220, 0.5
    %v2222 = vadd.f32 %v2221, 0.5
    %v2223 = vmul.f32 %v2217, %v1986
    %v2224 = vmul.f32 %v2213, %v2218
    %v2225 = vadd.f32 %v2223, %v2224
    %v2226 = vtanh.pop %v2225
    %v2227 = vmul.f32 %v2222, %v2226
    %s2228 = scalar_lea.vmem [#allocation3], 48
    %2229 = vst [vmem:[%s2228] sm:$0xff] %v2227
    %s2230 = scalar_lea.vmem [#allocation4], 72
    %2231 = vst [vmem:[%s2230] sm:$0xff] %v2227
    %s2232 = smul.u32 7, 4
    %s2233 = smul.addr %s2232, 8
    %s2234 = scalar_lea.vmem [#allocation2], %s2233
    %v2235 = vld [vmem:[%s2234] sm:$0xff]
    %v2236 = vld [vmem:[%s2234 + $0x8] sm:$0xff]
    %v2237 = vld [vmem:[%s2234 + $0x10] sm:$0xff]
    %v2238 = vld [vmem:[%s2234 + $0x18] sm:$0xff]
    %v2239 = vld [vmem:[%s3] sm:$0xff]
    %v2240 = vld [vmem:[%s3 + $0x8] sm:$0xff]
    %v2241 = vld [vmem:[%s3 + $0x10] sm:$0xff]
    %v2242 = vld [vmem:[%s3 + $0x18] sm:$0xff]
    %v2243 = vld [vmem:[%s3 + $0x20] sm:$0xff]
    %v2244 = vld [vmem:[%s3 + $0x28] sm:$0xff]
    %v2245 = vld [vmem:[%s3 + $0x30] sm:$0xff]
    %v2246 = vld [vmem:[%s3 + $0x38] sm:$0xff]
    %v2247 = vld [vmem:[%s3 + $0x40] sm:$0xff]
    %v2248 = vld [vmem:[%s3 + $0x48] sm:$0xff]
    %v2249 = vld [vmem:[%s3 + $0x50] sm:$0xff]
    %v2250 = vld [vmem:[%s3 + $0x58] sm:$0xff]
    %v2251 = vld [vmem:[%s3 + $0x60] sm:$0xff]
    %v2252 = vld [vmem:[%s3 + $0x68] sm:$0xff]
    %v2253 = vld [vmem:[%s3 + $0x70] sm:$0xff]
    %v2254 = vld [vmem:[%s3 + $0x78] sm:$0xff]
    %v2255 = vld [vmem:[%s3 + $0x80] sm:$0xff]
    %v2256 = vld [vmem:[%s3 + $0x88] sm:$0xff]
    %v2257 = vld [vmem:[%s3 + $0x90] sm:$0xff]
    %v2258 = vld [vmem:[%s3 + $0x98] sm:$0xff]
    %v2259 = vld [vmem:[%s3 + $0xa0] sm:$0xff]
    %v2260 = vld [vmem:[%s3 + $0xa8] sm:$0xff]
    %v2261 = vld [vmem:[%s3 + $0xb0] sm:$0xff]
    %v2262 = vld [vmem:[%s3 + $0xb8] sm:$0xff]
    %v2263 = vld [vmem:[%s3 + $0xc0] sm:$0xff]
    %v2264 = vld [vmem:[%s3 + $0xc8] sm:$0xff]
    %v2265 = vld [vmem:[%s3 + $0xd0] sm:$0xff]
    %v2266 = vld [vmem:[%s3 + $0xd8] sm:$0xff]
    %v2267 = vld [vmem:[%s3 + $0xe0] sm:$0xff]
    %v2268 = vld [vmem:[%s3 + $0xe8] sm:$0xff]
    %v2269 = vld [vmem:[%s3 + $0xf0] sm:$0xff]
    %v2270 = vld [vmem:[%s3 + $0xf8] sm:$0xff]
    %v2271 = vld [vmem:[%s3 + $0x100] sm:$0xff]
    %v2272 = vld [vmem:[%s3 + $0x108] sm:$0xff]
    %v2273 = vld [vmem:[%s3 + $0x110] sm:$0xff]
    %v2274 = vld [vmem:[%s3 + $0x118] sm:$0xff]
    %v2275 = vld [vmem:[%s3 + $0x120] sm:$0xff]
    %v2276 = vld [vmem:[%s3 + $0x128] sm:$0xff]
    %v2277 = vld [vmem:[%s3 + $0x130] sm:$0xff]
    %v2278 = vld [vmem:[%s3 + $0x138] sm:$0xff]
    %v2279 = vld [vmem:[%s3 + $0x140] sm:$0xff]
    %v2280 = vld [vmem:[%s3 + $0x148] sm:$0xff]
    %v2281 = vld [vmem:[%s3 + $0x150] sm:$0xff]
    %v2282 = vld [vmem:[%s3 + $0x158] sm:$0xff]
    %v2283 = vld [vmem:[%s3 + $0x160] sm:$0xff]
    %v2284 = vld [vmem:[%s3 + $0x168] sm:$0xff]
    %v2285 = vld [vmem:[%s3 + $0x170] sm:$0xff]
    %v2286 = vld [vmem:[%s3 + $0x178] sm:$0xff]
    %v2287 = vld [vmem:[%s3 + $0x180] sm:$0xff]
    %v2288 = vld [vmem:[%s3 + $0x188] sm:$0xff]
    %v2289 = vld [vmem:[%s3 + $0x190] sm:$0xff]
    %v2290 = vld [vmem:[%s3 + $0x198] sm:$0xff]
    %v2291 = vld [vmem:[%s3 + $0x1a0] sm:$0xff]
    %v2292 = vld [vmem:[%s3 + $0x1a8] sm:$0xff]
    %v2293 = vld [vmem:[%s3 + $0x1b0] sm:$0xff]
    %v2294 = vld [vmem:[%s3 + $0x1b8] sm:$0xff]
    %v2295 = vld [vmem:[%s3 + $0x1c0] sm:$0xff]
    %v2296 = vld [vmem:[%s3 + $0x1c8] sm:$0xff]
    %v2297 = vld [vmem:[%s3 + $0x1d0] sm:$0xff]
    %v2298 = vld [vmem:[%s3 + $0x1d8] sm:$0xff]
    %v2299 = vld [vmem:[%s3 + $0x1e0] sm:$0xff]
    %v2300 = vld [vmem:[%s3 + $0x1e8] sm:$0xff]
    %v2301 = vld [vmem:[%s3 + $0x1f0] sm:$0xff]
    %v2302 = vld [vmem:[%s3 + $0x1f8] sm:$0xff]
    %2303 = vmatprep.subr.mxu0 %v2240
    %2304 = vmatpush1.msra.mxu0 %v2239
    %2305 = vmatprep.subr.mxu0 %v2244
    %2306 = vmatpush1.msra.mxu0 %v2243
    %2307 = vmatprep.subr.mxu0 %v2248
    %2308 = vmatpush1.msra.mxu0 %v2247
    %2309 = vmatprep.subr.mxu0 %v2252
    %2310 = vmatpush1.msra.mxu0 %v2251
    %2311 = vmatprep.subr.mxu0 %v2256
    %2312 = vmatpush1.msra.mxu0 %v2255
    %2313 = vmatprep.subr.mxu0 %v2260
    %2314 = vmatpush1.msra.mxu0 %v2259
    %2315 = vmatprep.subr.mxu0 %v2264
    %2316 = vmatpush1.msra.mxu0 %v2263
    %2317 = vmatprep.subr.mxu0 %v2268
    %2318 = vmatpush1.msra.mxu0 %v2267
    %2319 = vmatprep.subr.mxu0 %v2272
    %2320 = vmatpush1.msra.mxu0 %v2271
    %2321 = vmatprep.subr.mxu0 %v2276
    %2322 = vmatpush1.msra.mxu0 %v2275
    %2323 = vmatprep.subr.mxu0 %v2280
    %2324 = vmatpush1.msra.mxu0 %v2279
    %2325 = vmatprep.subr.mxu0 %v2284
    %2326 = vmatpush1.msra.mxu0 %v2283
    %2327 = vmatprep.subr.mxu0 %v2288
    %2328 = vmatpush1.msra.mxu0 %v2287
    %2329 = vmatprep.subr.mxu0 %v2292
    %2330 = vmatpush1.msra.mxu0 %v2291
    %2331 = vmatprep.subr.mxu0 %v2296
    %2332 = vmatpush1.msra.mxu0 %v2295
    %2333 = vmatprep.subr.mxu0 %v2300
    %2334 = vmatpush1.msra.mxu0 %v2299
    %2335 = vmatprep.subr.mxu0 0.0
    %2336 = vmatpush1.msra.mxu0 0.0
    %2337 = vmatprep.subr.mxu0 0.0
    %2338 = vmatpush1.msra.mxu0 0.0
    %2339 = vmatprep.subr.mxu0 0.0
    %2340 = vmatpush1.msra.mxu0 0.0
    %2341 = vmatprep.subr.mxu0 0.0
    %2342 = vmatpush1.msra.mxu0 0.0
    %2343 = vmatprep.subr.mxu0 0.0
    %2344 = vmatpush1.msra.mxu0 0.0
    %2345 = vmatprep.subr.mxu0 0.0
    %2346 = vmatpush1.msra.mxu0 0.0
    %2347 = vmatprep.subr.mxu0 0.0
    %2348 = vmatpush1.msra.mxu0 0.0
    %2349 = vmatprep.subr.mxu0 0.0
    %2350 = vmatpush1.msra.mxu0 0.0
    %2351 = vmatprep.subr.mxu0 0.0
    %2352 = vmatpush1.msra.mxu0 0.0
    %2353 = vmatprep.subr.mxu0 0.0
    %2354 = vmatpush1.msra.mxu0 0.0
    %2355 = vmatprep.subr.mxu0 0.0
    %2356 = vmatpush1.msra.mxu0 0.0
    %2357 = vmatprep.subr.mxu0 0.0
    %2358 = vmatpush1.msra.mxu0 0.0
    %2359 = vmatprep.subr.mxu0 0.0
    %2360 = vmatpush1.msra.mxu0 0.0
    %2361 = vmatprep.subr.mxu0 0.0
    %2362 = vmatpush1.msra.mxu0 0.0
    %2363 = vmatprep.subr.mxu0 0.0
    %2364 = vmatpush1.msra.mxu0 0.0
    %2365 = vmatprep.subr.mxu0 0.0
    %2366 = vmatpush1.msra.mxu0 0.0
    %2367 = vmatprep.mubr.f32.mxu0 0.0
    %2368 = vmatmul.mubr.f32.gmra.mrb[0].mxu0 %v2227
    %v2369 = vpop.f32.mrb[0].mxu0
    %v2370 = vadd.f32 0.0, %v2369
    %v2371 = vpop.f32.mrb[0].mxu0
    %v2372 = vadd.f32 0.0, %v2371
    %2373 = vdwg.mxu0
    %2374 = vmatprep.subr.mxu0 %v2242
    %2375 = vmatpush1.msra.mxu0 %v2241
    %2376 = vmatprep.subr.mxu0 %v2246
    %2377 = vmatpush1.msra.mxu0 %v2245
    %2378 = vmatprep.subr.mxu0 %v2250
    %2379 = vmatpush1.msra.mxu0 %v2249
    %2380 = vmatprep.subr.mxu0 %v2254
    %2381 = vmatpush1.msra.mxu0 %v2253
    %2382 = vmatprep.subr.mxu0 %v2258
    %2383 = vmatpush1.msra.mxu0 %v2257
    %2384 = vmatprep.subr.mxu0 %v2262
    %2385 = vmatpush1.msra.mxu0 %v2261
    %2386 = vmatprep.subr.mxu0 %v2266
    %2387 = vmatpush1.msra.mxu0 %v2265
    %2388 = vmatprep.subr.mxu0 %v2270
    %2389 = vmatpush1.msra.mxu0 %v2269
    %2390 = vmatprep.subr.mxu0 %v2274
    %2391 = vmatpush1.msra.mxu0 %v2273
    %2392 = vmatprep.subr.mxu0 %v2278
    %2393 = vmatpush1.msra.mxu0 %v2277
    %2394 = vmatprep.subr.mxu0 %v2282
    %2395 = vmatpush1.msra.mxu0 %v2281
    %2396 = vmatprep.subr.mxu0 %v2286
    %2397 = vmatpush1.msra.mxu0 %v2285
    %2398 = vmatprep.subr.mxu0 %v2290
    %2399 = vmatpush1.msra.mxu0 %v2289
    %2400 = vmatprep.subr.mxu0 %v2294
    %2401 = vmatpush1.msra.mxu0 %v2293
    %2402 = vmatprep.subr.mxu0 %v2298
    %2403 = vmatpush1.msra.mxu0 %v2297
    %2404 = vmatprep.subr.mxu0 %v2302
    %2405 = vmatpush1.msra.mxu0 %v2301
    %2406 = vmatprep.subr.mxu0 0.0
    %2407 = vmatpush1.msra.mxu0 0.0
    %2408 = vmatprep.subr.mxu0 0.0
    %2409 = vmatpush1.msra.mxu0 0.0
    %2410 = vmatprep.subr.mxu0 0.0
    %2411 = vmatpush1.msra.mxu0 0.0
    %2412 = vmatprep.subr.mxu0 0.0
    %2413 = vmatpush1.msra.mxu0 0.0
    %2414 = vmatprep.subr.mxu0 0.0
    %2415 = vmatpush1.msra.mxu0 0.0
    %2416 = vmatprep.subr.mxu0 0.0
    %2417 = vmatpush1.msra.mxu0 0.0
    %2418 = vmatprep.subr.mxu0 0.0
    %2419 = vmatpush1.msra.mxu0 0.0
    %2420 = vmatprep.subr.mxu0 0.0
    %2421 = vmatpush1.msra.mxu0 0.0
    %2422 = vmatprep.subr.mxu0 0.0
    %2423 = vmatpush1.msra.mxu0 0.0
    %2424 = vmatprep.subr.mxu0 0.0
    %2425 = vmatpush1.msra.mxu0 0.0
    %2426 = vmatprep.subr.mxu0 0.0
    %2427 = vmatpush1.msra.mxu0 0.0
    %2428 = vmatprep.subr.mxu0 0.0
    %2429 = vmatpush1.msra.mxu0 0.0
    %2430 = vmatprep.subr.mxu0 0.0
    %2431 = vmatpush1.msra.mxu0 0.0
    %2432 = vmatprep.subr.mxu0 0.0
    %2433 = vmatpush1.msra.mxu0 0.0
    %2434 = vmatprep.subr.mxu0 0.0
    %2435 = vmatpush1.msra.mxu0 0.0
    %2436 = vmatprep.subr.mxu0 0.0
    %2437 = vmatpush1.msra.mxu0 0.0
    %2438 = vmatprep.mubr.f32.mxu0 0.0
    %2439 = vmatmul.mubr.f32.gmra.mrb[0].mxu0 %v2227
    %v2440 = vpop.f32.mrb[0].mxu0
    %v2441 = vadd.f32 0.0, %v2440
    %v2442 = vpop.f32.mrb[0].mxu0
    %v2443 = vadd.f32 0.0, %v2442
    %2444 = vdwg.mxu0
    %v2445 = vadd.f32 %v2235, %v2370
    %v2446 = vadd.f32 %v2236, %v2372
    %v2447 = vadd.f32 %v2237, %v2441
    %v2448 = vadd.f32 %v2238, %v2443
    %v2449 = vmul.f32 %v2445, 0.5
    %v2450 = vtanh.pop %v2449
    %v2451 = vmul.f32 %v2450, 0.5
    %v2452 = vadd.f32 %v2451, 0.5
    %v2453 = vmul.f32 %v2446, 0.5
    %v2454 = vtanh.pop %v2453
    %v2455 = vmul.f32 %v2454, 0.5
    %v2456 = vadd.f32 %v2455, 0.5
    %v2457 = vtanh.pop %v2447
    %v2458 = vmul.f32 %v2448, 0.5
    %v2459 = vtanh.pop %v2458
    %v2460 = vmul.f32 %v2459, 0.5
    %v2461 = vadd.f32 %v2460, 0.5
    %v2462 = vmul.f32 %v2456, %v2225
    %v2463 = vmul.f32 %v2452, %v2457
    %v2464 = vadd.f32 %v2462, %v2463
    %v2465 = vtanh.pop %v2464
    %v2466 = vmul.f32 %v2461, %v2465
    %s2467 = scalar_lea.vmem [#allocation3], 56
    %2468 = vst [vmem:[%s2467] sm:$0xff] %v2466
    %s2469 = scalar_lea.vmem [#allocation4], 64
    %2470 = vst [vmem:[%s2469] sm:$0xff] %v2466
    %s2471 = smul.u32 8, 4
    %s2472 = smul.addr %s2471, 8
    %s2473 = scalar_lea.vmem [#allocation2], %s2472
    %v2474 = vld [vmem:[%s2473] sm:$0xff]
    %v2475 = vld [vmem:[%s2473 + $0x8] sm:$0xff]
    %v2476 = vld [vmem:[%s2473 + $0x10] sm:$0xff]
    %v2477 = vld [vmem:[%s2473 + $0x18] sm:$0xff]
    %v2478 = vld [vmem:[%s3] sm:$0xff]
    %v2479 = vld [vmem:[%s3 + $0x8] sm:$0xff]
    %v2480 = vld [vmem:[%s3 + $0x10] sm:$0xff]
    %v2481 = vld [vmem:[%s3 + $0x18] sm:$0xff]
    %v2482 = vld [vmem:[%s3 + $0x20] sm:$0xff]
    %v2483 = vld [vmem:[%s3 + $0x28] sm:$0xff]
    %v2484 = vld [vmem:[%s3 + $0x30] sm:$0xff]
    %v2485 = vld [vmem:[%s3 + $0x38] sm:$0xff]
    %v2486 = vld [vmem:[%s3 + $0x40] sm:$0xff]
    %v2487 = vld [vmem:[%s3 + $0x48] sm:$0xff]
    %v2488 = vld [vmem:[%s3 + $0x50] sm:$0xff]
    %v2489 = vld [vmem:[%s3 + $0x58] sm:$0xff]
    %v2490 = vld [vmem:[%s3 + $0x60] sm:$0xff]
    %v2491 = vld [vmem:[%s3 + $0x68] sm:$0xff]
    %v2492 = vld [vmem:[%s3 + $0x70] sm:$0xff]
    %v2493 = vld [vmem:[%s3 + $0x78] sm:$0xff]
    %v2494 = vld [vmem:[%s3 + $0x80] sm:$0xff]
    %v2495 = vld [vmem:[%s3 + $0x88] sm:$0xff]
    %v2496 = vld [vmem:[%s3 + $0x90] sm:$0xff]
    %v2497 = vld [vmem:[%s3 + $0x98] sm:$0xff]
    %v2498 = vld [vmem:[%s3 + $0xa0] sm:$0xff]
    %v2499 = vld [vmem:[%s3 + $0xa8] sm:$0xff]
    %v2500 = vld [vmem:[%s3 + $0xb0] sm:$0xff]
    %v2501 = vld [vmem:[%s3 + $0xb8] sm:$0xff]
    %v2502 = vld [vmem:[%s3 + $0xc0] sm:$0xff]
    %v2503 = vld [vmem:[%s3 + $0xc8] sm:$0xff]
    %v2504 = vld [vmem:[%s3 + $0xd0] sm:$0xff]
    %v2505 = vld [vmem:[%s3 + $0xd8] sm:$0xff]
    %v2506 = vld [vmem:[%s3 + $0xe0] sm:$0xff]
    %v2507 = vld [vmem:[%s3 + $0xe8] sm:$0xff]
    %v2508 = vld [vmem:[%s3 + $0xf0] sm:$0xff]
    %v2509 = vld [vmem:[%s3 + $0xf8] sm:$0xff]
    %v2510 = vld [vmem:[%s3 + $0x100] sm:$0xff]
    %v2511 = vld [vmem:[%s3 + $0x108] sm:$0xff]
    %v2512 = vld [vmem:[%s3 + $0x110] sm:$0xff]
    %v2513 = vld [vmem:[%s3 + $0x118] sm:$0xff]
    %v2514 = vld [vmem:[%s3 + $0x120] sm:$0xff]
    %v2515 = vld [vmem:[%s3 + $0x128] sm:$0xff]
    %v2516 = vld [vmem:[%s3 + $0x130] sm:$0xff]
    %v2517 = vld [vmem:[%s3 + $0x138] sm:$0xff]
    %v2518 = vld [vmem:[%s3 + $0x140] sm:$0xff]
    %v2519 = vld [vmem:[%s3 + $0x148] sm:$0xff]
    %v2520 = vld [vmem:[%s3 + $0x150] sm:$0xff]
    %v2521 = vld [vmem:[%s3 + $0x158] sm:$0xff]
    %v2522 = vld [vmem:[%s3 + $0x160] sm:$0xff]
    %v2523 = vld [vmem:[%s3 + $0x168] sm:$0xff]
    %v2524 = vld [vmem:[%s3 + $0x170] sm:$0xff]
    %v2525 = vld [vmem:[%s3 + $0x178] sm:$0xff]
    %v2526 = vld [vmem:[%s3 + $0x180] sm:$0xff]
    %v2527 = vld [vmem:[%s3 + $0x188] sm:$0xff]
    %v2528 = vld [vmem:[%s3 + $0x190] sm:$0xff]
    %v2529 = vld [vmem:[%s3 + $0x198] sm:$0xff]
    %v2530 = vld [vmem:[%s3 + $0x1a0] sm:$0xff]
    %v2531 = vld [vmem:[%s3 + $0x1a8] sm:$0xff]
    %v2532 = vld [vmem:[%s3 + $0x1b0] sm:$0xff]
    %v2533 = vld [vmem:[%s3 + $0x1b8] sm:$0xff]
    %v2534 = vld [vmem:[%s3 + $0x1c0] sm:$0xff]
    %v2535 = vld [vmem:[%s3 + $0x1c8] sm:$0xff]
    %v2536 = vld [vmem:[%s3 + $0x1d0] sm:$0xff]
    %v2537 = vld [vmem:[%s3 + $0x1d8] sm:$0xff]
    %v2538 = vld [vmem:[%s3 + $0x1e0] sm:$0xff]
    %v2539 = vld [vmem:[%s3 + $0x1e8] sm:$0xff]
    %v2540 = vld [vmem:[%s3 + $0x1f0] sm:$0xff]
    %v2541 = vld [vmem:[%s3 + $0x1f8] sm:$0xff]
    %2542 = vmatprep.subr.mxu0 %v2479
    %2543 = vmatpush1.msra.mxu0 %v2478
    %2544 = vmatprep.subr.mxu0 %v2483
    %2545 = vmatpush1.msra.mxu0 %v2482
    %2546 = vmatprep.subr.mxu0 %v2487
    %2547 = vmatpush1.msra.mxu0 %v2486
    %2548 = vmatprep.subr.mxu0 %v2491
    %2549 = vmatpush1.msra.mxu0 %v2490
    %2550 = vmatprep.subr.mxu0 %v2495
    %2551 = vmatpush1.msra.mxu0 %v2494
    %2552 = vmatprep.subr.mxu0 %v2499
    %2553 = vmatpush1.msra.mxu0 %v2498
    %2554 = vmatprep.subr.mxu0 %v2503
    %2555 = vmatpush1.msra.mxu0 %v2502
    %2556 = vmatprep.subr.mxu0 %v2507
    %2557 = vmatpush1.msra.mxu0 %v2506
    %2558 = vmatprep.subr.mxu0 %v2511
    %2559 = vmatpush1.msra.mxu0 %v2510
    %2560 = vmatprep.subr.mxu0 %v2515
    %2561 = vmatpush1.msra.mxu0 %v2514
    %2562 = vmatprep.subr.mxu0 %v2519
    %2563 = vmatpush1.msra.mxu0 %v2518
    %2564 = vmatprep.subr.mxu0 %v2523
    %2565 = vmatpush1.msra.mxu0 %v2522
    %2566 = vmatprep.subr.mxu0 %v2527
    %2567 = vmatpush1.msra.mxu0 %v2526
    %2568 = vmatprep.subr.mxu0 %v2531
    %2569 = vmatpush1.msra.mxu0 %v2530
    %2570 = vmatprep.subr.mxu0 %v2535
    %2571 = vmatpush1.msra.mxu0 %v2534
    %2572 = vmatprep.subr.mxu0 %v2539
    %2573 = vmatpush1.msra.mxu0 %v2538
    %2574 = vmatprep.subr.mxu0 0.0
    %2575 = vmatpush1.msra.mxu0 0.0
    %2576 = vmatprep.subr.mxu0 0.0
    %2577 = vmatpush1.msra.mxu0 0.0
    %2578 = vmatprep.subr.mxu0 0.0
    %2579 = vmatpush1.msra.mxu0 0.0
    %2580 = vmatprep.subr.mxu0 0.0
    %2581 = vmatpush1.msra.mxu0 0.0
    %2582 = vmatprep.subr.mxu0 0.0
    %2583 = vmatpush1.msra.mxu0 0.0
    %2584 = vmatprep.subr.mxu0 0.0
    %2585 = vmatpush1.msra.mxu0 0.0
    %2586 = vmatprep.subr.mxu0 0.0
    %2587 = vmatpush1.msra.mxu0 0.0
    %2588 = vmatprep.subr.mxu0 0.0
    %2589 = vmatpush1.msra.mxu0 0.0
    %2590 = vmatprep.subr.mxu0 0.0
    %2591 = vmatpush1.msra.mxu0 0.0
    %2592 = vmatprep.subr.mxu0 0.0
    %2593 = vmatpush1.msra.mxu0 0.0
    %2594 = vmatprep.subr.mxu0 0.0
    %2595 = vmatpush1.msra.mxu0 0.0
    %2596 = vmatprep.subr.mxu0 0.0
    %2597 = vmatpush1.msra.mxu0 0.0
    %2598 = vmatprep.subr.mxu0 0.0
    %2599 = vmatpush1.msra.mxu0 0.0
    %2600 = vmatprep.subr.mxu0 0.0
    %2601 = vmatpush1.msra.mxu0 0.0
    %2602 = vmatprep.subr.mxu0 0.0
    %2603 = vmatpush1.msra.mxu0 0.0
    %2604 = vmatprep.subr.mxu0 0.0
    %2605 = vmatpush1.msra.mxu0 0.0
    %2606 = vmatprep.mubr.f32.mxu0 0.0
    %2607 = vmatmul.mubr.f32.gmra.mrb[0].mxu0 %v2466
    %v2608 = vpop.f32.mrb[0].mxu0
    %v2609 = vadd.f32 0.0, %v2608
    %v2610 = vpop.f32.mrb[0].mxu0
    %v2611 = vadd.f32 0.0, %v2610
    %2612 = vdwg.mxu0
    %2613 = vmatprep.subr.mxu0 %v2481
    %2614 = vmatpush1.msra.mxu0 %v2480
    %2615 = vmatprep.subr.mxu0 %v2485
    %2616 = vmatpush1.msra.mxu0 %v2484
    %2617 = vmatprep.subr.mxu0 %v2489
    %2618 = vmatpush1.msra.mxu0 %v2488
    %2619 = vmatprep.subr.mxu0 %v2493
    %2620 = vmatpush1.msra.mxu0 %v2492
    %2621 = vmatprep.subr.mxu0 %v2497
    %2622 = vmatpush1.msra.mxu0 %v2496
    %2623 = vmatprep.subr.mxu0 %v2501
    %2624 = vmatpush1.msra.mxu0 %v2500
    %2625 = vmatprep.subr.mxu0 %v2505
    %2626 = vmatpush1.msra.mxu0 %v2504
    %2627 = vmatprep.subr.mxu0 %v2509
    %2628 = vmatpush1.msra.mxu0 %v2508
    %2629 = vmatprep.subr.mxu0 %v2513
    %2630 = vmatpush1.msra.mxu0 %v2512
    %2631 = vmatprep.subr.mxu0 %v2517
    %2632 = vmatpush1.msra.mxu0 %v2516
    %2633 = vmatprep.subr.mxu0 %v2521
    %2634 = vmatpush1.msra.mxu0 %v2520
    %2635 = vmatprep.subr.mxu0 %v2525
    %2636 = vmatpush1.msra.mxu0 %v2524
    %2637 = vmatprep.subr.mxu0 %v2529
    %2638 = vmatpush1.msra.mxu0 %v2528
    %2639 = vmatprep.subr.mxu0 %v2533
    %2640 = vmatpush1.msra.mxu0 %v2532
    %2641 = vmatprep.subr.mxu0 %v2537
    %2642 = vmatpush1.msra.mxu0 %v2536
    %2643 = vmatprep.subr.mxu0 %v2541
    %2644 = vmatpush1.msra.mxu0 %v2540
    %2645 = vmatprep.subr.mxu0 0.0
    %2646 = vmatpush1.msra.mxu0 0.0
    %2647 = vmatprep.subr.mxu0 0.0
    %2648 = vmatpush1.msra.mxu0 0.0
    %2649 = vmatprep.subr.mxu0 0.0
    %2650 = vmatpush1.msra.mxu0 0.0
    %2651 = vmatprep.subr.mxu0 0.0
    %2652 = vmatpush1.msra.mxu0 0.0
    %2653 = vmatprep.subr.mxu0 0.0
    %2654 = vmatpush1.msra.mxu0 0.0
    %2655 = vmatprep.subr.mxu0 0.0
    %2656 = vmatpush1.msra.mxu0 0.0
    %2657 = vmatprep.subr.mxu0 0.0
    %2658 = vmatpush1.msra.mxu0 0.0
    %2659 = vmatprep.subr.mxu0 0.0
    %2660 = vmatpush1.msra.mxu0 0.0
    %2661 = vmatprep.subr.mxu0 0.0
    %2662 = vmatpush1.msra.mxu0 0.0
    %2663 = vmatprep.subr.mxu0 0.0
    %2664 = vmatpush1.msra.mxu0 0.0
    %2665 = vmatprep.subr.mxu0 0.0
    %2666 = vmatpush1.msra.mxu0 0.0
    %2667 = vmatprep.subr.mxu0 0.0
    %2668 = vmatpush1.msra.mxu0 0.0
    %2669 = vmatprep.subr.mxu0 0.0
    %2670 = vmatpush1.msra.mxu0 0.0
    %2671 = vmatprep.subr.mxu0 0.0
    %2672 = vmatpush1.msra.mxu0 0.0
    %2673 = vmatprep.subr.mxu0 0.0
    %2674 = vmatpush1.msra.mxu0 0.0
    %2675 = vmatprep.subr.mxu0 0.0
    %2676 = vmatpush1.msra.mxu0 0.0
    %2677 = vmatprep.mubr.f32.mxu0 0.0
    %2678 = vmatmul.mubr.f32.gmra.mrb[0].mxu0 %v2466
    %v2679 = vpop.f32.mrb[0].mxu0
    %v2680 = vadd.f32 0.0, %v2679
    %v2681 = vpop.f32.mrb[0].mxu0
    %v2682 = vadd.f32 0.0, %v2681
    %2683 = vdwg.mxu0
    %v2684 = vadd.f32 %v2474, %v2609
    %v2685 = vadd.f32 %v2475, %v2611
    %v2686 = vadd.f32 %v2476, %v2680
    %v2687 = vadd.f32 %v2477, %v2682
    %v2688 = vmul.f32 %v2684, 0.5
    %v2689 = vtanh.pop %v2688
    %v2690 = vmul.f32 %v2689, 0.5
    %v2691 = vadd.f32 %v2690, 0.5
    %v2692 = vmul.f32 %v2685, 0.5
    %v2693 = vtanh.pop %v2692
    %v2694 = vmul.f32 %v2693, 0.5
    %v2695 = vadd.f32 %v2694, 0.5
    %v2696 = vtanh.pop %v2686
    %v2697 = vmul.f32 %v2687, 0.5
    %v2698 = vtanh.pop %v2697
    %v2699 = vmul.f32 %v2698, 0.5
    %v2700 = vadd.f32 %v2699, 0.5
    %v2701 = vmul.f32 %v2695, %v2464
    %v2702 = vmul.f32 %v2691, %v2696
    %v2703 = vadd.f32 %v2701, %v2702
    %v2704 = vtanh.pop %v2703
    %v2705 = vmul.f32 %v2700, %v2704
    %s2706 = scalar_lea.vmem [#allocation3], 64
    %2707 = vst [vmem:[%s2706] sm:$0xff] %v2705
    %s2708 = scalar_lea.vmem [#allocation4], 56
    %2709 = vst [vmem:[%s2708] sm:$0xff] %v2705
    %s2710 = smul.u32 9, 4
    %s2711 = smul.addr %s2710, 8
    %s2712 = scalar_lea.vmem [#allocation2], %s2711
    %v2713 = vld [vmem:[%s2712] sm:$0xff]
    %v2714 = vld [vmem:[%s2712 + $0x8] sm:$0xff]
    %v2715 = vld [vmem:[%s2712 + $0x10] sm:$0xff]
    %v2716 = vld [vmem:[%s2712 + $0x18] sm:$0xff]
    %v2717 = vld [vmem:[%s3] sm:$0xff]
    %v2718 = vld [vmem:[%s3 + $0x8] sm:$0xff]
    %v2719 = vld [vmem:[%s3 + $0x10] sm:$0xff]
    %v2720 = vld [vmem:[%s3 + $0x18] sm:$0xff]
    %v2721 = vld [vmem:[%s3 + $0x20] sm:$0xff]
    %v2722 = vld [vmem:[%s3 + $0x28] sm:$0xff]
    %v2723 = vld [vmem:[%s3 + $0x30] sm:$0xff]
    %v2724 = vld [vmem:[%s3 + $0x38] sm:$0xff]
    %v2725 = vld [vmem:[%s3 + $0x40] sm:$0xff]
    %v2726 = vld [vmem:[%s3 + $0x48] sm:$0xff]
    %v2727 = vld [vmem:[%s3 + $0x50] sm:$0xff]
    %v2728 = vld [vmem:[%s3 + $0x58] sm:$0xff]
    %v2729 = vld [vmem:[%s3 + $0x60] sm:$0xff]
    %v2730 = vld [vmem:[%s3 + $0x68] sm:$0xff]
    %v2731 = vld [vmem:[%s3 + $0x70] sm:$0xff]
    %v2732 = vld [vmem:[%s3 + $0x78] sm:$0xff]
    %v2733 = vld [vmem:[%s3 + $0x80] sm:$0xff]
    %v2734 = vld [vmem:[%s3 + $0x88] sm:$0xff]
    %v2735 = vld [vmem:[%s3 + $0x90] sm:$0xff]
    %v2736 = vld [vmem:[%s3 + $0x98] sm:$0xff]
    %v2737 = vld [vmem:[%s3 + $0xa0] sm:$0xff]
    %v2738 = vld [vmem:[%s3 + $0xa8] sm:$0xff]
    %v2739 = vld [vmem:[%s3 + $0xb0] sm:$0xff]
    %v2740 = vld [vmem:[%s3 + $0xb8] sm:$0xff]
    %v2741 = vld [vmem:[%s3 + $0xc0] sm:$0xff]
    %v2742 = vld [vmem:[%s3 + $0xc8] sm:$0xff]
    %v2743 = vld [vmem:[%s3 + $0xd0] sm:$0xff]
    %v2744 = vld [vmem:[%s3 + $0xd8] sm:$0xff]
    %v2745 = vld [vmem:[%s3 + $0xe0] sm:$0xff]
    %v2746 = vld [vmem:[%s3 + $0xe8] sm:$0xff]
    %v2747 = vld [vmem:[%s3 + $0xf0] sm:$0xff]
    %v2748 = vld [vmem:[%s3 + $0xf8] sm:$0xff]
    %v2749 = vld [vmem:[%s3 + $0x100] sm:$0xff]
    %v2750 = vld [vmem:[%s3 + $0x108] sm:$0xff]
    %v2751 = vld [vmem:[%s3 + $0x110] sm:$0xff]
    %v2752 = vld [vmem:[%s3 + $0x118] sm:$0xff]
    %v2753 = vld [vmem:[%s3 + $0x120] sm:$0xff]
    %v2754 = vld [vmem:[%s3 + $0x128] sm:$0xff]
    %v2755 = vld [vmem:[%s3 + $0x130] sm:$0xff]
    %v2756 = vld [vmem:[%s3 + $0x138] sm:$0xff]
    %v2757 = vld [vmem:[%s3 + $0x140] sm:$0xff]
    %v2758 = vld [vmem:[%s3 + $0x148] sm:$0xff]
    %v2759 = vld [vmem:[%s3 + $0x150] sm:$0xff]
    %v2760 = vld [vmem:[%s3 + $0x158] sm:$0xff]
    %v2761 = vld [vmem:[%s3 + $0x160] sm:$0xff]
    %v2762 = vld [vmem:[%s3 + $0x168] sm:$0xff]
    %v2763 = vld [vmem:[%s3 + $0x170] sm:$0xff]
    %v2764 = vld [vmem:[%s3 + $0x178] sm:$0xff]
    %v2765 = vld [vmem:[%s3 + $0x180] sm:$0xff]
    %v2766 = vld [vmem:[%s3 + $0x188] sm:$0xff]
    %v2767 = vld [vmem:[%s3 + $0x190] sm:$0xff]
    %v2768 = vld [vmem:[%s3 + $0x198] sm:$0xff]
    %v2769 = vld [vmem:[%s3 + $0x1a0] sm:$0xff]
    %v2770 = vld [vmem:[%s3 + $0x1a8] sm:$0xff]
    %v2771 = vld [vmem:[%s3 + $0x1b0] sm:$0xff]
    %v2772 = vld [vmem:[%s3 + $0x1b8] sm:$0xff]
    %v2773 = vld [vmem:[%s3 + $0x1c0] sm:$0xff]
    %v2774 = vld [vmem:[%s3 + $0x1c8] sm:$0xff]
    %v2775 = vld [vmem:[%s3 + $0x1d0] sm:$0xff]
    %v2776 = vld [vmem:[%s3 + $0x1d8] sm:$0xff]
    %v2777 = vld [vmem:[%s3 + $0x1e0] sm:$0xff]
    %v2778 = vld [vmem:[%s3 + $0x1e8] sm:$0xff]
    %v2779 = vld [vmem:[%s3 + $0x1f0] sm:$0xff]
    %v2780 = vld [vmem:[%s3 + $0x1f8] sm:$0xff]
    %2781 = vmatprep.subr.mxu0 %v2718
    %2782 = vmatpush1.msra.mxu0 %v2717
    %2783 = vmatprep.subr.mxu0 %v2722
    %2784 = vmatpush1.msra.mxu0 %v2721
    %2785 = vmatprep.subr.mxu0 %v2726
    %2786 = vmatpush1.msra.mxu0 %v2725
    %2787 = vmatprep.subr.mxu0 %v2730
    %2788 = vmatpush1.msra.mxu0 %v2729
    %2789 = vmatprep.subr.mxu0 %v2734
    %2790 = vmatpush1.msra.mxu0 %v2733
    %2791 = vmatprep.subr.mxu0 %v2738
    %2792 = vmatpush1.msra.mxu0 %v2737
    %2793 = vmatprep.subr.mxu0 %v2742
    %2794 = vmatpush1.msra.mxu0 %v2741
    %2795 = vmatprep.subr.mxu0 %v2746
    %2796 = vmatpush1.msra.mxu0 %v2745
    %2797 = vmatprep.subr.mxu0 %v2750
    %2798 = vmatpush1.msra.mxu0 %v2749
    %2799 = vmatprep.subr.mxu0 %v2754
    %2800 = vmatpush1.msra.mxu0 %v2753
    %2801 = vmatprep.subr.mxu0 %v2758
    %2802 = vmatpush1.msra.mxu0 %v2757
    %2803 = vmatprep.subr.mxu0 %v2762
    %2804 = vmatpush1.msra.mxu0 %v2761
    %2805 = vmatprep.subr.mxu0 %v2766
    %2806 = vmatpush1.msra.mxu0 %v2765
    %2807 = vmatprep.subr.mxu0 %v2770
    %2808 = vmatpush1.msra.mxu0 %v2769
    %2809 = vmatprep.subr.mxu0 %v2774
    %2810 = vmatpush1.msra.mxu0 %v2773
    %2811 = vmatprep.subr.mxu0 %v2778
    %2812 = vmatpush1.msra.mxu0 %v2777
    %2813 = vmatprep.subr.mxu0 0.0
    %2814 = vmatpush1.msra.mxu0 0.0
    %2815 = vmatprep.subr.mxu0 0.0
    %2816 = vmatpush1.msra.mxu0 0.0
    %2817 = vmatprep.subr.mxu0 0.0
    %2818 = vmatpush1.msra.mxu0 0.0
    %2819 = vmatprep.subr.mxu0 0.0
    %2820 = vmatpush1.msra.mxu0 0.0
    %2821 = vmatprep.subr.mxu0 0.0
    %2822 = vmatpush1.msra.mxu0 0.0
    %2823 = vmatprep.subr.mxu0 0.0
    %2824 = vmatpush1.msra.mxu0 0.0
    %2825 = vmatprep.subr.mxu0 0.0
    %2826 = vmatpush1.msra.mxu0 0.0
    %2827 = vmatprep.subr.mxu0 0.0
    %2828 = vmatpush1.msra.mxu0 0.0
    %2829 = vmatprep.subr.mxu0 0.0
    %2830 = vmatpush1.msra.mxu0 0.0
    %2831 = vmatprep.subr.mxu0 0.0
    %2832 = vmatpush1.msra.mxu0 0.0
    %2833 = vmatprep.subr.mxu0 0.0
    %2834 = vmatpush1.msra.mxu0 0.0
    %2835 = vmatprep.subr.mxu0 0.0
    %2836 = vmatpush1.msra.mxu0 0.0
    %2837 = vmatprep.subr.mxu0 0.0
    %2838 = vmatpush1.msra.mxu0 0.0
    %2839 = vmatprep.subr.mxu0 0.0
    %2840 = vmatpush1.msra.mxu0 0.0
    %2841 = vmatprep.subr.mxu0 0.0
    %2842 = vmatpush1.msra.mxu0 0.0
    %2843 = vmatprep.subr.mxu0 0.0
    %2844 = vmatpush1.msra.mxu0 0.0
    %2845 = vmatprep.mubr.f32.mxu0 0.0
    %2846 = vmatmul.mubr.f32.gmra.mrb[0].mxu0 %v2705
    %v2847 = vpop.f32.mrb[0].mxu0
    %v2848 = vadd.f32 0.0, %v2847
    %v2849 = vpop.f32.mrb[0].mxu0
    %v2850 = vadd.f32 0.0, %v2849
    %2851 = vdwg.mxu0
    %2852 = vmatprep.subr.mxu0 %v2720
    %2853 = vmatpush1.msra.mxu0 %v2719
    %2854 = vmatprep.subr.mxu0 %v2724
    %2855 = vmatpush1.msra.mxu0 %v2723
    %2856 = vmatprep.subr.mxu0 %v2728
    %2857 = vmatpush1.msra.mxu0 %v2727
    %2858 = vmatprep.subr.mxu0 %v2732
    %2859 = vmatpush1.msra.mxu0 %v2731
    %2860 = vmatprep.subr.mxu0 %v2736
    %2861 = vmatpush1.msra.mxu0 %v2735
    %2862 = vmatprep.subr.mxu0 %v2740
    %2863 = vmatpush1.msra.mxu0 %v2739
    %2864 = vmatprep.subr.mxu0 %v2744
    %2865 = vmatpush1.msra.mxu0 %v2743
    %2866 = vmatprep.subr.mxu0 %v2748
    %2867 = vmatpush1.msra.mxu0 %v2747
    %2868 = vmatprep.subr.mxu0 %v2752
    %2869 = vmatpush1.msra.mxu0 %v2751
    %2870 = vmatprep.subr.mxu0 %v2756
    %2871 = vmatpush1.msra.mxu0 %v2755
    %2872 = vmatprep.subr.mxu0 %v2760
    %2873 = vmatpush1.msra.mxu0 %v2759
    %2874 = vmatprep.subr.mxu0 %v2764
    %2875 = vmatpush1.msra.mxu0 %v2763
    %2876 = vmatprep.subr.mxu0 %v2768
    %2877 = vmatpush1.msra.mxu0 %v2767
    %2878 = vmatprep.subr.mxu0 %v2772
    %2879 = vmatpush1.msra.mxu0 %v2771
    %2880 = vmatprep.subr.mxu0 %v2776
    %2881 = vmatpush1.msra.mxu0 %v2775
    %2882 = vmatprep.subr.mxu0 %v2780
    %2883 = vmatpush1.msra.mxu0 %v2779
    %2884 = vmatprep.subr.mxu0 0.0
    %2885 = vmatpush1.msra.mxu0 0.0
    %2886 = vmatprep.subr.mxu0 0.0
    %2887 = vmatpush1.msra.mxu0 0.0
    %2888 = vmatprep.subr.mxu0 0.0
    %2889 = vmatpush1.msra.mxu0 0.0
    %2890 = vmatprep.subr.mxu0 0.0
    %2891 = vmatpush1.msra.mxu0 0.0
    %2892 = vmatprep.subr.mxu0 0.0
    %2893 = vmatpush1.msra.mxu0 0.0
    %2894 = vmatprep.subr.mxu0 0.0
    %2895 = vmatpush1.msra.mxu0 0.0
    %2896 = vmatprep.subr.mxu0 0.0
    %2897 = vmatpush1.msra.mxu0 0.0
    %2898 = vmatprep.subr.mxu0 0.0
    %2899 = vmatpush1.msra.mxu0 0.0
    %2900 = vmatprep.subr.mxu0 0.0
    %2901 = vmatpush1.msra.mxu0 0.0
    %2902 = vmatprep.subr.mxu0 0.0
    %2903 = vmatpush1.msra.mxu0 0.0
    %2904 = vmatprep.subr.mxu0 0.0
    %2905 = vmatpush1.msra.mxu0 0.0
    %2906 = vmatprep.subr.mxu0 0.0
    %2907 = vmatpush1.msra.mxu0 0.0
    %2908 = vmatprep.subr.mxu0 0.0
    %2909 = vmatpush1.msra.mxu0 0.0
    %2910 = vmatprep.subr.mxu0 0.0
    %2911 = vmatpush1.msra.mxu0 0.0
    %2912 = vmatprep.subr.mxu0 0.0
    %2913 = vmatpush1.msra.mxu0 0.0
    %2914 = vmatprep.subr.mxu0 0.0
    %2915 = vmatpush1.msra.mxu0 0.0
    %2916 = vmatprep.mubr.f32.mxu0 0.0
    %2917 = vmatmul.mubr.f32.gmra.mrb[0].mxu0 %v2705
    %v2918 = vpop.f32.mrb[0].mxu0
    %v2919 = vadd.f32 0.0, %v2918
    %v2920 = vpop.f32.mrb[0].mxu0
    %v2921 = vadd.f32 0.0, %v2920
    %2922 = vdwg.mxu0
    %v2923 = vadd.f32 %v2713, %v2848
    %v2924 = vadd.f32 %v2714, %v2850
    %v2925 = vadd.f32 %v2715, %v2919
    %v2926 = vadd.f32 %v2716, %v2921
    %v2927 = vmul.f32 %v2923, 0.5
    %v2928 = vtanh.pop %v2927
    %v2929 = vmul.f32 %v2928, 0.5
    %v2930 = vadd.f32 %v2929, 0.5
    %v2931 = vmul.f32 %v2924, 0.5
    %v2932 = vtanh.pop %v2931
    %v2933 = vmul.f32 %v2932, 0.5
    %v2934 = vadd.f32 %v2933, 0.5
    %v2935 = vtanh.pop %v2925
    %v2936 = vmul.f32 %v2926, 0.5
    %v2937 = vtanh.pop %v2936
    %v2938 = vmul.f32 %v2937, 0.5
    %v2939 = vadd.f32 %v2938, 0.5
    %v2940 = vmul.f32 %v2934, %v2703
    %v2941 = vmul.f32 %v2930, %v2935
    %v2942 = vadd.f32 %v2940, %v2941
    %v2943 = vtanh.pop %v2942
    %v2944 = vmul.f32 %v2939, %v2943
    %s2945 = scalar_lea.vmem [#allocation3], 72
    %2946 = vst [vmem:[%s2945] sm:$0xff] %v2944
    %s2947 = scalar_lea.vmem [#allocation4], 48
    %2948 = vst [vmem:[%s2947] sm:$0xff] %v2944
    %s2949 = smul.u32 10, 4
    %s2950 = smul.addr %s2949, 8
    %s2951 = scalar_lea.vmem [#allocation2], %s2950
    %v2952 = vld [vmem:[%s2951] sm:$0xff]
    %v2953 = vld [vmem:[%s2951 + $0x8] sm:$0xff]
    %v2954 = vld [vmem:[%s2951 + $0x10] sm:$0xff]
    %v2955 = vld [vmem:[%s2951 + $0x18] sm:$0xff]
    %v2956 = vld [vmem:[%s3] sm:$0xff]
    %v2957 = vld [vmem:[%s3 + $0x8] sm:$0xff]
    %v2958 = vld [vmem:[%s3 + $0x10] sm:$0xff]
    %v2959 = vld [vmem:[%s3 + $0x18] sm:$0xff]
    %v2960 = vld [vmem:[%s3 + $0x20] sm:$0xff]
    %v2961 = vld [vmem:[%s3 + $0x28] sm:$0xff]
    %v2962 = vld [vmem:[%s3 + $0x30] sm:$0xff]
    %v2963 = vld [vmem:[%s3 + $0x38] sm:$0xff]
    %v2964 = vld [vmem:[%s3 + $0x40] sm:$0xff]
    %v2965 = vld [vmem:[%s3 + $0x48] sm:$0xff]
    %v2966 = vld [vmem:[%s3 + $0x50] sm:$0xff]
    %v2967 = vld [vmem:[%s3 + $0x58] sm:$0xff]
    %v2968 = vld [vmem:[%s3 + $0x60] sm:$0xff]
    %v2969 = vld [vmem:[%s3 + $0x68] sm:$0xff]
    %v2970 = vld [vmem:[%s3 + $0x70] sm:$0xff]
    %v2971 = vld [vmem:[%s3 + $0x78] sm:$0xff]
    %v2972 = vld [vmem:[%s3 + $0x80] sm:$0xff]
    %v2973 = vld [vmem:[%s3 + $0x88] sm:$0xff]
    %v2974 = vld [vmem:[%s3 + $0x90] sm:$0xff]
    %v2975 = vld [vmem:[%s3 + $0x98] sm:$0xff]
    %v2976 = vld [vmem:[%s3 + $0xa0] sm:$0xff]
    %v2977 = vld [vmem:[%s3 + $0xa8] sm:$0xff]
    %v2978 = vld [vmem:[%s3 + $0xb0] sm:$0xff]
    %v2979 = vld [vmem:[%s3 + $0xb8] sm:$0xff]
    %v2980 = vld [vmem:[%s3 + $0xc0] sm:$0xff]
    %v2981 = vld [vmem:[%s3 + $0xc8] sm:$0xff]
    %v2982 = vld [vmem:[%s3 + $0xd0] sm:$0xff]
    %v2983 = vld [vmem:[%s3 + $0xd8] sm:$0xff]
    %v2984 = vld [vmem:[%s3 + $0xe0] sm:$0xff]
    %v2985 = vld [vmem:[%s3 + $0xe8] sm:$0xff]
    %v2986 = vld [vmem:[%s3 + $0xf0] sm:$0xff]
    %v2987 = vld [vmem:[%s3 + $0xf8] sm:$0xff]
    %v2988 = vld [vmem:[%s3 + $0x100] sm:$0xff]
    %v2989 = vld [vmem:[%s3 + $0x108] sm:$0xff]
    %v2990 = vld [vmem:[%s3 + $0x110] sm:$0xff]
    %v2991 = vld [vmem:[%s3 + $0x118] sm:$0xff]
    %v2992 = vld [vmem:[%s3 + $0x120] sm:$0xff]
    %v2993 = vld [vmem:[%s3 + $0x128] sm:$0xff]
    %v2994 = vld [vmem:[%s3 + $0x130] sm:$0xff]
    %v2995 = vld [vmem:[%s3 + $0x138] sm:$0xff]
    %v2996 = vld [vmem:[%s3 + $0x140] sm:$0xff]
    %v2997 = vld [vmem:[%s3 + $0x148] sm:$0xff]
    %v2998 = vld [vmem:[%s3 + $0x150] sm:$0xff]
    %v2999 = vld [vmem:[%s3 + $0x158] sm:$0xff]
    %v3000 = vld [vmem:[%s3 + $0x160] sm:$0xff]
    %v3001 = vld [vmem:[%s3 + $0x168] sm:$0xff]
    %v3002 = vld [vmem:[%s3 + $0x170] sm:$0xff]
    %v3003 = vld [vmem:[%s3 + $0x178] sm:$0xff]
    %v3004 = vld [vmem:[%s3 + $0x180] sm:$0xff]
    %v3005 = vld [vmem:[%s3 + $0x188] sm:$0xff]
    %v3006 = vld [vmem:[%s3 + $0x190] sm:$0xff]
    %v3007 = vld [vmem:[%s3 + $0x198] sm:$0xff]
    %v3008 = vld [vmem:[%s3 + $0x1a0] sm:$0xff]
    %v3009 = vld [vmem:[%s3 + $0x1a8] sm:$0xff]
    %v3010 = vld [vmem:[%s3 + $0x1b0] sm:$0xff]
    %v3011 = vld [vmem:[%s3 + $0x1b8] sm:$0xff]
    %v3012 = vld [vmem:[%s3 + $0x1c0] sm:$0xff]
    %v3013 = vld [vmem:[%s3 + $0x1c8] sm:$0xff]
    %v3014 = vld [vmem:[%s3 + $0x1d0] sm:$0xff]
    %v3015 = vld [vmem:[%s3 + $0x1d8] sm:$0xff]
    %v3016 = vld [vmem:[%s3 + $0x1e0] sm:$0xff]
    %v3017 = vld [vmem:[%s3 + $0x1e8] sm:$0xff]
    %v3018 = vld [vmem:[%s3 + $0x1f0] sm:$0xff]
    %v3019 = vld [vmem:[%s3 + $0x1f8] sm:$0xff]
    %3020 = vmatprep.subr.mxu0 %v2957
    %3021 = vmatpush1.msra.mxu0 %v2956
    %3022 = vmatprep.subr.mxu0 %v2961
    %3023 = vmatpush1.msra.mxu0 %v2960
    %3024 = vmatprep.subr.mxu0 %v2965
    %3025 = vmatpush1.msra.mxu0 %v2964
    %3026 = vmatprep.subr.mxu0 %v2969
    %3027 = vmatpush1.msra.mxu0 %v2968
    %3028 = vmatprep.subr.mxu0 %v2973
    %3029 = vmatpush1.msra.mxu0 %v2972
    %3030 = vmatprep.subr.mxu0 %v2977
    %3031 = vmatpush1.msra.mxu0 %v2976
    %3032 = vmatprep.subr.mxu0 %v2981
    %3033 = vmatpush1.msra.mxu0 %v2980
    %3034 = vmatprep.subr.mxu0 %v2985
    %3035 = vmatpush1.msra.mxu0 %v2984
    %3036 = vmatprep.subr.mxu0 %v2989
    %3037 = vmatpush1.msra.mxu0 %v2988
    %3038 = vmatprep.subr.mxu0 %v2993
    %3039 = vmatpush1.msra.mxu0 %v2992
    %3040 = vmatprep.subr.mxu0 %v2997
    %3041 = vmatpush1.msra.mxu0 %v2996
    %3042 = vmatprep.subr.mxu0 %v3001
    %3043 = vmatpush1.msra.mxu0 %v3000
    %3044 = vmatprep.subr.mxu0 %v3005
    %3045 = vmatpush1.msra.mxu0 %v3004
    %3046 = vmatprep.subr.mxu0 %v3009
    %3047 = vmatpush1.msra.mxu0 %v3008
    %3048 = vmatprep.subr.mxu0 %v3013
    %3049 = vmatpush1.msra.mxu0 %v3012
    %3050 = vmatprep.subr.mxu0 %v3017
    %3051 = vmatpush1.msra.mxu0 %v3016
    %3052 = vmatprep.subr.mxu0 0.0
    %3053 = vmatpush1.msra.mxu0 0.0
    %3054 = vmatprep.subr.mxu0 0.0
    %3055 = vmatpush1.msra.mxu0 0.0
    %3056 = vmatprep.subr.mxu0 0.0
    %3057 = vmatpush1.msra.mxu0 0.0
    %3058 = vmatprep.subr.mxu0 0.0
    %3059 = vmatpush1.msra.mxu0 0.0
    %3060 = vmatprep.subr.mxu0 0.0
    %3061 = vmatpush1.msra.mxu0 0.0
    %3062 = vmatprep.subr.mxu0 0.0
    %3063 = vmatpush1.msra.mxu0 0.0
    %3064 = vmatprep.subr.mxu0 0.0
    %3065 = vmatpush1.msra.mxu0 0.0
    %3066 = vmatprep.subr.mxu0 0.0
    %3067 = vmatpush1.msra.mxu0 0.0
    %3068 = vmatprep.subr.mxu0 0.0
    %3069 = vmatpush1.msra.mxu0 0.0
    %3070 = vmatprep.subr.mxu0 0.0
    %3071 = vmatpush1.msra.mxu0 0.0
    %3072 = vmatprep.subr.mxu0 0.0
    %3073 = vmatpush1.msra.mxu0 0.0
    %3074 = vmatprep.subr.mxu0 0.0
    %3075 = vmatpush1.msra.mxu0 0.0
    %3076 = vmatprep.subr.mxu0 0.0
    %3077 = vmatpush1.msra.mxu0 0.0
    %3078 = vmatprep.subr.mxu0 0.0
    %3079 = vmatpush1.msra.mxu0 0.0
    %3080 = vmatprep.subr.mxu0 0.0
    %3081 = vmatpush1.msra.mxu0 0.0
    %3082 = vmatprep.subr.mxu0 0.0
    %3083 = vmatpush1.msra.mxu0 0.0
    %3084 = vmatprep.mubr.f32.mxu0 0.0
    %3085 = vmatmul.mubr.f32.gmra.mrb[0].mxu0 %v2944
    %v3086 = vpop.f32.mrb[0].mxu0
    %v3087 = vadd.f32 0.0, %v3086
    %v3088 = vpop.f32.mrb[0].mxu0
    %v3089 = vadd.f32 0.0, %v3088
    %3090 = vdwg.mxu0
    %3091 = vmatprep.subr.mxu0 %v2959
    %3092 = vmatpush1.msra.mxu0 %v2958
    %3093 = vmatprep.subr.mxu0 %v2963
    %3094 = vmatpush1.msra.mxu0 %v2962
    %3095 = vmatprep.subr.mxu0 %v2967
    %3096 = vmatpush1.msra.mxu0 %v2966
    %3097 = vmatprep.subr.mxu0 %v2971
    %3098 = vmatpush1.msra.mxu0 %v2970
    %3099 = vmatprep.subr.mxu0 %v2975
    %3100 = vmatpush1.msra.mxu0 %v2974
    %3101 = vmatprep.subr.mxu0 %v2979
    %3102 = vmatpush1.msra.mxu0 %v2978
    %3103 = vmatprep.subr.mxu0 %v2983
    %3104 = vmatpush1.msra.mxu0 %v2982
    %3105 = vmatprep.subr.mxu0 %v2987
    %3106 = vmatpush1.msra.mxu0 %v2986
    %3107 = vmatprep.subr.mxu0 %v2991
    %3108 = vmatpush1.msra.mxu0 %v2990
    %3109 = vmatprep.subr.mxu0 %v2995
    %3110 = vmatpush1.msra.mxu0 %v2994
    %3111 = vmatprep.subr.mxu0 %v2999
    %3112 = vmatpush1.msra.mxu0 %v2998
    %3113 = vmatprep.subr.mxu0 %v3003
    %3114 = vmatpush1.msra.mxu0 %v3002
    %3115 = vmatprep.subr.mxu0 %v3007
    %3116 = vmatpush1.msra.mxu0 %v3006
    %3117 = vmatprep.subr.mxu0 %v3011
    %3118 = vmatpush1.msra.mxu0 %v3010
    %3119 = vmatprep.subr.mxu0 %v3015
    %3120 = vmatpush1.msra.mxu0 %v3014
    %3121 = vmatprep.subr.mxu0 %v3019
    %3122 = vmatpush1.msra.mxu0 %v3018
    %3123 = vmatprep.subr.mxu0 0.0
    %3124 = vmatpush1.msra.mxu0 0.0
    %3125 = vmatprep.subr.mxu0 0.0
    %3126 = vmatpush1.msra.mxu0 0.0
    %3127 = vmatprep.subr.mxu0 0.0
    %3128 = vmatpush1.msra.mxu0 0.0
    %3129 = vmatprep.subr.mxu0 0.0
    %3130 = vmatpush1.msra.mxu0 0.0
    %3131 = vmatprep.subr.mxu0 0.0
    %3132 = vmatpush1.msra.mxu0 0.0
    %3133 = vmatprep.subr.mxu0 0.0
    %3134 = vmatpush1.msra.mxu0 0.0
    %3135 = vmatprep.subr.mxu0 0.0
    %3136 = vmatpush1.msra.mxu0 0.0
    %3137 = vmatprep.subr.mxu0 0.0
    %3138 = vmatpush1.msra.mxu0 0.0
    %3139 = vmatprep.subr.mxu0 0.0
    %3140 = vmatpush1.msra.mxu0 0.0
    %3141 = vmatprep.subr.mxu0 0.0
    %3142 = vmatpush1.msra.mxu0 0.0
    %3143 = vmatprep.subr.mxu0 0.0
    %3144 = vmatpush1.msra.mxu0 0.0
    %3145 = vmatprep.subr.mxu0 0.0
    %3146 = vmatpush1.msra.mxu0 0.0
    %3147 = vmatprep.subr.mxu0 0.0
    %3148 = vmatpush1.msra.mxu0 0.0
    %3149 = vmatprep.subr.mxu0 0.0
    %3150 = vmatpush1.msra.mxu0 0.0
    %3151 = vmatprep.subr.mxu0 0.0
    %3152 = vmatpush1.msra.mxu0 0.0
    %3153 = vmatprep.subr.mxu0 0.0
    %3154 = vmatpush1.msra.mxu0 0.0
    %3155 = vmatprep.mubr.f32.mxu0 0.0
    %3156 = vmatmul.mubr.f32.gmra.mrb[0].mxu0 %v2944
    %v3157 = vpop.f32.mrb[0].mxu0
    %v3158 = vadd.f32 0.0, %v3157
    %v3159 = vpop.f32.mrb[0].mxu0
    %v3160 = vadd.f32 0.0, %v3159
    %3161 = vdwg.mxu0
    %v3162 = vadd.f32 %v2952, %v3087
    %v3163 = vadd.f32 %v2953, %v3089
    %v3164 = vadd.f32 %v2954, %v3158
    %v3165 = vadd.f32 %v2955, %v3160
    %v3166 = vmul.f32 %v3162, 0.5
    %v3167 = vtanh.pop %v3166
    %v3168 = vmul.f32 %v3167, 0.5
    %v3169 = vadd.f32 %v3168, 0.5
    %v3170 = vmul.f32 %v3163, 0.5
    %v3171 = vtanh.pop %v3170
    %v3172 = vmul.f32 %v3171, 0.5
    %v3173 = vadd.f32 %v3172, 0.5
    %v3174 = vtanh.pop %v3164
    %v3175 = vmul.f32 %v3165, 0.5
    %v3176 = vtanh.pop %v3175
    %v3177 = vmul.f32 %v3176, 0.5
    %v3178 = vadd.f32 %v3177, 0.5
    %v3179 = vmul.f32 %v3173, %v2942
    %v3180 = vmul.f32 %v3169, %v3174
    %v3181 = vadd.f32 %v3179, %v3180
    %v3182 = vtanh.pop %v3181
    %v3183 = vmul.f32 %v3178, %v3182
    %s3184 = scalar_lea.vmem [#allocation3], 80
    %3185 = vst [vmem:[%s3184] sm:$0xff] %v3183
    %s3186 = scalar_lea.vmem [#allocation4], 40
    %3187 = vst [vmem:[%s3186] sm:$0xff] %v3183
    %s3188 = smul.u32 11, 4
    %s3189 = smul.addr %s3188, 8
    %s3190 = scalar_lea.vmem [#allocation2], %s3189
    %v3191 = vld [vmem:[%s3190] sm:$0xff]
    %v3192 = vld [vmem:[%s3190 + $0x8] sm:$0xff]
    %v3193 = vld [vmem:[%s3190 + $0x10] sm:$0xff]
    %v3194 = vld [vmem:[%s3190 + $0x18] sm:$0xff]
    %v3195 = vld [vmem:[%s3] sm:$0xff]
    %v3196 = vld [vmem:[%s3 + $0x8] sm:$0xff]
    %v3197 = vld [vmem:[%s3 + $0x10] sm:$0xff]
    %v3198 = vld [vmem:[%s3 + $0x18] sm:$0xff]
    %v3199 = vld [vmem:[%s3 + $0x20] sm:$0xff]
    %v3200 = vld [vmem:[%s3 + $0x28] sm:$0xff]
    %v3201 = vld [vmem:[%s3 + $0x30] sm:$0xff]
    %v3202 = vld [vmem:[%s3 + $0x38] sm:$0xff]
    %v3203 = vld [vmem:[%s3 + $0x40] sm:$0xff]
    %v3204 = vld [vmem:[%s3 + $0x48] sm:$0xff]
    %v3205 = vld [vmem:[%s3 + $0x50] sm:$0xff]
    %v3206 = vld [vmem:[%s3 + $0x58] sm:$0xff]
    %v3207 = vld [vmem:[%s3 + $0x60] sm:$0xff]
    %v3208 = vld [vmem:[%s3 + $0x68] sm:$0xff]
    %v3209 = vld [vmem:[%s3 + $0x70] sm:$0xff]
    %v3210 = vld [vmem:[%s3 + $0x78] sm:$0xff]
    %v3211 = vld [vmem:[%s3 + $0x80] sm:$0xff]
    %v3212 = vld [vmem:[%s3 + $0x88] sm:$0xff]
    %v3213 = vld [vmem:[%s3 + $0x90] sm:$0xff]
    %v3214 = vld [vmem:[%s3 + $0x98] sm:$0xff]
    %v3215 = vld [vmem:[%s3 + $0xa0] sm:$0xff]
    %v3216 = vld [vmem:[%s3 + $0xa8] sm:$0xff]
    %v3217 = vld [vmem:[%s3 + $0xb0] sm:$0xff]
    %v3218 = vld [vmem:[%s3 + $0xb8] sm:$0xff]
    %v3219 = vld [vmem:[%s3 + $0xc0] sm:$0xff]
    %v3220 = vld [vmem:[%s3 + $0xc8] sm:$0xff]
    %v3221 = vld [vmem:[%s3 + $0xd0] sm:$0xff]
    %v3222 = vld [vmem:[%s3 + $0xd8] sm:$0xff]
    %v3223 = vld [vmem:[%s3 + $0xe0] sm:$0xff]
    %v3224 = vld [vmem:[%s3 + $0xe8] sm:$0xff]
    %v3225 = vld [vmem:[%s3 + $0xf0] sm:$0xff]
    %v3226 = vld [vmem:[%s3 + $0xf8] sm:$0xff]
    %v3227 = vld [vmem:[%s3 + $0x100] sm:$0xff]
    %v3228 = vld [vmem:[%s3 + $0x108] sm:$0xff]
    %v3229 = vld [vmem:[%s3 + $0x110] sm:$0xff]
    %v3230 = vld [vmem:[%s3 + $0x118] sm:$0xff]
    %v3231 = vld [vmem:[%s3 + $0x120] sm:$0xff]
    %v3232 = vld [vmem:[%s3 + $0x128] sm:$0xff]
    %v3233 = vld [vmem:[%s3 + $0x130] sm:$0xff]
    %v3234 = vld [vmem:[%s3 + $0x138] sm:$0xff]
    %v3235 = vld [vmem:[%s3 + $0x140] sm:$0xff]
    %v3236 = vld [vmem:[%s3 + $0x148] sm:$0xff]
    %v3237 = vld [vmem:[%s3 + $0x150] sm:$0xff]
    %v3238 = vld [vmem:[%s3 + $0x158] sm:$0xff]
    %v3239 = vld [vmem:[%s3 + $0x160] sm:$0xff]
    %v3240 = vld [vmem:[%s3 + $0x168] sm:$0xff]
    %v3241 = vld [vmem:[%s3 + $0x170] sm:$0xff]
    %v3242 = vld [vmem:[%s3 + $0x178] sm:$0xff]
    %v3243 = vld [vmem:[%s3 + $0x180] sm:$0xff]
    %v3244 = vld [vmem:[%s3 + $0x188] sm:$0xff]
    %v3245 = vld [vmem:[%s3 + $0x190] sm:$0xff]
    %v3246 = vld [vmem:[%s3 + $0x198] sm:$0xff]
    %v3247 = vld [vmem:[%s3 + $0x1a0] sm:$0xff]
    %v3248 = vld [vmem:[%s3 + $0x1a8] sm:$0xff]
    %v3249 = vld [vmem:[%s3 + $0x1b0] sm:$0xff]
    %v3250 = vld [vmem:[%s3 + $0x1b8] sm:$0xff]
    %v3251 = vld [vmem:[%s3 + $0x1c0] sm:$0xff]
    %v3252 = vld [vmem:[%s3 + $0x1c8] sm:$0xff]
    %v3253 = vld [vmem:[%s3 + $0x1d0] sm:$0xff]
    %v3254 = vld [vmem:[%s3 + $0x1d8] sm:$0xff]
    %v3255 = vld [vmem:[%s3 + $0x1e0] sm:$0xff]
    %v3256 = vld [vmem:[%s3 + $0x1e8] sm:$0xff]
    %v3257 = vld [vmem:[%s3 + $0x1f0] sm:$0xff]
    %v3258 = vld [vmem:[%s3 + $0x1f8] sm:$0xff]
    %3259 = vmatprep.subr.mxu0 %v3196
    %3260 = vmatpush1.msra.mxu0 %v3195
    %3261 = vmatprep.subr.mxu0 %v3200
    %3262 = vmatpush1.msra.mxu0 %v3199
    %3263 = vmatprep.subr.mxu0 %v3204
    %3264 = vmatpush1.msra.mxu0 %v3203
    %3265 = vmatprep.subr.mxu0 %v3208
    %3266 = vmatpush1.msra.mxu0 %v3207
    %3267 = vmatprep.subr.mxu0 %v3212
    %3268 = vmatpush1.msra.mxu0 %v3211
    %3269 = vmatprep.subr.mxu0 %v3216
    %3270 = vmatpush1.msra.mxu0 %v3215
    %3271 = vmatprep.subr.mxu0 %v3220
    %3272 = vmatpush1.msra.mxu0 %v3219
    %3273 = vmatprep.subr.mxu0 %v3224
    %3274 = vmatpush1.msra.mxu0 %v3223
    %3275 = vmatprep.subr.mxu0 %v3228
    %3276 = vmatpush1.msra.mxu0 %v3227
    %3277 = vmatprep.subr.mxu0 %v3232
    %3278 = vmatpush1.msra.mxu0 %v3231
    %3279 = vmatprep.subr.mxu0 %v3236
    %3280 = vmatpush1.msra.mxu0 %v3235
    %3281 = vmatprep.subr.mxu0 %v3240
    %3282 = vmatpush1.msra.mxu0 %v3239
    %3283 = vmatprep.subr.mxu0 %v3244
    %3284 = vmatpush1.msra.mxu0 %v3243
    %3285 = vmatprep.subr.mxu0 %v3248
    %3286 = vmatpush1.msra.mxu0 %v3247
    %3287 = vmatprep.subr.mxu0 %v3252
    %3288 = vmatpush1.msra.mxu0 %v3251
    %3289 = vmatprep.subr.mxu0 %v3256
    %3290 = vmatpush1.msra.mxu0 %v3255
    %3291 = vmatprep.subr.mxu0 0.0
    %3292 = vmatpush1.msra.mxu0 0.0
    %3293 = vmatprep.subr.mxu0 0.0
    %3294 = vmatpush1.msra.mxu0 0.0
    %3295 = vmatprep.subr.mxu0 0.0
    %3296 = vmatpush1.msra.mxu0 0.0
    %3297 = vmatprep.subr.mxu0 0.0
    %3298 = vmatpush1.msra.mxu0 0.0
    %3299 = vmatprep.subr.mxu0 0.0
    %3300 = vmatpush1.msra.mxu0 0.0
    %3301 = vmatprep.subr.mxu0 0.0
    %3302 = vmatpush1.msra.mxu0 0.0
    %3303 = vmatprep.subr.mxu0 0.0
    %3304 = vmatpush1.msra.mxu0 0.0
    %3305 = vmatprep.subr.mxu0 0.0
    %3306 = vmatpush1.msra.mxu0 0.0
    %3307 = vmatprep.subr.mxu0 0.0
    %3308 = vmatpush1.msra.mxu0 0.0
    %3309 = vmatprep.subr.mxu0 0.0
    %3310 = vmatpush1.msra.mxu0 0.0
    %3311 = vmatprep.subr.mxu0 0.0
    %3312 = vmatpush1.msra.mxu0 0.0
    %3313 = vmatprep.subr.mxu0 0.0
    %3314 = vmatpush1.msra.mxu0 0.0
    %3315 = vmatprep.subr.mxu0 0.0
    %3316 = vmatpush1.msra.mxu0 0.0
    %3317 = vmatprep.subr.mxu0 0.0
    %3318 = vmatpush1.msra.mxu0 0.0
    %3319 = vmatprep.subr.mxu0 0.0
    %3320 = vmatpush1.msra.mxu0 0.0
    %3321 = vmatprep.subr.mxu0 0.0
    %3322 = vmatpush1.msra.mxu0 0.0
    %3323 = vmatprep.mubr.f32.mxu0 0.0
    %3324 = vmatmul.mubr.f32.gmra.mrb[0].mxu0 %v3183
    %v3325 = vpop.f32.mrb[0].mxu0
    %v3326 = vadd.f32 0.0, %v3325
    %v3327 = vpop.f32.mrb[0].mxu0
    %v3328 = vadd.f32 0.0, %v3327
    %3329 = vdwg.mxu0
    %3330 = vmatprep.subr.mxu0 %v3198
    %3331 = vmatpush1.msra.mxu0 %v3197
    %3332 = vmatprep.subr.mxu0 %v3202
    %3333 = vmatpush1.msra.mxu0 %v3201
    %3334 = vmatprep.subr.mxu0 %v3206
    %3335 = vmatpush1.msra.mxu0 %v3205
    %3336 = vmatprep.subr.mxu0 %v3210
    %3337 = vmatpush1.msra.mxu0 %v3209
    %3338 = vmatprep.subr.mxu0 %v3214
    %3339 = vmatpush1.msra.mxu0 %v3213
    %3340 = vmatprep.subr.mxu0 %v3218
    %3341 = vmatpush1.msra.mxu0 %v3217
    %3342 = vmatprep.subr.mxu0 %v3222
    %3343 = vmatpush1.msra.mxu0 %v3221
    %3344 = vmatprep.subr.mxu0 %v3226
    %3345 = vmatpush1.msra.mxu0 %v3225
    %3346 = vmatprep.subr.mxu0 %v3230
    %3347 = vmatpush1.msra.mxu0 %v3229
    %3348 = vmatprep.subr.mxu0 %v3234
    %3349 = vmatpush1.msra.mxu0 %v3233
    %3350 = vmatprep.subr.mxu0 %v3238
    %3351 = vmatpush1.msra.mxu0 %v3237
    %3352 = vmatprep.subr.mxu0 %v3242
    %3353 = vmatpush1.msra.mxu0 %v3241
    %3354 = vmatprep.subr.mxu0 %v3246
    %3355 = vmatpush1.msra.mxu0 %v3245
    %3356 = vmatprep.subr.mxu0 %v3250
    %3357 = vmatpush1.msra.mxu0 %v3249
    %3358 = vmatprep.subr.mxu0 %v3254
    %3359 = vmatpush1.msra.mxu0 %v3253
    %3360 = vmatprep.subr.mxu0 %v3258
    %3361 = vmatpush1.msra.mxu0 %v3257
    %3362 = vmatprep.subr.mxu0 0.0
    %3363 = vmatpush1.msra.mxu0 0.0
    %3364 = vmatprep.subr.mxu0 0.0
    %3365 = vmatpush1.msra.mxu0 0.0
    %3366 = vmatprep.subr.mxu0 0.0
    %3367 = vmatpush1.msra.mxu0 0.0
    %3368 = vmatprep.subr.mxu0 0.0
    %3369 = vmatpush1.msra.mxu0 0.0
    %3370 = vmatprep.subr.mxu0 0.0
    %3371 = vmatpush1.msra.mxu0 0.0
    %3372 = vmatprep.subr.mxu0 0.0
    %3373 = vmatpush1.msra.mxu0 0.0
    %3374 = vmatprep.subr.mxu0 0.0
    %3375 = vmatpush1.msra.mxu0 0.0
    %3376 = vmatprep.subr.mxu0 0.0
    %3377 = vmatpush1.msra.mxu0 0.0
    %3378 = vmatprep.subr.mxu0 0.0
    %3379 = vmatpush1.msra.mxu0 0.0
    %3380 = vmatprep.subr.mxu0 0.0
    %3381 = vmatpush1.msra.mxu0 0.0
    %3382 = vmatprep.subr.mxu0 0.0
    %3383 = vmatpush1.msra.mxu0 0.0
    %3384 = vmatprep.subr.mxu0 0.0
    %3385 = vmatpush1.msra.mxu0 0.0
    %3386 = vmatprep.subr.mxu0 0.0
    %3387 = vmatpush1.msra.mxu0 0.0
    %3388 = vmatprep.subr.mxu0 0.0
    %3389 = vmatpush1.msra.mxu0 0.0
    %3390 = vmatprep.subr.mxu0 0.0
    %3391 = vmatpush1.msra.mxu0 0.0
    %3392 = vmatprep.subr.mxu0 0.0
    %3393 = vmatpush1.msra.mxu0 0.0
    %3394 = vmatprep.mubr.f32.mxu0 0.0
    %3395 = vmatmul.mubr.f32.gmra.mrb[0].mxu0 %v3183
    %v3396 = vpop.f32.mrb[0].mxu0
    %v3397 = vadd.f32 0.0, %v3396
    %v3398 = vpop.f32.mrb[0].mxu0
    %v3399 = vadd.f32 0.0, %v3398
    %3400 = vdwg.mxu0
    %v3401 = vadd.f32 %v3191, %v3326
    %v3402 = vadd.f32 %v3192, %v3328
    %v3403 = vadd.f32 %v3193, %v3397
    %v3404 = vadd.f32 %v3194, %v3399
    %v3405 = vmul.f32 %v3401, 0.5
    %v3406 = vtanh.pop %v3405
    %v3407 = vmul.f32 %v3406, 0.5
    %v3408 = vadd.f32 %v3407, 0.5
    %v3409 = vmul.f32 %v3402, 0.5
    %v3410 = vtanh.pop %v3409
    %v3411 = vmul.f32 %v3410, 0.5
    %v3412 = vadd.f32 %v3411, 0.5
    %v3413 = vtanh.pop %v3403
    %v3414 = vmul.f32 %v3404, 0.5
    %v3415 = vtanh.pop %v3414
    %v3416 = vmul.f32 %v3415, 0.5
    %v3417 = vadd.f32 %v3416, 0.5
    %v3418 = vmul.f32 %v3412, %v3181
    %v3419 = vmul.f32 %v3408, %v3413
    %v3420 = vadd.f32 %v3418, %v3419
    %v3421 = vtanh.pop %v3420
    %v3422 = vmul.f32 %v3417, %v3421
    %s3423 = scalar_lea.vmem [#allocation3], 88
    %3424 = vst [vmem:[%s3423] sm:$0xff] %v3422
    %s3425 = scalar_lea.vmem [#allocation4], 32
    %3426 = vst [vmem:[%s3425] sm:$0xff] %v3422
    %s3427 = smul.u32 12, 4
    %s3428 = smul.addr %s3427, 8
    %s3429 = scalar_lea.vmem [#allocation2], %s3428
    %v3430 = vld [vmem:[%s3429] sm:$0xff]
    %v3431 = vld [vmem:[%s3429 + $0x8] sm:$0xff]
    %v3432 = vld [vmem:[%s3429 + $0x10] sm:$0xff]
    %v3433 = vld [vmem:[%s3429 + $0x18] sm:$0xff]
    %v3434 = vld [vmem:[%s3] sm:$0xff]
    %v3435 = vld [vmem:[%s3 + $0x8] sm:$0xff]
    %v3436 = vld [vmem:[%s3 + $0x10] sm:$0xff]
    %v3437 = vld [vmem:[%s3 + $0x18] sm:$0xff]
    %v3438 = vld [vmem:[%s3 + $0x20] sm:$0xff]
    %v3439 = vld [vmem:[%s3 + $0x28] sm:$0xff]
    %v3440 = vld [vmem:[%s3 + $0x30] sm:$0xff]
    %v3441 = vld [vmem:[%s3 + $0x38] sm:$0xff]
    %v3442 = vld [vmem:[%s3 + $0x40] sm:$0xff]
    %v3443 = vld [vmem:[%s3 + $0x48] sm:$0xff]
    %v3444 = vld [vmem:[%s3 + $0x50] sm:$0xff]
    %v3445 = vld [vmem:[%s3 + $0x58] sm:$0xff]
    %v3446 = vld [vmem:[%s3 + $0x60] sm:$0xff]
    %v3447 = vld [vmem:[%s3 + $0x68] sm:$0xff]
    %v3448 = vld [vmem:[%s3 + $0x70] sm:$0xff]
    %v3449 = vld [vmem:[%s3 + $0x78] sm:$0xff]
    %v3450 = vld [vmem:[%s3 + $0x80] sm:$0xff]
    %v3451 = vld [vmem:[%s3 + $0x88] sm:$0xff]
    %v3452 = vld [vmem:[%s3 + $0x90] sm:$0xff]
    %v3453 = vld [vmem:[%s3 + $0x98] sm:$0xff]
    %v3454 = vld [vmem:[%s3 + $0xa0] sm:$0xff]
    %v3455 = vld [vmem:[%s3 + $0xa8] sm:$0xff]
    %v3456 = vld [vmem:[%s3 + $0xb0] sm:$0xff]
    %v3457 = vld [vmem:[%s3 + $0xb8] sm:$0xff]
    %v3458 = vld [vmem:[%s3 + $0xc0] sm:$0xff]
    %v3459 = vld [vmem:[%s3 + $0xc8] sm:$0xff]
    %v3460 = vld [vmem:[%s3 + $0xd0] sm:$0xff]
    %v3461 = vld [vmem:[%s3 + $0xd8] sm:$0xff]
    %v3462 = vld [vmem:[%s3 + $0xe0] sm:$0xff]
    %v3463 = vld [vmem:[%s3 + $0xe8] sm:$0xff]
    %v3464 = vld [vmem:[%s3 + $0xf0] sm:$0xff]
    %v3465 = vld [vmem:[%s3 + $0xf8] sm:$0xff]
    %v3466 = vld [vmem:[%s3 + $0x100] sm:$0xff]
    %v3467 = vld [vmem:[%s3 + $0x108] sm:$0xff]
    %v3468 = vld [vmem:[%s3 + $0x110] sm:$0xff]
    %v3469 = vld [vmem:[%s3 + $0x118] sm:$0xff]
    %v3470 = vld [vmem:[%s3 + $0x120] sm:$0xff]
    %v3471 = vld [vmem:[%s3 + $0x128] sm:$0xff]
    %v3472 = vld [vmem:[%s3 + $0x130] sm:$0xff]
    %v3473 = vld [vmem:[%s3 + $0x138] sm:$0xff]
    %v3474 = vld [vmem:[%s3 + $0x140] sm:$0xff]
    %v3475 = vld [vmem:[%s3 + $0x148] sm:$0xff]
    %v3476 = vld [vmem:[%s3 + $0x150] sm:$0xff]
    %v3477 = vld [vmem:[%s3 + $0x158] sm:$0xff]
    %v3478 = vld [vmem:[%s3 + $0x160] sm:$0xff]
    %v3479 = vld [vmem:[%s3 + $0x168] sm:$0xff]
    %v3480 = vld [vmem:[%s3 + $0x170] sm:$0xff]
    %v3481 = vld [vmem:[%s3 + $0x178] sm:$0xff]
    %v3482 = vld [vmem:[%s3 + $0x180] sm:$0xff]
    %v3483 = vld [vmem:[%s3 + $0x188] sm:$0xff]
    %v3484 = vld [vmem:[%s3 + $0x190] sm:$0xff]
    %v3485 = vld [vmem:[%s3 + $0x198] sm:$0xff]
    %v3486 = vld [vmem:[%s3 + $0x1a0] sm:$0xff]
    %v3487 = vld [vmem:[%s3 + $0x1a8] sm:$0xff]
    %v3488 = vld [vmem:[%s3 + $0x1b0] sm:$0xff]
    %v3489 = vld [vmem:[%s3 + $0x1b8] sm:$0xff]
    %v3490 = vld [vmem:[%s3 + $0x1c0] sm:$0xff]
    %v3491 = vld [vmem:[%s3 + $0x1c8] sm:$0xff]
    %v3492 = vld [vmem:[%s3 + $0x1d0] sm:$0xff]
    %v3493 = vld [vmem:[%s3 + $0x1d8] sm:$0xff]
    %v3494 = vld [vmem:[%s3 + $0x1e0] sm:$0xff]
    %v3495 = vld [vmem:[%s3 + $0x1e8] sm:$0xff]
    %v3496 = vld [vmem:[%s3 + $0x1f0] sm:$0xff]
    %v3497 = vld [vmem:[%s3 + $0x1f8] sm:$0xff]
    %3498 = vmatprep.subr.mxu0 %v3435
    %3499 = vmatpush1.msra.mxu0 %v3434
    %3500 = vmatprep.subr.mxu0 %v3439
    %3501 = vmatpush1.msra.mxu0 %v3438
    %3502 = vmatprep.subr.mxu0 %v3443
    %3503 = vmatpush1.msra.mxu0 %v3442
    %3504 = vmatprep.subr.mxu0 %v3447
    %3505 = vmatpush1.msra.mxu0 %v3446
    %3506 = vmatprep.subr.mxu0 %v3451
    %3507 = vmatpush1.msra.mxu0 %v3450
    %3508 = vmatprep.subr.mxu0 %v3455
    %3509 = vmatpush1.msra.mxu0 %v3454
    %3510 = vmatprep.subr.mxu0 %v3459
    %3511 = vmatpush1.msra.mxu0 %v3458
    %3512 = vmatprep.subr.mxu0 %v3463
    %3513 = vmatpush1.msra.mxu0 %v3462
    %3514 = vmatprep.subr.mxu0 %v3467
    %3515 = vmatpush1.msra.mxu0 %v3466
    %3516 = vmatprep.subr.mxu0 %v3471
    %3517 = vmatpush1.msra.mxu0 %v3470
    %3518 = vmatprep.subr.mxu0 %v3475
    %3519 = vmatpush1.msra.mxu0 %v3474
    %3520 = vmatprep.subr.mxu0 %v3479
    %3521 = vmatpush1.msra.mxu0 %v3478
    %3522 = vmatprep.subr.mxu0 %v3483
    %3523 = vmatpush1.msra.mxu0 %v3482
    %3524 = vmatprep.subr.mxu0 %v3487
    %3525 = vmatpush1.msra.mxu0 %v3486
    %3526 = vmatprep.subr.mxu0 %v3491
    %3527 = vmatpush1.msra.mxu0 %v3490
    %3528 = vmatprep.subr.mxu0 %v3495
    %3529 = vmatpush1.msra.mxu0 %v3494
    %3530 = vmatprep.subr.mxu0 0.0
    %3531 = vmatpush1.msra.mxu0 0.0
    %3532 = vmatprep.subr.mxu0 0.0
    %3533 = vmatpush1.msra.mxu0 0.0
    %3534 = vmatprep.subr.mxu0 0.0
    %3535 = vmatpush1.msra.mxu0 0.0
    %3536 = vmatprep.subr.mxu0 0.0
    %3537 = vmatpush1.msra.mxu0 0.0
    %3538 = vmatprep.subr.mxu0 0.0
    %3539 = vmatpush1.msra.mxu0 0.0
    %3540 = vmatprep.subr.mxu0 0.0
    %3541 = vmatpush1.msra.mxu0 0.0
    %3542 = vmatprep.subr.mxu0 0.0
    %3543 = vmatpush1.msra.mxu0 0.0
    %3544 = vmatprep.subr.mxu0 0.0
    %3545 = vmatpush1.msra.mxu0 0.0
    %3546 = vmatprep.subr.mxu0 0.0
    %3547 = vmatpush1.msra.mxu0 0.0
    %3548 = vmatprep.subr.mxu0 0.0
    %3549 = vmatpush1.msra.mxu0 0.0
    %3550 = vmatprep.subr.mxu0 0.0
    %3551 = vmatpush1.msra.mxu0 0.0
    %3552 = vmatprep.subr.mxu0 0.0
    %3553 = vmatpush1.msra.mxu0 0.0
    %3554 = vmatprep.subr.mxu0 0.0
    %3555 = vmatpush1.msra.mxu0 0.0
    %3556 = vmatprep.subr.mxu0 0.0
    %3557 = vmatpush1.msra.mxu0 0.0
    %3558 = vmatprep.subr.mxu0 0.0
    %3559 = vmatpush1.msra.mxu0 0.0
    %3560 = vmatprep.subr.mxu0 0.0
    %3561 = vmatpush1.msra.mxu0 0.0
    %3562 = vmatprep.mubr.f32.mxu0 0.0
    %3563 = vmatmul.mubr.f32.gmra.mrb[0].mxu0 %v3422
    %v3564 = vpop.f32.mrb[0].mxu0
    %v3565 = vadd.f32 0.0, %v3564
    %v3566 = vpop.f32.mrb[0].mxu0
    %v3567 = vadd.f32 0.0, %v3566
    %3568 = vdwg.mxu0
    %3569 = vmatprep.subr.mxu0 %v3437
    %3570 = vmatpush1.msra.mxu0 %v3436
    %3571 = vmatprep.subr.mxu0 %v3441
    %3572 = vmatpush1.msra.mxu0 %v3440
    %3573 = vmatprep.subr.mxu0 %v3445
    %3574 = vmatpush1.msra.mxu0 %v3444
    %3575 = vmatprep.subr.mxu0 %v3449
    %3576 = vmatpush1.msra.mxu0 %v3448
    %3577 = vmatprep.subr.mxu0 %v3453
    %3578 = vmatpush1.msra.mxu0 %v3452
    %3579 = vmatprep.subr.mxu0 %v3457
    %3580 = vmatpush1.msra.mxu0 %v3456
    %3581 = vmatprep.subr.mxu0 %v3461
    %3582 = vmatpush1.msra.mxu0 %v3460
    %3583 = vmatprep.subr.mxu0 %v3465
    %3584 = vmatpush1.msra.mxu0 %v3464
    %3585 = vmatprep.subr.mxu0 %v3469
    %3586 = vmatpush1.msra.mxu0 %v3468
    %3587 = vmatprep.subr.mxu0 %v3473
    %3588 = vmatpush1.msra.mxu0 %v3472
    %3589 = vmatprep.subr.mxu0 %v3477
    %3590 = vmatpush1.msra.mxu0 %v3476
    %3591 = vmatprep.subr.mxu0 %v3481
    %3592 = vmatpush1.msra.mxu0 %v3480
    %3593 = vmatprep.subr.mxu0 %v3485
    %3594 = vmatpush1.msra.mxu0 %v3484
    %3595 = vmatprep.subr.mxu0 %v3489
    %3596 = vmatpush1.msra.mxu0 %v3488
    %3597 = vmatprep.subr.mxu0 %v3493
    %3598 = vmatpush1.msra.mxu0 %v3492
    %3599 = vmatprep.subr.mxu0 %v3497
    %3600 = vmatpush1.msra.mxu0 %v3496
    %3601 = vmatprep.subr.mxu0 0.0
    %3602 = vmatpush1.msra.mxu0 0.0
    %3603 = vmatprep.subr.mxu0 0.0
    %3604 = vmatpush1.msra.mxu0 0.0
    %3605 = vmatprep.subr.mxu0 0.0
    %3606 = vmatpush1.msra.mxu0 0.0
    %3607 = vmatprep.subr.mxu0 0.0
    %3608 = vmatpush1.msra.mxu0 0.0
    %3609 = vmatprep.subr.mxu0 0.0
    %3610 = vmatpush1.msra.mxu0 0.0
    %3611 = vmatprep.subr.mxu0 0.0
    %3612 = vmatpush1.msra.mxu0 0.0
    %3613 = vmatprep.subr.mxu0 0.0
    %3614 = vmatpush1.msra.mxu0 0.0
    %3615 = vmatprep.subr.mxu0 0.0
    %3616 = vmatpush1.msra.mxu0 0.0
    %3617 = vmatprep.subr.mxu0 0.0
    %3618 = vmatpush1.msra.mxu0 0.0
    %3619 = vmatprep.subr.mxu0 0.0
    %3620 = vmatpush1.msra.mxu0 0.0
    %3621 = vmatprep.subr.mxu0 0.0
    %3622 = vmatpush1.msra.mxu0 0.0
    %3623 = vmatprep.subr.mxu0 0.0
    %3624 = vmatpush1.msra.mxu0 0.0
    %3625 = vmatprep.subr.mxu0 0.0
    %3626 = vmatpush1.msra.mxu0 0.0
    %3627 = vmatprep.subr.mxu0 0.0
    %3628 = vmatpush1.msra.mxu0 0.0
    %3629 = vmatprep.subr.mxu0 0.0
    %3630 = vmatpush1.msra.mxu0 0.0
    %3631 = vmatprep.subr.mxu0 0.0
    %3632 = vmatpush1.msra.mxu0 0.0
    %3633 = vmatprep.mubr.f32.mxu0 0.0
    %3634 = vmatmul.mubr.f32.gmra.mrb[0].mxu0 %v3422
    %v3635 = vpop.f32.mrb[0].mxu0
    %v3636 = vadd.f32 0.0, %v3635
    %v3637 = vpop.f32.mrb[0].mxu0
    %v3638 = vadd.f32 0.0, %v3637
    %3639 = vdwg.mxu0
    %v3640 = vadd.f32 %v3430, %v3565
    %v3641 = vadd.f32 %v3431, %v3567
    %v3642 = vadd.f32 %v3432, %v3636
    %v3643 = vadd.f32 %v3433, %v3638
    %v3644 = vmul.f32 %v3640, 0.5
    %v3645 = vtanh.pop %v3644
    %v3646 = vmul.f32 %v3645, 0.5
    %v3647 = vadd.f32 %v3646, 0.5
    %v3648 = vmul.f32 %v3641, 0.5
    %v3649 = vtanh.pop %v3648
    %v3650 = vmul.f32 %v3649, 0.5
    %v3651 = vadd.f32 %v3650, 0.5
    %v3652 = vtanh.pop %v3642
    %v3653 = vmul.f32 %v3643, 0.5
    %v3654 = vtanh.pop %v3653
    %v3655 = vmul.f32 %v3654, 0.5
    %v3656 = vadd.f32 %v3655, 0.5
    %v3657 = vmul.f32 %v3651, %v3420
    %v3658 = vmul.f32 %v3647, %v3652
    %v3659 = vadd.f32 %v3657, %v3658
    %v3660 = vtanh.pop %v3659
    %v3661 = vmul.f32 %v3656, %v3660
    %s3662 = scalar_lea.vmem [#allocation3], 96
    %3663 = vst [vmem:[%s3662] sm:$0xff] %v3661
    %s3664 = scalar_lea.vmem [#allocation4], 24
    %3665 = vst [vmem:[%s3664] sm:$0xff] %v3661
    %s3666 = smul.u32 13, 4
    %s3667 = smul.addr %s3666, 8
    %s3668 = scalar_lea.vmem [#allocation2], %s3667
    %v3669 = vld [vmem:[%s3668] sm:$0xff]
    %v3670 = vld [vmem:[%s3668 + $0x8] sm:$0xff]
    %v3671 = vld [vmem:[%s3668 + $0x10] sm:$0xff]
    %v3672 = vld [vmem:[%s3668 + $0x18] sm:$0xff]
    %v3673 = vld [vmem:[%s3] sm:$0xff]
    %v3674 = vld [vmem:[%s3 + $0x8] sm:$0xff]
    %v3675 = vld [vmem:[%s3 + $0x10] sm:$0xff]
    %v3676 = vld [vmem:[%s3 + $0x18] sm:$0xff]
    %v3677 = vld [vmem:[%s3 + $0x20] sm:$0xff]
    %v3678 = vld [vmem:[%s3 + $0x28] sm:$0xff]
    %v3679 = vld [vmem:[%s3 + $0x30] sm:$0xff]
    %v3680 = vld [vmem:[%s3 + $0x38] sm:$0xff]
    %v3681 = vld [vmem:[%s3 + $0x40] sm:$0xff]
    %v3682 = vld [vmem:[%s3 + $0x48] sm:$0xff]
    %v3683 = vld [vmem:[%s3 + $0x50] sm:$0xff]
    %v3684 = vld [vmem:[%s3 + $0x58] sm:$0xff]
    %v3685 = vld [vmem:[%s3 + $0x60] sm:$0xff]
    %v3686 = vld [vmem:[%s3 + $0x68] sm:$0xff]
    %v3687 = vld [vmem:[%s3 + $0x70] sm:$0xff]
    %v3688 = vld [vmem:[%s3 + $0x78] sm:$0xff]
    %v3689 = vld [vmem:[%s3 + $0x80] sm:$0xff]
    %v3690 = vld [vmem:[%s3 + $0x88] sm:$0xff]
    %v3691 = vld [vmem:[%s3 + $0x90] sm:$0xff]
    %v3692 = vld [vmem:[%s3 + $0x98] sm:$0xff]
    %v3693 = vld [vmem:[%s3 + $0xa0] sm:$0xff]
    %v3694 = vld [vmem:[%s3 + $0xa8] sm:$0xff]
    %v3695 = vld [vmem:[%s3 + $0xb0] sm:$0xff]
    %v3696 = vld [vmem:[%s3 + $0xb8] sm:$0xff]
    %v3697 = vld [vmem:[%s3 + $0xc0] sm:$0xff]
    %v3698 = vld [vmem:[%s3 + $0xc8] sm:$0xff]
    %v3699 = vld [vmem:[%s3 + $0xd0] sm:$0xff]
    %v3700 = vld [vmem:[%s3 + $0xd8] sm:$0xff]
    %v3701 = vld [vmem:[%s3 + $0xe0] sm:$0xff]
    %v3702 = vld [vmem:[%s3 + $0xe8] sm:$0xff]
    %v3703 = vld [vmem:[%s3 + $0xf0] sm:$0xff]
    %v3704 = vld [vmem:[%s3 + $0xf8] sm:$0xff]
    %v3705 = vld [vmem:[%s3 + $0x100] sm:$0xff]
    %v3706 = vld [vmem:[%s3 + $0x108] sm:$0xff]
    %v3707 = vld [vmem:[%s3 + $0x110] sm:$0xff]
    %v3708 = vld [vmem:[%s3 + $0x118] sm:$0xff]
    %v3709 = vld [vmem:[%s3 + $0x120] sm:$0xff]
    %v3710 = vld [vmem:[%s3 + $0x128] sm:$0xff]
    %v3711 = vld [vmem:[%s3 + $0x130] sm:$0xff]
    %v3712 = vld [vmem:[%s3 + $0x138] sm:$0xff]
    %v3713 = vld [vmem:[%s3 + $0x140] sm:$0xff]
    %v3714 = vld [vmem:[%s3 + $0x148] sm:$0xff]
    %v3715 = vld [vmem:[%s3 + $0x150] sm:$0xff]
    %v3716 = vld [vmem:[%s3 + $0x158] sm:$0xff]
    %v3717 = vld [vmem:[%s3 + $0x160] sm:$0xff]
    %v3718 = vld [vmem:[%s3 + $0x168] sm:$0xff]
    %v3719 = vld [vmem:[%s3 + $0x170] sm:$0xff]
    %v3720 = vld [vmem:[%s3 + $0x178] sm:$0xff]
    %v3721 = vld [vmem:[%s3 + $0x180] sm:$0xff]
    %v3722 = vld [vmem:[%s3 + $0x188] sm:$0xff]
    %v3723 = vld [vmem:[%s3 + $0x190] sm:$0xff]
    %v3724 = vld [vmem:[%s3 + $0x198] sm:$0xff]
    %v3725 = vld [vmem:[%s3 + $0x1a0] sm:$0xff]
    %v3726 = vld [vmem:[%s3 + $0x1a8] sm:$0xff]
    %v3727 = vld [vmem:[%s3 + $0x1b0] sm:$0xff]
    %v3728 = vld [vmem:[%s3 + $0x1b8] sm:$0xff]
    %v3729 = vld [vmem:[%s3 + $0x1c0] sm:$0xff]
    %v3730 = vld [vmem:[%s3 + $0x1c8] sm:$0xff]
    %v3731 = vld [vmem:[%s3 + $0x1d0] sm:$0xff]
    %v3732 = vld [vmem:[%s3 + $0x1d8] sm:$0xff]
    %v3733 = vld [vmem:[%s3 + $0x1e0] sm:$0xff]
    %v3734 = vld [vmem:[%s3 + $0x1e8] sm:$0xff]
    %v3735 = vld [vmem:[%s3 + $0x1f0] sm:$0xff]
    %v3736 = vld [vmem:[%s3 + $0x1f8] sm:$0xff]
    %3737 = vmatprep.subr.mxu0 %v3674
    %3738 = vmatpush1.msra.mxu0 %v3673
    %3739 = vmatprep.subr.mxu0 %v3678
    %3740 = vmatpush1.msra.mxu0 %v3677
    %3741 = vmatprep.subr.mxu0 %v3682
    %3742 = vmatpush1.msra.mxu0 %v3681
    %3743 = vmatprep.subr.mxu0 %v3686
    %3744 = vmatpush1.msra.mxu0 %v3685
    %3745 = vmatprep.subr.mxu0 %v3690
    %3746 = vmatpush1.msra.mxu0 %v3689
    %3747 = vmatprep.subr.mxu0 %v3694
    %3748 = vmatpush1.msra.mxu0 %v3693
    %3749 = vmatprep.subr.mxu0 %v3698
    %3750 = vmatpush1.msra.mxu0 %v3697
    %3751 = vmatprep.subr.mxu0 %v3702
    %3752 = vmatpush1.msra.mxu0 %v3701
    %3753 = vmatprep.subr.mxu0 %v3706
    %3754 = vmatpush1.msra.mxu0 %v3705
    %3755 = vmatprep.subr.mxu0 %v3710
    %3756 = vmatpush1.msra.mxu0 %v3709
    %3757 = vmatprep.subr.mxu0 %v3714
    %3758 = vmatpush1.msra.mxu0 %v3713
    %3759 = vmatprep.subr.mxu0 %v3718
    %3760 = vmatpush1.msra.mxu0 %v3717
    %3761 = vmatprep.subr.mxu0 %v3722
    %3762 = vmatpush1.msra.mxu0 %v3721
    %3763 = vmatprep.subr.mxu0 %v3726
    %3764 = vmatpush1.msra.mxu0 %v3725
    %3765 = vmatprep.subr.mxu0 %v3730
    %3766 = vmatpush1.msra.mxu0 %v3729
    %3767 = vmatprep.subr.mxu0 %v3734
    %3768 = vmatpush1.msra.mxu0 %v3733
    %3769 = vmatprep.subr.mxu0 0.0
    %3770 = vmatpush1.msra.mxu0 0.0
    %3771 = vmatprep.subr.mxu0 0.0
    %3772 = vmatpush1.msra.mxu0 0.0
    %3773 = vmatprep.subr.mxu0 0.0
    %3774 = vmatpush1.msra.mxu0 0.0
    %3775 = vmatprep.subr.mxu0 0.0
    %3776 = vmatpush1.msra.mxu0 0.0
    %3777 = vmatprep.subr.mxu0 0.0
    %3778 = vmatpush1.msra.mxu0 0.0
    %3779 = vmatprep.subr.mxu0 0.0
    %3780 = vmatpush1.msra.mxu0 0.0
    %3781 = vmatprep.subr.mxu0 0.0
    %3782 = vmatpush1.msra.mxu0 0.0
    %3783 = vmatprep.subr.mxu0 0.0
    %3784 = vmatpush1.msra.mxu0 0.0
    %3785 = vmatprep.subr.mxu0 0.0
    %3786 = vmatpush1.msra.mxu0 0.0
    %3787 = vmatprep.subr.mxu0 0.0
    %3788 = vmatpush1.msra.mxu0 0.0
    %3789 = vmatprep.subr.mxu0 0.0
    %3790 = vmatpush1.msra.mxu0 0.0
    %3791 = vmatprep.subr.mxu0 0.0
    %3792 = vmatpush1.msra.mxu0 0.0
    %3793 = vmatprep.subr.mxu0 0.0
    %3794 = vmatpush1.msra.mxu0 0.0
    %3795 = vmatprep.subr.mxu0 0.0
    %3796 = vmatpush1.msra.mxu0 0.0
    %3797 = vmatprep.subr.mxu0 0.0
    %3798 = vmatpush1.msra.mxu0 0.0
    %3799 = vmatprep.subr.mxu0 0.0
    %3800 = vmatpush1.msra.mxu0 0.0
    %3801 = vmatprep.mubr.f32.mxu0 0.0
    %3802 = vmatmul.mubr.f32.gmra.mrb[0].mxu0 %v3661
    %v3803 = vpop.f32.mrb[0].mxu0
    %v3804 = vadd.f32 0.0, %v3803
    %v3805 = vpop.f32.mrb[0].mxu0
    %v3806 = vadd.f32 0.0, %v3805
    %3807 = vdwg.mxu0
    %3808 = vmatprep.subr.mxu0 %v3676
    %3809 = vmatpush1.msra.mxu0 %v3675
    %3810 = vmatprep.subr.mxu0 %v3680
    %3811 = vmatpush1.msra.mxu0 %v3679
    %3812 = vmatprep.subr.mxu0 %v3684
    %3813 = vmatpush1.msra.mxu0 %v3683
    %3814 = vmatprep.subr.mxu0 %v3688
    %3815 = vmatpush1.msra.mxu0 %v3687
    %3816 = vmatprep.subr.mxu0 %v3692
    %3817 = vmatpush1.msra.mxu0 %v3691
    %3818 = vmatprep.subr.mxu0 %v3696
    %3819 = vmatpush1.msra.mxu0 %v3695
    %3820 = vmatprep.subr.mxu0 %v3700
    %3821 = vmatpush1.msra.mxu0 %v3699
    %3822 = vmatprep.subr.mxu0 %v3704
    %3823 = vmatpush1.msra.mxu0 %v3703
    %3824 = vmatprep.subr.mxu0 %v3708
    %3825 = vmatpush1.msra.mxu0 %v3707
    %3826 = vmatprep.subr.mxu0 %v3712
    %3827 = vmatpush1.msra.mxu0 %v3711
    %3828 = vmatprep.subr.mxu0 %v3716
    %3829 = vmatpush1.msra.mxu0 %v3715
    %3830 = vmatprep.subr.mxu0 %v3720
    %3831 = vmatpush1.msra.mxu0 %v3719
    %3832 = vmatprep.subr.mxu0 %v3724
    %3833 = vmatpush1.msra.mxu0 %v3723
    %3834 = vmatprep.subr.mxu0 %v3728
    %3835 = vmatpush1.msra.mxu0 %v3727
    %3836 = vmatprep.subr.mxu0 %v3732
    %3837 = vmatpush1.msra.mxu0 %v3731
    %3838 = vmatprep.subr.mxu0 %v3736
    %3839 = vmatpush1.msra.mxu0 %v3735
    %3840 = vmatprep.subr.mxu0 0.0
    %3841 = vmatpush1.msra.mxu0 0.0
    %3842 = vmatprep.subr.mxu0 0.0
    %3843 = vmatpush1.msra.mxu0 0.0
    %3844 = vmatprep.subr.mxu0 0.0
    %3845 = vmatpush1.msra.mxu0 0.0
    %3846 = vmatprep.subr.mxu0 0.0
    %3847 = vmatpush1.msra.mxu0 0.0
    %3848 = vmatprep.subr.mxu0 0.0
    %3849 = vmatpush1.msra.mxu0 0.0
    %3850 = vmatprep.subr.mxu0 0.0
    %3851 = vmatpush1.msra.mxu0 0.0
    %3852 = vmatprep.subr.mxu0 0.0
    %3853 = vmatpush1.msra.mxu0 0.0
    %3854 = vmatprep.subr.mxu0 0.0
    %3855 = vmatpush1.msra.mxu0 0.0
    %3856 = vmatprep.subr.mxu0 0.0
    %3857 = vmatpush1.msra.mxu0 0.0
    %3858 = vmatprep.subr.mxu0 0.0
    %3859 = vmatpush1.msra.mxu0 0.0
    %3860 = vmatprep.subr.mxu0 0.0
    %3861 = vmatpush1.msra.mxu0 0.0
    %3862 = vmatprep.subr.mxu0 0.0
    %3863 = vmatpush1.msra.mxu0 0.0
    %3864 = vmatprep.subr.mxu0 0.0
    %3865 = vmatpush1.msra.mxu0 0.0
    %3866 = vmatprep.subr.mxu0 0.0
    %3867 = vmatpush1.msra.mxu0 0.0
    %3868 = vmatprep.subr.mxu0 0.0
    %3869 = vmatpush1.msra.mxu0 0.0
    %3870 = vmatprep.subr.mxu0 0.0
    %3871 = vmatpush1.msra.mxu0 0.0
    %3872 = vmatprep.mubr.f32.mxu0 0.0
    %3873 = vmatmul.mubr.f32.gmra.mrb[0].mxu0 %v3661
    %v3874 = vpop.f32.mrb[0].mxu0
    %v3875 = vadd.f32 0.0, %v3874
    %v3876 = vpop.f32.mrb[0].mxu0
    %v3877 = vadd.f32 0.0, %v3876
    %3878 = vdwg.mxu0
    %v3879 = vadd.f32 %v3669, %v3804
    %v3880 = vadd.f32 %v3670, %v3806
    %v3881 = vadd.f32 %v3671, %v3875
    %v3882 = vadd.f32 %v3672, %v3877
    %v3883 = vmul.f32 %v3879, 0.5
    %v3884 = vtanh.pop %v3883
    %v3885 = vmul.f32 %v3884, 0.5
    %v3886 = vadd.f32 %v3885, 0.5
    %v3887 = vmul.f32 %v3880, 0.5
    %v3888 = vtanh.pop %v3887
    %v3889 = vmul.f32 %v3888, 0.5
    %v3890 = vadd.f32 %v3889, 0.5
    %v3891 = vtanh.pop %v3881
    %v3892 = vmul.f32 %v3882, 0.5
    %v3893 = vtanh.pop %v3892
    %v3894 = vmul.f32 %v3893, 0.5
    %v3895 = vadd.f32 %v3894, 0.5
    %v3896 = vmul.f32 %v3890, %v3659
    %v3897 = vmul.f32 %v3886, %v3891
    %v3898 = vadd.f32 %v3896, %v3897
    %v3899 = vtanh.pop %v3898
    %v3900 = vmul.f32 %v3895, %v3899
    %s3901 = scalar_lea.vmem [#allocation3], 104
    %3902 = vst [vmem:[%s3901] sm:$0xff] %v3900
    %s3903 = scalar_lea.vmem [#allocation4], 16
    %3904 = vst [vmem:[%s3903] sm:$0xff] %v3900
    %s3905 = smul.u32 14, 4
    %s3906 = smul.addr %s3905, 8
    %s3907 = scalar_lea.vmem [#allocation2], %s3906
    %v3908 = vld [vmem:[%s3907] sm:$0xff]
    %v3909 = vld [vmem:[%s3907 + $0x8] sm:$0xff]
    %v3910 = vld [vmem:[%s3907 + $0x10] sm:$0xff]
    %v3911 = vld [vmem:[%s3907 + $0x18] sm:$0xff]
    %v3912 = vld [vmem:[%s3] sm:$0xff]
    %v3913 = vld [vmem:[%s3 + $0x8] sm:$0xff]
    %v3914 = vld [vmem:[%s3 + $0x10] sm:$0xff]
    %v3915 = vld [vmem:[%s3 + $0x18] sm:$0xff]
    %v3916 = vld [vmem:[%s3 + $0x20] sm:$0xff]
    %v3917 = vld [vmem:[%s3 + $0x28] sm:$0xff]
    %v3918 = vld [vmem:[%s3 + $0x30] sm:$0xff]
    %v3919 = vld [vmem:[%s3 + $0x38] sm:$0xff]
    %v3920 = vld [vmem:[%s3 + $0x40] sm:$0xff]
    %v3921 = vld [vmem:[%s3 + $0x48] sm:$0xff]
    %v3922 = vld [vmem:[%s3 + $0x50] sm:$0xff]
    %v3923 = vld [vmem:[%s3 + $0x58] sm:$0xff]
    %v3924 = vld [vmem:[%s3 + $0x60] sm:$0xff]
    %v3925 = vld [vmem:[%s3 + $0x68] sm:$0xff]
    %v3926 = vld [vmem:[%s3 + $0x70] sm:$0xff]
    %v3927 = vld [vmem:[%s3 + $0x78] sm:$0xff]
    %v3928 = vld [vmem:[%s3 + $0x80] sm:$0xff]
    %v3929 = vld [vmem:[%s3 + $0x88] sm:$0xff]
    %v3930 = vld [vmem:[%s3 + $0x90] sm:$0xff]
    %v3931 = vld [vmem:[%s3 + $0x98] sm:$0xff]
    %v3932 = vld [vmem:[%s3 + $0xa0] sm:$0xff]
    %v3933 = vld [vmem:[%s3 + $0xa8] sm:$0xff]
    %v3934 = vld [vmem:[%s3 + $0xb0] sm:$0xff]
    %v3935 = vld [vmem:[%s3 + $0xb8] sm:$0xff]
    %v3936 = vld [vmem:[%s3 + $0xc0] sm:$0xff]
    %v3937 = vld [vmem:[%s3 + $0xc8] sm:$0xff]
    %v3938 = vld [vmem:[%s3 + $0xd0] sm:$0xff]
    %v3939 = vld [vmem:[%s3 + $0xd8] sm:$0xff]
    %v3940 = vld [vmem:[%s3 + $0xe0] sm:$0xff]
    %v3941 = vld [vmem:[%s3 + $0xe8] sm:$0xff]
    %v3942 = vld [vmem:[%s3 + $0xf0] sm:$0xff]
    %v3943 = vld [vmem:[%s3 + $0xf8] sm:$0xff]
    %v3944 = vld [vmem:[%s3 + $0x100] sm:$0xff]
    %v3945 = vld [vmem:[%s3 + $0x108] sm:$0xff]
    %v3946 = vld [vmem:[%s3 + $0x110] sm:$0xff]
    %v3947 = vld [vmem:[%s3 + $0x118] sm:$0xff]
    %v3948 = vld [vmem:[%s3 + $0x120] sm:$0xff]
    %v3949 = vld [vmem:[%s3 + $0x128] sm:$0xff]
    %v3950 = vld [vmem:[%s3 + $0x130] sm:$0xff]
    %v3951 = vld [vmem:[%s3 + $0x138] sm:$0xff]
    %v3952 = vld [vmem:[%s3 + $0x140] sm:$0xff]
    %v3953 = vld [vmem:[%s3 + $0x148] sm:$0xff]
    %v3954 = vld [vmem:[%s3 + $0x150] sm:$0xff]
    %v3955 = vld [vmem:[%s3 + $0x158] sm:$0xff]
    %v3956 = vld [vmem:[%s3 + $0x160] sm:$0xff]
    %v3957 = vld [vmem:[%s3 + $0x168] sm:$0xff]
    %v3958 = vld [vmem:[%s3 + $0x170] sm:$0xff]
    %v3959 = vld [vmem:[%s3 + $0x178] sm:$0xff]
    %v3960 = vld [vmem:[%s3 + $0x180] sm:$0xff]
    %v3961 = vld [vmem:[%s3 + $0x188] sm:$0xff]
    %v3962 = vld [vmem:[%s3 + $0x190] sm:$0xff]
    %v3963 = vld [vmem:[%s3 + $0x198] sm:$0xff]
    %v3964 = vld [vmem:[%s3 + $0x1a0] sm:$0xff]
    %v3965 = vld [vmem:[%s3 + $0x1a8] sm:$0xff]
    %v3966 = vld [vmem:[%s3 + $0x1b0] sm:$0xff]
    %v3967 = vld [vmem:[%s3 + $0x1b8] sm:$0xff]
    %v3968 = vld [vmem:[%s3 + $0x1c0] sm:$0xff]
    %v3969 = vld [vmem:[%s3 + $0x1c8] sm:$0xff]
    %v3970 = vld [vmem:[%s3 + $0x1d0] sm:$0xff]
    %v3971 = vld [vmem:[%s3 + $0x1d8] sm:$0xff]
    %v3972 = vld [vmem:[%s3 + $0x1e0] sm:$0xff]
    %v3973 = vld [vmem:[%s3 + $0x1e8] sm:$0xff]
    %v3974 = vld [vmem:[%s3 + $0x1f0] sm:$0xff]
    %v3975 = vld [vmem:[%s3 + $0x1f8] sm:$0xff]
    %3976 = vmatprep.subr.mxu0 %v3913
    %3977 = vmatpush1.msra.mxu0 %v3912
    %3978 = vmatprep.subr.mxu0 %v3917
    %3979 = vmatpush1.msra.mxu0 %v3916
    %3980 = vmatprep.subr.mxu0 %v3921
    %3981 = vmatpush1.msra.mxu0 %v3920
    %3982 = vmatprep.subr.mxu0 %v3925
    %3983 = vmatpush1.msra.mxu0 %v3924
    %3984 = vmatprep.subr.mxu0 %v3929
    %3985 = vmatpush1.msra.mxu0 %v3928
    %3986 = vmatprep.subr.mxu0 %v3933
    %3987 = vmatpush1.msra.mxu0 %v3932
    %3988 = vmatprep.subr.mxu0 %v3937
    %3989 = vmatpush1.msra.mxu0 %v3936
    %3990 = vmatprep.subr.mxu0 %v3941
    %3991 = vmatpush1.msra.mxu0 %v3940
    %3992 = vmatprep.subr.mxu0 %v3945
    %3993 = vmatpush1.msra.mxu0 %v3944
    %3994 = vmatprep.subr.mxu0 %v3949
    %3995 = vmatpush1.msra.mxu0 %v3948
    %3996 = vmatprep.subr.mxu0 %v3953
    %3997 = vmatpush1.msra.mxu0 %v3952
    %3998 = vmatprep.subr.mxu0 %v3957
    %3999 = vmatpush1.msra.mxu0 %v3956
    %4000 = vmatprep.subr.mxu0 %v3961
    %4001 = vmatpush1.msra.mxu0 %v3960
    %4002 = vmatprep.subr.mxu0 %v3965
    %4003 = vmatpush1.msra.mxu0 %v3964
    %4004 = vmatprep.subr.mxu0 %v3969
    %4005 = vmatpush1.msra.mxu0 %v3968
    %4006 = vmatprep.subr.mxu0 %v3973
    %4007 = vmatpush1.msra.mxu0 %v3972
    %4008 = vmatprep.subr.mxu0 0.0
    %4009 = vmatpush1.msra.mxu0 0.0
    %4010 = vmatprep.subr.mxu0 0.0
    %4011 = vmatpush1.msra.mxu0 0.0
    %4012 = vmatprep.subr.mxu0 0.0
    %4013 = vmatpush1.msra.mxu0 0.0
    %4014 = vmatprep.subr.mxu0 0.0
    %4015 = vmatpush1.msra.mxu0 0.0
    %4016 = vmatprep.subr.mxu0 0.0
    %4017 = vmatpush1.msra.mxu0 0.0
    %4018 = vmatprep.subr.mxu0 0.0
    %4019 = vmatpush1.msra.mxu0 0.0
    %4020 = vmatprep.subr.mxu0 0.0
    %4021 = vmatpush1.msra.mxu0 0.0
    %4022 = vmatprep.subr.mxu0 0.0
    %4023 = vmatpush1.msra.mxu0 0.0
    %4024 = vmatprep.subr.mxu0 0.0
    %4025 = vmatpush1.msra.mxu0 0.0
    %4026 = vmatprep.subr.mxu0 0.0
    %4027 = vmatpush1.msra.mxu0 0.0
    %4028 = vmatprep.subr.mxu0 0.0
    %4029 = vmatpush1.msra.mxu0 0.0
    %4030 = vmatprep.subr.mxu0 0.0
    %4031 = vmatpush1.msra.mxu0 0.0
    %4032 = vmatprep.subr.mxu0 0.0
    %4033 = vmatpush1.msra.mxu0 0.0
    %4034 = vmatprep.subr.mxu0 0.0
    %4035 = vmatpush1.msra.mxu0 0.0
    %4036 = vmatprep.subr.mxu0 0.0
    %4037 = vmatpush1.msra.mxu0 0.0
    %4038 = vmatprep.subr.mxu0 0.0
    %4039 = vmatpush1.msra.mxu0 0.0
    %4040 = vmatprep.mubr.f32.mxu0 0.0
    %4041 = vmatmul.mubr.f32.gmra.mrb[0].mxu0 %v3900
    %v4042 = vpop.f32.mrb[0].mxu0
    %v4043 = vadd.f32 0.0, %v4042
    %v4044 = vpop.f32.mrb[0].mxu0
    %v4045 = vadd.f32 0.0, %v4044
    %4046 = vdwg.mxu0
    %4047 = vmatprep.subr.mxu0 %v3915
    %4048 = vmatpush1.msra.mxu0 %v3914
    %4049 = vmatprep.subr.mxu0 %v3919
    %4050 = vmatpush1.msra.mxu0 %v3918
    %4051 = vmatprep.subr.mxu0 %v3923
    %4052 = vmatpush1.msra.mxu0 %v3922
    %4053 = vmatprep.subr.mxu0 %v3927
    %4054 = vmatpush1.msra.mxu0 %v3926
    %4055 = vmatprep.subr.mxu0 %v3931
    %4056 = vmatpush1.msra.mxu0 %v3930
    %4057 = vmatprep.subr.mxu0 %v3935
    %4058 = vmatpush1.msra.mxu0 %v3934
    %4059 = vmatprep.subr.mxu0 %v3939
    %4060 = vmatpush1.msra.mxu0 %v3938
    %4061 = vmatprep.subr.mxu0 %v3943
    %4062 = vmatpush1.msra.mxu0 %v3942
    %4063 = vmatprep.subr.mxu0 %v3947
    %4064 = vmatpush1.msra.mxu0 %v3946
    %4065 = vmatprep.subr.mxu0 %v3951
    %4066 = vmatpush1.msra.mxu0 %v3950
    %4067 = vmatprep.subr.mxu0 %v3955
    %4068 = vmatpush1.msra.mxu0 %v3954
    %4069 = vmatprep.subr.mxu0 %v3959
    %4070 = vmatpush1.msra.mxu0 %v3958
    %4071 = vmatprep.subr.mxu0 %v3963
    %4072 = vmatpush1.msra.mxu0 %v3962
    %4073 = vmatprep.subr.mxu0 %v3967
    %4074 = vmatpush1.msra.mxu0 %v3966
    %4075 = vmatprep.subr.mxu0 %v3971
    %4076 = vmatpush1.msra.mxu0 %v3970
    %4077 = vmatprep.subr.mxu0 %v3975
    %4078 = vmatpush1.msra.mxu0 %v3974
    %4079 = vmatprep.subr.mxu0 0.0
    %4080 = vmatpush1.msra.mxu0 0.0
    %4081 = vmatprep.subr.mxu0 0.0
    %4082 = vmatpush1.msra.mxu0 0.0
    %4083 = vmatprep.subr.mxu0 0.0
    %4084 = vmatpush1.msra.mxu0 0.0
    %4085 = vmatprep.subr.mxu0 0.0
    %4086 = vmatpush1.msra.mxu0 0.0
    %4087 = vmatprep.subr.mxu0 0.0
    %4088 = vmatpush1.msra.mxu0 0.0
    %4089 = vmatprep.subr.mxu0 0.0
    %4090 = vmatpush1.msra.mxu0 0.0
    %4091 = vmatprep.subr.mxu0 0.0
    %4092 = vmatpush1.msra.mxu0 0.0
    %4093 = vmatprep.subr.mxu0 0.0
    %4094 = vmatpush1.msra.mxu0 0.0
    %4095 = vmatprep.subr.mxu0 0.0
    %4096 = vmatpush1.msra.mxu0 0.0
    %4097 = vmatprep.subr.mxu0 0.0
    %4098 = vmatpush1.msra.mxu0 0.0
    %4099 = vmatprep.subr.mxu0 0.0
    %4100 = vmatpush1.msra.mxu0 0.0
    %4101 = vmatprep.subr.mxu0 0.0
    %4102 = vmatpush1.msra.mxu0 0.0
    %4103 = vmatprep.subr.mxu0 0.0
    %4104 = vmatpush1.msra.mxu0 0.0
    %4105 = vmatprep.subr.mxu0 0.0
    %4106 = vmatpush1.msra.mxu0 0.0
    %4107 = vmatprep.subr.mxu0 0.0
    %4108 = vmatpush1.msra.mxu0 0.0
    %4109 = vmatprep.subr.mxu0 0.0
    %4110 = vmatpush1.msra.mxu0 0.0
    %4111 = vmatprep.mubr.f32.mxu0 0.0
    %4112 = vmatmul.mubr.f32.gmra.mrb[0].mxu0 %v3900
    %v4113 = vpop.f32.mrb[0].mxu0
    %v4114 = vadd.f32 0.0, %v4113
    %v4115 = vpop.f32.mrb[0].mxu0
    %v4116 = vadd.f32 0.0, %v4115
    %4117 = vdwg.mxu0
    %v4118 = vadd.f32 %v3908, %v4043
    %v4119 = vadd.f32 %v3909, %v4045
    %v4120 = vadd.f32 %v3910, %v4114
    %v4121 = vadd.f32 %v3911, %v4116
    %v4122 = vmul.f32 %v4118, 0.5
    %v4123 = vtanh.pop %v4122
    %v4124 = vmul.f32 %v4123, 0.5
    %v4125 = vadd.f32 %v4124, 0.5
    %v4126 = vmul.f32 %v4119, 0.5
    %v4127 = vtanh.pop %v4126
    %v4128 = vmul.f32 %v4127, 0.5
    %v4129 = vadd.f32 %v4128, 0.5
    %v4130 = vtanh.pop %v4120
    %v4131 = vmul.f32 %v4121, 0.5
    %v4132 = vtanh.pop %v4131
    %v4133 = vmul.f32 %v4132, 0.5
    %v4134 = vadd.f32 %v4133, 0.5
    %v4135 = vmul.f32 %v4129, %v3898
    %v4136 = vmul.f32 %v4125, %v4130
    %v4137 = vadd.f32 %v4135, %v4136
    %v4138 = vtanh.pop %v4137
    %v4139 = vmul.f32 %v4134, %v4138
    %s4140 = scalar_lea.vmem [#allocation3], 112
    %4141 = vst [vmem:[%s4140] sm:$0xff] %v4139
    %s4142 = scalar_lea.vmem [#allocation4], 8
    %4143 = vst [vmem:[%s4142] sm:$0xff] %v4139
    %s4144 = smul.u32 15, 4
    %s4145 = smul.addr %s4144, 8
    %s4146 = scalar_lea.vmem [#allocation2], %s4145
    %v4147 = vld [vmem:[%s4146] sm:$0xff]
    %v4148 = vld [vmem:[%s4146 + $0x8] sm:$0xff]
    %v4149 = vld [vmem:[%s4146 + $0x10] sm:$0xff]
    %v4150 = vld [vmem:[%s4146 + $0x18] sm:$0xff]
    %v4151 = vld [vmem:[%s3] sm:$0xff]
    %v4152 = vld [vmem:[%s3 + $0x8] sm:$0xff]
    %v4153 = vld [vmem:[%s3 + $0x10] sm:$0xff]
    %v4154 = vld [vmem:[%s3 + $0x18] sm:$0xff]
    %v4155 = vld [vmem:[%s3 + $0x20] sm:$0xff]
    %v4156 = vld [vmem:[%s3 + $0x28] sm:$0xff]
    %v4157 = vld [vmem:[%s3 + $0x30] sm:$0xff]
    %v4158 = vld [vmem:[%s3 + $0x38] sm:$0xff]
    %v4159 = vld [vmem:[%s3 + $0x40] sm:$0xff]
    %v4160 = vld [vmem:[%s3 + $0x48] sm:$0xff]
    %v4161 = vld [vmem:[%s3 + $0x50] sm:$0xff]
    %v4162 = vld [vmem:[%s3 + $0x58] sm:$0xff]
    %v4163 = vld [vmem:[%s3 + $0x60] sm:$0xff]
    %v4164 = vld [vmem:[%s3 + $0x68] sm:$0xff]
    %v4165 = vld [vmem:[%s3 + $0x70] sm:$0xff]
    %v4166 = vld [vmem:[%s3 + $0x78] sm:$0xff]
    %v4167 = vld [vmem:[%s3 + $0x80] sm:$0xff]
    %v4168 = vld [vmem:[%s3 + $0x88] sm:$0xff]
    %v4169 = vld [vmem:[%s3 + $0x90] sm:$0xff]
    %v4170 = vld [vmem:[%s3 + $0x98] sm:$0xff]
    %v4171 = vld [vmem:[%s3 + $0xa0] sm:$0xff]
    %v4172 = vld [vmem:[%s3 + $0xa8] sm:$0xff]
    %v4173 = vld [vmem:[%s3 + $0xb0] sm:$0xff]
    %v4174 = vld [vmem:[%s3 + $0xb8] sm:$0xff]
    %v4175 = vld [vmem:[%s3 + $0xc0] sm:$0xff]
    %v4176 = vld [vmem:[%s3 + $0xc8] sm:$0xff]
    %v4177 = vld [vmem:[%s3 + $0xd0] sm:$0xff]
    %v4178 = vld [vmem:[%s3 + $0xd8] sm:$0xff]
    %v4179 = vld [vmem:[%s3 + $0xe0] sm:$0xff]
    %v4180 = vld [vmem:[%s3 + $0xe8] sm:$0xff]
    %v4181 = vld [vmem:[%s3 + $0xf0] sm:$0xff]
    %v4182 = vld [vmem:[%s3 + $0xf8] sm:$0xff]
    %v4183 = vld [vmem:[%s3 + $0x100] sm:$0xff]
    %v4184 = vld [vmem:[%s3 + $0x108] sm:$0xff]
    %v4185 = vld [vmem:[%s3 + $0x110] sm:$0xff]
    %v4186 = vld [vmem:[%s3 + $0x118] sm:$0xff]
    %v4187 = vld [vmem:[%s3 + $0x120] sm:$0xff]
    %v4188 = vld [vmem:[%s3 + $0x128] sm:$0xff]
    %v4189 = vld [vmem:[%s3 + $0x130] sm:$0xff]
    %v4190 = vld [vmem:[%s3 + $0x138] sm:$0xff]
    %v4191 = vld [vmem:[%s3 + $0x140] sm:$0xff]
    %v4192 = vld [vmem:[%s3 + $0x148] sm:$0xff]
    %v4193 = vld [vmem:[%s3 + $0x150] sm:$0xff]
    %v4194 = vld [vmem:[%s3 + $0x158] sm:$0xff]
    %v4195 = vld [vmem:[%s3 + $0x160] sm:$0xff]
    %v4196 = vld [vmem:[%s3 + $0x168] sm:$0xff]
    %v4197 = vld [vmem:[%s3 + $0x170] sm:$0xff]
    %v4198 = vld [vmem:[%s3 + $0x178] sm:$0xff]
    %v4199 = vld [vmem:[%s3 + $0x180] sm:$0xff]
    %v4200 = vld [vmem:[%s3 + $0x188] sm:$0xff]
    %v4201 = vld [vmem:[%s3 + $0x190] sm:$0xff]
    %v4202 = vld [vmem:[%s3 + $0x198] sm:$0xff]
    %v4203 = vld [vmem:[%s3 + $0x1a0] sm:$0xff]
    %v4204 = vld [vmem:[%s3 + $0x1a8] sm:$0xff]
    %v4205 = vld [vmem:[%s3 + $0x1b0] sm:$0xff]
    %v4206 = vld [vmem:[%s3 + $0x1b8] sm:$0xff]
    %v4207 = vld [vmem:[%s3 + $0x1c0] sm:$0xff]
    %v4208 = vld [vmem:[%s3 + $0x1c8] sm:$0xff]
    %v4209 = vld [vmem:[%s3 + $0x1d0] sm:$0xff]
    %v4210 = vld [vmem:[%s3 + $0x1d8] sm:$0xff]
    %v4211 = vld [vmem:[%s3 + $0x1e0] sm:$0xff]
    %v4212 = vld [vmem:[%s3 + $0x1e8] sm:$0xff]
    %v4213 = vld [vmem:[%s3 + $0x1f0] sm:$0xff]
    %v4214 = vld [vmem:[%s3 + $0x1f8] sm:$0xff]
    %4215 = vmatprep.subr.mxu0 %v4152
    %4216 = vmatpush1.msra.mxu0 %v4151
    %4217 = vmatprep.subr.mxu0 %v4156
    %4218 = vmatpush1.msra.mxu0 %v4155
    %4219 = vmatprep.subr.mxu0 %v4160
    %4220 = vmatpush1.msra.mxu0 %v4159
    %4221 = vmatprep.subr.mxu0 %v4164
    %4222 = vmatpush1.msra.mxu0 %v4163
    %4223 = vmatprep.subr.mxu0 %v4168
    %4224 = vmatpush1.msra.mxu0 %v4167
    %4225 = vmatprep.subr.mxu0 %v4172
    %4226 = vmatpush1.msra.mxu0 %v4171
    %4227 = vmatprep.subr.mxu0 %v4176
    %4228 = vmatpush1.msra.mxu0 %v4175
    %4229 = vmatprep.subr.mxu0 %v4180
    %4230 = vmatpush1.msra.mxu0 %v4179
    %4231 = vmatprep.subr.mxu0 %v4184
    %4232 = vmatpush1.msra.mxu0 %v4183
    %4233 = vmatprep.subr.mxu0 %v4188
    %4234 = vmatpush1.msra.mxu0 %v4187
    %4235 = vmatprep.subr.mxu0 %v4192
    %4236 = vmatpush1.msra.mxu0 %v4191
    %4237 = vmatprep.subr.mxu0 %v4196
    %4238 = vmatpush1.msra.mxu0 %v4195
    %4239 = vmatprep.subr.mxu0 %v4200
    %4240 = vmatpush1.msra.mxu0 %v4199
    %4241 = vmatprep.subr.mxu0 %v4204
    %4242 = vmatpush1.msra.mxu0 %v4203
    %4243 = vmatprep.subr.mxu0 %v4208
    %4244 = vmatpush1.msra.mxu0 %v4207
    %4245 = vmatprep.subr.mxu0 %v4212
    %4246 = vmatpush1.msra.mxu0 %v4211
    %4247 = vmatprep.subr.mxu0 0.0
    %4248 = vmatpush1.msra.mxu0 0.0
    %4249 = vmatprep.subr.mxu0 0.0
    %4250 = vmatpush1.msra.mxu0 0.0
    %4251 = vmatprep.subr.mxu0 0.0
    %4252 = vmatpush1.msra.mxu0 0.0
    %4253 = vmatprep.subr.mxu0 0.0
    %4254 = vmatpush1.msra.mxu0 0.0
    %4255 = vmatprep.subr.mxu0 0.0
    %4256 = vmatpush1.msra.mxu0 0.0
    %4257 = vmatprep.subr.mxu0 0.0
    %4258 = vmatpush1.msra.mxu0 0.0
    %4259 = vmatprep.subr.mxu0 0.0
    %4260 = vmatpush1.msra.mxu0 0.0
    %4261 = vmatprep.subr.mxu0 0.0
    %4262 = vmatpush1.msra.mxu0 0.0
    %4263 = vmatprep.subr.mxu0 0.0
    %4264 = vmatpush1.msra.mxu0 0.0
    %4265 = vmatprep.subr.mxu0 0.0
    %4266 = vmatpush1.msra.mxu0 0.0
    %4267 = vmatprep.subr.mxu0 0.0
    %4268 = vmatpush1.msra.mxu0 0.0
    %4269 = vmatprep.subr.mxu0 0.0
    %4270 = vmatpush1.msra.mxu0 0.0
    %4271 = vmatprep.subr.mxu0 0.0
    %4272 = vmatpush1.msra.mxu0 0.0
    %4273 = vmatprep.subr.mxu0 0.0
    %4274 = vmatpush1.msra.mxu0 0.0
    %4275 = vmatprep.subr.mxu0 0.0
    %4276 = vmatpush1.msra.mxu0 0.0
    %4277 = vmatprep.subr.mxu0 0.0
    %4278 = vmatpush1.msra.mxu0 0.0
    %4279 = vmatprep.mubr.f32.mxu0 0.0
    %4280 = vmatmul.mubr.f32.gmra.mrb[0].mxu0 %v4139
    %v4281 = vpop.f32.mrb[0].mxu0
    %v4282 = vadd.f32 0.0, %v4281
    %v4283 = vpop.f32.mrb[0].mxu0
    %v4284 = vadd.f32 0.0, %v4283
    %4285 = vdwg.mxu0
    %4286 = vmatprep.subr.mxu0 %v4154
    %4287 = vmatpush1.msra.mxu0 %v4153
    %4288 = vmatprep.subr.mxu0 %v4158
    %4289 = vmatpush1.msra.mxu0 %v4157
    %4290 = vmatprep.subr.mxu0 %v4162
    %4291 = vmatpush1.msra.mxu0 %v4161
    %4292 = vmatprep.subr.mxu0 %v4166
    %4293 = vmatpush1.msra.mxu0 %v4165
    %4294 = vmatprep.subr.mxu0 %v4170
    %4295 = vmatpush1.msra.mxu0 %v4169
    %4296 = vmatprep.subr.mxu0 %v4174
    %4297 = vmatpush1.msra.mxu0 %v4173
    %4298 = vmatprep.subr.mxu0 %v4178
    %4299 = vmatpush1.msra.mxu0 %v4177
    %4300 = vmatprep.subr.mxu0 %v4182
    %4301 = vmatpush1.msra.mxu0 %v4181
    %4302 = vmatprep.subr.mxu0 %v4186
    %4303 = vmatpush1.msra.mxu0 %v4185
    %4304 = vmatprep.subr.mxu0 %v4190
    %4305 = vmatpush1.msra.mxu0 %v4189
    %4306 = vmatprep.subr.mxu0 %v4194
    %4307 = vmatpush1.msra.mxu0 %v4193
    %4308 = vmatprep.subr.mxu0 %v4198
    %4309 = vmatpush1.msra.mxu0 %v4197
    %4310 = vmatprep.subr.mxu0 %v4202
    %4311 = vmatpush1.msra.mxu0 %v4201
    %4312 = vmatprep.subr.mxu0 %v4206
    %4313 = vmatpush1.msra.mxu0 %v4205
    %4314 = vmatprep.subr.mxu0 %v4210
    %4315 = vmatpush1.msra.mxu0 %v4209
    %4316 = vmatprep.subr.mxu0 %v4214
    %4317 = vmatpush1.msra.mxu0 %v4213
    %4318 = vmatprep.subr.mxu0 0.0
    %4319 = vmatpush1.msra.mxu0 0.0
    %4320 = vmatprep.subr.mxu0 0.0
    %4321 = vmatpush1.msra.mxu0 0.0
    %4322 = vmatprep.subr.mxu0 0.0
    %4323 = vmatpush1.msra.mxu0 0.0
    %4324 = vmatprep.subr.mxu0 0.0
    %4325 = vmatpush1.msra.mxu0 0.0
    %4326 = vmatprep.subr.mxu0 0.0
    %4327 = vmatpush1.msra.mxu0 0.0
    %4328 = vmatprep.subr.mxu0 0.0
    %4329 = vmatpush1.msra.mxu0 0.0
    %4330 = vmatprep.subr.mxu0 0.0
    %4331 = vmatpush1.msra.mxu0 0.0
    %4332 = vmatprep.subr.mxu0 0.0
    %4333 = vmatpush1.msra.mxu0 0.0
    %4334 = vmatprep.subr.mxu0 0.0
    %4335 = vmatpush1.msra.mxu0 0.0
    %4336 = vmatprep.subr.mxu0 0.0
    %4337 = vmatpush1.msra.mxu0 0.0
    %4338 = vmatprep.subr.mxu0 0.0
    %4339 = vmatpush1.msra.mxu0 0.0
    %4340 = vmatprep.subr.mxu0 0.0
    %4341 = vmatpush1.msra.mxu0 0.0
    %4342 = vmatprep.subr.mxu0 0.0
    %4343 = vmatpush1.msra.mxu0 0.0
    %4344 = vmatprep.subr.mxu0 0.0
    %4345 = vmatpush1.msra.mxu0 0.0
    %4346 = vmatprep.subr.mxu0 0.0
    %4347 = vmatpush1.msra.mxu0 0.0
    %4348 = vmatprep.subr.mxu0 0.0
    %4349 = vmatpush1.msra.mxu0 0.0
    %4350 = vmatprep.mubr.f32.mxu0 0.0
    %4351 = vmatmul.mubr.f32.gmra.mrb[0].mxu0 %v4139
    %v4352 = vpop.f32.mrb[0].mxu0
    %v4353 = vadd.f32 0.0, %v4352
    %v4354 = vpop.f32.mrb[0].mxu0
    %v4355 = vadd.f32 0.0, %v4354
    %4356 = vdwg.mxu0
    %v4357 = vadd.f32 %v4147, %v4282
    %v4358 = vadd.f32 %v4148, %v4284
    %v4359 = vadd.f32 %v4149, %v4353
    %v4360 = vadd.f32 %v4150, %v4355
    %v4361 = vmul.f32 %v4357, 0.5
    %v4362 = vtanh.pop %v4361
    %v4363 = vmul.f32 %v4362, 0.5
    %v4364 = vadd.f32 %v4363, 0.5
    %v4365 = vmul.f32 %v4358, 0.5
    %v4366 = vtanh.pop %v4365
    %v4367 = vmul.f32 %v4366, 0.5
    %v4368 = vadd.f32 %v4367, 0.5
    %v4369 = vtanh.pop %v4359
    %v4370 = vmul.f32 %v4360, 0.5
    %v4371 = vtanh.pop %v4370
    %v4372 = vmul.f32 %v4371, 0.5
    %v4373 = vadd.f32 %v4372, 0.5
    %v4374 = vmul.f32 %v4368, %v4137
    %v4375 = vmul.f32 %v4364, %v4369
    %v4376 = vadd.f32 %v4374, %v4375
    %v4377 = vtanh.pop %v4376
    %v4378 = vmul.f32 %v4373, %v4377
    %s4379 = scalar_lea.vmem [#allocation3], 120
    %4380 = vst [vmem:[%s4379] sm:$0xff] %v4378
    %4381 = vst [vmem:[#allocation4] sm:$0xff] %v4378
    %v4382 = vld [vmem:[#allocation3] sm:$0xff]
    %v4383 = vld [vmem:[#allocation3 + $0x8] sm:$0xff]
    %v4384 = vld [vmem:[#allocation3 + $0x10] sm:$0xff]
    %v4385 = vld [vmem:[#allocation3 + $0x18] sm:$0xff]
    %v4386 = vld [vmem:[#allocation3 + $0x20] sm:$0xff]
    %v4387 = vld [vmem:[#allocation3 + $0x28] sm:$0xff]
    %v4388 = vld [vmem:[#allocation3 + $0x30] sm:$0xff]
    %v4389 = vld [vmem:[#allocation3 + $0x38] sm:$0xff]
    %v4390 = vld [vmem:[#allocation3 + $0x40] sm:$0xff]
    %v4391 = vld [vmem:[#allocation3 + $0x48] sm:$0xff]
    %v4392 = vld [vmem:[#allocation3 + $0x50] sm:$0xff]
    %v4393 = vld [vmem:[#allocation3 + $0x58] sm:$0xff]
    %v4394 = vld [vmem:[#allocation3 + $0x60] sm:$0xff]
    %v4395 = vld [vmem:[#allocation3 + $0x68] sm:$0xff]
    %v4396 = vld [vmem:[#allocation3 + $0x70] sm:$0xff]
    %v4397 = vld [vmem:[#allocation3 + $0x78] sm:$0xff]
    %v4398 = vld [vmem:[#allocation8] sm:$0xff]
    %v4399 = vld [vmem:[#allocation8 + $0x8] sm:$0xff]
    %v4400 = vld [vmem:[#allocation8 + $0x10] sm:$0xff]
    %v4401 = vld [vmem:[#allocation8 + $0x18] sm:$0xff]
    %v4402 = vld [vmem:[#allocation8 + $0x20] sm:$0xff]
    %v4403 = vld [vmem:[#allocation8 + $0x28] sm:$0xff]
    %v4404 = vld [vmem:[#allocation8 + $0x30] sm:$0xff]
    %v4405 = vld [vmem:[#allocation8 + $0x38] sm:$0xff]
    %v4406 = vld [vmem:[#allocation8 + $0x40] sm:$0xff]
    %v4407 = vld [vmem:[#allocation8 + $0x48] sm:$0xff]
    %v4408 = vld [vmem:[#allocation8 + $0x50] sm:$0xff]
    %v4409 = vld [vmem:[#allocation8 + $0x58] sm:$0xff]
    %v4410 = vld [vmem:[#allocation8 + $0x60] sm:$0xff]
    %v4411 = vld [vmem:[#allocation8 + $0x68] sm:$0xff]
    %v4412 = vld [vmem:[#allocation8 + $0x70] sm:$0xff]
    %v4413 = vld [vmem:[#allocation8 + $0x78] sm:$0xff]
    %v4414 = vld [vmem:[#allocation8 + $0x80] sm:$0xff]
    %v4415 = vld [vmem:[#allocation8 + $0x88] sm:$0xff]
    %v4416 = vld [vmem:[#allocation8 + $0x90] sm:$0xff]
    %v4417 = vld [vmem:[#allocation8 + $0x98] sm:$0xff]
    %v4418 = vld [vmem:[#allocation8 + $0xa0] sm:$0xff]
    %v4419 = vld [vmem:[#allocation8 + $0xa8] sm:$0xff]
    %v4420 = vld [vmem:[#allocation8 + $0xb0] sm:$0xff]
    %v4421 = vld [vmem:[#allocation8 + $0xb8] sm:$0xff]
    %v4422 = vld [vmem:[#allocation8 + $0xc0] sm:$0xff]
    %v4423 = vld [vmem:[#allocation8 + $0xc8] sm:$0xff]
    %v4424 = vld [vmem:[#allocation8 + $0xd0] sm:$0xff]
    %v4425 = vld [vmem:[#allocation8 + $0xd8] sm:$0xff]
    %v4426 = vld [vmem:[#allocation8 + $0xe0] sm:$0xff]
    %v4427 = vld [vmem:[#allocation8 + $0xe8] sm:$0xff]
    %v4428 = vld [vmem:[#allocation8 + $0xf0] sm:$0xff]
    %v4429 = vld [vmem:[#allocation8 + $0xf8] sm:$0xff]
    %v4430 = vld [vmem:[#allocation4] sm:$0xff]
    %v4431 = vld [vmem:[#allocation4 + $0x8] sm:$0xff]
    %v4432 = vld [vmem:[#allocation4 + $0x10] sm:$0xff]
    %v4433 = vld [vmem:[#allocation4 + $0x18] sm:$0xff]
    %v4434 = vld [vmem:[#allocation4 + $0x20] sm:$0xff]
    %v4435 = vld [vmem:[#allocation4 + $0x28] sm:$0xff]
    %v4436 = vld [vmem:[#allocation4 + $0x30] sm:$0xff]
    %v4437 = vld [vmem:[#allocation4 + $0x38] sm:$0xff]
    %v4438 = vld [vmem:[#allocation4 + $0x40] sm:$0xff]
    %v4439 = vld [vmem:[#allocation4 + $0x48] sm:$0xff]
    %v4440 = vld [vmem:[#allocation4 + $0x50] sm:$0xff]
    %v4441 = vld [vmem:[#allocation4 + $0x58] sm:$0xff]
    %v4442 = vld [vmem:[#allocation4 + $0x60] sm:$0xff]
    %v4443 = vld [vmem:[#allocation4 + $0x68] sm:$0xff]
    %v4444 = vld [vmem:[#allocation4 + $0x70] sm:$0xff]
    %v4445 = vld [vmem:[#allocation4 + $0x78] sm:$0xff]
    %v4446 = vld [vmem:[#allocation10] sm:$0xff]
    %v4447 = vld [vmem:[#allocation10 + $0x8] sm:$0xff]
    %v4448 = vld [vmem:[#allocation10 + $0x10] sm:$0xff]
    %v4449 = vld [vmem:[#allocation10 + $0x18] sm:$0xff]
    %v4450 = vld [vmem:[#allocation10 + $0x20] sm:$0xff]
    %v4451 = vld [vmem:[#allocation10 + $0x28] sm:$0xff]
    %v4452 = vld [vmem:[#allocation10 + $0x30] sm:$0xff]
    %v4453 = vld [vmem:[#allocation10 + $0x38] sm:$0xff]
    %v4454 = vld [vmem:[#allocation10 + $0x40] sm:$0xff]
    %v4455 = vld [vmem:[#allocation10 + $0x48] sm:$0xff]
    %v4456 = vld [vmem:[#allocation10 + $0x50] sm:$0xff]
    %v4457 = vld [vmem:[#allocation10 + $0x58] sm:$0xff]
    %v4458 = vld [vmem:[#allocation10 + $0x60] sm:$0xff]
    %v4459 = vld [vmem:[#allocation10 + $0x68] sm:$0xff]
    %v4460 = vld [vmem:[#allocation10 + $0x70] sm:$0xff]
    %v4461 = vld [vmem:[#allocation10 + $0x78] sm:$0xff]
    %v4462 = vld [vmem:[#allocation10 + $0x80] sm:$0xff]
    %v4463 = vld [vmem:[#allocation10 + $0x88] sm:$0xff]
    %v4464 = vld [vmem:[#allocation10 + $0x90] sm:$0xff]
    %v4465 = vld [vmem:[#allocation10 + $0x98] sm:$0xff]
    %v4466 = vld [vmem:[#allocation10 + $0xa0] sm:$0xff]
    %v4467 = vld [vmem:[#allocation10 + $0xa8] sm:$0xff]
    %v4468 = vld [vmem:[#allocation10 + $0xb0] sm:$0xff]
    %v4469 = vld [vmem:[#allocation10 + $0xb8] sm:$0xff]
    %v4470 = vld [vmem:[#allocation10 + $0xc0] sm:$0xff]
    %v4471 = vld [vmem:[#allocation10 + $0xc8] sm:$0xff]
    %v4472 = vld [vmem:[#allocation10 + $0xd0] sm:$0xff]
    %v4473 = vld [vmem:[#allocation10 + $0xd8] sm:$0xff]
    %v4474 = vld [vmem:[#allocation10 + $0xe0] sm:$0xff]
    %v4475 = vld [vmem:[#allocation10 + $0xe8] sm:$0xff]
    %v4476 = vld [vmem:[#allocation10 + $0xf0] sm:$0xff]
    %v4477 = vld [vmem:[#allocation10 + $0xf8] sm:$0xff]
    %4478 = vmatprep.subr.mxu0 %v4447
    %4479 = vmatpush1.msra.mxu0 %v4446
    %4480 = vmatprep.subr.mxu0 %v4449
    %4481 = vmatpush1.msra.mxu0 %v4448
    %4482 = vmatprep.subr.mxu0 %v4451
    %4483 = vmatpush1.msra.mxu0 %v4450
    %4484 = vmatprep.subr.mxu0 %v4453
    %4485 = vmatpush1.msra.mxu0 %v4452
    %4486 = vmatprep.subr.mxu0 %v4455
    %4487 = vmatpush1.msra.mxu0 %v4454
    %4488 = vmatprep.subr.mxu0 %v4457
    %4489 = vmatpush1.msra.mxu0 %v4456
    %4490 = vmatprep.subr.mxu0 %v4459
    %4491 = vmatpush1.msra.mxu0 %v4458
    %4492 = vmatprep.subr.mxu0 %v4461
    %4493 = vmatpush1.msra.mxu0 %v4460
    %4494 = vmatprep.subr.mxu0 %v4463
    %4495 = vmatpush1.msra.mxu0 %v4462
    %4496 = vmatprep.subr.mxu0 %v4465
    %4497 = vmatpush1.msra.mxu0 %v4464
    %4498 = vmatprep.subr.mxu0 %v4467
    %4499 = vmatpush1.msra.mxu0 %v4466
    %4500 = vmatprep.subr.mxu0 %v4469
    %4501 = vmatpush1.msra.mxu0 %v4468
    %4502 = vmatprep.subr.mxu0 %v4471
    %4503 = vmatpush1.msra.mxu0 %v4470
    %4504 = vmatprep.subr.mxu0 %v4473
    %4505 = vmatpush1.msra.mxu0 %v4472
    %4506 = vmatprep.subr.mxu0 %v4475
    %4507 = vmatpush1.msra.mxu0 %v4474
    %4508 = vmatprep.subr.mxu0 %v4477
    %4509 = vmatpush1.msra.mxu0 %v4476
    %4510 = vmatprep.subr.mxu0 0.0
    %4511 = vmatpush1.msra.mxu0 0.0
    %4512 = vmatprep.subr.mxu0 0.0
    %4513 = vmatpush1.msra.mxu0 0.0
    %4514 = vmatprep.subr.mxu0 0.0
    %4515 = vmatpush1.msra.mxu0 0.0
    %4516 = vmatprep.subr.mxu0 0.0
    %4517 = vmatpush1.msra.mxu0 0.0
    %4518 = vmatprep.subr.mxu0 0.0
    %4519 = vmatpush1.msra.mxu0 0.0
    %4520 = vmatprep.subr.mxu0 0.0
    %4521 = vmatpush1.msra.mxu0 0.0
    %4522 = vmatprep.subr.mxu0 0.0
    %4523 = vmatpush1.msra.mxu0 0.0
    %4524 = vmatprep.subr.mxu0 0.0
    %4525 = vmatpush1.msra.mxu0 0.0
    %4526 = vmatprep.subr.mxu0 0.0
    %4527 = vmatpush1.msra.mxu0 0.0
    %4528 = vmatprep.subr.mxu0 0.0
    %4529 = vmatpush1.msra.mxu0 0.0
    %4530 = vmatprep.subr.mxu0 0.0
    %4531 = vmatpush1.msra.mxu0 0.0
    %4532 = vmatprep.subr.mxu0 0.0
    %4533 = vmatpush1.msra.mxu0 0.0
    %4534 = vmatprep.subr.mxu0 0.0
    %4535 = vmatpush1.msra.mxu0 0.0
    %4536 = vmatprep.subr.mxu0 0.0
    %4537 = vmatpush1.msra.mxu0 0.0
    %4538 = vmatprep.subr.mxu0 0.0
    %4539 = vmatpush1.msra.mxu0 0.0
    %4540 = vmatprep.subr.mxu0 0.0
    %4541 = vmatpush1.msra.mxu0 0.0
    %4542 = vmatprep.mubr.f32.mxu0 0.0
    %4543 = vmatmul.mubr.f32.gmra.mrb[0].mxu0 %v4430
    %v4544 = vpop.f32.mrb[0].mxu0
    %v4545 = vadd.f32 0.0, %v4544
    %v4546 = vpop.f32.mrb[0].mxu0
    %v4547 = vadd.f32 0.0, %v4546
    %4548 = vmatprep.mubr.f32.mxu0 0.0
    %4549 = vmatmul.mubr.f32.gmra.mrb[0].mxu0 %v4431
    %v4550 = vpop.f32.mrb[0].mxu0
    %v4551 = vadd.f32 0.0, %v4550
    %v4552 = vpop.f32.mrb[0].mxu0
    %v4553 = vadd.f32 0.0, %v4552
    %4554 = vmatprep.mubr.f32.mxu0 0.0
    %4555 = vmatmul.mubr.f32.gmra.mrb[0].mxu0 %v4432
    %v4556 = vpop.f32.mrb[0].mxu0
    %v4557 = vadd.f32 0.0, %v4556
    %v4558 = vpop.f32.mrb[0].mxu0
    %v4559 = vadd.f32 0.0, %v4558
    %4560 = vmatprep.mubr.f32.mxu0 0.0
    %4561 = vmatmul.mubr.f32.gmra.mrb[0].mxu0 %v4433
    %v4562 = vpop.f32.mrb[0].mxu0
    %v4563 = vadd.f32 0.0, %v4562
    %v4564 = vpop.f32.mrb[0].mxu0
    %v4565 = vadd.f32 0.0, %v4564
    %4566 = vmatprep.mubr.f32.mxu0 0.0
    %4567 = vmatmul.mubr.f32.gmra.mrb[0].mxu0 %v4434
    %v4568 = vpop.f32.mrb[0].mxu0
    %v4569 = vadd.f32 0.0, %v4568
    %v4570 = vpop.f32.mrb[0].mxu0
    %v4571 = vadd.f32 0.0, %v4570
    %4572 = vmatprep.mubr.f32.mxu0 0.0
    %4573 = vmatmul.mubr.f32.gmra.mrb[0].mxu0 %v4435
    %v4574 = vpop.f32.mrb[0].mxu0
    %v4575 = vadd.f32 0.0, %v4574
    %v4576 = vpop.f32.mrb[0].mxu0
    %v4577 = vadd.f32 0.0, %v4576
    %4578 = vmatprep.mubr.f32.mxu0 0.0
    %4579 = vmatmul.mubr.f32.gmra.mrb[0].mxu0 %v4436
    %v4580 = vpop.f32.mrb[0].mxu0
    %v4581 = vadd.f32 0.0, %v4580
    %v4582 = vpop.f32.mrb[0].mxu0
    %v4583 = vadd.f32 0.0, %v4582
    %4584 = vmatprep.mubr.f32.mxu0 0.0
    %4585 = vmatmul.mubr.f32.gmra.mrb[0].mxu0 %v4437
    %v4586 = vpop.f32.mrb[0].mxu0
    %v4587 = vadd.f32 0.0, %v4586
    %v4588 = vpop.f32.mrb[0].mxu0
    %v4589 = vadd.f32 0.0, %v4588
    %4590 = vmatprep.mubr.f32.mxu0 0.0
    %4591 = vmatmul.mubr.f32.gmra.mrb[0].mxu0 %v4438
    %v4592 = vpop.f32.mrb[0].mxu0
    %v4593 = vadd.f32 0.0, %v4592
    %v4594 = vpop.f32.mrb[0].mxu0
    %v4595 = vadd.f32 0.0, %v4594
    %4596 = vmatprep.mubr.f32.mxu0 0.0
    %4597 = vmatmul.mubr.f32.gmra.mrb[0].mxu0 %v4439
    %v4598 = vpop.f32.mrb[0].mxu0
    %v4599 = vadd.f32 0.0, %v4598
    %v4600 = vpop.f32.mrb[0].mxu0
    %v4601 = vadd.f32 0.0, %v4600
    %4602 = vmatprep.mubr.f32.mxu0 0.0
    %4603 = vmatmul.mubr.f32.gmra.mrb[0].mxu0 %v4440
    %v4604 = vpop.f32.mrb[0].mxu0
    %v4605 = vadd.f32 0.0, %v4604
    %v4606 = vpop.f32.mrb[0].mxu0
    %v4607 = vadd.f32 0.0, %v4606
    %4608 = vmatprep.mubr.f32.mxu0 0.0
    %4609 = vmatmul.mubr.f32.gmra.mrb[0].mxu0 %v4441
    %v4610 = vpop.f32.mrb[0].mxu0
    %v4611 = vadd.f32 0.0, %v4610
    %v4612 = vpop.f32.mrb[0].mxu0
    %v4613 = vadd.f32 0.0, %v4612
    %4614 = vmatprep.mubr.f32.mxu0 0.0
    %4615 = vmatmul.mubr.f32.gmra.mrb[0].mxu0 %v4442
    %v4616 = vpop.f32.mrb[0].mxu0
    %v4617 = vadd.f32 0.0, %v4616
    %v4618 = vpop.f32.mrb[0].mxu0
    %v4619 = vadd.f32 0.0, %v4618
    %4620 = vmatprep.mubr.f32.mxu0 0.0
    %4621 = vmatmul.mubr.f32.gmra.mrb[0].mxu0 %v4443
    %v4622 = vpop.f32.mrb[0].mxu0
    %v4623 = vadd.f32 0.0, %v4622
    %v4624 = vpop.f32.mrb[0].mxu0
    %v4625 = vadd.f32 0.0, %v4624
    %4626 = vmatprep.mubr.f32.mxu0 0.0
    %4627 = vmatmul.mubr.f32.gmra.mrb[0].mxu0 %v4444
    %v4628 = vpop.f32.mrb[0].mxu0
    %v4629 = vadd.f32 0.0, %v4628
    %v4630 = vpop.f32.mrb[0].mxu0
    %v4631 = vadd.f32 0.0, %v4630
    %4632 = vmatprep.mubr.f32.mxu0 0.0
    %4633 = vmatmul.mubr.f32.gmra.mrb[0].mxu0 %v4445
    %v4634 = vpop.f32.mrb[0].mxu0
    %v4635 = vadd.f32 0.0, %v4634
    %v4636 = vpop.f32.mrb[0].mxu0
    %v4637 = vadd.f32 0.0, %v4636
    %4638 = vdwg.mxu0
    %4639 = vmatprep.subr.mxu0 %v4399
    %4640 = vmatpush1.msra.mxu0 %v4398
    %4641 = vmatprep.subr.mxu0 %v4401
    %4642 = vmatpush1.msra.mxu0 %v4400
    %4643 = vmatprep.subr.mxu0 %v4403
    %4644 = vmatpush1.msra.mxu0 %v4402
    %4645 = vmatprep.subr.mxu0 %v4405
    %4646 = vmatpush1.msra.mxu0 %v4404
    %4647 = vmatprep.subr.mxu0 %v4407
    %4648 = vmatpush1.msra.mxu0 %v4406
    %4649 = vmatprep.subr.mxu0 %v4409
    %4650 = vmatpush1.msra.mxu0 %v4408
    %4651 = vmatprep.subr.mxu0 %v4411
    %4652 = vmatpush1.msra.mxu0 %v4410
    %4653 = vmatprep.subr.mxu0 %v4413
    %4654 = vmatpush1.msra.mxu0 %v4412
    %4655 = vmatprep.subr.mxu0 %v4415
    %4656 = vmatpush1.msra.mxu0 %v4414
    %4657 = vmatprep.subr.mxu0 %v4417
    %4658 = vmatpush1.msra.mxu0 %v4416
    %4659 = vmatprep.subr.mxu0 %v4419
    %4660 = vmatpush1.msra.mxu0 %v4418
    %4661 = vmatprep.subr.mxu0 %v4421
    %4662 = vmatpush1.msra.mxu0 %v4420
    %4663 = vmatprep.subr.mxu0 %v4423
    %4664 = vmatpush1.msra.mxu0 %v4422
    %4665 = vmatprep.subr.mxu0 %v4425
    %4666 = vmatpush1.msra.mxu0 %v4424
    %4667 = vmatprep.subr.mxu0 %v4427
    %4668 = vmatpush1.msra.mxu0 %v4426
    %4669 = vmatprep.subr.mxu0 %v4429
    %4670 = vmatpush1.msra.mxu0 %v4428
    %4671 = vmatprep.subr.mxu0 0.0
    %4672 = vmatpush1.msra.mxu0 0.0
    %4673 = vmatprep.subr.mxu0 0.0
    %4674 = vmatpush1.msra.mxu0 0.0
    %4675 = vmatprep.subr.mxu0 0.0
    %4676 = vmatpush1.msra.mxu0 0.0
    %4677 = vmatprep.subr.mxu0 0.0
    %4678 = vmatpush1.msra.mxu0 0.0
    %4679 = vmatprep.subr.mxu0 0.0
    %4680 = vmatpush1.msra.mxu0 0.0
    %4681 = vmatprep.subr.mxu0 0.0
    %4682 = vmatpush1.msra.mxu0 0.0
    %4683 = vmatprep.subr.mxu0 0.0
    %4684 = vmatpush1.msra.mxu0 0.0
    %4685 = vmatprep.subr.mxu0 0.0
    %4686 = vmatpush1.msra.mxu0 0.0
    %4687 = vmatprep.subr.mxu0 0.0
    %4688 = vmatpush1.msra.mxu0 0.0
    %4689 = vmatprep.subr.mxu0 0.0
    %4690 = vmatpush1.msra.mxu0 0.0
    %4691 = vmatprep.subr.mxu0 0.0
    %4692 = vmatpush1.msra.mxu0 0.0
    %4693 = vmatprep.subr.mxu0 0.0
    %4694 = vmatpush1.msra.mxu0 0.0
    %4695 = vmatprep.subr.mxu0 0.0
    %4696 = vmatpush1.msra.mxu0 0.0
    %4697 = vmatprep.subr.mxu0 0.0
    %4698 = vmatpush1.msra.mxu0 0.0
    %4699 = vmatprep.subr.mxu0 0.0
    %4700 = vmatpush1.msra.mxu0 0.0
    %4701 = vmatprep.subr.mxu0 0.0
    %4702 = vmatpush1.msra.mxu0 0.0
    %4703 = vmatprep.mubr.f32.mxu0 0.0
    %4704 = vmatmul.mubr.f32.gmra.mrb[0].mxu0 %v4382
    %v4705 = vpop.f32.mrb[0].mxu0
    %v4706 = vadd.f32 %v4545, %v4705
    %v4707 = vpop.f32.mrb[0].mxu0
    %v4708 = vadd.f32 %v4547, %v4707
    %4709 = vmatprep.mubr.f32.mxu0 0.0
    %4710 = vmatmul.mubr.f32.gmra.mrb[0].mxu0 %v4383
    %v4711 = vpop.f32.mrb[0].mxu0
    %v4712 = vadd.f32 %v4551, %v4711
    %v4713 = vpop.f32.mrb[0].mxu0
    %v4714 = vadd.f32 %v4553, %v4713
    %4715 = vmatprep.mubr.f32.mxu0 0.0
    %4716 = vmatmul.mubr.f32.gmra.mrb[0].mxu0 %v4384
    %v4717 = vpop.f32.mrb[0].mxu0
    %v4718 = vadd.f32 %v4557, %v4717
    %v4719 = vpop.f32.mrb[0].mxu0
    %v4720 = vadd.f32 %v4559, %v4719
    %4721 = vmatprep.mubr.f32.mxu0 0.0
    %4722 = vmatmul.mubr.f32.gmra.mrb[0].mxu0 %v4385
    %v4723 = vpop.f32.mrb[0].mxu0
    %v4724 = vadd.f32 %v4563, %v4723
    %v4725 = vpop.f32.mrb[0].mxu0
    %v4726 = vadd.f32 %v4565, %v4725
    %4727 = vmatprep.mubr.f32.mxu0 0.0
    %4728 = vmatmul.mubr.f32.gmra.mrb[0].mxu0 %v4386
    %v4729 = vpop.f32.mrb[0].mxu0
    %v4730 = vadd.f32 %v4569, %v4729
    %v4731 = vpop.f32.mrb[0].mxu0
    %v4732 = vadd.f32 %v4571, %v4731
    %4733 = vmatprep.mubr.f32.mxu0 0.0
    %4734 = vmatmul.mubr.f32.gmra.mrb[0].mxu0 %v4387
    %v4735 = vpop.f32.mrb[0].mxu0
    %v4736 = vadd.f32 %v4575, %v4735
    %v4737 = vpop.f32.mrb[0].mxu0
    %v4738 = vadd.f32 %v4577, %v4737
    %4739 = vmatprep.mubr.f32.mxu0 0.0
    %4740 = vmatmul.mubr.f32.gmra.mrb[0].mxu0 %v4388
    %v4741 = vpop.f32.mrb[0].mxu0
    %v4742 = vadd.f32 %v4581, %v4741
    %v4743 = vpop.f32.mrb[0].mxu0
    %v4744 = vadd.f32 %v4583, %v4743
    %4745 = vmatprep.mubr.f32.mxu0 0.0
    %4746 = vmatmul.mubr.f32.gmra.mrb[0].mxu0 %v4389
    %v4747 = vpop.f32.mrb[0].mxu0
    %v4748 = vadd.f32 %v4587, %v4747
    %v4749 = vpop.f32.mrb[0].mxu0
    %v4750 = vadd.f32 %v4589, %v4749
    %4751 = vmatprep.mubr.f32.mxu0 0.0
    %4752 = vmatmul.mubr.f32.gmra.mrb[0].mxu0 %v4390
    %v4753 = vpop.f32.mrb[0].mxu0
    %v4754 = vadd.f32 %v4593, %v4753
    %v4755 = vpop.f32.mrb[0].mxu0
    %v4756 = vadd.f32 %v4595, %v4755
    %4757 = vmatprep.mubr.f32.mxu0 0.0
    %4758 = vmatmul.mubr.f32.gmra.mrb[0].mxu0 %v4391
    %v4759 = vpop.f32.mrb[0].mxu0
    %v4760 = vadd.f32 %v4599, %v4759
    %v4761 = vpop.f32.mrb[0].mxu0
    %v4762 = vadd.f32 %v4601, %v4761
    %4763 = vmatprep.mubr.f32.mxu0 0.0
    %4764 = vmatmul.mubr.f32.gmra.mrb[0].mxu0 %v4392
    %v4765 = vpop.f32.mrb[0].mxu0
    %v4766 = vadd.f32 %v4605, %v4765
    %v4767 = vpop.f32.mrb[0].mxu0
    %v4768 = vadd.f32 %v4607, %v4767
    %4769 = vmatprep.mubr.f32.mxu0 0.0
    %4770 = vmatmul.mubr.f32.gmra.mrb[0].mxu0 %v4393
    %v4771 = vpop.f32.mrb[0].mxu0
    %v4772 = vadd.f32 %v4611, %v4771
    %v4773 = vpop.f32.mrb[0].mxu0
    %v4774 = vadd.f32 %v4613, %v4773
    %4775 = vmatprep.mubr.f32.mxu0 0.0
    %4776 = vmatmul.mubr.f32.gmra.mrb[0].mxu0 %v4394
    %v4777 = vpop.f32.mrb[0].mxu0
    %v4778 = vadd.f32 %v4617, %v4777
    %v4779 = vpop.f32.mrb[0].mxu0
    %v4780 = vadd.f32 %v4619, %v4779
    %4781 = vmatprep.mubr.f32.mxu0 0.0
    %4782 = vmatmul.mubr.f32.gmra.mrb[0].mxu0 %v4395
    %v4783 = vpop.f32.mrb[0].mxu0
    %v4784 = vadd.f32 %v4623, %v4783
    %v4785 = vpop.f32.mrb[0].mxu0
    %v4786 = vadd.f32 %v4625, %v4785
    %4787 = vmatprep.mubr.f32.mxu0 0.0
    %4788 = vmatmul.mubr.f32.gmra.mrb[0].mxu0 %v4396
    %v4789 = vpop.f32.mrb[0].mxu0
    %v4790 = vadd.f32 %v4629, %v4789
    %v4791 = vpop.f32.mrb[0].mxu0
    %v4792 = vadd.f32 %v4631, %v4791
    %4793 = vmatprep.mubr.f32.mxu0 0.0
    %4794 = vmatmul.mubr.f32.gmra.mrb[0].mxu0 %v4397
    %v4795 = vpop.f32.mrb[0].mxu0
    %v4796 = vadd.f32 %v4635, %v4795
    %v4797 = vpop.f32.mrb[0].mxu0
    %v4798 = vadd.f32 %v4637, %v4797
    %4799 = vdwg.mxu0
    %v4800 = vld [vmem:[%s6] sm:$0x3]
    %v4802 = vlaneseq
    %v4803 = vshrl.u32 %v4802, 7
    %v4804 = vsub.s32 0, %v4803
    %v4805 = vrot.slane %v4800, %v4804
    %v4806 = vlaneseq
    %v4807 = vshrl.u32 %v4806, 7
    %v4808 = vsub.s32 1, %v4807
    %v4809 = vrot.slane %v4800, %v4808
    %v4812 = vadd.f32 %v4706, %v4805
    %v4813 = vadd.f32 %v4708, %v4809
    %v4814 = vadd.f32 %v4712, %v4805
    %v4815 = vadd.f32 %v4714, %v4809
    %v4816 = vadd.f32 %v4718, %v4805
    %v4817 = vadd.f32 %v4720, %v4809
    %v4818 = vadd.f32 %v4724, %v4805
    %v4819 = vadd.f32 %v4726, %v4809
    %v4820 = vadd.f32 %v4730, %v4805
    %v4821 = vadd.f32 %v4732, %v4809
    %v4822 = vadd.f32 %v4736, %v4805
    %v4823 = vadd.f32 %v4738, %v4809
    %v4824 = vadd.f32 %v4742, %v4805
    %v4825 = vadd.f32 %v4744, %v4809
    %v4826 = vadd.f32 %v4748, %v4805
    %v4827 = vadd.f32 %v4750, %v4809
    %v4828 = vadd.f32 %v4754, %v4805
    %v4829 = vadd.f32 %v4756, %v4809
    %v4830 = vadd.f32 %v4760, %v4805
    %v4831 = vadd.f32 %v4762, %v4809
    %v4832 = vadd.f32 %v4766, %v4805
    %v4833 = vadd.f32 %v4768, %v4809
    %v4834 = vadd.f32 %v4772, %v4805
    %v4835 = vadd.f32 %v4774, %v4809
    %v4836 = vadd.f32 %v4778, %v4805
    %v4837 = vadd.f32 %v4780, %v4809
    %v4838 = vadd.f32 %v4784, %v4805
    %v4839 = vadd.f32 %v4786, %v4809
    %v4840 = vadd.f32 %v4790, %v4805
    %v4841 = vadd.f32 %v4792, %v4809
    %v4842 = vadd.f32 %v4796, %v4805
    %v4843 = vadd.f32 %v4798, %v4809
    %v4844 = vmax.f32 %v4812, 0.0
    %v4845 = vmax.f32 %v4813, 0.0
    %v4846 = vmax.f32 %v4814, 0.0
    %v4847 = vmax.f32 %v4815, 0.0
    %v4848 = vmax.f32 %v4816, 0.0
    %v4849 = vmax.f32 %v4817, 0.0
    %v4850 = vmax.f32 %v4818, 0.0
    %v4851 = vmax.f32 %v4819, 0.0
    %v4852 = vmax.f32 %v4820, 0.0
    %v4853 = vmax.f32 %v4821, 0.0
    %v4854 = vmax.f32 %v4822, 0.0
    %v4855 = vmax.f32 %v4823, 0.0
    %v4856 = vmax.f32 %v4824, 0.0
    %v4857 = vmax.f32 %v4825, 0.0
    %v4858 = vmax.f32 %v4826, 0.0
    %v4859 = vmax.f32 %v4827, 0.0
    %v4860 = vmax.f32 %v4828, 0.0
    %v4861 = vmax.f32 %v4829, 0.0
    %v4862 = vmax.f32 %v4830, 0.0
    %v4863 = vmax.f32 %v4831, 0.0
    %v4864 = vmax.f32 %v4832, 0.0
    %v4865 = vmax.f32 %v4833, 0.0
    %v4866 = vmax.f32 %v4834, 0.0
    %v4867 = vmax.f32 %v4835, 0.0
    %v4868 = vmax.f32 %v4836, 0.0
    %v4869 = vmax.f32 %v4837, 0.0
    %v4870 = vmax.f32 %v4838, 0.0
    %v4871 = vmax.f32 %v4839, 0.0
    %v4872 = vmax.f32 %v4840, 0.0
    %v4873 = vmax.f32 %v4841, 0.0
    %v4874 = vmax.f32 %v4842, 0.0
    %v4875 = vmax.f32 %v4843, 0.0
    %v4876 = vld [vmem:[%s7] sm:$0xff]
    %v4877 = vld [vmem:[%s7 + $0x8] sm:$0xff]
    %v4878 = vld [vmem:[%s7 + $0x10] sm:$0xff]
    %v4879 = vld [vmem:[%s7 + $0x18] sm:$0xff]
    %v4880 = vld [vmem:[%s7 + $0x20] sm:$0xff]
    %v4881 = vld [vmem:[%s7 + $0x28] sm:$0xff]
    %v4882 = vld [vmem:[%s7 + $0x30] sm:$0xff]
    %v4883 = vld [vmem:[%s7 + $0x38] sm:$0xff]
    %v4884 = vld [vmem:[%s7 + $0x40] sm:$0xff]
    %v4885 = vld [vmem:[%s7 + $0x48] sm:$0xff]
    %v4886 = vld [vmem:[%s7 + $0x50] sm:$0xff]
    %v4887 = vld [vmem:[%s7 + $0x58] sm:$0xff]
    %v4888 = vld [vmem:[%s7 + $0x60] sm:$0xff]
    %v4889 = vld [vmem:[%s7 + $0x68] sm:$0xff]
    %v4890 = vld [vmem:[%s7 + $0x70] sm:$0xff]
    %v4891 = vld [vmem:[%s7 + $0x78] sm:$0xff]
    %v4892 = vld [vmem:[%s7 + $0x80] sm:$0xff]
    %v4893 = vld [vmem:[%s7 + $0x88] sm:$0xff]
    %v4894 = vld [vmem:[%s7 + $0x90] sm:$0xff]
    %v4895 = vld [vmem:[%s7 + $0x98] sm:$0xff]
    %v4896 = vld [vmem:[%s7 + $0xa0] sm:$0xff]
    %v4897 = vld [vmem:[%s7 + $0xa8] sm:$0xff]
    %v4898 = vld [vmem:[%s7 + $0xb0] sm:$0xff]
    %v4899 = vld [vmem:[%s7 + $0xb8] sm:$0xff]
    %v4900 = vld [vmem:[%s7 + $0xc0] sm:$0xff]
    %v4901 = vld [vmem:[%s7 + $0xc8] sm:$0xff]
    %v4902 = vld [vmem:[%s7 + $0xd0] sm:$0xff]
    %v4903 = vld [vmem:[%s7 + $0xd8] sm:$0xff]
    %v4904 = vld [vmem:[%s7 + $0xe0] sm:$0xff]
    %v4905 = vld [vmem:[%s7 + $0xe8] sm:$0xff]
    %v4906 = vld [vmem:[%s7 + $0xf0] sm:$0xff]
    %v4907 = vld [vmem:[%s7 + $0xf8] sm:$0xff]
    %v4908 = vld [vmem:[%s8] sm:$0x1]
    %v4910 = vlaneseq
    %v4911 = vshrl.u32 %v4910, 7
    %v4912 = vsub.s32 0, %v4911
    %v4913 = vrot.slane %v4908, %v4912
    %4915 = vmatprep.subr.mxu0 0.0
    %4916 = vmatpush1.msra.mxu0 %v4876
    %4917 = vmatprep.subr.mxu0 0.0
    %4918 = vmatpush1.msra.mxu0 %v4877
    %4919 = vmatprep.subr.mxu0 0.0
    %4920 = vmatpush1.msra.mxu0 %v4878
    %4921 = vmatprep.subr.mxu0 0.0
    %4922 = vmatpush1.msra.mxu0 %v4879
    %4923 = vmatprep.subr.mxu0 0.0
    %4924 = vmatpush1.msra.mxu0 %v4880
    %4925 = vmatprep.subr.mxu0 0.0
    %4926 = vmatpush1.msra.mxu0 %v4881
    %4927 = vmatprep.subr.mxu0 0.0
    %4928 = vmatpush1.msra.mxu0 %v4882
    %4929 = vmatprep.subr.mxu0 0.0
    %4930 = vmatpush1.msra.mxu0 %v4883
    %4931 = vmatprep.subr.mxu0 0.0
    %4932 = vmatpush1.msra.mxu0 %v4884
    %4933 = vmatprep.subr.mxu0 0.0
    %4934 = vmatpush1.msra.mxu0 %v4885
    %4935 = vmatprep.subr.mxu0 0.0
    %4936 = vmatpush1.msra.mxu0 %v4886
    %4937 = vmatprep.subr.mxu0 0.0
    %4938 = vmatpush1.msra.mxu0 %v4887
    %4939 = vmatprep.subr.mxu0 0.0
    %4940 = vmatpush1.msra.mxu0 %v4888
    %4941 = vmatprep.subr.mxu0 0.0
    %4942 = vmatpush1.msra.mxu0 %v4889
    %4943 = vmatprep.subr.mxu0 0.0
    %4944 = vmatpush1.msra.mxu0 %v4890
    %4945 = vmatprep.subr.mxu0 0.0
    %4946 = vmatpush1.msra.mxu0 %v4891
    %4947 = vmatprep.subr.mxu0 0.0
    %4948 = vmatpush1.msra.mxu0 %v4892
    %4949 = vmatprep.subr.mxu0 0.0
    %4950 = vmatpush1.msra.mxu0 %v4893
    %4951 = vmatprep.subr.mxu0 0.0
    %4952 = vmatpush1.msra.mxu0 %v4894
    %4953 = vmatprep.subr.mxu0 0.0
    %4954 = vmatpush1.msra.mxu0 %v4895
    %4955 = vmatprep.subr.mxu0 0.0
    %4956 = vmatpush1.msra.mxu0 %v4896
    %4957 = vmatprep.subr.mxu0 0.0
    %4958 = vmatpush1.msra.mxu0 %v4897
    %4959 = vmatprep.subr.mxu0 0.0
    %4960 = vmatpush1.msra.mxu0 %v4898
    %4961 = vmatprep.subr.mxu0 0.0
    %4962 = vmatpush1.msra.mxu0 %v4899
    %4963 = vmatprep.subr.mxu0 0.0
    %4964 = vmatpush1.msra.mxu0 %v4900
    %4965 = vmatprep.subr.mxu0 0.0
    %4966 = vmatpush1.msra.mxu0 %v4901
    %4967 = vmatprep.subr.mxu0 0.0
    %4968 = vmatpush1.msra.mxu0 %v4902
    %4969 = vmatprep.subr.mxu0 0.0
    %4970 = vmatpush1.msra.mxu0 %v4903
    %4971 = vmatprep.subr.mxu0 0.0
    %4972 = vmatpush1.msra.mxu0 %v4904
    %4973 = vmatprep.subr.mxu0 0.0
    %4974 = vmatpush1.msra.mxu0 %v4905
    %4975 = vmatprep.subr.mxu0 0.0
    %4976 = vmatpush1.msra.mxu0 %v4906
    %4977 = vmatprep.subr.mxu0 0.0
    %4978 = vmatpush1.msra.mxu0 %v4907
    %4979 = vmatprep.mubr.f32.mxu0 %v4845
    %4980 = vmatmul.mubr.f32.gmra.mrb[0].mxu0 %v4844
    %v4981 = vpop.f32.mrb[0].mxu0
    %v4982 = vadd.f32 %v4913, %v4981
    %v4983 = vpop.f32.mrb[0].mxu0
    %4984 = vmatprep.mubr.f32.mxu0 %v4847
    %4985 = vmatmul.mubr.f32.gmra.mrb[0].mxu0 %v4846
    %v4986 = vpop.f32.mrb[0].mxu0
    %v4987 = vadd.f32 %v4913, %v4986
    %v4988 = vpop.f32.mrb[0].mxu0
    %4989 = vmatprep.mubr.f32.mxu0 %v4849
    %4990 = vmatmul.mubr.f32.gmra.mrb[0].mxu0 %v4848
    %v4991 = vpop.f32.mrb[0].mxu0
    %v4992 = vadd.f32 %v4913, %v4991
    %v4993 = vpop.f32.mrb[0].mxu0
    %4994 = vmatprep.mubr.f32.mxu0 %v4851
    %4995 = vmatmul.mubr.f32.gmra.mrb[0].mxu0 %v4850
    %v4996 = vpop.f32.mrb[0].mxu0
    %v4997 = vadd.f32 %v4913, %v4996
    %v4998 = vpop.f32.mrb[0].mxu0
    %4999 = vmatprep.mubr.f32.mxu0 %v4853
    %5000 = vmatmul.mubr.f32.gmra.mrb[0].mxu0 %v4852
    %v5001 = vpop.f32.mrb[0].mxu0
    %v5002 = vadd.f32 %v4913, %v5001
    %v5003 = vpop.f32.mrb[0].mxu0
    %5004 = vmatprep.mubr.f32.mxu0 %v4855
    %5005 = vmatmul.mubr.f32.gmra.mrb[0].mxu0 %v4854
    %v5006 = vpop.f32.mrb[0].mxu0
    %v5007 = vadd.f32 %v4913, %v5006
    %v5008 = vpop.f32.mrb[0].mxu0
    %5009 = vmatprep.mubr.f32.mxu0 %v4857
    %5010 = vmatmul.mubr.f32.gmra.mrb[0].mxu0 %v4856
    %v5011 = vpop.f32.mrb[0].mxu0
    %v5012 = vadd.f32 %v4913, %v5011
    %v5013 = vpop.f32.mrb[0].mxu0
    %5014 = vmatprep.mubr.f32.mxu0 %v4859
    %5015 = vmatmul.mubr.f32.gmra.mrb[0].mxu0 %v4858
    %v5016 = vpop.f32.mrb[0].mxu0
    %v5017 = vadd.f32 %v4913, %v5016
    %v5018 = vpop.f32.mrb[0].mxu0
    %5019 = vmatprep.mubr.f32.mxu0 %v4861
    %5020 = vmatmul.mubr.f32.gmra.mrb[0].mxu0 %v4860
    %v5021 = vpop.f32.mrb[0].mxu0
    %v5022 = vadd.f32 %v4913, %v5021
    %v5023 = vpop.f32.mrb[0].mxu0
    %5024 = vmatprep.mubr.f32.mxu0 %v4863
    %5025 = vmatmul.mubr.f32.gmra.mrb[0].mxu0 %v4862
    %v5026 = vpop.f32.mrb[0].mxu0
    %v5027 = vadd.f32 %v4913, %v5026
    %v5028 = vpop.f32.mrb[0].mxu0
    %5029 = vmatprep.mubr.f32.mxu0 %v4865
    %5030 = vmatmul.mubr.f32.gmra.mrb[0].mxu0 %v4864
    %v5031 = vpop.f32.mrb[0].mxu0
    %v5032 = vadd.f32 %v4913, %v5031
    %v5033 = vpop.f32.mrb[0].mxu0
    %5034 = vmatprep.mubr.f32.mxu0 %v4867
    %5035 = vmatmul.mubr.f32.gmra.mrb[0].mxu0 %v4866
    %v5036 = vpop.f32.mrb[0].mxu0
    %v5037 = vadd.f32 %v4913, %v5036
    %v5038 = vpop.f32.mrb[0].mxu0
    %5039 = vmatprep.mubr.f32.mxu0 %v4869
    %5040 = vmatmul.mubr.f32.gmra.mrb[0].mxu0 %v4868
    %v5041 = vpop.f32.mrb[0].mxu0
    %v5042 = vadd.f32 %v4913, %v5041
    %v5043 = vpop.f32.mrb[0].mxu0
    %5044 = vmatprep.mubr.f32.mxu0 %v4871
    %5045 = vmatmul.mubr.f32.gmra.mrb[0].mxu0 %v4870
    %v5046 = vpop.f32.mrb[0].mxu0
    %v5047 = vadd.f32 %v4913, %v5046
    %v5048 = vpop.f32.mrb[0].mxu0
    %5049 = vmatprep.mubr.f32.mxu0 %v4873
    %5050 = vmatmul.mubr.f32.gmra.mrb[0].mxu0 %v4872
    %v5051 = vpop.f32.mrb[0].mxu0
    %v5052 = vadd.f32 %v4913, %v5051
    %v5053 = vpop.f32.mrb[0].mxu0
    %5054 = vmatprep.mubr.f32.mxu0 %v4875
    %5055 = vmatmul.mubr.f32.gmra.mrb[0].mxu0 %v4874
    %v5056 = vpop.f32.mrb[0].mxu0
    %v5057 = vadd.f32 %v4913, %v5056
    %v5058 = vpop.f32.mrb[0].mxu0
    %5059 = vdwg.mxu0
    %vm5060 = vcmask 523264
    %5061 = vst.msk [vmem:[#allocation11] sm:$0xff] %vm5060, %v4982
    %5062 = vst.msk [vmem:[#allocation11 + $0x8] sm:$0xff] %vm5060, %v4987
    %5063 = vst.msk [vmem:[#allocation11 + $0x10] sm:$0xff] %vm5060, %v4992
    %5064 = vst.msk [vmem:[#allocation11 + $0x18] sm:$0xff] %vm5060, %v4997
    %5065 = vst.msk [vmem:[#allocation11 + $0x20] sm:$0xff] %vm5060, %v5002
    %5066 = vst.msk [vmem:[#allocation11 + $0x28] sm:$0xff] %vm5060, %v5007
    %5067 = vst.msk [vmem:[#allocation11 + $0x30] sm:$0xff] %vm5060, %v5012
    %5068 = vst.msk [vmem:[#allocation11 + $0x38] sm:$0xff] %vm5060, %v5017
    %5069 = vst.msk [vmem:[#allocation11 + $0x40] sm:$0xff] %vm5060, %v5022
    %5070 = vst.msk [vmem:[#allocation11 + $0x48] sm:$0xff] %vm5060, %v5027
    %5071 = vst.msk [vmem:[#allocation11 + $0x50] sm:$0xff] %vm5060, %v5032
    %5072 = vst.msk [vmem:[#allocation11 + $0x58] sm:$0xff] %vm5060, %v5037
    %5073 = vst.msk [vmem:[#allocation11 + $0x60] sm:$0xff] %vm5060, %v5042
    %5074 = vst.msk [vmem:[#allocation11 + $0x68] sm:$0xff] %vm5060, %v5047
    %5075 = vst.msk [vmem:[#allocation11 + $0x70] sm:$0xff] %vm5060, %v5052
    %5076 = vst.msk [vmem:[#allocation11 + $0x78] sm:$0xff] %vm5060, %v5057
    // Predicated region
    $region50: #{non_residual_lstm.1} parent=1 // pred_check
      _
    $region51: #{non_residual_lstm.1} parent=1 // pred_check_branch
      %5078 = sbr.rel (0) target = $region53
    $region52: #{non_residual_lstm.1} parent=1 // pred_region
      %s5080 = ssub.s32 2048, 2048
      %5081 = vsyncadd [#allocation7], %s5080
      %s5082 = sshll.u32 [#allocation11], 4
      %s5083 = int_to_ptr.vmem [resolvable:$true] %s5082
      %5088 = dma.vmem_to_hbm [thread:$0]  %s5083, 2048, %s9, [#allocation7], 128, 128, 8
    $region53: #{non_residual_lstm.1} parent=1 // pred_fallthru
      _
    // Predicated region
    $region54: #{non_residual_lstm.1} parent=1 // pred_check
      _
    $region55: #{non_residual_lstm.1} parent=1 // pred_check_branch
      %5090 = sbr.rel (0) target = $region57
    $region56: #{non_residual_lstm.1} parent=1 // pred_region
      %5091 = dma.done [#allocation7], 2048
    $region57: #{non_residual_lstm.1} parent=1 // pred_fallthru
      _
    %5092 = vsyncpa [#allocation6], 1
    %5093 = vsyncpa [#allocation9], 1
    %5094 = vsyncpa [#allocation7], 1

</llo_original>
